<compile_context>
chip_gen: v6e
topology: v6e:2x2x1
jax: 0.10.0
libtpu: 0.0.40
codegen_flags: <defaults>
</compile_context>

<pallas_src>
import math
import functools

import jax
import jax.numpy as jnp
from jax.experimental import pallas as pl
from jax.experimental.pallas import tpu as pltpu


# ----------------------------------------------------------------------------
# In-kernel multi-head self-attention helper (attends over axis -2).
# ----------------------------------------------------------------------------
def _mha_heads(xin, w, b, n_heads, mask=None):
    """xin: (Tb, S, D);  w: (4, D, D) = [Wq, Wk, Wv, Wo] stored (in, out);
    b: (4, D);  mask: (Tb, S, S) with 0 = masked, or None.  Eval mode (no dropout)."""
    D = xin.shape[-1]
    dk = D // n_heads
    scale = 1.0 / math.sqrt(dk)

    q = jnp.einsum('tsd,de->tse', xin, w[0], preferred_element_type=jnp.float32) + b[0]
    k = jnp.einsum('tsd,de->tse', xin, w[1], preferred_element_type=jnp.float32) + b[1]
    v = jnp.einsum('tsd,de->tse', xin, w[2], preferred_element_type=jnp.float32) + b[2]

    acc = None
    for hh in range(n_heads):
        lo, hi = hh * dk, (hh + 1) * dk
        qh, kh, vh = q[..., lo:hi], k[..., lo:hi], v[..., lo:hi]
        s = jnp.einsum('tad,tbd->tab', qh, kh, preferred_element_type=jnp.float32) * scale
        if mask is not None:
            s = jnp.where(mask == 0.0, -1e9, s)
        m = jnp.max(s, axis=-1, keepdims=True)
        p = jnp.exp(s - m)
        p = p / jnp.sum(p, axis=-1, keepdims=True)
        oh = jnp.einsum('tab,tbd->tad', p, vh, preferred_element_type=jnp.float32)
        # accumulate straight into the output projection: concat(o_h) @ Wo == sum_h o_h @ Wo[rows_h]
        part = jnp.einsum('tad,de->tae', oh, w[3][lo:hi, :],
                          preferred_element_type=jnp.float32)
        acc = part if acc is None else acc + part
    return acc + b[3]


# ----------------------------------------------------------------------------
# Fused SummaryDecoder forward kernel (one batch element per grid step).
# ----------------------------------------------------------------------------
def _summary_decoder_kernel(x_ref, mask_ref, wa_ref, ba_ref, w1_ref, b1_ref,
                            w2_ref, b2_ref, wt_ref, bt_ref, wm_ref, bm_ref,
                            out_ref, *, n_heads, static):
    x = x_ref[...]                                   # (T, A, D)
    mask = mask_ref[...]                             # (T, A, A)

    # 1) agent attention over the agent axis, batched over time
    a = _mha_heads(x, wa_ref[...], ba_ref[...], n_heads, mask=mask)      # (T, A, D)

    # 2) torch.max(x, dim=-3)[0]  -> max-pool over time
    pooled = jnp.max(a, axis=0)                      # (A, D)

    # 3) PositionwiseFeedForward (Linear -> ReLU -> Linear), eval mode
    hid = jnp.maximum(
        jnp.dot(pooled, w1_ref[...], preferred_element_type=jnp.float32) + b1_ref[...],
        0.0)                                         # (A, d_ff)
    ffo = jnp.dot(hid, w2_ref[...], preferred_element_type=jnp.float32) + b2_ref[...]   # (A, D)

    if static:
        y = ffo                                      # (A, D)  -> torch keeps [B, 1, A, D]
    else:
        # 4) temporal attention on the pooled tokens (unsqueeze(1) -> attend over dim -2)
        t = _mha_heads(ffo[None], wt_ref[...], bt_ref[...], n_heads)     # (1, A, D)
        # 5) torch.max(x, dim=-2)[0].squeeze(1)
        y = jnp.max(t[0], axis=0, keepdims=True)                          # (1, D)

    # 6) MLP head: Linear + Sigmoid
    logits = jnp.dot(y, wm_ref[...], preferred_element_type=jnp.float32) + bm_ref[...]
    out_ref[...] = (1.0 / (1.0 + jnp.exp(-logits))).reshape(out_ref.shape)


def summary_decoder(x, mask, params, *, n_heads, static=False):
    """Pallas equivalent of SummaryDecoder.forward(x, mask) (inference mode)."""
    B, T, A, D = x.shape
    Fh = params['w1'].shape[-1]
    O = params['wm'].shape[-1]
    assert D % n_heads == 0

    if static:
        out_shape = jax.ShapeDtypeStruct((B, 1, A, O), jnp.float32)
        out_spec = pl.BlockSpec((None, 1, A, O), lambda b: (b, 0, 0, 0))
    else:
        out_shape = jax.ShapeDtypeStruct((B, 1, O), jnp.float32)
        out_spec = pl.BlockSpec((None, 1, O), lambda b: (b, 0, 0))

    in_specs = [
        pl.BlockSpec((None, T, A, D), lambda b: (b, 0, 0, 0)),   # x          (per batch)
        pl.BlockSpec((None, T, A, A), lambda b: (b, 0, 0, 0)),   # mask       (per batch)
        pl.BlockSpec((4, D, D), lambda b: (0, 0, 0)),            # agent attn [Wq,Wk,Wv,Wo]
        pl.BlockSpec((4, D), lambda b: (0, 0)),                  # agent attn biases
        pl.BlockSpec((D, Fh), lambda b: (0, 0)),                 # ff W1
        pl.BlockSpec((1, Fh), lambda b: (0, 0)),                 # ff b1
        pl.BlockSpec((Fh, D), lambda b: (0, 0)),                 # ff W2
        pl.BlockSpec((1, D), lambda b: (0, 0)),                  # ff b2
        pl.BlockSpec((4, D, D), lambda b: (0, 0, 0)),            # temporal attn weights
        pl.BlockSpec((4, D), lambda b: (0, 0)),                  # temporal attn biases
        pl.BlockSpec((D, O), lambda b: (0, 0)),                  # MLP W
        pl.BlockSpec((1, O), lambda b: (0, 0)),                  # MLP b
    ]

    out = pl.pallas_call(
        functools.partial(_summary_decoder_kernel, n_heads=n_heads, static=static),
        out_shape=out_shape,
        grid_spec=pltpu.PrefetchScalarGridSpec(
            num_scalar_prefetch=0,
            grid=(B,),
            in_specs=in_specs,
            out_specs=out_spec,
        ),
        compiler_params=pltpu.CompilerParams(dimension_semantics=("parallel",)),
    )(x, mask, params['wa'], params['ba'], params['w1'], params['b1'],
      params['w2'], params['b2'], params['wt'], params['bt'],
      params['wm'], params['bm'])

    if static:
        return out                    # (B, 1, A, output_dim) — matches torch static path
    return out.reshape(B, O)          # (B, output_dim)       — matches torch default path


# ----------------------------------------------------------------------------
# Pure-JAX reference (independent formulation: head reshape/transpose + concat),
# mirroring the PyTorch MultiHeadedAttention / PositionwiseFeedForward / MLP math.
# ----------------------------------------------------------------------------
def _ref_mha(xin, w, b, n_heads, mask=None):
    *lead, S, D = xin.shape
    dk = D // n_heads
    q = (xin @ w[0] + b[0]).reshape(*lead, S, n_heads, dk)
    k = (xin @ w[1] + b[1]).reshape(*lead, S, n_heads, dk)
    v = (xin @ w[2] + b[2]).reshape(*lead, S, n_heads, dk)
    q, k, v = [jnp.moveaxis(t, -2, -3) for t in (q, k, v)]     # (..., h, S, dk)
    s = (q @ jnp.swapaxes(k, -1, -2)) / math.sqrt(dk)          # (..., h, S, S)
    if mask is not None:
        s = jnp.where(mask[..., None, :, :] == 0.0, -1e9, s)   # same mask for all heads
    p = jax.nn.softmax(s, axis=-1)
    o = p @ v                                                   # (..., h, S, dk)
    o = jnp.moveaxis(o, -3, -2).reshape(*lead, S, D)
    return o @ w[3] + b[3]


def summary_decoder_ref(x, mask, params, *, n_heads, static=False):
    a = _ref_mha(x, params['wa'], params['ba'], n_heads, mask=mask)      # (B, T, A, D)
    pooled = jnp.max(a, axis=-3)                                          # (B, A, D)
    hid = jax.nn.relu(pooled @ params['w1'] + params['b1'])
    ffo = hid @ params['w2'] + params['b2']                               # (B, A, D)
    y = ffo[:, None]                                                      # (B, 1, A, D)
    if not static:
        y = _ref_mha(y, params['wt'], params['bt'], n_heads)              # (B, 1, A, D)
        y = jnp.max(y, axis=-2)                                           # (B, 1, D)
        y = jnp.squeeze(y, axis=1)                                        # (B, D)
    return jax.nn.sigmoid(y @ params['wm'] + params['bm'])


if __name__ == "__main__":
    key = jax.random.PRNGKey(0)
    B, T, A, D = 2, 8, 4, 32          # batch, time steps, agents, emb_dim
    H, FF, O = 4, 64, 8               # heads, ff hidden, output_dim

    keys = jax.random.split(key, 12)

    def rnd(k, shape, scale=0.1):
        return scale * jax.random.normal(k, shape, dtype=jnp.float32)

    params = dict(
        wa=rnd(keys[0], (4, D, D)), ba=rnd(keys[1], (4, D)),
        w1=rnd(keys[2], (D, FF)),   b1=rnd(keys[3], (1, FF)),
        w2=rnd(keys[4], (FF, D)),   b2=rnd(keys[5], (1, D)),
        wt=rnd(keys[6], (4, D, D)), bt=rnd(keys[7], (4, D)),
        wm=rnd(keys[8], (D, O)),    bm=rnd(keys[9], (1, O)),
    )

    x = jax.random.normal(keys[10], (B, T, A, D), dtype=jnp.float32)
    avail = jax.random.uniform(keys[11], (B, T, A)) > 0.3
    avail = avail.at[:, :, 0].set(True)            # at least one visible agent per (b, t)
    mask = jnp.broadcast_to(avail[:, :, None, :], (B, T, A, A)).astype(jnp.float32)

    # default (non-static) path
    out = jax.block_until_ready(summary_decoder(x, mask, params, n_heads=H, static=False))
    with jax.default_matmul_precision("float32"):
        ref = summary_decoder_ref(x, mask, params, n_heads=H, static=False)
    assert out.shape == (B, O), out.shape
    assert jnp.allclose(out, ref, atol=1e-3, rtol=1e-3), float(jnp.max(jnp.abs(out - ref)))

    # static path (skips the temporal attention / second max-pool)
    out_s = jax.block_until_ready(summary_decoder(x, mask, params, n_heads=H, static=True))
    with jax.default_matmul_precision("float32"):
        ref_s = summary_decoder_ref(x, mask, params, n_heads=H, static=True)
    assert out_s.shape == (B, 1, A, O), out_s.shape
    assert jnp.allclose(out_s, ref_s, atol=1e-3, rtol=1e-3), float(jnp.max(jnp.abs(out_s - ref_s)))

    # TODO(synk): training-mode dropout inside the attention / feed-forward submodules
    #             would use pltpu.prng_seed + pltpu.stateful_bernoulli; eval mode here.
    print("KERNEL_OK")
</pallas_src>

<mosaic_0001>
module attributes {stable_mosaic.version = 11 : i64} {
  func.func @_summary_decoder_kernel(%arg0: i32, %arg1: memref<1x8x4x32xf32, #tpu.memory_space<vmem>>, %arg2: memref<1x8x4x4xf32, #tpu.memory_space<vmem>>, %arg3: memref<4x32x32xf32, #tpu.memory_space<vmem>>, %arg4: memref<4x32xf32, #tpu.memory_space<vmem>>, %arg5: memref<32x64xf32, #tpu.memory_space<vmem>>, %arg6: memref<1x64xf32, #tpu.memory_space<vmem>>, %arg7: memref<64x32xf32, #tpu.memory_space<vmem>>, %arg8: memref<1x32xf32, #tpu.memory_space<vmem>>, %arg9: memref<4x32x32xf32, #tpu.memory_space<vmem>>, %arg10: memref<4x32xf32, #tpu.memory_space<vmem>>, %arg11: memref<32x8xf32, #tpu.memory_space<vmem>>, %arg12: memref<1x8xf32, #tpu.memory_space<vmem>>, %arg13: memref<1x1x8xf32, #tpu.memory_space<vmem>>) attributes {dimension_semantics = [#tpu.dimension_semantics<parallel>], iteration_bounds = array<i64: 2>, scalar_prefetch = 0 : i64, scratch_operands = 0 : i64, tpu.core_type = #tpu.core_type<tc>, window_params = [{transform_indices = @transform_0, window_bounds = array<i64: 1, 8, 4, 32>}, {transform_indices = @transform_1, window_bounds = array<i64: 1, 8, 4, 4>}, {pipeline_mode = #tpu.pipeline_mode<synchronous>, transform_indices = @transform_2, window_bounds = array<i64: 4, 32, 32>}, {pipeline_mode = #tpu.pipeline_mode<synchronous>, transform_indices = @transform_3, window_bounds = array<i64: 4, 32>}, {pipeline_mode = #tpu.pipeline_mode<synchronous>, transform_indices = @transform_4, window_bounds = array<i64: 32, 64>}, {pipeline_mode = #tpu.pipeline_mode<synchronous>, transform_indices = @transform_5, window_bounds = array<i64: 1, 64>}, {pipeline_mode = #tpu.pipeline_mode<synchronous>, transform_indices = @transform_6, window_bounds = array<i64: 64, 32>}, {pipeline_mode = #tpu.pipeline_mode<synchronous>, transform_indices = @transform_7, window_bounds = array<i64: 1, 32>}, {pipeline_mode = #tpu.pipeline_mode<synchronous>, transform_indices = @transform_8, window_bounds = array<i64: 4, 32, 32>}, {pipeline_mode = #tpu.pipeline_mode<synchronous>, transform_indices = @transform_9, window_bounds = array<i64: 4, 32>}, {pipeline_mode = #tpu.pipeline_mode<synchronous>, transform_indices = @transform_10, window_bounds = array<i64: 32, 8>}, {pipeline_mode = #tpu.pipeline_mode<synchronous>, transform_indices = @transform_11, window_bounds = array<i64: 1, 8>}, {transform_indices = @transform_12, window_bounds = array<i64: 1, 1, 8>}]} {
    %c0 = arith.constant 0 : index
    %c0_0 = arith.constant 0 : index
    %c0_1 = arith.constant 0 : index
    %c0_2 = arith.constant 0 : index
    %0 = vector.load %arg1[%c0, %c0_0, %c0_1, %c0_2] : memref<1x8x4x32xf32, #tpu.memory_space<vmem>>, vector<1x8x4x32xf32>
    %1 = vector.shape_cast %0 : vector<1x8x4x32xf32> to vector<8x4x32xf32>
    %c0_3 = arith.constant 0 : index
    %c0_4 = arith.constant 0 : index
    %c0_5 = arith.constant 0 : index
    %c0_6 = arith.constant 0 : index
    %2 = vector.load %arg2[%c0_3, %c0_4, %c0_5, %c0_6] : memref<1x8x4x4xf32, #tpu.memory_space<vmem>>, vector<1x8x4x4xf32>
    %3 = vector.shape_cast %2 : vector<1x8x4x4xf32> to vector<8x4x4xf32>
    %c0_7 = arith.constant 0 : index
    %c0_8 = arith.constant 0 : index
    %c0_9 = arith.constant 0 : index
    %4 = vector.load %arg3[%c0_7, %c0_8, %c0_9] : memref<4x32x32xf32, #tpu.memory_space<vmem>>, vector<4x32x32xf32>
    %c0_10 = arith.constant 0 : index
    %c0_11 = arith.constant 0 : index
    %5 = vector.load %arg4[%c0_10, %c0_11] : memref<4x32xf32, #tpu.memory_space<vmem>>, vector<4x32xf32>
    %6 = vector.extract_strided_slice %4 {offsets = [0, 0, 0], sizes = [1, 32, 32], strides = [1, 1, 1]} : vector<4x32x32xf32> to vector<1x32x32xf32>
    %7 = vector.shape_cast %6 : vector<1x32x32xf32> to vector<32x32xf32>
    "tpu.trace_start"() <{level = 10 : i32, message = "tsd,de->tse"}> : () -> ()
    %cst = arith.constant dense<0.000000e+00> : vector<8x4x32xf32>
    %8 = tpu.matmul %1, %7, %cst {dimension_numbers = #tpu.dot_dimension_numbers<[2], [0], [0, 1], [1], [0, 0, 0, 1, 1, 1], [], []>} : vector<8x4x32xf32>, vector<32x32xf32>, vector<8x4x32xf32> -> vector<8x4x32xf32>
    "tpu.trace_stop"() : () -> ()
    %9 = vector.extract_strided_slice %5 {offsets = [0, 0], sizes = [1, 32], strides = [1, 1]} : vector<4x32xf32> to vector<1x32xf32>
    %10 = vector.shape_cast %9 : vector<1x32xf32> to vector<32xf32>
    %11 = vector.shape_cast %10 : vector<32xf32> to vector<1x1x32xf32>
    %12 = vector.broadcast %11 : vector<1x1x32xf32> to vector<8x4x32xf32>
    %13 = arith.addf %8, %12 : vector<8x4x32xf32>
    %14 = vector.extract_strided_slice %4 {offsets = [1, 0, 0], sizes = [1, 32, 32], strides = [1, 1, 1]} : vector<4x32x32xf32> to vector<1x32x32xf32>
    %15 = vector.shape_cast %14 : vector<1x32x32xf32> to vector<32x32xf32>
    "tpu.trace_start"() <{level = 10 : i32, message = "tsd,de->tse"}> : () -> ()
    %cst_12 = arith.constant dense<0.000000e+00> : vector<8x4x32xf32>
    %16 = tpu.matmul %1, %15, %cst_12 {dimension_numbers = #tpu.dot_dimension_numbers<[2], [0], [0, 1], [1], [0, 0, 0, 1, 1, 1], [], []>} : vector<8x4x32xf32>, vector<32x32xf32>, vector<8x4x32xf32> -> vector<8x4x32xf32>
    "tpu.trace_stop"() : () -> ()
    %17 = vector.extract_strided_slice %5 {offsets = [1, 0], sizes = [1, 32], strides = [1, 1]} : vector<4x32xf32> to vector<1x32xf32>
    %18 = vector.shape_cast %17 : vector<1x32xf32> to vector<32xf32>
    %19 = vector.shape_cast %18 : vector<32xf32> to vector<1x1x32xf32>
    %20 = vector.broadcast %19 : vector<1x1x32xf32> to vector<8x4x32xf32>
    %21 = arith.addf %16, %20 : vector<8x4x32xf32>
    %22 = vector.extract_strided_slice %4 {offsets = [2, 0, 0], sizes = [1, 32, 32], strides = [1, 1, 1]} : vector<4x32x32xf32> to vector<1x32x32xf32>
    %23 = vector.shape_cast %22 : vector<1x32x32xf32> to vector<32x32xf32>
    "tpu.trace_start"() <{level = 10 : i32, message = "tsd,de->tse"}> : () -> ()
    %cst_13 = arith.constant dense<0.000000e+00> : vector<8x4x32xf32>
    %24 = tpu.matmul %1, %23, %cst_13 {dimension_numbers = #tpu.dot_dimension_numbers<[2], [0], [0, 1], [1], [0, 0, 0, 1, 1, 1], [], []>} : vector<8x4x32xf32>, vector<32x32xf32>, vector<8x4x32xf32> -> vector<8x4x32xf32>
    "tpu.trace_stop"() : () -> ()
    %25 = vector.extract_strided_slice %5 {offsets = [2, 0], sizes = [1, 32], strides = [1, 1]} : vector<4x32xf32> to vector<1x32xf32>
    %26 = vector.shape_cast %25 : vector<1x32xf32> to vector<32xf32>
    %27 = vector.shape_cast %26 : vector<32xf32> to vector<1x1x32xf32>
    %28 = vector.broadcast %27 : vector<1x1x32xf32> to vector<8x4x32xf32>
    %29 = arith.addf %24, %28 : vector<8x4x32xf32>
    %30 = vector.extract_strided_slice %13 {offsets = [0, 0, 0], sizes = [8, 4, 8], strides = [1, 1, 1]} : vector<8x4x32xf32> to vector<8x4x8xf32>
    %31 = vector.extract_strided_slice %21 {offsets = [0, 0, 0], sizes = [8, 4, 8], strides = [1, 1, 1]} : vector<8x4x32xf32> to vector<8x4x8xf32>
    %32 = vector.extract_strided_slice %29 {offsets = [0, 0, 0], sizes = [8, 4, 8], strides = [1, 1, 1]} : vector<8x4x32xf32> to vector<8x4x8xf32>
    "tpu.trace_start"() <{level = 10 : i32, message = "tad,tbd->tab"}> : () -> ()
    %cst_14 = arith.constant dense<0.000000e+00> : vector<8x4x4xf32>
    %33 = tpu.matmul %30, %31, %cst_14 {dimension_numbers = #tpu.dot_dimension_numbers<[2], [2], [1], [1], [0, 0, 0, 1, 1, 1], [0], [0]>} : vector<8x4x8xf32>, vector<8x4x8xf32>, vector<8x4x4xf32> -> vector<8x4x4xf32>
    "tpu.trace_stop"() : () -> ()
    %cst_15 = arith.constant 0.353553385 : f32
    %34 = vector.broadcast %cst_15 : f32 to vector<8x4x4xf32>
    %35 = arith.mulf %33, %34 : vector<8x4x4xf32>
    %cst_16 = arith.constant 0.000000e+00 : f32
    %36 = vector.broadcast %cst_16 : f32 to vector<8x4x4xf32>
    %37 = arith.cmpf oeq, %3, %36 : vector<8x4x4xf32>
    %cst_17 = arith.constant -1.000000e+09 : f32
    %38 = vector.broadcast %cst_17 : f32 to vector<8x4x4xf32>
    %39 = arith.select %37, %38, %35 : vector<8x4x4xi1>, vector<8x4x4xf32>
    %cst_18 = arith.constant dense<0xFF800000> : vector<8x4xf32>
    %40 = vector.multi_reduction <maximumf>, %39, %cst_18 [2] : vector<8x4x4xf32> to vector<8x4xf32>
    %41 = vector.shape_cast %40 : vector<8x4xf32> to vector<8x4x1xf32>
    %42 = vector.broadcast %41 : vector<8x4x1xf32> to vector<8x4x4xf32>
    %43 = arith.subf %39, %42 : vector<8x4x4xf32>
    %44 = math.exp %43 : vector<8x4x4xf32>
    %cst_19 = arith.constant dense<0.000000e+00> : vector<8x4xf32>
    %45 = vector.multi_reduction <add>, %44, %cst_19 [2] : vector<8x4x4xf32> to vector<8x4xf32>
    %46 = vector.shape_cast %45 : vector<8x4xf32> to vector<8x4x1xf32>
    %47 = vector.broadcast %46 : vector<8x4x1xf32> to vector<8x4x4xf32>
    %48 = arith.divf %44, %47 : vector<8x4x4xf32>
    "tpu.trace_start"() <{level = 10 : i32, message = "tab,tbd->tad"}> : () -> ()
    %cst_20 = arith.constant dense<0.000000e+00> : vector<8x4x8xf32>
    %49 = tpu.matmul %48, %32, %cst_20 {dimension_numbers = #tpu.dot_dimension_numbers<[2], [1], [1], [2], [0, 0, 0, 1, 1, 2], [0], [0]>} : vector<8x4x4xf32>, vector<8x4x8xf32>, vector<8x4x8xf32> -> vector<8x4x8xf32>
    "tpu.trace_stop"() : () -> ()
    %50 = vector.extract_strided_slice %4 {offsets = [3, 0, 0], sizes = [1, 32, 32], strides = [1, 1, 1]} : vector<4x32x32xf32> to vector<1x32x32xf32>
    %51 = vector.shape_cast %50 : vector<1x32x32xf32> to vector<32x32xf32>
    %52 = vector.extract_strided_slice %51 {offsets = [0, 0], sizes = [8, 32], strides = [1, 1]} : vector<32x32xf32> to vector<8x32xf32>
    "tpu.trace_start"() <{level = 10 : i32, message = "tad,de->tae"}> : () -> ()
    %cst_21 = arith.constant dense<0.000000e+00> : vector<8x4x32xf32>
    %53 = tpu.matmul %49, %52, %cst_21 {dimension_numbers = #tpu.dot_dimension_numbers<[2], [0], [0, 1], [1], [0, 0, 0, 1, 1, 1], [], []>} : vector<8x4x8xf32>, vector<8x32xf32>, vector<8x4x32xf32> -> vector<8x4x32xf32>
    "tpu.trace_stop"() : () -> ()
    %54 = vector.extract_strided_slice %13 {offsets = [0, 0, 8], sizes = [8, 4, 8], strides = [1, 1, 1]} : vector<8x4x32xf32> to vector<8x4x8xf32>
    %55 = vector.extract_strided_slice %21 {offsets = [0, 0, 8], sizes = [8, 4, 8], strides = [1, 1, 1]} : vector<8x4x32xf32> to vector<8x4x8xf32>
    %56 = vector.extract_strided_slice %29 {offsets = [0, 0, 8], sizes = [8, 4, 8], strides = [1, 1, 1]} : vector<8x4x32xf32> to vector<8x4x8xf32>
    "tpu.trace_start"() <{level = 10 : i32, message = "tad,tbd->tab"}> : () -> ()
    %cst_22 = arith.constant dense<0.000000e+00> : vector<8x4x4xf32>
    %57 = tpu.matmul %54, %55, %cst_22 {dimension_numbers = #tpu.dot_dimension_numbers<[2], [2], [1], [1], [0, 0, 0, 1, 1, 1], [0], [0]>} : vector<8x4x8xf32>, vector<8x4x8xf32>, vector<8x4x4xf32> -> vector<8x4x4xf32>
    "tpu.trace_stop"() : () -> ()
    %cst_23 = arith.constant 0.353553385 : f32
    %58 = vector.broadcast %cst_23 : f32 to vector<8x4x4xf32>
    %59 = arith.mulf %57, %58 : vector<8x4x4xf32>
    %cst_24 = arith.constant 0.000000e+00 : f32
    %60 = vector.broadcast %cst_24 : f32 to vector<8x4x4xf32>
    %61 = arith.cmpf oeq, %3, %60 : vector<8x4x4xf32>
    %cst_25 = arith.constant -1.000000e+09 : f32
    %62 = vector.broadcast %cst_25 : f32 to vector<8x4x4xf32>
    %63 = arith.select %61, %62, %59 : vector<8x4x4xi1>, vector<8x4x4xf32>
    %cst_26 = arith.constant dense<0xFF800000> : vector<8x4xf32>
    %64 = vector.multi_reduction <maximumf>, %63, %cst_26 [2] : vector<8x4x4xf32> to vector<8x4xf32>
    %65 = vector.shape_cast %64 : vector<8x4xf32> to vector<8x4x1xf32>
    %66 = vector.broadcast %65 : vector<8x4x1xf32> to vector<8x4x4xf32>
    %67 = arith.subf %63, %66 : vector<8x4x4xf32>
    %68 = math.exp %67 : vector<8x4x4xf32>
    %cst_27 = arith.constant dense<0.000000e+00> : vector<8x4xf32>
    %69 = vector.multi_reduction <add>, %68, %cst_27 [2] : vector<8x4x4xf32> to vector<8x4xf32>
    %70 = vector.shape_cast %69 : vector<8x4xf32> to vector<8x4x1xf32>
    %71 = vector.broadcast %70 : vector<8x4x1xf32> to vector<8x4x4xf32>
    %72 = arith.divf %68, %71 : vector<8x4x4xf32>
    "tpu.trace_start"() <{level = 10 : i32, message = "tab,tbd->tad"}> : () -> ()
    %cst_28 = arith.constant dense<0.000000e+00> : vector<8x4x8xf32>
    %73 = tpu.matmul %72, %56, %cst_28 {dimension_numbers = #tpu.dot_dimension_numbers<[2], [1], [1], [2], [0, 0, 0, 1, 1, 2], [0], [0]>} : vector<8x4x4xf32>, vector<8x4x8xf32>, vector<8x4x8xf32> -> vector<8x4x8xf32>
    "tpu.trace_stop"() : () -> ()
    %74 = vector.extract_strided_slice %4 {offsets = [3, 0, 0], sizes = [1, 32, 32], strides = [1, 1, 1]} : vector<4x32x32xf32> to vector<1x32x32xf32>
    %75 = vector.shape_cast %74 : vector<1x32x32xf32> to vector<32x32xf32>
    %76 = vector.extract_strided_slice %75 {offsets = [8, 0], sizes = [8, 32], strides = [1, 1]} : vector<32x32xf32> to vector<8x32xf32>
    "tpu.trace_start"() <{level = 10 : i32, message = "tad,de->tae"}> : () -> ()
    %cst_29 = arith.constant dense<0.000000e+00> : vector<8x4x32xf32>
    %77 = tpu.matmul %73, %76, %cst_29 {dimension_numbers = #tpu.dot_dimension_numbers<[2], [0], [0, 1], [1], [0, 0, 0, 1, 1, 1], [], []>} : vector<8x4x8xf32>, vector<8x32xf32>, vector<8x4x32xf32> -> vector<8x4x32xf32>
    "tpu.trace_stop"() : () -> ()
    %78 = arith.addf %53, %77 : vector<8x4x32xf32>
    %79 = vector.extract_strided_slice %13 {offsets = [0, 0, 16], sizes = [8, 4, 8], strides = [1, 1, 1]} : vector<8x4x32xf32> to vector<8x4x8xf32>
    %80 = vector.extract_strided_slice %21 {offsets = [0, 0, 16], sizes = [8, 4, 8], strides = [1, 1, 1]} : vector<8x4x32xf32> to vector<8x4x8xf32>
    %81 = vector.extract_strided_slice %29 {offsets = [0, 0, 16], sizes = [8, 4, 8], strides = [1, 1, 1]} : vector<8x4x32xf32> to vector<8x4x8xf32>
    "tpu.trace_start"() <{level = 10 : i32, message = "tad,tbd->tab"}> : () -> ()
    %cst_30 = arith.constant dense<0.000000e+00> : vector<8x4x4xf32>
    %82 = tpu.matmul %79, %80, %cst_30 {dimension_numbers = #tpu.dot_dimension_numbers<[2], [2], [1], [1], [0, 0, 0, 1, 1, 1], [0], [0]>} : vector<8x4x8xf32>, vector<8x4x8xf32>, vector<8x4x4xf32> -> vector<8x4x4xf32>
    "tpu.trace_stop"() : () -> ()
    %cst_31 = arith.constant 0.353553385 : f32
    %83 = vector.broadcast %cst_31 : f32 to vector<8x4x4xf32>
    %84 = arith.mulf %82, %83 : vector<8x4x4xf32>
    %cst_32 = arith.constant 0.000000e+00 : f32
    %85 = vector.broadcast %cst_32 : f32 to vector<8x4x4xf32>
    %86 = arith.cmpf oeq, %3, %85 : vector<8x4x4xf32>
    %cst_33 = arith.constant -1.000000e+09 : f32
    %87 = vector.broadcast %cst_33 : f32 to vector<8x4x4xf32>
    %88 = arith.select %86, %87, %84 : vector<8x4x4xi1>, vector<8x4x4xf32>
    %cst_34 = arith.constant dense<0xFF800000> : vector<8x4xf32>
    %89 = vector.multi_reduction <maximumf>, %88, %cst_34 [2] : vector<8x4x4xf32> to vector<8x4xf32>
    %90 = vector.shape_cast %89 : vector<8x4xf32> to vector<8x4x1xf32>
    %91 = vector.broadcast %90 : vector<8x4x1xf32> to vector<8x4x4xf32>
    %92 = arith.subf %88, %91 : vector<8x4x4xf32>
    %93 = math.exp %92 : vector<8x4x4xf32>
    %cst_35 = arith.constant dense<0.000000e+00> : vector<8x4xf32>
    %94 = vector.multi_reduction <add>, %93, %cst_35 [2] : vector<8x4x4xf32> to vector<8x4xf32>
    %95 = vector.shape_cast %94 : vector<8x4xf32> to vector<8x4x1xf32>
    %96 = vector.broadcast %95 : vector<8x4x1xf32> to vector<8x4x4xf32>
    %97 = arith.divf %93, %96 : vector<8x4x4xf32>
    "tpu.trace_start"() <{level = 10 : i32, message = "tab,tbd->tad"}> : () -> ()
    %cst_36 = arith.constant dense<0.000000e+00> : vector<8x4x8xf32>
    %98 = tpu.matmul %97, %81, %cst_36 {dimension_numbers = #tpu.dot_dimension_numbers<[2], [1], [1], [2], [0, 0, 0, 1, 1, 2], [0], [0]>} : vector<8x4x4xf32>, vector<8x4x8xf32>, vector<8x4x8xf32> -> vector<8x4x8xf32>
    "tpu.trace_stop"() : () -> ()
    %99 = vector.extract_strided_slice %4 {offsets = [3, 0, 0], sizes = [1, 32, 32], strides = [1, 1, 1]} : vector<4x32x32xf32> to vector<1x32x32xf32>
    %100 = vector.shape_cast %99 : vector<1x32x32xf32> to vector<32x32xf32>
    %101 = vector.extract_strided_slice %100 {offsets = [16, 0], sizes = [8, 32], strides = [1, 1]} : vector<32x32xf32> to vector<8x32xf32>
    "tpu.trace_start"() <{level = 10 : i32, message = "tad,de->tae"}> : () -> ()
    %cst_37 = arith.constant dense<0.000000e+00> : vector<8x4x32xf32>
    %102 = tpu.matmul %98, %101, %cst_37 {dimension_numbers = #tpu.dot_dimension_numbers<[2], [0], [0, 1], [1], [0, 0, 0, 1, 1, 1], [], []>} : vector<8x4x8xf32>, vector<8x32xf32>, vector<8x4x32xf32> -> vector<8x4x32xf32>
    "tpu.trace_stop"() : () -> ()
    %103 = arith.addf %78, %102 : vector<8x4x32xf32>
    %104 = vector.extract_strided_slice %13 {offsets = [0, 0, 24], sizes = [8, 4, 8], strides = [1, 1, 1]} : vector<8x4x32xf32> to vector<8x4x8xf32>
    %105 = vector.extract_strided_slice %21 {offsets = [0, 0, 24], sizes = [8, 4, 8], strides = [1, 1, 1]} : vector<8x4x32xf32> to vector<8x4x8xf32>
    %106 = vector.extract_strided_slice %29 {offsets = [0, 0, 24], sizes = [8, 4, 8], strides = [1, 1, 1]} : vector<8x4x32xf32> to vector<8x4x8xf32>
    "tpu.trace_start"() <{level = 10 : i32, message = "tad,tbd->tab"}> : () -> ()
    %cst_38 = arith.constant dense<0.000000e+00> : vector<8x4x4xf32>
    %107 = tpu.matmul %104, %105, %cst_38 {dimension_numbers = #tpu.dot_dimension_numbers<[2], [2], [1], [1], [0, 0, 0, 1, 1, 1], [0], [0]>} : vector<8x4x8xf32>, vector<8x4x8xf32>, vector<8x4x4xf32> -> vector<8x4x4xf32>
    "tpu.trace_stop"() : () -> ()
    %cst_39 = arith.constant 0.353553385 : f32
    %108 = vector.broadcast %cst_39 : f32 to vector<8x4x4xf32>
    %109 = arith.mulf %107, %108 : vector<8x4x4xf32>
    %cst_40 = arith.constant 0.000000e+00 : f32
    %110 = vector.broadcast %cst_40 : f32 to vector<8x4x4xf32>
    %111 = arith.cmpf oeq, %3, %110 : vector<8x4x4xf32>
    %cst_41 = arith.constant -1.000000e+09 : f32
    %112 = vector.broadcast %cst_41 : f32 to vector<8x4x4xf32>
    %113 = arith.select %111, %112, %109 : vector<8x4x4xi1>, vector<8x4x4xf32>
    %cst_42 = arith.constant dense<0xFF800000> : vector<8x4xf32>
    %114 = vector.multi_reduction <maximumf>, %113, %cst_42 [2] : vector<8x4x4xf32> to vector<8x4xf32>
    %115 = vector.shape_cast %114 : vector<8x4xf32> to vector<8x4x1xf32>
    %116 = vector.broadcast %115 : vector<8x4x1xf32> to vector<8x4x4xf32>
    %117 = arith.subf %113, %116 : vector<8x4x4xf32>
    %118 = math.exp %117 : vector<8x4x4xf32>
    %cst_43 = arith.constant dense<0.000000e+00> : vector<8x4xf32>
    %119 = vector.multi_reduction <add>, %118, %cst_43 [2] : vector<8x4x4xf32> to vector<8x4xf32>
    %120 = vector.shape_cast %119 : vector<8x4xf32> to vector<8x4x1xf32>
    %121 = vector.broadcast %120 : vector<8x4x1xf32> to vector<8x4x4xf32>
    %122 = arith.divf %118, %121 : vector<8x4x4xf32>
    "tpu.trace_start"() <{level = 10 : i32, message = "tab,tbd->tad"}> : () -> ()
    %cst_44 = arith.constant dense<0.000000e+00> : vector<8x4x8xf32>
    %123 = tpu.matmul %122, %106, %cst_44 {dimension_numbers = #tpu.dot_dimension_numbers<[2], [1], [1], [2], [0, 0, 0, 1, 1, 2], [0], [0]>} : vector<8x4x4xf32>, vector<8x4x8xf32>, vector<8x4x8xf32> -> vector<8x4x8xf32>
    "tpu.trace_stop"() : () -> ()
    %124 = vector.extract_strided_slice %4 {offsets = [3, 0, 0], sizes = [1, 32, 32], strides = [1, 1, 1]} : vector<4x32x32xf32> to vector<1x32x32xf32>
    %125 = vector.shape_cast %124 : vector<1x32x32xf32> to vector<32x32xf32>
    %126 = vector.extract_strided_slice %125 {offsets = [24, 0], sizes = [8, 32], strides = [1, 1]} : vector<32x32xf32> to vector<8x32xf32>
    "tpu.trace_start"() <{level = 10 : i32, message = "tad,de->tae"}> : () -> ()
    %cst_45 = arith.constant dense<0.000000e+00> : vector<8x4x32xf32>
    %127 = tpu.matmul %123, %126, %cst_45 {dimension_numbers = #tpu.dot_dimension_numbers<[2], [0], [0, 1], [1], [0, 0, 0, 1, 1, 1], [], []>} : vector<8x4x8xf32>, vector<8x32xf32>, vector<8x4x32xf32> -> vector<8x4x32xf32>
    "tpu.trace_stop"() : () -> ()
    %128 = arith.addf %103, %127 : vector<8x4x32xf32>
    %129 = vector.extract_strided_slice %5 {offsets = [3, 0], sizes = [1, 32], strides = [1, 1]} : vector<4x32xf32> to vector<1x32xf32>
    %130 = vector.shape_cast %129 : vector<1x32xf32> to vector<32xf32>
    %131 = vector.shape_cast %130 : vector<32xf32> to vector<1x1x32xf32>
    %132 = vector.broadcast %131 : vector<1x1x32xf32> to vector<8x4x32xf32>
    %133 = arith.addf %128, %132 : vector<8x4x32xf32>
    %cst_46 = arith.constant dense<0xFF800000> : vector<4x32xf32>
    %134 = vector.multi_reduction <maximumf>, %133, %cst_46 [0] : vector<8x4x32xf32> to vector<4x32xf32>
    %c0_47 = arith.constant 0 : index
    %c0_48 = arith.constant 0 : index
    %135 = vector.load %arg5[%c0_47, %c0_48] : memref<32x64xf32, #tpu.memory_space<vmem>>, vector<32x64xf32>
    %cst_49 = arith.constant dense<0.000000e+00> : vector<4x64xf32>
    %136 = tpu.matmul %134, %135, %cst_49 {dimension_numbers = #tpu.dot_dimension_numbers<[1], [0], [0], [1], [0, 0, 1, 1], [], []>} : vector<4x32xf32>, vector<32x64xf32>, vector<4x64xf32> -> vector<4x64xf32>
    %c0_50 = arith.constant 0 : index
    %c0_51 = arith.constant 0 : index
    %137 = vector.load %arg6[%c0_50, %c0_51] : memref<1x64xf32, #tpu.memory_space<vmem>>, vector<1x64xf32>
    %138 = vector.broadcast %137 : vector<1x64xf32> to vector<4x64xf32>
    %139 = arith.addf %136, %138 : vector<4x64xf32>
    %cst_52 = arith.constant 0.000000e+00 : f32
    %140 = vector.broadcast %cst_52 : f32 to vector<4x64xf32>
    %141 = arith.maximumf %139, %140 : vector<4x64xf32>
    %c0_53 = arith.constant 0 : index
    %c0_54 = arith.constant 0 : index
    %142 = vector.load %arg7[%c0_53, %c0_54] : memref<64x32xf32, #tpu.memory_space<vmem>>, vector<64x32xf32>
    %cst_55 = arith.constant dense<0.000000e+00> : vector<4x32xf32>
    %143 = tpu.matmul %141, %142, %cst_55 {dimension_numbers = #tpu.dot_dimension_numbers<[1], [0], [0], [1], [0, 0, 1, 1], [], []>} : vector<4x64xf32>, vector<64x32xf32>, vector<4x32xf32> -> vector<4x32xf32>
    %c0_56 = arith.constant 0 : index
    %c0_57 = arith.constant 0 : index
    %144 = vector.load %arg8[%c0_56, %c0_57] : memref<1x32xf32, #tpu.memory_space<vmem>>, vector<1x32xf32>
    %145 = vector.broadcast %144 : vector<1x32xf32> to vector<4x32xf32>
    %146 = arith.addf %143, %145 : vector<4x32xf32>
    %147 = vector.shape_cast %146 : vector<4x32xf32> to vector<1x4x32xf32>
    %c0_58 = arith.constant 0 : index
    %c0_59 = arith.constant 0 : index
    %c0_60 = arith.constant 0 : index
    %148 = vector.load %arg9[%c0_58, %c0_59, %c0_60] : memref<4x32x32xf32, #tpu.memory_space<vmem>>, vector<4x32x32xf32>
    %c0_61 = arith.constant 0 : index
    %c0_62 = arith.constant 0 : index
    %149 = vector.load %arg10[%c0_61, %c0_62] : memref<4x32xf32, #tpu.memory_space<vmem>>, vector<4x32xf32>
    %150 = vector.extract_strided_slice %148 {offsets = [0, 0, 0], sizes = [1, 32, 32], strides = [1, 1, 1]} : vector<4x32x32xf32> to vector<1x32x32xf32>
    %151 = vector.shape_cast %150 : vector<1x32x32xf32> to vector<32x32xf32>
    "tpu.trace_start"() <{level = 10 : i32, message = "tsd,de->tse"}> : () -> ()
    %cst_63 = arith.constant dense<0.000000e+00> : vector<1x4x32xf32>
    %152 = tpu.matmul %147, %151, %cst_63 {dimension_numbers = #tpu.dot_dimension_numbers<[2], [0], [0, 1], [1], [0, 0, 0, 1, 1, 1], [], []>} : vector<1x4x32xf32>, vector<32x32xf32>, vector<1x4x32xf32> -> vector<1x4x32xf32>
    "tpu.trace_stop"() : () -> ()
    %153 = vector.extract_strided_slice %149 {offsets = [0, 0], sizes = [1, 32], strides = [1, 1]} : vector<4x32xf32> to vector<1x32xf32>
    %154 = vector.shape_cast %153 : vector<1x32xf32> to vector<32xf32>
    %155 = vector.shape_cast %154 : vector<32xf32> to vector<1x1x32xf32>
    %156 = vector.broadcast %155 : vector<1x1x32xf32> to vector<1x4x32xf32>
    %157 = arith.addf %152, %156 : vector<1x4x32xf32>
    %158 = vector.extract_strided_slice %148 {offsets = [1, 0, 0], sizes = [1, 32, 32], strides = [1, 1, 1]} : vector<4x32x32xf32> to vector<1x32x32xf32>
    %159 = vector.shape_cast %158 : vector<1x32x32xf32> to vector<32x32xf32>
    "tpu.trace_start"() <{level = 10 : i32, message = "tsd,de->tse"}> : () -> ()
    %cst_64 = arith.constant dense<0.000000e+00> : vector<1x4x32xf32>
    %160 = tpu.matmul %147, %159, %cst_64 {dimension_numbers = #tpu.dot_dimension_numbers<[2], [0], [0, 1], [1], [0, 0, 0, 1, 1, 1], [], []>} : vector<1x4x32xf32>, vector<32x32xf32>, vector<1x4x32xf32> -> vector<1x4x32xf32>
    "tpu.trace_stop"() : () -> ()
    %161 = vector.extract_strided_slice %149 {offsets = [1, 0], sizes = [1, 32], strides = [1, 1]} : vector<4x32xf32> to vector<1x32xf32>
    %162 = vector.shape_cast %161 : vector<1x32xf32> to vector<32xf32>
    %163 = vector.shape_cast %162 : vector<32xf32> to vector<1x1x32xf32>
    %164 = vector.broadcast %163 : vector<1x1x32xf32> to vector<1x4x32xf32>
    %165 = arith.addf %160, %164 : vector<1x4x32xf32>
    %166 = vector.extract_strided_slice %148 {offsets = [2, 0, 0], sizes = [1, 32, 32], strides = [1, 1, 1]} : vector<4x32x32xf32> to vector<1x32x32xf32>
    %167 = vector.shape_cast %166 : vector<1x32x32xf32> to vector<32x32xf32>
    "tpu.trace_start"() <{level = 10 : i32, message = "tsd,de->tse"}> : () -> ()
    %cst_65 = arith.constant dense<0.000000e+00> : vector<1x4x32xf32>
    %168 = tpu.matmul %147, %167, %cst_65 {dimension_numbers = #tpu.dot_dimension_numbers<[2], [0], [0, 1], [1], [0, 0, 0, 1, 1, 1], [], []>} : vector<1x4x32xf32>, vector<32x32xf32>, vector<1x4x32xf32> -> vector<1x4x32xf32>
    "tpu.trace_stop"() : () -> ()
    %169 = vector.extract_strided_slice %149 {offsets = [2, 0], sizes = [1, 32], strides = [1, 1]} : vector<4x32xf32> to vector<1x32xf32>
    %170 = vector.shape_cast %169 : vector<1x32xf32> to vector<32xf32>
    %171 = vector.shape_cast %170 : vector<32xf32> to vector<1x1x32xf32>
    %172 = vector.broadcast %171 : vector<1x1x32xf32> to vector<1x4x32xf32>
    %173 = arith.addf %168, %172 : vector<1x4x32xf32>
    %174 = vector.extract_strided_slice %157 {offsets = [0, 0, 0], sizes = [1, 4, 8], strides = [1, 1, 1]} : vector<1x4x32xf32> to vector<1x4x8xf32>
    %175 = vector.extract_strided_slice %165 {offsets = [0, 0, 0], sizes = [1, 4, 8], strides = [1, 1, 1]} : vector<1x4x32xf32> to vector<1x4x8xf32>
    %176 = vector.extract_strided_slice %173 {offsets = [0, 0, 0], sizes = [1, 4, 8], strides = [1, 1, 1]} : vector<1x4x32xf32> to vector<1x4x8xf32>
    "tpu.trace_start"() <{level = 10 : i32, message = "tad,tbd->tab"}> : () -> ()
    %cst_66 = arith.constant dense<0.000000e+00> : vector<1x4x4xf32>
    %177 = tpu.matmul %174, %175, %cst_66 {dimension_numbers = #tpu.dot_dimension_numbers<[2], [2], [1], [1], [0, 0, 0, 1, 1, 1], [0], [0]>} : vector<1x4x8xf32>, vector<1x4x8xf32>, vector<1x4x4xf32> -> vector<1x4x4xf32>
    "tpu.trace_stop"() : () -> ()
    %cst_67 = arith.constant 0.353553385 : f32
    %178 = vector.broadcast %cst_67 : f32 to vector<1x4x4xf32>
    %179 = arith.mulf %177, %178 : vector<1x4x4xf32>
    %cst_68 = arith.constant dense<0xFF800000> : vector<1x4xf32>
    %180 = vector.multi_reduction <maximumf>, %179, %cst_68 [2] : vector<1x4x4xf32> to vector<1x4xf32>
    %181 = vector.shape_cast %180 : vector<1x4xf32> to vector<1x4x1xf32>
    %182 = vector.broadcast %181 : vector<1x4x1xf32> to vector<1x4x4xf32>
    %183 = arith.subf %179, %182 : vector<1x4x4xf32>
    %184 = math.exp %183 : vector<1x4x4xf32>
    %cst_69 = arith.constant dense<0.000000e+00> : vector<1x4xf32>
    %185 = vector.multi_reduction <add>, %184, %cst_69 [2] : vector<1x4x4xf32> to vector<1x4xf32>
    %186 = vector.shape_cast %185 : vector<1x4xf32> to vector<1x4x1xf32>
    %187 = vector.broadcast %186 : vector<1x4x1xf32> to vector<1x4x4xf32>
    %188 = arith.divf %184, %187 : vector<1x4x4xf32>
    "tpu.trace_start"() <{level = 10 : i32, message = "tab,tbd->tad"}> : () -> ()
    %cst_70 = arith.constant dense<0.000000e+00> : vector<1x4x8xf32>
    %189 = tpu.matmul %188, %176, %cst_70 {dimension_numbers = #tpu.dot_dimension_numbers<[2], [1], [1], [2], [0, 0, 0, 1, 1, 2], [0], [0]>} : vector<1x4x4xf32>, vector<1x4x8xf32>, vector<1x4x8xf32> -> vector<1x4x8xf32>
    "tpu.trace_stop"() : () -> ()
    %190 = vector.extract_strided_slice %148 {offsets = [3, 0, 0], sizes = [1, 32, 32], strides = [1, 1, 1]} : vector<4x32x32xf32> to vector<1x32x32xf32>
    %191 = vector.shape_cast %190 : vector<1x32x32xf32> to vector<32x32xf32>
    %192 = vector.extract_strided_slice %191 {offsets = [0, 0], sizes = [8, 32], strides = [1, 1]} : vector<32x32xf32> to vector<8x32xf32>
    "tpu.trace_start"() <{level = 10 : i32, message = "tad,de->tae"}> : () -> ()
    %cst_71 = arith.constant dense<0.000000e+00> : vector<1x4x32xf32>
    %193 = tpu.matmul %189, %192, %cst_71 {dimension_numbers = #tpu.dot_dimension_numbers<[2], [0], [0, 1], [1], [0, 0, 0, 1, 1, 1], [], []>} : vector<1x4x8xf32>, vector<8x32xf32>, vector<1x4x32xf32> -> vector<1x4x32xf32>
    "tpu.trace_stop"() : () -> ()
    %194 = vector.extract_strided_slice %157 {offsets = [0, 0, 8], sizes = [1, 4, 8], strides = [1, 1, 1]} : vector<1x4x32xf32> to vector<1x4x8xf32>
    %195 = vector.extract_strided_slice %165 {offsets = [0, 0, 8], sizes = [1, 4, 8], strides = [1, 1, 1]} : vector<1x4x32xf32> to vector<1x4x8xf32>
    %196 = vector.extract_strided_slice %173 {offsets = [0, 0, 8], sizes = [1, 4, 8], strides = [1, 1, 1]} : vector<1x4x32xf32> to vector<1x4x8xf32>
    "tpu.trace_start"() <{level = 10 : i32, message = "tad,tbd->tab"}> : () -> ()
    %cst_72 = arith.constant dense<0.000000e+00> : vector<1x4x4xf32>
    %197 = tpu.matmul %194, %195, %cst_72 {dimension_numbers = #tpu.dot_dimension_numbers<[2], [2], [1], [1], [0, 0, 0, 1, 1, 1], [0], [0]>} : vector<1x4x8xf32>, vector<1x4x8xf32>, vector<1x4x4xf32> -> vector<1x4x4xf32>
    "tpu.trace_stop"() : () -> ()
    %cst_73 = arith.constant 0.353553385 : f32
    %198 = vector.broadcast %cst_73 : f32 to vector<1x4x4xf32>
    %199 = arith.mulf %197, %198 : vector<1x4x4xf32>
    %cst_74 = arith.constant dense<0xFF800000> : vector<1x4xf32>
    %200 = vector.multi_reduction <maximumf>, %199, %cst_74 [2] : vector<1x4x4xf32> to vector<1x4xf32>
    %201 = vector.shape_cast %200 : vector<1x4xf32> to vector<1x4x1xf32>
    %202 = vector.broadcast %201 : vector<1x4x1xf32> to vector<1x4x4xf32>
    %203 = arith.subf %199, %202 : vector<1x4x4xf32>
    %204 = math.exp %203 : vector<1x4x4xf32>
    %cst_75 = arith.constant dense<0.000000e+00> : vector<1x4xf32>
    %205 = vector.multi_reduction <add>, %204, %cst_75 [2] : vector<1x4x4xf32> to vector<1x4xf32>
    %206 = vector.shape_cast %205 : vector<1x4xf32> to vector<1x4x1xf32>
    %207 = vector.broadcast %206 : vector<1x4x1xf32> to vector<1x4x4xf32>
    %208 = arith.divf %204, %207 : vector<1x4x4xf32>
    "tpu.trace_start"() <{level = 10 : i32, message = "tab,tbd->tad"}> : () -> ()
    %cst_76 = arith.constant dense<0.000000e+00> : vector<1x4x8xf32>
    %209 = tpu.matmul %208, %196, %cst_76 {dimension_numbers = #tpu.dot_dimension_numbers<[2], [1], [1], [2], [0, 0, 0, 1, 1, 2], [0], [0]>} : vector<1x4x4xf32>, vector<1x4x8xf32>, vector<1x4x8xf32> -> vector<1x4x8xf32>
    "tpu.trace_stop"() : () -> ()
    %210 = vector.extract_strided_slice %148 {offsets = [3, 0, 0], sizes = [1, 32, 32], strides = [1, 1, 1]} : vector<4x32x32xf32> to vector<1x32x32xf32>
    %211 = vector.shape_cast %210 : vector<1x32x32xf32> to vector<32x32xf32>
    %212 = vector.extract_strided_slice %211 {offsets = [8, 0], sizes = [8, 32], strides = [1, 1]} : vector<32x32xf32> to vector<8x32xf32>
    "tpu.trace_start"() <{level = 10 : i32, message = "tad,de->tae"}> : () -> ()
    %cst_77 = arith.constant dense<0.000000e+00> : vector<1x4x32xf32>
    %213 = tpu.matmul %209, %212, %cst_77 {dimension_numbers = #tpu.dot_dimension_numbers<[2], [0], [0, 1], [1], [0, 0, 0, 1, 1, 1], [], []>} : vector<1x4x8xf32>, vector<8x32xf32>, vector<1x4x32xf32> -> vector<1x4x32xf32>
    "tpu.trace_stop"() : () -> ()
    %214 = arith.addf %193, %213 : vector<1x4x32xf32>
    %215 = vector.extract_strided_slice %157 {offsets = [0, 0, 16], sizes = [1, 4, 8], strides = [1, 1, 1]} : vector<1x4x32xf32> to vector<1x4x8xf32>
    %216 = vector.extract_strided_slice %165 {offsets = [0, 0, 16], sizes = [1, 4, 8], strides = [1, 1, 1]} : vector<1x4x32xf32> to vector<1x4x8xf32>
    %217 = vector.extract_strided_slice %173 {offsets = [0, 0, 16], sizes = [1, 4, 8], strides = [1, 1, 1]} : vector<1x4x32xf32> to vector<1x4x8xf32>
    "tpu.trace_start"() <{level = 10 : i32, message = "tad,tbd->tab"}> : () -> ()
    %cst_78 = arith.constant dense<0.000000e+00> : vector<1x4x4xf32>
    %218 = tpu.matmul %215, %216, %cst_78 {dimension_numbers = #tpu.dot_dimension_numbers<[2], [2], [1], [1], [0, 0, 0, 1, 1, 1], [0], [0]>} : vector<1x4x8xf32>, vector<1x4x8xf32>, vector<1x4x4xf32> -> vector<1x4x4xf32>
    "tpu.trace_stop"() : () -> ()
    %cst_79 = arith.constant 0.353553385 : f32
    %219 = vector.broadcast %cst_79 : f32 to vector<1x4x4xf32>
    %220 = arith.mulf %218, %219 : vector<1x4x4xf32>
    %cst_80 = arith.constant dense<0xFF800000> : vector<1x4xf32>
    %221 = vector.multi_reduction <maximumf>, %220, %cst_80 [2] : vector<1x4x4xf32> to vector<1x4xf32>
    %222 = vector.shape_cast %221 : vector<1x4xf32> to vector<1x4x1xf32>
    %223 = vector.broadcast %222 : vector<1x4x1xf32> to vector<1x4x4xf32>
    %224 = arith.subf %220, %223 : vector<1x4x4xf32>
    %225 = math.exp %224 : vector<1x4x4xf32>
    %cst_81 = arith.constant dense<0.000000e+00> : vector<1x4xf32>
    %226 = vector.multi_reduction <add>, %225, %cst_81 [2] : vector<1x4x4xf32> to vector<1x4xf32>
    %227 = vector.shape_cast %226 : vector<1x4xf32> to vector<1x4x1xf32>
    %228 = vector.broadcast %227 : vector<1x4x1xf32> to vector<1x4x4xf32>
    %229 = arith.divf %225, %228 : vector<1x4x4xf32>
    "tpu.trace_start"() <{level = 10 : i32, message = "tab,tbd->tad"}> : () -> ()
    %cst_82 = arith.constant dense<0.000000e+00> : vector<1x4x8xf32>
    %230 = tpu.matmul %229, %217, %cst_82 {dimension_numbers = #tpu.dot_dimension_numbers<[2], [1], [1], [2], [0, 0, 0, 1, 1, 2], [0], [0]>} : vector<1x4x4xf32>, vector<1x4x8xf32>, vector<1x4x8xf32> -> vector<1x4x8xf32>
    "tpu.trace_stop"() : () -> ()
    %231 = vector.extract_strided_slice %148 {offsets = [3, 0, 0], sizes = [1, 32, 32], strides = [1, 1, 1]} : vector<4x32x32xf32> to vector<1x32x32xf32>
    %232 = vector.shape_cast %231 : vector<1x32x32xf32> to vector<32x32xf32>
    %233 = vector.extract_strided_slice %232 {offsets = [16, 0], sizes = [8, 32], strides = [1, 1]} : vector<32x32xf32> to vector<8x32xf32>
    "tpu.trace_start"() <{level = 10 : i32, message = "tad,de->tae"}> : () -> ()
    %cst_83 = arith.constant dense<0.000000e+00> : vector<1x4x32xf32>
    %234 = tpu.matmul %230, %233, %cst_83 {dimension_numbers = #tpu.dot_dimension_numbers<[2], [0], [0, 1], [1], [0, 0, 0, 1, 1, 1], [], []>} : vector<1x4x8xf32>, vector<8x32xf32>, vector<1x4x32xf32> -> vector<1x4x32xf32>
    "tpu.trace_stop"() : () -> ()
    %235 = arith.addf %214, %234 : vector<1x4x32xf32>
    %236 = vector.extract_strided_slice %157 {offsets = [0, 0, 24], sizes = [1, 4, 8], strides = [1, 1, 1]} : vector<1x4x32xf32> to vector<1x4x8xf32>
    %237 = vector.extract_strided_slice %165 {offsets = [0, 0, 24], sizes = [1, 4, 8], strides = [1, 1, 1]} : vector<1x4x32xf32> to vector<1x4x8xf32>
    %238 = vector.extract_strided_slice %173 {offsets = [0, 0, 24], sizes = [1, 4, 8], strides = [1, 1, 1]} : vector<1x4x32xf32> to vector<1x4x8xf32>
    "tpu.trace_start"() <{level = 10 : i32, message = "tad,tbd->tab"}> : () -> ()
    %cst_84 = arith.constant dense<0.000000e+00> : vector<1x4x4xf32>
    %239 = tpu.matmul %236, %237, %cst_84 {dimension_numbers = #tpu.dot_dimension_numbers<[2], [2], [1], [1], [0, 0, 0, 1, 1, 1], [0], [0]>} : vector<1x4x8xf32>, vector<1x4x8xf32>, vector<1x4x4xf32> -> vector<1x4x4xf32>
    "tpu.trace_stop"() : () -> ()
    %cst_85 = arith.constant 0.353553385 : f32
    %240 = vector.broadcast %cst_85 : f32 to vector<1x4x4xf32>
    %241 = arith.mulf %239, %240 : vector<1x4x4xf32>
    %cst_86 = arith.constant dense<0xFF800000> : vector<1x4xf32>
    %242 = vector.multi_reduction <maximumf>, %241, %cst_86 [2] : vector<1x4x4xf32> to vector<1x4xf32>
    %243 = vector.shape_cast %242 : vector<1x4xf32> to vector<1x4x1xf32>
    %244 = vector.broadcast %243 : vector<1x4x1xf32> to vector<1x4x4xf32>
    %245 = arith.subf %241, %244 : vector<1x4x4xf32>
    %246 = math.exp %245 : vector<1x4x4xf32>
    %cst_87 = arith.constant dense<0.000000e+00> : vector<1x4xf32>
    %247 = vector.multi_reduction <add>, %246, %cst_87 [2] : vector<1x4x4xf32> to vector<1x4xf32>
    %248 = vector.shape_cast %247 : vector<1x4xf32> to vector<1x4x1xf32>
    %249 = vector.broadcast %248 : vector<1x4x1xf32> to vector<1x4x4xf32>
    %250 = arith.divf %246, %249 : vector<1x4x4xf32>
    "tpu.trace_start"() <{level = 10 : i32, message = "tab,tbd->tad"}> : () -> ()
    %cst_88 = arith.constant dense<0.000000e+00> : vector<1x4x8xf32>
    %251 = tpu.matmul %250, %238, %cst_88 {dimension_numbers = #tpu.dot_dimension_numbers<[2], [1], [1], [2], [0, 0, 0, 1, 1, 2], [0], [0]>} : vector<1x4x4xf32>, vector<1x4x8xf32>, vector<1x4x8xf32> -> vector<1x4x8xf32>
    "tpu.trace_stop"() : () -> ()
    %252 = vector.extract_strided_slice %148 {offsets = [3, 0, 0], sizes = [1, 32, 32], strides = [1, 1, 1]} : vector<4x32x32xf32> to vector<1x32x32xf32>
    %253 = vector.shape_cast %252 : vector<1x32x32xf32> to vector<32x32xf32>
    %254 = vector.extract_strided_slice %253 {offsets = [24, 0], sizes = [8, 32], strides = [1, 1]} : vector<32x32xf32> to vector<8x32xf32>
    "tpu.trace_start"() <{level = 10 : i32, message = "tad,de->tae"}> : () -> ()
    %cst_89 = arith.constant dense<0.000000e+00> : vector<1x4x32xf32>
    %255 = tpu.matmul %251, %254, %cst_89 {dimension_numbers = #tpu.dot_dimension_numbers<[2], [0], [0, 1], [1], [0, 0, 0, 1, 1, 1], [], []>} : vector<1x4x8xf32>, vector<8x32xf32>, vector<1x4x32xf32> -> vector<1x4x32xf32>
    "tpu.trace_stop"() : () -> ()
    %256 = arith.addf %235, %255 : vector<1x4x32xf32>
    %257 = vector.extract_strided_slice %149 {offsets = [3, 0], sizes = [1, 32], strides = [1, 1]} : vector<4x32xf32> to vector<1x32xf32>
    %258 = vector.shape_cast %257 : vector<1x32xf32> to vector<32xf32>
    %259 = vector.shape_cast %258 : vector<32xf32> to vector<1x1x32xf32>
    %260 = vector.broadcast %259 : vector<1x1x32xf32> to vector<1x4x32xf32>
    %261 = arith.addf %256, %260 : vector<1x4x32xf32>
    %262 = vector.shape_cast %261 : vector<1x4x32xf32> to vector<4x32xf32>
    %cst_90 = arith.constant dense<0xFF800000> : vector<32xf32>
    %263 = vector.multi_reduction <maximumf>, %262, %cst_90 [0] : vector<4x32xf32> to vector<32xf32>
    %264 = vector.shape_cast %263 : vector<32xf32> to vector<1x32xf32>
    %c0_91 = arith.constant 0 : index
    %c0_92 = arith.constant 0 : index
    %265 = vector.load %arg11[%c0_91, %c0_92] : memref<32x8xf32, #tpu.memory_space<vmem>>, vector<32x8xf32>
    %cst_93 = arith.constant dense<0.000000e+00> : vector<1x8xf32>
    %266 = tpu.matmul %264, %265, %cst_93 {dimension_numbers = #tpu.dot_dimension_numbers<[1], [0], [0], [1], [0, 0, 1, 1], [], []>} : vector<1x32xf32>, vector<32x8xf32>, vector<1x8xf32> -> vector<1x8xf32>
    %c0_94 = arith.constant 0 : index
    %c0_95 = arith.constant 0 : index
    %267 = vector.load %arg12[%c0_94, %c0_95] : memref<1x8xf32, #tpu.memory_space<vmem>>, vector<1x8xf32>
    %268 = arith.addf %266, %267 : vector<1x8xf32>
    %cst_96 = arith.constant 0.000000e+00 : f32
    %269 = vector.broadcast %cst_96 : f32 to vector<1x8xf32>
    %270 = arith.subf %269, %268 : vector<1x8xf32>
    %271 = math.exp %270 : vector<1x8xf32>
    %cst_97 = arith.constant 1.000000e+00 : f32
    %272 = vector.broadcast %cst_97 : f32 to vector<1x8xf32>
    %273 = arith.addf %272, %271 : vector<1x8xf32>
    %cst_98 = arith.constant 1.000000e+00 : f32
    %274 = vector.broadcast %cst_98 : f32 to vector<1x8xf32>
    %275 = arith.divf %274, %273 : vector<1x8xf32>
    %c0_99 = arith.constant 0 : index
    %c0_100 = arith.constant 0 : index
    %c0_101 = arith.constant 0 : index
    %276 = vector.load %arg13[%c0_99, %c0_100, %c0_101] : memref<1x1x8xf32, #tpu.memory_space<vmem>>, vector<1x1x8xf32>
    %277 = vector.shape_cast %276 : vector<1x1x8xf32> to vector<1x8xf32>
    %278 = vector.shape_cast %275 : vector<1x8xf32> to vector<1x1x8xf32>
    tpu.vector_store %arg13[%c0_99, %c0_100, %c0_101], %278 {strides = array<i32>} : memref<1x1x8xf32, #tpu.memory_space<vmem>>, vector<1x1x8xf32>,
    return
  }
  func.func @transform_0(%arg0: i32) -> (i32, i32, i32, i32) {
    %c0_i32 = arith.constant 0 : i32
    %c0_i32_0 = arith.constant 0 : i32
    %c0_i32_1 = arith.constant 0 : i32
    %c0_i32_2 = arith.constant 0 : i32
    return %arg0, %c0_i32, %c0_i32_0, %c0_i32_1 : i32, i32, i32, i32
  }
  func.func @transform_1(%arg0: i32) -> (i32, i32, i32, i32) {
    %c0_i32 = arith.constant 0 : i32
    %c0_i32_0 = arith.constant 0 : i32
    %c0_i32_1 = arith.constant 0 : i32
    %c0_i32_2 = arith.constant 0 : i32
    return %arg0, %c0_i32, %c0_i32_0, %c0_i32_1 : i32, i32, i32, i32
  }
  func.func @transform_2(%arg0: i32) -> (i32, i32, i32) {
    %c0_i32 = arith.constant 0 : i32
    %c0_i32_0 = arith.constant 0 : i32
    %c0_i32_1 = arith.constant 0 : i32
    %c0_i32_2 = arith.constant 0 : i32
    return %c0_i32, %c0_i32_0, %c0_i32_1 : i32, i32, i32
  }
  func.func @transform_3(%arg0: i32) -> (i32, i32) {
    %c0_i32 = arith.constant 0 : i32
    %c0_i32_0 = arith.constant 0 : i32
    %c0_i32_1 = arith.constant 0 : i32
    return %c0_i32, %c0_i32_0 : i32, i32
  }
  func.func @transform_4(%arg0: i32) -> (i32, i32) {
    %c0_i32 = arith.constant 0 : i32
    %c0_i32_0 = arith.constant 0 : i32
    %c0_i32_1 = arith.constant 0 : i32
    return %c0_i32, %c0_i32_0 : i32, i32
  }
  func.func @transform_5(%arg0: i32) -> (i32, i32) {
    %c0_i32 = arith.constant 0 : i32
    %c0_i32_0 = arith.constant 0 : i32
    %c0_i32_1 = arith.constant 0 : i32
    return %c0_i32, %c0_i32_0 : i32, i32
  }
  func.func @transform_6(%arg0: i32) -> (i32, i32) {
    %c0_i32 = arith.constant 0 : i32
    %c0_i32_0 = arith.constant 0 : i32
    %c0_i32_1 = arith.constant 0 : i32
    return %c0_i32, %c0_i32_0 : i32, i32
  }
  func.func @transform_7(%arg0: i32) -> (i32, i32) {
    %c0_i32 = arith.constant 0 : i32
    %c0_i32_0 = arith.constant 0 : i32
    %c0_i32_1 = arith.constant 0 : i32
    return %c0_i32, %c0_i32_0 : i32, i32
  }
  func.func @transform_8(%arg0: i32) -> (i32, i32, i32) {
    %c0_i32 = arith.constant 0 : i32
    %c0_i32_0 = arith.constant 0 : i32
    %c0_i32_1 = arith.constant 0 : i32
    %c0_i32_2 = arith.constant 0 : i32
    return %c0_i32, %c0_i32_0, %c0_i32_1 : i32, i32, i32
  }
  func.func @transform_9(%arg0: i32) -> (i32, i32) {
    %c0_i32 = arith.constant 0 : i32
    %c0_i32_0 = arith.constant 0 : i32
    %c0_i32_1 = arith.constant 0 : i32
    return %c0_i32, %c0_i32_0 : i32, i32
  }
  func.func @transform_10(%arg0: i32) -> (i32, i32) {
    %c0_i32 = arith.constant 0 : i32
    %c0_i32_0 = arith.constant 0 : i32
    %c0_i32_1 = arith.constant 0 : i32
    return %c0_i32, %c0_i32_0 : i32, i32
  }
  func.func @transform_11(%arg0: i32) -> (i32, i32) {
    %c0_i32 = arith.constant 0 : i32
    %c0_i32_0 = arith.constant 0 : i32
    %c0_i32_1 = arith.constant 0 : i32
    return %c0_i32, %c0_i32_0 : i32, i32
  }
  func.func @transform_12(%arg0: i32) -> (i32, i32, i32) {
    %c0_i32 = arith.constant 0 : i32
    %c0_i32_0 = arith.constant 0 : i32
    %c0_i32_1 = arith.constant 0 : i32
    return %arg0, %c0_i32, %c0_i32_0 : i32, i32, i32
  }
}

</mosaic_0001>

<llo_original>
// kernel: tpu_custom_call.1
$region0: #{tpu_custom_call.1}
  #allocation0 [shape = 'u32[]', space=smem, size = 0x4, offset = 0x4, fixed_abs, tag = 'smem constant byte address 0x4 - core index']
  #allocation1 [shape = 'u32[144,128]{1,0:T(1,128)}', space=vmem, size = 0x12000, scoped, tag = 'internal scratch']
  %s0 = inlined_call_operand.vmem [shape: f32[2,8,4,32], index: 0, kind: input, shape index: {}]
  %s1 = inlined_call_operand.vmem [shape: f32[2,8,4,4], index: 1, kind: input, shape index: {}]
  %s2 = inlined_call_operand.vmem [shape: f32[4,32,32], index: 2, kind: input, shape index: {}]
  %s3 = inlined_call_operand.vmem [shape: f32[4,32], index: 3, kind: input, shape index: {}]
  %s4 = inlined_call_operand.hbm [shape: f32[32,64], index: 4, kind: input, shape index: {}]
  %s5 = inlined_call_operand.vmem [shape: f32[1,64], index: 5, kind: input, shape index: {}]
  %s6 = inlined_call_operand.vmem [shape: f32[64,32], index: 6, kind: input, shape index: {}]
  %s7 = inlined_call_operand.vmem [shape: f32[1,32], index: 7, kind: input, shape index: {}]
  %s8 = inlined_call_operand.hbm [shape: f32[4,32,32], index: 8, kind: input, shape index: {}]
  %s9 = inlined_call_operand.vmem [shape: f32[4,32], index: 9, kind: input, shape index: {}]
  %s10 = inlined_call_operand.vmem [shape: f32[32,8], index: 10, kind: input, shape index: {}]
  %s11 = inlined_call_operand.vmem [shape: f32[1,8], index: 11, kind: input, shape index: {}]
  %s12 = inlined_call_operand.hbm [shape: f32[2,1,8], index: 12, kind: output, shape index: {}]
  %s13 = sld [smem:[#allocation0]]
  $region89: #{tpu_custom_call.1} parent=0
    _
  %s15 = ssub.s32 1, %s13
  %s16 = scalar_select 0, %s15, %s13
  $region1: #{tpu_custom_call.1} parent=0
    #allocation2 [shape = 'u8[16384]{0}', space=vmem, size = 0x4000, scoped, tag = 'input window, operand 4, single buffered']
    #allocation3 [shape = 's32[2]{0}', space=sflag, size = 0x8, scoped, tag = 'scoped memory for tpu_custom_call.1']
    #allocation4 [shape = 's32[2]{0}', space=sflag, size = 0x8, scoped, tag = 'scoped memory for tpu_custom_call.1']
    #allocation5 [shape = 'u8[65536]{0}', space=vmem, size = 0x10000, scoped, tag = 'input window, operand 8, single buffered']
    #allocation6 [shape = 's32[1]{0}', space=sflag, size = 0x4, scoped, tag = 'scoped memory for tpu_custom_call.1']
    #allocation7 [shape = 'u8[1024]{0}', space=vmem, size = 0x400, scoped, tag = 'output window, operand 0']
    %17 = vsyncpa [#allocation3], 0
    %18 = vsyncpa [#allocation6], 0
    %19 = vsyncpa [#allocation4], 0
    %s20 = scalar_lea.sflag [#allocation4], 1
    %21 = vsyncpa %s20, 0
    loop: start=0, step=1, limit=4
    $region2: #{tpu_custom_call.1} parent=1 // loop_pre_header
      _
    $region3: #{tpu_custom_call.1} parent=1 // loop_header
      %s23 = sphi 0, %s27
      %p24 = scmp.ge.s32.totalorder %s23, 4
      %s33 = sphi 0, %s35
      %s36 = sphi 0, %s33
      %s37 = sphi 0, %s36
      %s53 = sphi 0, %s37
      %s59 = sphi 0, %s61
      %s62 = sphi 0, %s59
      %s63 = sphi 0, %s62
      %s79 = sphi 0, %s63
      %s83 = sphi 0, %s83
      %s85 = sphi 0, %s83
      %s86 = sphi 0, %s85
      %s100 = sphi 0, %s86
      %s104 = sphi 0, %s104
      %s106 = sphi 0, %s104
      %s107 = sphi 0, %s106
      %s121 = sphi 0, %s107
      %s125 = sphi 0, %s125
      %s127 = sphi 0, %s125
      %s128 = sphi 0, %s127
      %s142 = sphi 0, %s128
      %s146 = sphi 0, %s146
      %s148 = sphi 0, %s146
      %s149 = sphi 0, %s148
      %s163 = sphi 0, %s149
      %s167 = sphi 0, %s167
      %s169 = sphi 0, %s167
      %s170 = sphi 0, %s169
      %s184 = sphi 0, %s170
      %s188 = sphi 0, %s188
      %s190 = sphi 0, %s188
      %s191 = sphi 0, %s190
      %s205 = sphi 0, %s191
      %s209 = sphi 0, %s209
      %s211 = sphi 0, %s209
      %s212 = sphi 0, %s211
      %s226 = sphi 0, %s212
      %s230 = sphi 0, %s230
      %s232 = sphi 0, %s230
      %s233 = sphi 0, %s232
      %s247 = sphi 0, %s233
      %s251 = sphi 0, %s251
      %s253 = sphi 0, %s251
      %s254 = sphi 0, %s253
      %s268 = sphi 0, %s254
      %s272 = sphi 0, %s272
      %s274 = sphi 0, %s272
      %s275 = sphi 0, %s274
      %s289 = sphi 0, %s275
      %s295 = sphi 0, %s297
      %s298 = sphi 0, %s295
      %s299 = sphi 0, %s298
      %s315 = sphi 0, %s299
    $region4: #{tpu_custom_call.1} parent=1 // loop_header_branch
      %26 = sbr.rel (%p24) target = $region8
    $region5: #{tpu_custom_call.1} parent=1 // loop_body
      %s28 = ssub.s32 %s23, 1
      %s29 = ssub.s32 %s23, 2
      %s30 = sadd.s32 %s23, 1
      %s31 = ssub.s32 %s23, %s30
      %p32 = scmp.eq.s32.totalorder %s31, 0
      %s34 = sadd.s32 %s33, 1
      %s35 = scalar_select %p32, %s33, %s34
      %p38 = pneg %p32
      %p39 = scmp.eq.s32.totalorder %s23, 1
      %p40 = por %p38, %p39
      %p41 = scmp.ne.s32.totalorder %s33, %s36
      %p42 = scmp.eq.s32.totalorder %s23, 0
      %p43 = por %p41, %p42
      %p44 = scmp.ne.s32.totalorder %s33, %s36
      %p45 = scmp.eq.s32.totalorder %s28, 1
      %p46 = por %p44, %p45
      %p47 = scmp.ne.s32.totalorder %s36, %s37
      %p48 = scmp.eq.s32.totalorder %s28, 0
      %p49 = por %p47, %p48
      %p50 = scmp.ne.s32.totalorder %s36, %s37
      %p51 = scmp.eq.s32.totalorder %s29, 1
      %p52 = por %p50, %p51
      %p54 = scmp.ne.s32.totalorder %s37, %s53
      %p55 = scmp.eq.s32.totalorder %s29, 0
      %p56 = por %p54, %p55
      %s57 = ssub.s32 %s23, %s30
      %p58 = scmp.eq.s32.totalorder %s57, 0
      %s60 = sadd.s32 %s59, 1
      %s61 = scalar_select %p58, %s59, %s60
      %p64 = pneg %p58
      %p65 = scmp.eq.s32.totalorder %s23, 1
      %p66 = por %p64, %p65
      %p67 = scmp.ne.s32.totalorder %s59, %s62
      %p68 = scmp.eq.s32.totalorder %s23, 0
      %p69 = por %p67, %p68
      %p70 = scmp.ne.s32.totalorder %s59, %s62
      %p71 = scmp.eq.s32.totalorder %s28, 1
      %p72 = por %p70, %p71
      %p73 = scmp.ne.s32.totalorder %s62, %s63
      %p74 = scmp.eq.s32.totalorder %s28, 0
      %p75 = por %p73, %p74
      %p76 = scmp.ne.s32.totalorder %s62, %s63
      %p77 = scmp.eq.s32.totalorder %s29, 1
      %p78 = por %p76, %p77
      %p80 = scmp.ne.s32.totalorder %s63, %s79
      %p81 = scmp.eq.s32.totalorder %s29, 0
      %p82 = por %p80, %p81
      %s84 = sadd.s32 %s83, 1
      %p87 = scmp.eq.s32.totalorder %s23, 1
      %p88 = scmp.ne.s32.totalorder %s83, %s85
      %p89 = scmp.eq.s32.totalorder %s23, 0
      %p90 = por %p88, %p89
      %p91 = scmp.ne.s32.totalorder %s83, %s85
      %p92 = scmp.eq.s32.totalorder %s28, 1
      %p93 = por %p91, %p92
      %p94 = scmp.ne.s32.totalorder %s85, %s86
      %p95 = scmp.eq.s32.totalorder %s28, 0
      %p96 = por %p94, %p95
      %p97 = scmp.ne.s32.totalorder %s85, %s86
      %p98 = scmp.eq.s32.totalorder %s29, 1
      %p99 = por %p97, %p98
      %p101 = scmp.ne.s32.totalorder %s86, %s100
      %p102 = scmp.eq.s32.totalorder %s29, 0
      %p103 = por %p101, %p102
      %s105 = sadd.s32 %s104, 1
      %p108 = scmp.eq.s32.totalorder %s23, 1
      %p109 = scmp.ne.s32.totalorder %s104, %s106
      %p110 = scmp.eq.s32.totalorder %s23, 0
      %p111 = por %p109, %p110
      %p112 = scmp.ne.s32.totalorder %s104, %s106
      %p113 = scmp.eq.s32.totalorder %s28, 1
      %p114 = por %p112, %p113
      %p115 = scmp.ne.s32.totalorder %s106, %s107
      %p116 = scmp.eq.s32.totalorder %s28, 0
      %p117 = por %p115, %p116
      %p118 = scmp.ne.s32.totalorder %s106, %s107
      %p119 = scmp.eq.s32.totalorder %s29, 1
      %p120 = por %p118, %p119
      %p122 = scmp.ne.s32.totalorder %s107, %s121
      %p123 = scmp.eq.s32.totalorder %s29, 0
      %p124 = por %p122, %p123
      %s126 = sadd.s32 %s125, 1
      %p129 = scmp.eq.s32.totalorder %s23, 1
      %p130 = scmp.ne.s32.totalorder %s125, %s127
      %p131 = scmp.eq.s32.totalorder %s23, 0
      %p132 = por %p130, %p131
      %p133 = scmp.ne.s32.totalorder %s125, %s127
      %p134 = scmp.eq.s32.totalorder %s28, 1
      %p135 = por %p133, %p134
      %p136 = scmp.ne.s32.totalorder %s127, %s128
      %p137 = scmp.eq.s32.totalorder %s28, 0
      %p138 = por %p136, %p137
      %p139 = scmp.ne.s32.totalorder %s127, %s128
      %p140 = scmp.eq.s32.totalorder %s29, 1
      %p141 = por %p139, %p140
      %p143 = scmp.ne.s32.totalorder %s128, %s142
      %p144 = scmp.eq.s32.totalorder %s29, 0
      %p145 = por %p143, %p144
      %s147 = sadd.s32 %s146, 1
      %p150 = scmp.eq.s32.totalorder %s23, 1
      %p151 = scmp.ne.s32.totalorder %s146, %s148
      %p152 = scmp.eq.s32.totalorder %s23, 0
      %p153 = por %p151, %p152
      %p154 = scmp.ne.s32.totalorder %s146, %s148
      %p155 = scmp.eq.s32.totalorder %s28, 1
      %p156 = por %p154, %p155
      %p157 = scmp.ne.s32.totalorder %s148, %s149
      %p158 = scmp.eq.s32.totalorder %s28, 0
      %p159 = por %p157, %p158
      %p160 = scmp.ne.s32.totalorder %s148, %s149
      %p161 = scmp.eq.s32.totalorder %s29, 1
      %p162 = por %p160, %p161
      %p164 = scmp.ne.s32.totalorder %s149, %s163
      %p165 = scmp.eq.s32.totalorder %s29, 0
      %p166 = por %p164, %p165
      %s168 = sadd.s32 %s167, 1
      %p171 = scmp.eq.s32.totalorder %s23, 1
      %p172 = scmp.ne.s32.totalorder %s167, %s169
      %p173 = scmp.eq.s32.totalorder %s23, 0
      %p174 = por %p172, %p173
      %p175 = scmp.ne.s32.totalorder %s167, %s169
      %p176 = scmp.eq.s32.totalorder %s28, 1
      %p177 = por %p175, %p176
      %p178 = scmp.ne.s32.totalorder %s169, %s170
      %p179 = scmp.eq.s32.totalorder %s28, 0
      %p180 = por %p178, %p179
      %p181 = scmp.ne.s32.totalorder %s169, %s170
      %p182 = scmp.eq.s32.totalorder %s29, 1
      %p183 = por %p181, %p182
      %p185 = scmp.ne.s32.totalorder %s170, %s184
      %p186 = scmp.eq.s32.totalorder %s29, 0
      %p187 = por %p185, %p186
      %s189 = sadd.s32 %s188, 1
      %p192 = scmp.eq.s32.totalorder %s23, 1
      %p193 = scmp.ne.s32.totalorder %s188, %s190
      %p194 = scmp.eq.s32.totalorder %s23, 0
      %p195 = por %p193, %p194
      %p196 = scmp.ne.s32.totalorder %s188, %s190
      %p197 = scmp.eq.s32.totalorder %s28, 1
      %p198 = por %p196, %p197
      %p199 = scmp.ne.s32.totalorder %s190, %s191
      %p200 = scmp.eq.s32.totalorder %s28, 0
      %p201 = por %p199, %p200
      %p202 = scmp.ne.s32.totalorder %s190, %s191
      %p203 = scmp.eq.s32.totalorder %s29, 1
      %p204 = por %p202, %p203
      %p206 = scmp.ne.s32.totalorder %s191, %s205
      %p207 = scmp.eq.s32.totalorder %s29, 0
      %p208 = por %p206, %p207
      %s210 = sadd.s32 %s209, 1
      %p213 = scmp.eq.s32.totalorder %s23, 1
      %p214 = scmp.ne.s32.totalorder %s209, %s211
      %p215 = scmp.eq.s32.totalorder %s23, 0
      %p216 = por %p214, %p215
      %p217 = scmp.ne.s32.totalorder %s209, %s211
      %p218 = scmp.eq.s32.totalorder %s28, 1
      %p219 = por %p217, %p218
      %p220 = scmp.ne.s32.totalorder %s211, %s212
      %p221 = scmp.eq.s32.totalorder %s28, 0
      %p222 = por %p220, %p221
      %p223 = scmp.ne.s32.totalorder %s211, %s212
      %p224 = scmp.eq.s32.totalorder %s29, 1
      %p225 = por %p223, %p224
      %p227 = scmp.ne.s32.totalorder %s212, %s226
      %p228 = scmp.eq.s32.totalorder %s29, 0
      %p229 = por %p227, %p228
      %s231 = sadd.s32 %s230, 1
      %p234 = scmp.eq.s32.totalorder %s23, 1
      %p235 = scmp.ne.s32.totalorder %s230, %s232
      %p236 = scmp.eq.s32.totalorder %s23, 0
      %p237 = por %p235, %p236
      %p238 = scmp.ne.s32.totalorder %s230, %s232
      %p239 = scmp.eq.s32.totalorder %s28, 1
      %p240 = por %p238, %p239
      %p241 = scmp.ne.s32.totalorder %s232, %s233
      %p242 = scmp.eq.s32.totalorder %s28, 0
      %p243 = por %p241, %p242
      %p244 = scmp.ne.s32.totalorder %s232, %s233
      %p245 = scmp.eq.s32.totalorder %s29, 1
      %p246 = por %p244, %p245
      %p248 = scmp.ne.s32.totalorder %s233, %s247
      %p249 = scmp.eq.s32.totalorder %s29, 0
      %p250 = por %p248, %p249
      %s252 = sadd.s32 %s251, 1
      %p255 = scmp.eq.s32.totalorder %s23, 1
      %p256 = scmp.ne.s32.totalorder %s251, %s253
      %p257 = scmp.eq.s32.totalorder %s23, 0
      %p258 = por %p256, %p257
      %p259 = scmp.ne.s32.totalorder %s251, %s253
      %p260 = scmp.eq.s32.totalorder %s28, 1
      %p261 = por %p259, %p260
      %p262 = scmp.ne.s32.totalorder %s253, %s254
      %p263 = scmp.eq.s32.totalorder %s28, 0
      %p264 = por %p262, %p263
      %p265 = scmp.ne.s32.totalorder %s253, %s254
      %p266 = scmp.eq.s32.totalorder %s29, 1
      %p267 = por %p265, %p266
      %p269 = scmp.ne.s32.totalorder %s254, %s268
      %p270 = scmp.eq.s32.totalorder %s29, 0
      %p271 = por %p269, %p270
      %s273 = sadd.s32 %s272, 1
      %p276 = scmp.eq.s32.totalorder %s23, 1
      %p277 = scmp.ne.s32.totalorder %s272, %s274
      %p278 = scmp.eq.s32.totalorder %s23, 0
      %p279 = por %p277, %p278
      %p280 = scmp.ne.s32.totalorder %s272, %s274
      %p281 = scmp.eq.s32.totalorder %s28, 1
      %p282 = por %p280, %p281
      %p283 = scmp.ne.s32.totalorder %s274, %s275
      %p284 = scmp.eq.s32.totalorder %s28, 0
      %p285 = por %p283, %p284
      %p286 = scmp.ne.s32.totalorder %s274, %s275
      %p287 = scmp.eq.s32.totalorder %s29, 1
      %p288 = por %p286, %p287
      %p290 = scmp.ne.s32.totalorder %s275, %s289
      %p291 = scmp.eq.s32.totalorder %s29, 0
      %p292 = por %p290, %p291
      %s293 = ssub.s32 %s23, %s30
      %p294 = scmp.eq.s32.totalorder %s293, 0
      %s296 = sadd.s32 %s295, 1
      %s297 = scalar_select %p294, %s295, %s296
      %p300 = pneg %p294
      %p301 = scmp.eq.s32.totalorder %s23, 1
      %p302 = por %p300, %p301
      %p303 = scmp.ne.s32.totalorder %s295, %s298
      %p304 = scmp.eq.s32.totalorder %s23, 0
      %p305 = por %p303, %p304
      %p306 = scmp.ne.s32.totalorder %s295, %s298
      %p307 = scmp.eq.s32.totalorder %s28, 1
      %p308 = por %p306, %p307
      %p309 = scmp.ne.s32.totalorder %s298, %s299
      %p310 = scmp.eq.s32.totalorder %s28, 0
      %p311 = por %p309, %p310
      %p312 = scmp.ne.s32.totalorder %s298, %s299
      %p313 = scmp.eq.s32.totalorder %s29, 1
      %p314 = por %p312, %p313
      %p316 = scmp.ne.s32.totalorder %s299, %s315
      %p317 = scmp.eq.s32.totalorder %s29, 0
      %p318 = por %p316, %p317
      %p319 = scmp.le.s32.totalorder 1, %s23
      %p320 = scmp.lt.s32.totalorder %s23, 3
      %p321 = pnand %p319, %p320
      %p322 = pneg %p321
      // Predicated region
      $region9: #{tpu_custom_call.1} parent=5 // pred_check
        _
      $region10: #{tpu_custom_call.1} parent=5 // pred_check_branch
        %324 = sbr.rel (%p321) target = $region12
      $region11: #{tpu_custom_call.1} parent=5 // pred_region
        %s325 = ssub.s32 %s23, 1
        // Predicated region
        $region13: #{tpu_custom_call.1} parent=11 // pred_check
          %p326 = pneg %p96
        $region14: #{tpu_custom_call.1} parent=11 // pred_check_branch
          %328 = sbr.rel (%p326) target = $region16
        $region15: #{tpu_custom_call.1} parent=11 // pred_region
          _
        $region16: #{tpu_custom_call.1} parent=11 // pred_fallthru
          _
        // Predicated region
        $region17: #{tpu_custom_call.1} parent=11 // pred_check
          %p329 = pneg %p117
        $region18: #{tpu_custom_call.1} parent=11 // pred_check_branch
          %331 = sbr.rel (%p329) target = $region20
        $region19: #{tpu_custom_call.1} parent=11 // pred_region
          _
        $region20: #{tpu_custom_call.1} parent=11 // pred_fallthru
          _
        // Predicated region
        $region21: #{tpu_custom_call.1} parent=11 // pred_check
          %p332 = pneg %p138
        $region22: #{tpu_custom_call.1} parent=11 // pred_check_branch
          %334 = sbr.rel (%p332) target = $region24
        $region23: #{tpu_custom_call.1} parent=11 // pred_region
          %s336 = ssub.s32 512, 512
          %337 = vsyncadd [#allocation3], %s336
          %s338 = sshll.u32 [#allocation2], 4
          %s339 = int_to_ptr.vmem [resolvable:$true] %s338
          %344 = dma.hbm_to_vmem [thread:$0]  %s4, 512, %s339, [#allocation3], 128, 128, 8
        $region24: #{tpu_custom_call.1} parent=11 // pred_fallthru
          _
        // Predicated region
        $region25: #{tpu_custom_call.1} parent=11 // pred_check
          %p345 = pneg %p159
        $region26: #{tpu_custom_call.1} parent=11 // pred_check_branch
          %347 = sbr.rel (%p345) target = $region28
        $region27: #{tpu_custom_call.1} parent=11 // pred_region
          _
        $region28: #{tpu_custom_call.1} parent=11 // pred_fallthru
          _
        // Predicated region
        $region29: #{tpu_custom_call.1} parent=11 // pred_check
          %p348 = pneg %p180
        $region30: #{tpu_custom_call.1} parent=11 // pred_check_branch
          %350 = sbr.rel (%p348) target = $region32
        $region31: #{tpu_custom_call.1} parent=11 // pred_region
          _
        $region32: #{tpu_custom_call.1} parent=11 // pred_fallthru
          _
        // Predicated region
        $region33: #{tpu_custom_call.1} parent=11 // pred_check
          %p351 = pneg %p201
        $region34: #{tpu_custom_call.1} parent=11 // pred_check_branch
          %353 = sbr.rel (%p351) target = $region36
        $region35: #{tpu_custom_call.1} parent=11 // pred_region
          _
        $region36: #{tpu_custom_call.1} parent=11 // pred_fallthru
          _
        // Predicated region
        $region37: #{tpu_custom_call.1} parent=11 // pred_check
          %p354 = pneg %p222
        $region38: #{tpu_custom_call.1} parent=11 // pred_check_branch
          %356 = sbr.rel (%p354) target = $region40
        $region39: #{tpu_custom_call.1} parent=11 // pred_region
          %s358 = ssub.s32 2048, 2048
          %359 = vsyncadd [#allocation6], %s358
          %s360 = sshll.u32 [#allocation5], 4
          %s361 = int_to_ptr.vmem [resolvable:$true] %s360
          %366 = dma.hbm_to_vmem [thread:$0]  %s8, 2048, %s361, [#allocation6], 128, 128, 8
        $region40: #{tpu_custom_call.1} parent=11 // pred_fallthru
          _
        // Predicated region
        $region41: #{tpu_custom_call.1} parent=11 // pred_check
          %p367 = pneg %p243
        $region42: #{tpu_custom_call.1} parent=11 // pred_check_branch
          %369 = sbr.rel (%p367) target = $region44
        $region43: #{tpu_custom_call.1} parent=11 // pred_region
          _
        $region44: #{tpu_custom_call.1} parent=11 // pred_fallthru
          _
        // Predicated region
        $region45: #{tpu_custom_call.1} parent=11 // pred_check
          %p370 = pneg %p264
        $region46: #{tpu_custom_call.1} parent=11 // pred_check_branch
          %372 = sbr.rel (%p370) target = $region48
        $region47: #{tpu_custom_call.1} parent=11 // pred_region
          _
        $region48: #{tpu_custom_call.1} parent=11 // pred_fallthru
          _
        // Predicated region
        $region49: #{tpu_custom_call.1} parent=11 // pred_check
          %p373 = pneg %p285
        $region50: #{tpu_custom_call.1} parent=11 // pred_check_branch
          %375 = sbr.rel (%p373) target = $region52
        $region51: #{tpu_custom_call.1} parent=11 // pred_region
          _
        $region52: #{tpu_custom_call.1} parent=11 // pred_fallthru
          _
      $region12: #{tpu_custom_call.1} parent=5 // pred_fallthru
        _
      %p376 = scmp.lt.s32.totalorder %s23, 2
      // Predicated region
      $region53: #{tpu_custom_call.1} parent=5 // pred_check
        %p377 = pneg %p376
      $region54: #{tpu_custom_call.1} parent=5 // pred_check_branch
        %379 = sbr.rel (%p377) target = $region56
      $region55: #{tpu_custom_call.1} parent=5 // pred_region
        // Predicated region
        $region57: #{tpu_custom_call.1} parent=55 // pred_check
          %p380 = pneg %p43
        $region58: #{tpu_custom_call.1} parent=55 // pred_check_branch
          %382 = sbr.rel (%p380) target = $region60
        $region59: #{tpu_custom_call.1} parent=55 // pred_region
          %p383 = scmp.lt.s32.totalorder %s23, 1
          %s384 = scalar_select %p383, %s23, 1
          %s385 = smul.addr %s384, 8
          %s386 = smul.addr %s385, 4
          %s387 = scalar_lea.vmem %s0, %s386
        $region60: #{tpu_custom_call.1} parent=55 // pred_fallthru
          _
        // Predicated region
        $region61: #{tpu_custom_call.1} parent=55 // pred_check
          %p388 = pneg %p69
        $region62: #{tpu_custom_call.1} parent=55 // pred_check_branch
          %390 = sbr.rel (%p388) target = $region64
        $region63: #{tpu_custom_call.1} parent=55 // pred_region
          %p391 = scmp.lt.s32.totalorder %s23, 1
          %s392 = scalar_select %p391, %s23, 1
          %s393 = smul.addr %s392, 8
          %s394 = smul.addr %s393, 4
          %s395 = scalar_lea.vmem %s1, %s394
        $region64: #{tpu_custom_call.1} parent=55 // pred_fallthru
          _
      $region56: #{tpu_custom_call.1} parent=5 // pred_fallthru
        _
      %p396 = scmp.le.s32.totalorder 1, %s23
      %p397 = scmp.lt.s32.totalorder %s23, 3
      %p398 = pnand %p396, %p397
      %p399 = pneg %p398
      // Predicated region
      $region65: #{tpu_custom_call.1} parent=5 // pred_check
        _
      $region66: #{tpu_custom_call.1} parent=5 // pred_check_branch
        %401 = sbr.rel (%p398) target = $region68
      $region67: #{tpu_custom_call.1} parent=5 // pred_region
        %s402 = ssub.s32 %s23, 1
        // Predicated region
        $region69: #{tpu_custom_call.1} parent=67 // pred_check
          %p403 = pneg %p138
        $region70: #{tpu_custom_call.1} parent=67 // pred_check_branch
          %405 = sbr.rel (%p403) target = $region72
        $region71: #{tpu_custom_call.1} parent=67 // pred_region
          %406 = dma.done [#allocation3], 512
        $region72: #{tpu_custom_call.1} parent=67 // pred_fallthru
          _
        // Predicated region
        $region73: #{tpu_custom_call.1} parent=67 // pred_check
          %p407 = pneg %p222
        $region74: #{tpu_custom_call.1} parent=67 // pred_check_branch
          %409 = sbr.rel (%p407) target = $region76
        $region75: #{tpu_custom_call.1} parent=67 // pred_region
          %410 = dma.done [#allocation6], 2048
        $region76: #{tpu_custom_call.1} parent=67 // pred_fallthru
          _
        %p411 = scmp.lt.s32.totalorder %s28, 1
        %s412 = scalar_select %p411, %s28, 1
        %s413 = smul.addr %s412, 8
        %s414 = smul.addr %s413, 4
        %s415 = scalar_lea.vmem %s0, %s414
        %p416 = pneg %p49
        %p417 = pneg %p46
        %p418 = scmp.lt.s32.totalorder %s28, 1
        %s419 = scalar_select %p418, %s28, 1
        %s420 = smul.addr %s419, 8
        %s421 = smul.addr %s420, 4
        %s422 = scalar_lea.vmem %s1, %s421
        %p423 = pneg %p75
        %p424 = pneg %p72
        %p425 = pneg %p96
        %p426 = pneg %p93
        %p427 = pneg %p117
        %p428 = pneg %p114
        %p429 = pneg %p138
        %p430 = pneg %p135
        %p431 = pneg %p159
        %p432 = pneg %p156
        %p433 = pneg %p180
        %p434 = pneg %p177
        %p435 = pneg %p201
        %p436 = pneg %p198
        %p437 = pneg %p222
        %p438 = pneg %p219
        %p439 = pneg %p243
        %p440 = pneg %p240
        %p441 = pneg %p264
        %p442 = pneg %p261
        %p443 = pneg %p285
        %p444 = pneg %p282
        %p445 = pneg %p311
        %p446 = pneg %p308
        %s447 = sand.u32 %s298, 1
        %s448 = scalar_lea.sflag [#allocation4], %s447
        %s449 = sand.u32 %s298, 1
        %s450 = scalar_lea.vmem [#allocation7], %s449
        %p451 = scmp.lt.s32.totalorder %s28, 1
        %s452 = scalar_select %p451, %s28, 1
        %s453 = smul.addr %s452, 8
        %s454 = smul.addr %s453, 4
        %s455 = scalar_lea.vmem %s0, %s454
        %p456 = scmp.lt.s32.totalorder %s28, 1
        %s457 = scalar_select %p456, %s28, 1
        %s458 = smul.addr %s457, 8
        %s459 = smul.addr %s458, 4
        %s460 = scalar_lea.vmem %s1, %s459
        %v461 = vld [vmem:[%s455] sm:$0xf]
        %v462 = vld [vmem:[%s455 + $0x4] sm:$0xf]
        %v463 = vld [vmem:[%s455 + $0x8] sm:$0xf]
        %v464 = vld [vmem:[%s455 + $0xc] sm:$0xf]
        %v465 = vld [vmem:[%s455 + $0x10] sm:$0xf]
        %v466 = vld [vmem:[%s455 + $0x14] sm:$0xf]
        %v467 = vld [vmem:[%s455 + $0x18] sm:$0xf]
        %v468 = vld [vmem:[%s455 + $0x1c] sm:$0xf]
        %v469 = vld [vmem:[%s460] sm:$0xf]
        %v470 = vld [vmem:[%s460 + $0x4] sm:$0xf]
        %v471 = vld [vmem:[%s460 + $0x8] sm:$0xf]
        %v472 = vld [vmem:[%s460 + $0xc] sm:$0xf]
        %v473 = vld [vmem:[%s460 + $0x10] sm:$0xf]
        %v474 = vld [vmem:[%s460 + $0x14] sm:$0xf]
        %v475 = vld [vmem:[%s460 + $0x18] sm:$0xf]
        %v476 = vld [vmem:[%s460 + $0x1c] sm:$0xf]
        %v477 = vld [vmem:[%s2] sm:$0xff]
        %v478 = vld [vmem:[%s2 + $0x8] sm:$0xff]
        %v479 = vld [vmem:[%s2 + $0x10] sm:$0xff]
        %v480 = vld [vmem:[%s2 + $0x18] sm:$0xff]
        %v481 = vld [vmem:[%s2 + $0x20] sm:$0xff]
        %v482 = vld [vmem:[%s2 + $0x28] sm:$0xff]
        %v483 = vld [vmem:[%s2 + $0x30] sm:$0xff]
        %v484 = vld [vmem:[%s2 + $0x38] sm:$0xff]
        %v485 = vld [vmem:[%s2 + $0x40] sm:$0xff]
        %v486 = vld [vmem:[%s2 + $0x48] sm:$0xff]
        %v487 = vld [vmem:[%s2 + $0x50] sm:$0xff]
        %v488 = vld [vmem:[%s2 + $0x58] sm:$0xff]
        %v489 = vld [vmem:[%s2 + $0x60] sm:$0xff]
        %v490 = vld [vmem:[%s2 + $0x68] sm:$0xff]
        %v491 = vld [vmem:[%s2 + $0x70] sm:$0xff]
        %v492 = vld [vmem:[%s2 + $0x78] sm:$0xff]
        %v493 = vld [vmem:[%s3] sm:$0xf]
        %v494 = vlaneseq
        %v495 = vshrl.u32 %v494, 7
        %v496 = vsub.s32 0, %v495
        %v497 = vrot.slane %v493, %v496
        %v506 = vcombine.low %v461, %v462
        %v507 = vcombine.low %v463, %v464
        %v508 = vcombine.low %v465, %v466
        %v509 = vcombine.low %v467, %v468
        %v511 = vcombine.low %v497, %v497
        %vm513 = vcmask 261120
        %v514 = vsel %vm513, %v506, 0
        %v516 = vsel %vm513, %v507, 0
        %v518 = vsel %vm513, %v508, 0
        %v520 = vsel %vm513, %v509, 0
        %522 = vmatprep.subr.mxu0 0.0
        %523 = vmatpush1.msra.mxu0 0.0
        %524 = vmatprep.subr.mxu0 0.0
        %525 = vmatpush1.msra.mxu0 0.0
        %526 = vmatprep.subr.mxu0 0.0
        %527 = vmatpush1.msra.mxu0 0.0
        %528 = vmatprep.subr.mxu0 0.0
        %529 = vmatpush1.msra.mxu0 0.0
        %530 = vmatprep.subr.mxu0 0.0
        %531 = vmatpush1.msra.mxu0 0.0
        %532 = vmatprep.subr.mxu0 0.0
        %533 = vmatpush1.msra.mxu0 0.0
        %534 = vmatprep.subr.mxu0 0.0
        %535 = vmatpush1.msra.mxu0 0.0
        %536 = vmatprep.subr.mxu0 0.0
        %537 = vmatpush1.msra.mxu0 0.0
        %538 = vmatprep.subr.mxu0 0.0
        %539 = vmatpush1.msra.mxu0 0.0
        %540 = vmatprep.subr.mxu0 0.0
        %541 = vmatpush1.msra.mxu0 0.0
        %542 = vmatprep.subr.mxu0 0.0
        %543 = vmatpush1.msra.mxu0 0.0
        %544 = vmatprep.subr.mxu0 0.0
        %545 = vmatpush1.msra.mxu0 0.0
        %546 = vmatprep.subr.mxu0 0.0
        %547 = vmatpush1.msra.mxu0 %v480
        %548 = vmatprep.subr.mxu0 0.0
        %549 = vmatpush1.msra.mxu0 %v479
        %550 = vmatprep.subr.mxu0 0.0
        %551 = vmatpush1.msra.mxu0 %v478
        %552 = vmatprep.subr.mxu0 0.0
        %553 = vmatpush1.msra.mxu0 %v477
        %554 = vmatprep.subr.mxu0 0.0
        %555 = vmatpush2.msra.mxu0 0.0
        %556 = vmatprep.subr.mxu0 0.0
        %557 = vmatpush2.msra.mxu0 0.0
        %558 = vmatprep.subr.mxu0 0.0
        %559 = vmatpush2.msra.mxu0 0.0
        %560 = vmatprep.subr.mxu0 0.0
        %561 = vmatpush2.msra.mxu0 0.0
        %562 = vmatprep.subr.mxu0 0.0
        %563 = vmatpush2.msra.mxu0 0.0
        %564 = vmatprep.subr.mxu0 0.0
        %565 = vmatpush2.msra.mxu0 0.0
        %566 = vmatprep.subr.mxu0 0.0
        %567 = vmatpush2.msra.mxu0 0.0
        %568 = vmatprep.subr.mxu0 0.0
        %569 = vmatpush2.msra.mxu0 0.0
        %570 = vmatprep.subr.mxu0 0.0
        %571 = vmatpush2.msra.mxu0 0.0
        %572 = vmatprep.subr.mxu0 0.0
        %573 = vmatpush2.msra.mxu0 0.0
        %574 = vmatprep.subr.mxu0 0.0
        %575 = vmatpush2.msra.mxu0 0.0
        %576 = vmatprep.subr.mxu0 0.0
        %577 = vmatpush2.msra.mxu0 0.0
        %578 = vmatprep.subr.mxu0 0.0
        %579 = vmatpush2.msra.mxu0 0.0
        %580 = vmatprep.subr.mxu0 0.0
        %581 = vmatpush2.msra.mxu0 0.0
        %582 = vmatprep.subr.mxu0 0.0
        %583 = vmatpush2.msra.mxu0 0.0
        %584 = vmatprep.subr.mxu0 0.0
        %585 = vmatpush2.msra.mxu0 0.0
        %586 = vmatprep.mubr.f32.mxu0 0.0
        %587 = vmatmul.mubr.f32.gmra.mxu0 %v514
        %v588 = vpop.f32.mrf.mxu0
        %v589 = vadd.f32 %v511, %v588
        %v590 = vpop.f32.mrf.mxu0
        %591 = vmatprep.mubr.f32.mxu0 0.0
        %592 = vmatmul.mubr.f32.gmra.mxu0 %v516
        %v593 = vpop.f32.mrf.mxu0
        %v594 = vadd.f32 %v511, %v593
        %v595 = vpop.f32.mrf.mxu0
        %596 = vmatprep.mubr.f32.mxu0 0.0
        %597 = vmatmul.mubr.f32.gmra.mxu0 %v518
        %v598 = vpop.f32.mrf.mxu0
        %v599 = vadd.f32 %v511, %v598
        %v600 = vpop.f32.mrf.mxu0
        %601 = vmatprep.mubr.f32.mxu0 0.0
        %602 = vmatmul.mubr.f32.gmra.mxu0 %v520
        %v603 = vpop.f32.mrf.mxu0
        %v604 = vadd.f32 %v511, %v603
        %v605 = vpop.f32.mrf.mxu0
        %606 = vdwg.mxu0
        %v611 = vcombine.high %v589, %v589
        %v612 = vcombine.high %v594, %v594
        %v613 = vcombine.high %v599, %v599
        %v614 = vcombine.high %v604, %v604
        %v615 = vlaneseq
        %v616 = vshrl.u32 %v615, 7
        %v617 = vsub.s32 1, %v616
        %v618 = vrot.slane %v493, %v617
        %v620 = vcombine.low %v618, %v618
        %622 = vmatprep.subr.mxu0 0.0
        %623 = vmatpush1.msra.mxu0 0.0
        %624 = vmatprep.subr.mxu0 0.0
        %625 = vmatpush1.msra.mxu0 0.0
        %626 = vmatprep.subr.mxu0 0.0
        %627 = vmatpush1.msra.mxu0 0.0
        %628 = vmatprep.subr.mxu0 0.0
        %629 = vmatpush1.msra.mxu0 0.0
        %630 = vmatprep.subr.mxu0 0.0
        %631 = vmatpush1.msra.mxu0 0.0
        %632 = vmatprep.subr.mxu0 0.0
        %633 = vmatpush1.msra.mxu0 0.0
        %634 = vmatprep.subr.mxu0 0.0
        %635 = vmatpush1.msra.mxu0 0.0
        %636 = vmatprep.subr.mxu0 0.0
        %637 = vmatpush1.msra.mxu0 0.0
        %638 = vmatprep.subr.mxu0 0.0
        %639 = vmatpush1.msra.mxu0 0.0
        %640 = vmatprep.subr.mxu0 0.0
        %641 = vmatpush1.msra.mxu0 0.0
        %642 = vmatprep.subr.mxu0 0.0
        %643 = vmatpush1.msra.mxu0 0.0
        %644 = vmatprep.subr.mxu0 0.0
        %645 = vmatpush1.msra.mxu0 0.0
        %646 = vmatprep.subr.mxu0 0.0
        %647 = vmatpush1.msra.mxu0 %v484
        %648 = vmatprep.subr.mxu0 0.0
        %649 = vmatpush1.msra.mxu0 %v483
        %650 = vmatprep.subr.mxu0 0.0
        %651 = vmatpush1.msra.mxu0 %v482
        %652 = vmatprep.subr.mxu0 0.0
        %653 = vmatpush1.msra.mxu0 %v481
        %654 = vmatprep.subr.mxu0 0.0
        %655 = vmatpush2.msra.mxu0 0.0
        %656 = vmatprep.subr.mxu0 0.0
        %657 = vmatpush2.msra.mxu0 0.0
        %658 = vmatprep.subr.mxu0 0.0
        %659 = vmatpush2.msra.mxu0 0.0
        %660 = vmatprep.subr.mxu0 0.0
        %661 = vmatpush2.msra.mxu0 0.0
        %662 = vmatprep.subr.mxu0 0.0
        %663 = vmatpush2.msra.mxu0 0.0
        %664 = vmatprep.subr.mxu0 0.0
        %665 = vmatpush2.msra.mxu0 0.0
        %666 = vmatprep.subr.mxu0 0.0
        %667 = vmatpush2.msra.mxu0 0.0
        %668 = vmatprep.subr.mxu0 0.0
        %669 = vmatpush2.msra.mxu0 0.0
        %670 = vmatprep.subr.mxu0 0.0
        %671 = vmatpush2.msra.mxu0 0.0
        %672 = vmatprep.subr.mxu0 0.0
        %673 = vmatpush2.msra.mxu0 0.0
        %674 = vmatprep.subr.mxu0 0.0
        %675 = vmatpush2.msra.mxu0 0.0
        %676 = vmatprep.subr.mxu0 0.0
        %677 = vmatpush2.msra.mxu0 0.0
        %678 = vmatprep.subr.mxu0 0.0
        %679 = vmatpush2.msra.mxu0 0.0
        %680 = vmatprep.subr.mxu0 0.0
        %681 = vmatpush2.msra.mxu0 0.0
        %682 = vmatprep.subr.mxu0 0.0
        %683 = vmatpush2.msra.mxu0 0.0
        %684 = vmatprep.subr.mxu0 0.0
        %685 = vmatpush2.msra.mxu0 0.0
        %686 = vmatprep.mubr.f32.mxu0 0.0
        %687 = vmatmul.mubr.f32.gmra.mxu0 %v514
        %v688 = vpop.f32.mrf.mxu0
        %v689 = vadd.f32 %v620, %v688
        %v690 = vpop.f32.mrf.mxu0
        %691 = vmatprep.mubr.f32.mxu0 0.0
        %692 = vmatmul.mubr.f32.gmra.mxu0 %v516
        %v693 = vpop.f32.mrf.mxu0
        %v694 = vadd.f32 %v620, %v693
        %v695 = vpop.f32.mrf.mxu0
        %696 = vmatprep.mubr.f32.mxu0 0.0
        %697 = vmatmul.mubr.f32.gmra.mxu0 %v518
        %v698 = vpop.f32.mrf.mxu0
        %v699 = vadd.f32 %v620, %v698
        %v700 = vpop.f32.mrf.mxu0
        %701 = vmatprep.mubr.f32.mxu0 0.0
        %702 = vmatmul.mubr.f32.gmra.mxu0 %v520
        %v703 = vpop.f32.mrf.mxu0
        %v704 = vadd.f32 %v620, %v703
        %v705 = vpop.f32.mrf.mxu0
        %706 = vdwg.mxu0
        %v711 = vcombine.high %v689, %v689
        %v712 = vcombine.high %v694, %v694
        %v713 = vcombine.high %v699, %v699
        %v714 = vcombine.high %v704, %v704
        %v715 = vlaneseq
        %v716 = vshrl.u32 %v715, 7
        %v717 = vsub.s32 2, %v716
        %v718 = vrot.slane %v493, %v717
        %v720 = vcombine.low %v718, %v718
        %722 = vmatprep.subr.mxu0 0.0
        %723 = vmatpush1.msra.mxu0 0.0
        %724 = vmatprep.subr.mxu0 0.0
        %725 = vmatpush1.msra.mxu0 0.0
        %726 = vmatprep.subr.mxu0 0.0
        %727 = vmatpush1.msra.mxu0 0.0
        %728 = vmatprep.subr.mxu0 0.0
        %729 = vmatpush1.msra.mxu0 0.0
        %730 = vmatprep.subr.mxu0 0.0
        %731 = vmatpush1.msra.mxu0 0.0
        %732 = vmatprep.subr.mxu0 0.0
        %733 = vmatpush1.msra.mxu0 0.0
        %734 = vmatprep.subr.mxu0 0.0
        %735 = vmatpush1.msra.mxu0 0.0
        %736 = vmatprep.subr.mxu0 0.0
        %737 = vmatpush1.msra.mxu0 0.0
        %738 = vmatprep.subr.mxu0 0.0
        %739 = vmatpush1.msra.mxu0 0.0
        %740 = vmatprep.subr.mxu0 0.0
        %741 = vmatpush1.msra.mxu0 0.0
        %742 = vmatprep.subr.mxu0 0.0
        %743 = vmatpush1.msra.mxu0 0.0
        %744 = vmatprep.subr.mxu0 0.0
        %745 = vmatpush1.msra.mxu0 0.0
        %746 = vmatprep.subr.mxu0 0.0
        %747 = vmatpush1.msra.mxu0 %v488
        %748 = vmatprep.subr.mxu0 0.0
        %749 = vmatpush1.msra.mxu0 %v487
        %750 = vmatprep.subr.mxu0 0.0
        %751 = vmatpush1.msra.mxu0 %v486
        %752 = vmatprep.subr.mxu0 0.0
        %753 = vmatpush1.msra.mxu0 %v485
        %754 = vmatprep.subr.mxu0 0.0
        %755 = vmatpush2.msra.mxu0 0.0
        %756 = vmatprep.subr.mxu0 0.0
        %757 = vmatpush2.msra.mxu0 0.0
        %758 = vmatprep.subr.mxu0 0.0
        %759 = vmatpush2.msra.mxu0 0.0
        %760 = vmatprep.subr.mxu0 0.0
        %761 = vmatpush2.msra.mxu0 0.0
        %762 = vmatprep.subr.mxu0 0.0
        %763 = vmatpush2.msra.mxu0 0.0
        %764 = vmatprep.subr.mxu0 0.0
        %765 = vmatpush2.msra.mxu0 0.0
        %766 = vmatprep.subr.mxu0 0.0
        %767 = vmatpush2.msra.mxu0 0.0
        %768 = vmatprep.subr.mxu0 0.0
        %769 = vmatpush2.msra.mxu0 0.0
        %770 = vmatprep.subr.mxu0 0.0
        %771 = vmatpush2.msra.mxu0 0.0
        %772 = vmatprep.subr.mxu0 0.0
        %773 = vmatpush2.msra.mxu0 0.0
        %774 = vmatprep.subr.mxu0 0.0
        %775 = vmatpush2.msra.mxu0 0.0
        %776 = vmatprep.subr.mxu0 0.0
        %777 = vmatpush2.msra.mxu0 0.0
        %778 = vmatprep.subr.mxu0 0.0
        %779 = vmatpush2.msra.mxu0 0.0
        %780 = vmatprep.subr.mxu0 0.0
        %781 = vmatpush2.msra.mxu0 0.0
        %782 = vmatprep.subr.mxu0 0.0
        %783 = vmatpush2.msra.mxu0 0.0
        %784 = vmatprep.subr.mxu0 0.0
        %785 = vmatpush2.msra.mxu0 0.0
        %786 = vmatprep.mubr.f32.mxu0 0.0
        %787 = vmatmul.mubr.f32.gmra.mxu0 %v514
        %v788 = vpop.f32.mrf.mxu0
        %v789 = vadd.f32 %v720, %v788
        %v790 = vpop.f32.mrf.mxu0
        %791 = vmatprep.mubr.f32.mxu0 0.0
        %792 = vmatmul.mubr.f32.gmra.mxu0 %v516
        %v793 = vpop.f32.mrf.mxu0
        %v794 = vadd.f32 %v720, %v793
        %v795 = vpop.f32.mrf.mxu0
        %796 = vmatprep.mubr.f32.mxu0 0.0
        %797 = vmatmul.mubr.f32.gmra.mxu0 %v518
        %v798 = vpop.f32.mrf.mxu0
        %v799 = vadd.f32 %v720, %v798
        %v800 = vpop.f32.mrf.mxu0
        %801 = vmatprep.mubr.f32.mxu0 0.0
        %802 = vmatmul.mubr.f32.gmra.mxu0 %v520
        %v803 = vpop.f32.mrf.mxu0
        %v804 = vadd.f32 %v720, %v803
        %v805 = vpop.f32.mrf.mxu0
        %806 = vdwg.mxu0
        %v811 = vcombine.high %v789, %v789
        %v812 = vcombine.high %v794, %v794
        %v813 = vcombine.high %v799, %v799
        %v814 = vcombine.high %v804, %v804
        %vm815 = vcmask 64512
        %v816 = vsel %vm815, %v589, 0
        %v818 = vsel %vm815, %v689, 0
        %820 = vmatprep.subr.mxu0 0.0
        %821 = vmatpush1.xpose.msra.mxu0 0.0
        %822 = vmatprep.subr.mxu0 0.0
        %823 = vmatpush1.xpose.msra.mxu0 0.0
        %824 = vmatprep.subr.mxu0 0.0
        %825 = vmatpush1.xpose.msra.mxu0 0.0
        %826 = vmatprep.subr.mxu0 0.0
        %827 = vmatpush1.xpose.msra.mxu0 0.0
        %828 = vmatprep.subr.mxu0 0.0
        %829 = vmatpush1.xpose.msra.mxu0 0.0
        %830 = vmatprep.subr.mxu0 0.0
        %831 = vmatpush1.xpose.msra.mxu0 0.0
        %832 = vmatprep.subr.mxu0 0.0
        %833 = vmatpush1.xpose.msra.mxu0 0.0
        %834 = vmatprep.subr.mxu0 0.0
        %835 = vmatpush1.xpose.msra.mxu0 0.0
        %836 = vmatprep.subr.mxu0 0.0
        %837 = vmatpush1.xpose.msra.mxu0 0.0
        %838 = vmatprep.subr.mxu0 0.0
        %839 = vmatpush1.xpose.msra.mxu0 0.0
        %840 = vmatprep.subr.mxu0 0.0
        %841 = vmatpush1.xpose.msra.mxu0 0.0
        %842 = vmatprep.subr.mxu0 0.0
        %843 = vmatpush1.xpose.msra.mxu0 0.0
        %844 = vmatprep.subr.mxu0 0.0
        %845 = vmatpush1.xpose.msra.mxu0 0.0
        %846 = vmatprep.subr.mxu0 0.0
        %847 = vmatpush1.xpose.msra.mxu0 0.0
        %848 = vmatprep.subr.mxu0 0.0
        %849 = vmatpush1.xpose.msra.mxu0 0.0
        %850 = vmatprep.subr.mxu0 0.0
        %851 = vmatpush1.xpose.msra.mxu0 %v818
        %852 = vmatprep.subr.mxu0 0.0
        %853 = vmatpush2.xpose.msra.mxu0 0.0
        %854 = vmatprep.subr.mxu0 0.0
        %855 = vmatpush2.xpose.msra.mxu0 0.0
        %856 = vmatprep.subr.mxu0 0.0
        %857 = vmatpush2.xpose.msra.mxu0 0.0
        %858 = vmatprep.subr.mxu0 0.0
        %859 = vmatpush2.xpose.msra.mxu0 0.0
        %860 = vmatprep.subr.mxu0 0.0
        %861 = vmatpush2.xpose.msra.mxu0 0.0
        %862 = vmatprep.subr.mxu0 0.0
        %863 = vmatpush2.xpose.msra.mxu0 0.0
        %864 = vmatprep.subr.mxu0 0.0
        %865 = vmatpush2.xpose.msra.mxu0 0.0
        %866 = vmatprep.subr.mxu0 0.0
        %867 = vmatpush2.xpose.msra.mxu0 0.0
        %868 = vmatprep.subr.mxu0 0.0
        %869 = vmatpush2.xpose.msra.mxu0 0.0
        %870 = vmatprep.subr.mxu0 0.0
        %871 = vmatpush2.xpose.msra.mxu0 0.0
        %872 = vmatprep.subr.mxu0 0.0
        %873 = vmatpush2.xpose.msra.mxu0 0.0
        %874 = vmatprep.subr.mxu0 0.0
        %875 = vmatpush2.xpose.msra.mxu0 0.0
        %876 = vmatprep.subr.mxu0 0.0
        %877 = vmatpush2.xpose.msra.mxu0 0.0
        %878 = vmatprep.subr.mxu0 0.0
        %879 = vmatpush2.xpose.msra.mxu0 0.0
        %880 = vmatprep.subr.mxu0 0.0
        %881 = vmatpush2.xpose.msra.mxu0 0.0
        %882 = vmatprep.subr.mxu0 0.0
        %883 = vmatpush2.xpose.msra.mxu0 0.0
        %884 = vmatprep.mubr.f32.mxu0 0.0
        %885 = vmatmul.mubr.f32.gmra.mxu0 %v816
        %v886 = vpop.f32.mrf.mxu0
        %v887 = vadd.f32 0.0, %v886
        %v888 = vpop.f32.mrf.mxu0
        %889 = vdwg.mxu0
        %v890 = vsel %vm815, %v611, 0
        %v892 = vsel %vm815, %v711, 0
        %894 = vmatprep.subr.mxu0 0.0
        %895 = vmatpush1.xpose.msra.mxu0 0.0
        %896 = vmatprep.subr.mxu0 0.0
        %897 = vmatpush1.xpose.msra.mxu0 0.0
        %898 = vmatprep.subr.mxu0 0.0
        %899 = vmatpush1.xpose.msra.mxu0 0.0
        %900 = vmatprep.subr.mxu0 0.0
        %901 = vmatpush1.xpose.msra.mxu0 0.0
        %902 = vmatprep.subr.mxu0 0.0
        %903 = vmatpush1.xpose.msra.mxu0 0.0
        %904 = vmatprep.subr.mxu0 0.0
        %905 = vmatpush1.xpose.msra.mxu0 0.0
        %906 = vmatprep.subr.mxu0 0.0
        %907 = vmatpush1.xpose.msra.mxu0 0.0
        %908 = vmatprep.subr.mxu0 0.0
        %909 = vmatpush1.xpose.msra.mxu0 0.0
        %910 = vmatprep.subr.mxu0 0.0
        %911 = vmatpush1.xpose.msra.mxu0 0.0
        %912 = vmatprep.subr.mxu0 0.0
        %913 = vmatpush1.xpose.msra.mxu0 0.0
        %914 = vmatprep.subr.mxu0 0.0
        %915 = vmatpush1.xpose.msra.mxu0 0.0
        %916 = vmatprep.subr.mxu0 0.0
        %917 = vmatpush1.xpose.msra.mxu0 0.0
        %918 = vmatprep.subr.mxu0 0.0
        %919 = vmatpush1.xpose.msra.mxu0 0.0
        %920 = vmatprep.subr.mxu0 0.0
        %921 = vmatpush1.xpose.msra.mxu0 0.0
        %922 = vmatprep.subr.mxu0 0.0
        %923 = vmatpush1.xpose.msra.mxu0 0.0
        %924 = vmatprep.subr.mxu0 0.0
        %925 = vmatpush1.xpose.msra.mxu0 %v892
        %926 = vmatprep.subr.mxu0 0.0
        %927 = vmatpush2.xpose.msra.mxu0 0.0
        %928 = vmatprep.subr.mxu0 0.0
        %929 = vmatpush2.xpose.msra.mxu0 0.0
        %930 = vmatprep.subr.mxu0 0.0
        %931 = vmatpush2.xpose.msra.mxu0 0.0
        %932 = vmatprep.subr.mxu0 0.0
        %933 = vmatpush2.xpose.msra.mxu0 0.0
        %934 = vmatprep.subr.mxu0 0.0
        %935 = vmatpush2.xpose.msra.mxu0 0.0
        %936 = vmatprep.subr.mxu0 0.0
        %937 = vmatpush2.xpose.msra.mxu0 0.0
        %938 = vmatprep.subr.mxu0 0.0
        %939 = vmatpush2.xpose.msra.mxu0 0.0
        %940 = vmatprep.subr.mxu0 0.0
        %941 = vmatpush2.xpose.msra.mxu0 0.0
        %942 = vmatprep.subr.mxu0 0.0
        %943 = vmatpush2.xpose.msra.mxu0 0.0
        %944 = vmatprep.subr.mxu0 0.0
        %945 = vmatpush2.xpose.msra.mxu0 0.0
        %946 = vmatprep.subr.mxu0 0.0
        %947 = vmatpush2.xpose.msra.mxu0 0.0
        %948 = vmatprep.subr.mxu0 0.0
        %949 = vmatpush2.xpose.msra.mxu0 0.0
        %950 = vmatprep.subr.mxu0 0.0
        %951 = vmatpush2.xpose.msra.mxu0 0.0
        %952 = vmatprep.subr.mxu0 0.0
        %953 = vmatpush2.xpose.msra.mxu0 0.0
        %954 = vmatprep.subr.mxu0 0.0
        %955 = vmatpush2.xpose.msra.mxu0 0.0
        %956 = vmatprep.subr.mxu0 0.0
        %957 = vmatpush2.xpose.msra.mxu0 0.0
        %958 = vmatprep.mubr.f32.mxu0 0.0
        %959 = vmatmul.mubr.f32.gmra.mxu0 %v890
        %v960 = vpop.f32.mrf.mxu0
        %v961 = vadd.f32 0.0, %v960
        %v962 = vpop.f32.mrf.mxu0
        %963 = vdwg.mxu0
        %v964 = vsel %vm815, %v594, 0
        %v966 = vsel %vm815, %v694, 0
        %968 = vmatprep.subr.mxu0 0.0
        %969 = vmatpush1.xpose.msra.mxu0 0.0
        %970 = vmatprep.subr.mxu0 0.0
        %971 = vmatpush1.xpose.msra.mxu0 0.0
        %972 = vmatprep.subr.mxu0 0.0
        %973 = vmatpush1.xpose.msra.mxu0 0.0
        %974 = vmatprep.subr.mxu0 0.0
        %975 = vmatpush1.xpose.msra.mxu0 0.0
        %976 = vmatprep.subr.mxu0 0.0
        %977 = vmatpush1.xpose.msra.mxu0 0.0
        %978 = vmatprep.subr.mxu0 0.0
        %979 = vmatpush1.xpose.msra.mxu0 0.0
        %980 = vmatprep.subr.mxu0 0.0
        %981 = vmatpush1.xpose.msra.mxu0 0.0
        %982 = vmatprep.subr.mxu0 0.0
        %983 = vmatpush1.xpose.msra.mxu0 0.0
        %984 = vmatprep.subr.mxu0 0.0
        %985 = vmatpush1.xpose.msra.mxu0 0.0
        %986 = vmatprep.subr.mxu0 0.0
        %987 = vmatpush1.xpose.msra.mxu0 0.0
        %988 = vmatprep.subr.mxu0 0.0
        %989 = vmatpush1.xpose.msra.mxu0 0.0
        %990 = vmatprep.subr.mxu0 0.0
        %991 = vmatpush1.xpose.msra.mxu0 0.0
        %992 = vmatprep.subr.mxu0 0.0
        %993 = vmatpush1.xpose.msra.mxu0 0.0
        %994 = vmatprep.subr.mxu0 0.0
        %995 = vmatpush1.xpose.msra.mxu0 0.0
        %996 = vmatprep.subr.mxu0 0.0
        %997 = vmatpush1.xpose.msra.mxu0 0.0
        %998 = vmatprep.subr.mxu0 0.0
        %999 = vmatpush1.xpose.msra.mxu0 %v966
        %1000 = vmatprep.subr.mxu0 0.0
        %1001 = vmatpush2.xpose.msra.mxu0 0.0
        %1002 = vmatprep.subr.mxu0 0.0
        %1003 = vmatpush2.xpose.msra.mxu0 0.0
        %1004 = vmatprep.subr.mxu0 0.0
        %1005 = vmatpush2.xpose.msra.mxu0 0.0
        %1006 = vmatprep.subr.mxu0 0.0
        %1007 = vmatpush2.xpose.msra.mxu0 0.0
        %1008 = vmatprep.subr.mxu0 0.0
        %1009 = vmatpush2.xpose.msra.mxu0 0.0
        %1010 = vmatprep.subr.mxu0 0.0
        %1011 = vmatpush2.xpose.msra.mxu0 0.0
        %1012 = vmatprep.subr.mxu0 0.0
        %1013 = vmatpush2.xpose.msra.mxu0 0.0
        %1014 = vmatprep.subr.mxu0 0.0
        %1015 = vmatpush2.xpose.msra.mxu0 0.0
        %1016 = vmatprep.subr.mxu0 0.0
        %1017 = vmatpush2.xpose.msra.mxu0 0.0
        %1018 = vmatprep.subr.mxu0 0.0
        %1019 = vmatpush2.xpose.msra.mxu0 0.0
        %1020 = vmatprep.subr.mxu0 0.0
        %1021 = vmatpush2.xpose.msra.mxu0 0.0
        %1022 = vmatprep.subr.mxu0 0.0
        %1023 = vmatpush2.xpose.msra.mxu0 0.0
        %1024 = vmatprep.subr.mxu0 0.0
        %1025 = vmatpush2.xpose.msra.mxu0 0.0
        %1026 = vmatprep.subr.mxu0 0.0
        %1027 = vmatpush2.xpose.msra.mxu0 0.0
        %1028 = vmatprep.subr.mxu0 0.0
        %1029 = vmatpush2.xpose.msra.mxu0 0.0
        %1030 = vmatprep.subr.mxu0 0.0
        %1031 = vmatpush2.xpose.msra.mxu0 0.0
        %1032 = vmatprep.mubr.f32.mxu0 0.0
        %1033 = vmatmul.mubr.f32.gmra.mxu0 %v964
        %v1034 = vpop.f32.mrf.mxu0
        %v1035 = vadd.f32 0.0, %v1034
        %v1036 = vpop.f32.mrf.mxu0
        %1037 = vdwg.mxu0
        %v1038 = vsel %vm815, %v612, 0
        %v1040 = vsel %vm815, %v712, 0
        %1042 = vmatprep.subr.mxu0 0.0
        %1043 = vmatpush1.xpose.msra.mxu0 0.0
        %1044 = vmatprep.subr.mxu0 0.0
        %1045 = vmatpush1.xpose.msra.mxu0 0.0
        %1046 = vmatprep.subr.mxu0 0.0
        %1047 = vmatpush1.xpose.msra.mxu0 0.0
        %1048 = vmatprep.subr.mxu0 0.0
        %1049 = vmatpush1.xpose.msra.mxu0 0.0
        %1050 = vmatprep.subr.mxu0 0.0
        %1051 = vmatpush1.xpose.msra.mxu0 0.0
        %1052 = vmatprep.subr.mxu0 0.0
        %1053 = vmatpush1.xpose.msra.mxu0 0.0
        %1054 = vmatprep.subr.mxu0 0.0
        %1055 = vmatpush1.xpose.msra.mxu0 0.0
        %1056 = vmatprep.subr.mxu0 0.0
        %1057 = vmatpush1.xpose.msra.mxu0 0.0
        %1058 = vmatprep.subr.mxu0 0.0
        %1059 = vmatpush1.xpose.msra.mxu0 0.0
        %1060 = vmatprep.subr.mxu0 0.0
        %1061 = vmatpush1.xpose.msra.mxu0 0.0
        %1062 = vmatprep.subr.mxu0 0.0
        %1063 = vmatpush1.xpose.msra.mxu0 0.0
        %1064 = vmatprep.subr.mxu0 0.0
        %1065 = vmatpush1.xpose.msra.mxu0 0.0
        %1066 = vmatprep.subr.mxu0 0.0
        %1067 = vmatpush1.xpose.msra.mxu0 0.0
        %1068 = vmatprep.subr.mxu0 0.0
        %1069 = vmatpush1.xpose.msra.mxu0 0.0
        %1070 = vmatprep.subr.mxu0 0.0
        %1071 = vmatpush1.xpose.msra.mxu0 0.0
        %1072 = vmatprep.subr.mxu0 0.0
        %1073 = vmatpush1.xpose.msra.mxu0 %v1040
        %1074 = vmatprep.subr.mxu0 0.0
        %1075 = vmatpush2.xpose.msra.mxu0 0.0
        %1076 = vmatprep.subr.mxu0 0.0
        %1077 = vmatpush2.xpose.msra.mxu0 0.0
        %1078 = vmatprep.subr.mxu0 0.0
        %1079 = vmatpush2.xpose.msra.mxu0 0.0
        %1080 = vmatprep.subr.mxu0 0.0
        %1081 = vmatpush2.xpose.msra.mxu0 0.0
        %1082 = vmatprep.subr.mxu0 0.0
        %1083 = vmatpush2.xpose.msra.mxu0 0.0
        %1084 = vmatprep.subr.mxu0 0.0
        %1085 = vmatpush2.xpose.msra.mxu0 0.0
        %1086 = vmatprep.subr.mxu0 0.0
        %1087 = vmatpush2.xpose.msra.mxu0 0.0
        %1088 = vmatprep.subr.mxu0 0.0
        %1089 = vmatpush2.xpose.msra.mxu0 0.0
        %1090 = vmatprep.subr.mxu0 0.0
        %1091 = vmatpush2.xpose.msra.mxu0 0.0
        %1092 = vmatprep.subr.mxu0 0.0
        %1093 = vmatpush2.xpose.msra.mxu0 0.0
        %1094 = vmatprep.subr.mxu0 0.0
        %1095 = vmatpush2.xpose.msra.mxu0 0.0
        %1096 = vmatprep.subr.mxu0 0.0
        %1097 = vmatpush2.xpose.msra.mxu0 0.0
        %1098 = vmatprep.subr.mxu0 0.0
        %1099 = vmatpush2.xpose.msra.mxu0 0.0
        %1100 = vmatprep.subr.mxu0 0.0
        %1101 = vmatpush2.xpose.msra.mxu0 0.0
        %1102 = vmatprep.subr.mxu0 0.0
        %1103 = vmatpush2.xpose.msra.mxu0 0.0
        %1104 = vmatprep.subr.mxu0 0.0
        %1105 = vmatpush2.xpose.msra.mxu0 0.0
        %1106 = vmatprep.mubr.f32.mxu0 0.0
        %1107 = vmatmul.mubr.f32.gmra.mxu0 %v1038
        %v1108 = vpop.f32.mrf.mxu0
        %v1109 = vadd.f32 0.0, %v1108
        %v1110 = vpop.f32.mrf.mxu0
        %1111 = vdwg.mxu0
        %v1112 = vsel %vm815, %v599, 0
        %v1114 = vsel %vm815, %v699, 0
        %1116 = vmatprep.subr.mxu0 0.0
        %1117 = vmatpush1.xpose.msra.mxu0 0.0
        %1118 = vmatprep.subr.mxu0 0.0
        %1119 = vmatpush1.xpose.msra.mxu0 0.0
        %1120 = vmatprep.subr.mxu0 0.0
        %1121 = vmatpush1.xpose.msra.mxu0 0.0
        %1122 = vmatprep.subr.mxu0 0.0
        %1123 = vmatpush1.xpose.msra.mxu0 0.0
        %1124 = vmatprep.subr.mxu0 0.0
        %1125 = vmatpush1.xpose.msra.mxu0 0.0
        %1126 = vmatprep.subr.mxu0 0.0
        %1127 = vmatpush1.xpose.msra.mxu0 0.0
        %1128 = vmatprep.subr.mxu0 0.0
        %1129 = vmatpush1.xpose.msra.mxu0 0.0
        %1130 = vmatprep.subr.mxu0 0.0
        %1131 = vmatpush1.xpose.msra.mxu0 0.0
        %1132 = vmatprep.subr.mxu0 0.0
        %1133 = vmatpush1.xpose.msra.mxu0 0.0
        %1134 = vmatprep.subr.mxu0 0.0
        %1135 = vmatpush1.xpose.msra.mxu0 0.0
        %1136 = vmatprep.subr.mxu0 0.0
        %1137 = vmatpush1.xpose.msra.mxu0 0.0
        %1138 = vmatprep.subr.mxu0 0.0
        %1139 = vmatpush1.xpose.msra.mxu0 0.0
        %1140 = vmatprep.subr.mxu0 0.0
        %1141 = vmatpush1.xpose.msra.mxu0 0.0
        %1142 = vmatprep.subr.mxu0 0.0
        %1143 = vmatpush1.xpose.msra.mxu0 0.0
        %1144 = vmatprep.subr.mxu0 0.0
        %1145 = vmatpush1.xpose.msra.mxu0 0.0
        %1146 = vmatprep.subr.mxu0 0.0
        %1147 = vmatpush1.xpose.msra.mxu0 %v1114
        %1148 = vmatprep.subr.mxu0 0.0
        %1149 = vmatpush2.xpose.msra.mxu0 0.0
        %1150 = vmatprep.subr.mxu0 0.0
        %1151 = vmatpush2.xpose.msra.mxu0 0.0
        %1152 = vmatprep.subr.mxu0 0.0
        %1153 = vmatpush2.xpose.msra.mxu0 0.0
        %1154 = vmatprep.subr.mxu0 0.0
        %1155 = vmatpush2.xpose.msra.mxu0 0.0
        %1156 = vmatprep.subr.mxu0 0.0
        %1157 = vmatpush2.xpose.msra.mxu0 0.0
        %1158 = vmatprep.subr.mxu0 0.0
        %1159 = vmatpush2.xpose.msra.mxu0 0.0
        %1160 = vmatprep.subr.mxu0 0.0
        %1161 = vmatpush2.xpose.msra.mxu0 0.0
        %1162 = vmatprep.subr.mxu0 0.0
        %1163 = vmatpush2.xpose.msra.mxu0 0.0
        %1164 = vmatprep.subr.mxu0 0.0
        %1165 = vmatpush2.xpose.msra.mxu0 0.0
        %1166 = vmatprep.subr.mxu0 0.0
        %1167 = vmatpush2.xpose.msra.mxu0 0.0
        %1168 = vmatprep.subr.mxu0 0.0
        %1169 = vmatpush2.xpose.msra.mxu0 0.0
        %1170 = vmatprep.subr.mxu0 0.0
        %1171 = vmatpush2.xpose.msra.mxu0 0.0
        %1172 = vmatprep.subr.mxu0 0.0
        %1173 = vmatpush2.xpose.msra.mxu0 0.0
        %1174 = vmatprep.subr.mxu0 0.0
        %1175 = vmatpush2.xpose.msra.mxu0 0.0
        %1176 = vmatprep.subr.mxu0 0.0
        %1177 = vmatpush2.xpose.msra.mxu0 0.0
        %1178 = vmatprep.subr.mxu0 0.0
        %1179 = vmatpush2.xpose.msra.mxu0 0.0
        %1180 = vmatprep.mubr.f32.mxu0 0.0
        %1181 = vmatmul.mubr.f32.gmra.mxu0 %v1112
        %v1182 = vpop.f32.mrf.mxu0
        %v1183 = vadd.f32 0.0, %v1182
        %v1184 = vpop.f32.mrf.mxu0
        %1185 = vdwg.mxu0
        %v1186 = vsel %vm815, %v613, 0
        %v1188 = vsel %vm815, %v713, 0
        %1190 = vmatprep.subr.mxu0 0.0
        %1191 = vmatpush1.xpose.msra.mxu0 0.0
        %1192 = vmatprep.subr.mxu0 0.0
        %1193 = vmatpush1.xpose.msra.mxu0 0.0
        %1194 = vmatprep.subr.mxu0 0.0
        %1195 = vmatpush1.xpose.msra.mxu0 0.0
        %1196 = vmatprep.subr.mxu0 0.0
        %1197 = vmatpush1.xpose.msra.mxu0 0.0
        %1198 = vmatprep.subr.mxu0 0.0
        %1199 = vmatpush1.xpose.msra.mxu0 0.0
        %1200 = vmatprep.subr.mxu0 0.0
        %1201 = vmatpush1.xpose.msra.mxu0 0.0
        %1202 = vmatprep.subr.mxu0 0.0
        %1203 = vmatpush1.xpose.msra.mxu0 0.0
        %1204 = vmatprep.subr.mxu0 0.0
        %1205 = vmatpush1.xpose.msra.mxu0 0.0
        %1206 = vmatprep.subr.mxu0 0.0
        %1207 = vmatpush1.xpose.msra.mxu0 0.0
        %1208 = vmatprep.subr.mxu0 0.0
        %1209 = vmatpush1.xpose.msra.mxu0 0.0
        %1210 = vmatprep.subr.mxu0 0.0
        %1211 = vmatpush1.xpose.msra.mxu0 0.0
        %1212 = vmatprep.subr.mxu0 0.0
        %1213 = vmatpush1.xpose.msra.mxu0 0.0
        %1214 = vmatprep.subr.mxu0 0.0
        %1215 = vmatpush1.xpose.msra.mxu0 0.0
        %1216 = vmatprep.subr.mxu0 0.0
        %1217 = vmatpush1.xpose.msra.mxu0 0.0
        %1218 = vmatprep.subr.mxu0 0.0
        %1219 = vmatpush1.xpose.msra.mxu0 0.0
        %1220 = vmatprep.subr.mxu0 0.0
        %1221 = vmatpush1.xpose.msra.mxu0 %v1188
        %1222 = vmatprep.subr.mxu0 0.0
        %1223 = vmatpush2.xpose.msra.mxu0 0.0
        %1224 = vmatprep.subr.mxu0 0.0
        %1225 = vmatpush2.xpose.msra.mxu0 0.0
        %1226 = vmatprep.subr.mxu0 0.0
        %1227 = vmatpush2.xpose.msra.mxu0 0.0
        %1228 = vmatprep.subr.mxu0 0.0
        %1229 = vmatpush2.xpose.msra.mxu0 0.0
        %1230 = vmatprep.subr.mxu0 0.0
        %1231 = vmatpush2.xpose.msra.mxu0 0.0
        %1232 = vmatprep.subr.mxu0 0.0
        %1233 = vmatpush2.xpose.msra.mxu0 0.0
        %1234 = vmatprep.subr.mxu0 0.0
        %1235 = vmatpush2.xpose.msra.mxu0 0.0
        %1236 = vmatprep.subr.mxu0 0.0
        %1237 = vmatpush2.xpose.msra.mxu0 0.0
        %1238 = vmatprep.subr.mxu0 0.0
        %1239 = vmatpush2.xpose.msra.mxu0 0.0
        %1240 = vmatprep.subr.mxu0 0.0
        %1241 = vmatpush2.xpose.msra.mxu0 0.0
        %1242 = vmatprep.subr.mxu0 0.0
        %1243 = vmatpush2.xpose.msra.mxu0 0.0
        %1244 = vmatprep.subr.mxu0 0.0
        %1245 = vmatpush2.xpose.msra.mxu0 0.0
        %1246 = vmatprep.subr.mxu0 0.0
        %1247 = vmatpush2.xpose.msra.mxu0 0.0
        %1248 = vmatprep.subr.mxu0 0.0
        %1249 = vmatpush2.xpose.msra.mxu0 0.0
        %1250 = vmatprep.subr.mxu0 0.0
        %1251 = vmatpush2.xpose.msra.mxu0 0.0
        %1252 = vmatprep.subr.mxu0 0.0
        %1253 = vmatpush2.xpose.msra.mxu0 0.0
        %1254 = vmatprep.mubr.f32.mxu0 0.0
        %1255 = vmatmul.mubr.f32.gmra.mxu0 %v1186
        %v1256 = vpop.f32.mrf.mxu0
        %v1257 = vadd.f32 0.0, %v1256
        %v1258 = vpop.f32.mrf.mxu0
        %1259 = vdwg.mxu0
        %v1260 = vsel %vm815, %v604, 0
        %v1262 = vsel %vm815, %v704, 0
        %1264 = vmatprep.subr.mxu0 0.0
        %1265 = vmatpush1.xpose.msra.mxu0 0.0
        %1266 = vmatprep.subr.mxu0 0.0
        %1267 = vmatpush1.xpose.msra.mxu0 0.0
        %1268 = vmatprep.subr.mxu0 0.0
        %1269 = vmatpush1.xpose.msra.mxu0 0.0
        %1270 = vmatprep.subr.mxu0 0.0
        %1271 = vmatpush1.xpose.msra.mxu0 0.0
        %1272 = vmatprep.subr.mxu0 0.0
        %1273 = vmatpush1.xpose.msra.mxu0 0.0
        %1274 = vmatprep.subr.mxu0 0.0
        %1275 = vmatpush1.xpose.msra.mxu0 0.0
        %1276 = vmatprep.subr.mxu0 0.0
        %1277 = vmatpush1.xpose.msra.mxu0 0.0
        %1278 = vmatprep.subr.mxu0 0.0
        %1279 = vmatpush1.xpose.msra.mxu0 0.0
        %1280 = vmatprep.subr.mxu0 0.0
        %1281 = vmatpush1.xpose.msra.mxu0 0.0
        %1282 = vmatprep.subr.mxu0 0.0
        %1283 = vmatpush1.xpose.msra.mxu0 0.0
        %1284 = vmatprep.subr.mxu0 0.0
        %1285 = vmatpush1.xpose.msra.mxu0 0.0
        %1286 = vmatprep.subr.mxu0 0.0
        %1287 = vmatpush1.xpose.msra.mxu0 0.0
        %1288 = vmatprep.subr.mxu0 0.0
        %1289 = vmatpush1.xpose.msra.mxu0 0.0
        %1290 = vmatprep.subr.mxu0 0.0
        %1291 = vmatpush1.xpose.msra.mxu0 0.0
        %1292 = vmatprep.subr.mxu0 0.0
        %1293 = vmatpush1.xpose.msra.mxu0 0.0
        %1294 = vmatprep.subr.mxu0 0.0
        %1295 = vmatpush1.xpose.msra.mxu0 %v1262
        %1296 = vmatprep.subr.mxu0 0.0
        %1297 = vmatpush2.xpose.msra.mxu0 0.0
        %1298 = vmatprep.subr.mxu0 0.0
        %1299 = vmatpush2.xpose.msra.mxu0 0.0
        %1300 = vmatprep.subr.mxu0 0.0
        %1301 = vmatpush2.xpose.msra.mxu0 0.0
        %1302 = vmatprep.subr.mxu0 0.0
        %1303 = vmatpush2.xpose.msra.mxu0 0.0
        %1304 = vmatprep.subr.mxu0 0.0
        %1305 = vmatpush2.xpose.msra.mxu0 0.0
        %1306 = vmatprep.subr.mxu0 0.0
        %1307 = vmatpush2.xpose.msra.mxu0 0.0
        %1308 = vmatprep.subr.mxu0 0.0
        %1309 = vmatpush2.xpose.msra.mxu0 0.0
        %1310 = vmatprep.subr.mxu0 0.0
        %1311 = vmatpush2.xpose.msra.mxu0 0.0
        %1312 = vmatprep.subr.mxu0 0.0
        %1313 = vmatpush2.xpose.msra.mxu0 0.0
        %1314 = vmatprep.subr.mxu0 0.0
        %1315 = vmatpush2.xpose.msra.mxu0 0.0
        %1316 = vmatprep.subr.mxu0 0.0
        %1317 = vmatpush2.xpose.msra.mxu0 0.0
        %1318 = vmatprep.subr.mxu0 0.0
        %1319 = vmatpush2.xpose.msra.mxu0 0.0
        %1320 = vmatprep.subr.mxu0 0.0
        %1321 = vmatpush2.xpose.msra.mxu0 0.0
        %1322 = vmatprep.subr.mxu0 0.0
        %1323 = vmatpush2.xpose.msra.mxu0 0.0
        %1324 = vmatprep.subr.mxu0 0.0
        %1325 = vmatpush2.xpose.msra.mxu0 0.0
        %1326 = vmatprep.subr.mxu0 0.0
        %1327 = vmatpush2.xpose.msra.mxu0 0.0
        %1328 = vmatprep.mubr.f32.mxu0 0.0
        %1329 = vmatmul.mubr.f32.gmra.mxu0 %v1260
        %v1330 = vpop.f32.mrf.mxu0
        %v1331 = vadd.f32 0.0, %v1330
        %v1332 = vpop.f32.mrf.mxu0
        %1333 = vdwg.mxu0
        %v1334 = vsel %vm815, %v614, 0
        %v1336 = vsel %vm815, %v714, 0
        %1338 = vmatprep.subr.mxu0 0.0
        %1339 = vmatpush1.xpose.msra.mxu0 0.0
        %1340 = vmatprep.subr.mxu0 0.0
        %1341 = vmatpush1.xpose.msra.mxu0 0.0
        %1342 = vmatprep.subr.mxu0 0.0
        %1343 = vmatpush1.xpose.msra.mxu0 0.0
        %1344 = vmatprep.subr.mxu0 0.0
        %1345 = vmatpush1.xpose.msra.mxu0 0.0
        %1346 = vmatprep.subr.mxu0 0.0
        %1347 = vmatpush1.xpose.msra.mxu0 0.0
        %1348 = vmatprep.subr.mxu0 0.0
        %1349 = vmatpush1.xpose.msra.mxu0 0.0
        %1350 = vmatprep.subr.mxu0 0.0
        %1351 = vmatpush1.xpose.msra.mxu0 0.0
        %1352 = vmatprep.subr.mxu0 0.0
        %1353 = vmatpush1.xpose.msra.mxu0 0.0
        %1354 = vmatprep.subr.mxu0 0.0
        %1355 = vmatpush1.xpose.msra.mxu0 0.0
        %1356 = vmatprep.subr.mxu0 0.0
        %1357 = vmatpush1.xpose.msra.mxu0 0.0
        %1358 = vmatprep.subr.mxu0 0.0
        %1359 = vmatpush1.xpose.msra.mxu0 0.0
        %1360 = vmatprep.subr.mxu0 0.0
        %1361 = vmatpush1.xpose.msra.mxu0 0.0
        %1362 = vmatprep.subr.mxu0 0.0
        %1363 = vmatpush1.xpose.msra.mxu0 0.0
        %1364 = vmatprep.subr.mxu0 0.0
        %1365 = vmatpush1.xpose.msra.mxu0 0.0
        %1366 = vmatprep.subr.mxu0 0.0
        %1367 = vmatpush1.xpose.msra.mxu0 0.0
        %1368 = vmatprep.subr.mxu0 0.0
        %1369 = vmatpush1.xpose.msra.mxu0 %v1336
        %1370 = vmatprep.subr.mxu0 0.0
        %1371 = vmatpush2.xpose.msra.mxu0 0.0
        %1372 = vmatprep.subr.mxu0 0.0
        %1373 = vmatpush2.xpose.msra.mxu0 0.0
        %1374 = vmatprep.subr.mxu0 0.0
        %1375 = vmatpush2.xpose.msra.mxu0 0.0
        %1376 = vmatprep.subr.mxu0 0.0
        %1377 = vmatpush2.xpose.msra.mxu0 0.0
        %1378 = vmatprep.subr.mxu0 0.0
        %1379 = vmatpush2.xpose.msra.mxu0 0.0
        %1380 = vmatprep.subr.mxu0 0.0
        %1381 = vmatpush2.xpose.msra.mxu0 0.0
        %1382 = vmatprep.subr.mxu0 0.0
        %1383 = vmatpush2.xpose.msra.mxu0 0.0
        %1384 = vmatprep.subr.mxu0 0.0
        %1385 = vmatpush2.xpose.msra.mxu0 0.0
        %1386 = vmatprep.subr.mxu0 0.0
        %1387 = vmatpush2.xpose.msra.mxu0 0.0
        %1388 = vmatprep.subr.mxu0 0.0
        %1389 = vmatpush2.xpose.msra.mxu0 0.0
        %1390 = vmatprep.subr.mxu0 0.0
        %1391 = vmatpush2.xpose.msra.mxu0 0.0
        %1392 = vmatprep.subr.mxu0 0.0
        %1393 = vmatpush2.xpose.msra.mxu0 0.0
        %1394 = vmatprep.subr.mxu0 0.0
        %1395 = vmatpush2.xpose.msra.mxu0 0.0
        %1396 = vmatprep.subr.mxu0 0.0
        %1397 = vmatpush2.xpose.msra.mxu0 0.0
        %1398 = vmatprep.subr.mxu0 0.0
        %1399 = vmatpush2.xpose.msra.mxu0 0.0
        %1400 = vmatprep.subr.mxu0 0.0
        %1401 = vmatpush2.xpose.msra.mxu0 0.0
        %1402 = vmatprep.mubr.f32.mxu0 0.0
        %1403 = vmatmul.mubr.f32.gmra.mxu0 %v1334
        %v1404 = vpop.f32.mrf.mxu0
        %v1405 = vadd.f32 0.0, %v1404
        %v1406 = vpop.f32.mrf.mxu0
        %1407 = vdwg.mxu0
        %v1408 = vmul.f32 %v887, 0.35355338
        %v1409 = vmul.f32 %v961, 0.35355338
        %v1410 = vmul.f32 %v1035, 0.35355338
        %v1411 = vmul.f32 %v1109, 0.35355338
        %v1412 = vmul.f32 %v1183, 0.35355338
        %v1413 = vmul.f32 %v1257, 0.35355338
        %v1414 = vmul.f32 %v1331, 0.35355338
        %v1415 = vmul.f32 %v1405, 0.35355338
        %vm1416 = vcmp.eq.f32.partialorder %v469, 0.0
        %vm1417 = vcmp.eq.f32.partialorder %v470, 0.0
        %vm1418 = vcmp.eq.f32.partialorder %v471, 0.0
        %vm1419 = vcmp.eq.f32.partialorder %v472, 0.0
        %vm1420 = vcmp.eq.f32.partialorder %v473, 0.0
        %vm1421 = vcmp.eq.f32.partialorder %v474, 0.0
        %vm1422 = vcmp.eq.f32.partialorder %v475, 0.0
        %vm1423 = vcmp.eq.f32.partialorder %v476, 0.0
        %v1424 = vsel %vm1416, -1e+09, %v1408
        %v1425 = vsel %vm1417, -1e+09, %v1409
        %v1426 = vsel %vm1418, -1e+09, %v1410
        %v1427 = vsel %vm1419, -1e+09, %v1411
        %v1428 = vsel %vm1420, -1e+09, %v1412
        %v1429 = vsel %vm1421, -1e+09, %v1413
        %v1430 = vsel %vm1422, -1e+09, %v1414
        %v1431 = vsel %vm1423, -1e+09, %v1415
        %vm1432 = vcmask 27648
        %v1433 = vsel %vm1432, %v1424, -inf
        %1434 = vmax.xlane.f32.xlu0 %v1433
        %v1435 = vpop.xlane.xlu0 %1434
        %v1436 = vsel %vm1432, %v1425, -inf
        %1437 = vmax.xlane.f32.xlu0 %v1436
        %v1438 = vpop.xlane.xlu0 %1437
        %v1439 = vsel %vm1432, %v1426, -inf
        %1440 = vmax.xlane.f32.xlu0 %v1439
        %v1441 = vpop.xlane.xlu0 %1440
        %v1442 = vsel %vm1432, %v1427, -inf
        %1443 = vmax.xlane.f32.xlu0 %v1442
        %v1444 = vpop.xlane.xlu0 %1443
        %v1445 = vsel %vm1432, %v1428, -inf
        %1446 = vmax.xlane.f32.xlu0 %v1445
        %v1447 = vpop.xlane.xlu0 %1446
        %v1448 = vsel %vm1432, %v1429, -inf
        %1449 = vmax.xlane.f32.xlu0 %v1448
        %v1450 = vpop.xlane.xlu0 %1449
        %v1451 = vsel %vm1432, %v1430, -inf
        %1452 = vmax.xlane.f32.xlu0 %v1451
        %v1453 = vpop.xlane.xlu0 %1452
        %v1454 = vsel %vm1432, %v1431, -inf
        %1455 = vmax.xlane.f32.xlu0 %v1454
        %v1456 = vpop.xlane.xlu0 %1455
        %v1457 = vsub.f32 %v1424, %v1435
        %v1458 = vsub.f32 %v1425, %v1438
        %v1459 = vsub.f32 %v1426, %v1441
        %v1460 = vsub.f32 %v1427, %v1444
        %v1461 = vsub.f32 %v1428, %v1447
        %v1462 = vsub.f32 %v1429, %v1450
        %v1463 = vsub.f32 %v1430, %v1453
        %v1464 = vsub.f32 %v1431, %v1456
        %v1465 = vmul.f32 %v1457, 1.442695
        %v1466 = vpow.pop %v1465
        %v1467 = vmul.f32 %v1458, 1.442695
        %v1468 = vpow.pop %v1467
        %v1469 = vmul.f32 %v1459, 1.442695
        %v1470 = vpow.pop %v1469
        %v1471 = vmul.f32 %v1460, 1.442695
        %v1472 = vpow.pop %v1471
        %v1473 = vmul.f32 %v1461, 1.442695
        %v1474 = vpow.pop %v1473
        %v1475 = vmul.f32 %v1462, 1.442695
        %v1476 = vpow.pop %v1475
        %v1477 = vmul.f32 %v1463, 1.442695
        %v1478 = vpow.pop %v1477
        %v1479 = vmul.f32 %v1464, 1.442695
        %v1480 = vpow.pop %v1479
        %v1481 = vsel %vm1432, %v1466, 0.0
        %1482 = vadd.xlane.f32.xlu0 %v1481
        %v1483 = vpop.xlane.xlu0 %1482
        %v1484 = vsel %vm1432, %v1468, 0.0
        %1485 = vadd.xlane.f32.xlu0 %v1484
        %v1486 = vpop.xlane.xlu0 %1485
        %v1487 = vsel %vm1432, %v1470, 0.0
        %1488 = vadd.xlane.f32.xlu0 %v1487
        %v1489 = vpop.xlane.xlu0 %1488
        %v1490 = vsel %vm1432, %v1472, 0.0
        %1491 = vadd.xlane.f32.xlu0 %v1490
        %v1492 = vpop.xlane.xlu0 %1491
        %v1493 = vsel %vm1432, %v1474, 0.0
        %1494 = vadd.xlane.f32.xlu0 %v1493
        %v1495 = vpop.xlane.xlu0 %1494
        %v1496 = vsel %vm1432, %v1476, 0.0
        %1497 = vadd.xlane.f32.xlu0 %v1496
        %v1498 = vpop.xlane.xlu0 %1497
        %v1499 = vsel %vm1432, %v1478, 0.0
        %1500 = vadd.xlane.f32.xlu0 %v1499
        %v1501 = vpop.xlane.xlu0 %1500
        %v1502 = vsel %vm1432, %v1480, 0.0
        %1503 = vadd.xlane.f32.xlu0 %v1502
        %v1504 = vpop.xlane.xlu0 %1503
        %v1505 = vrcp.pop %v1483
        %v1506 = vmul.f32 %v1466, %v1505
        %v1507 = vrcp.pop %v1486
        %v1508 = vmul.f32 %v1468, %v1507
        %v1509 = vrcp.pop %v1489
        %v1510 = vmul.f32 %v1470, %v1509
        %v1511 = vrcp.pop %v1492
        %v1512 = vmul.f32 %v1472, %v1511
        %v1513 = vrcp.pop %v1495
        %v1514 = vmul.f32 %v1474, %v1513
        %v1515 = vrcp.pop %v1498
        %v1516 = vmul.f32 %v1476, %v1515
        %v1517 = vrcp.pop %v1501
        %v1518 = vmul.f32 %v1478, %v1517
        %v1519 = vrcp.pop %v1504
        %v1520 = vmul.f32 %v1480, %v1519
        %vm1521 = vcmask 31744
        %v1523 = vsel %vm1521, %v1506, 0
        %vm1525 = vcmask 1043456
        %v1526 = vsel %vm1525, %v789, 0
        %1528 = vmatprep.subr.mxu0 0.0
        %1529 = vmatpush1.msra.mxu0 0.0
        %1530 = vmatprep.subr.mxu0 0.0
        %1531 = vmatpush1.msra.mxu0 0.0
        %1532 = vmatprep.subr.mxu0 0.0
        %1533 = vmatpush1.msra.mxu0 0.0
        %1534 = vmatprep.subr.mxu0 0.0
        %1535 = vmatpush1.msra.mxu0 0.0
        %1536 = vmatprep.subr.mxu0 0.0
        %1537 = vmatpush1.msra.mxu0 0.0
        %1538 = vmatprep.subr.mxu0 0.0
        %1539 = vmatpush1.msra.mxu0 0.0
        %1540 = vmatprep.subr.mxu0 0.0
        %1541 = vmatpush1.msra.mxu0 0.0
        %1542 = vmatprep.subr.mxu0 0.0
        %1543 = vmatpush1.msra.mxu0 0.0
        %1544 = vmatprep.subr.mxu0 0.0
        %1545 = vmatpush1.msra.mxu0 0.0
        %1546 = vmatprep.subr.mxu0 0.0
        %1547 = vmatpush1.msra.mxu0 0.0
        %1548 = vmatprep.subr.mxu0 0.0
        %1549 = vmatpush1.msra.mxu0 0.0
        %1550 = vmatprep.subr.mxu0 0.0
        %1551 = vmatpush1.msra.mxu0 0.0
        %1552 = vmatprep.subr.mxu0 0.0
        %1553 = vmatpush1.msra.mxu0 0.0
        %1554 = vmatprep.subr.mxu0 0.0
        %1555 = vmatpush1.msra.mxu0 0.0
        %1556 = vmatprep.subr.mxu0 0.0
        %1557 = vmatpush1.msra.mxu0 0.0
        %1558 = vmatprep.subr.mxu0 0.0
        %1559 = vmatpush1.msra.mxu0 %v1526
        %1560 = vmatprep.subr.mxu0 0.0
        %1561 = vmatpush2.msra.mxu0 0.0
        %1562 = vmatprep.subr.mxu0 0.0
        %1563 = vmatpush2.msra.mxu0 0.0
        %1564 = vmatprep.subr.mxu0 0.0
        %1565 = vmatpush2.msra.mxu0 0.0
        %1566 = vmatprep.subr.mxu0 0.0
        %1567 = vmatpush2.msra.mxu0 0.0
        %1568 = vmatprep.subr.mxu0 0.0
        %1569 = vmatpush2.msra.mxu0 0.0
        %1570 = vmatprep.subr.mxu0 0.0
        %1571 = vmatpush2.msra.mxu0 0.0
        %1572 = vmatprep.subr.mxu0 0.0
        %1573 = vmatpush2.msra.mxu0 0.0
        %1574 = vmatprep.subr.mxu0 0.0
        %1575 = vmatpush2.msra.mxu0 0.0
        %1576 = vmatprep.subr.mxu0 0.0
        %1577 = vmatpush2.msra.mxu0 0.0
        %1578 = vmatprep.subr.mxu0 0.0
        %1579 = vmatpush2.msra.mxu0 0.0
        %1580 = vmatprep.subr.mxu0 0.0
        %1581 = vmatpush2.msra.mxu0 0.0
        %1582 = vmatprep.subr.mxu0 0.0
        %1583 = vmatpush2.msra.mxu0 0.0
        %1584 = vmatprep.subr.mxu0 0.0
        %1585 = vmatpush2.msra.mxu0 0.0
        %1586 = vmatprep.subr.mxu0 0.0
        %1587 = vmatpush2.msra.mxu0 0.0
        %1588 = vmatprep.subr.mxu0 0.0
        %1589 = vmatpush2.msra.mxu0 0.0
        %1590 = vmatprep.subr.mxu0 0.0
        %1591 = vmatpush2.msra.mxu0 0.0
        %1592 = vmatprep.mubr.f32.mxu0 0.0
        %1593 = vmatmul.mubr.f32.gmra.mxu0 %v1523
        %v1594 = vpop.f32.mrf.mxu0
        %v1595 = vadd.f32 0.0, %v1594
        %v1596 = vpop.f32.mrf.mxu0
        %1597 = vdwg.mxu0
        %v1599 = vsel %vm1521, %v1508, 0
        %v1601 = vsel %vm1525, %v811, 0
        %1603 = vmatprep.subr.mxu0 0.0
        %1604 = vmatpush1.msra.mxu0 0.0
        %1605 = vmatprep.subr.mxu0 0.0
        %1606 = vmatpush1.msra.mxu0 0.0
        %1607 = vmatprep.subr.mxu0 0.0
        %1608 = vmatpush1.msra.mxu0 0.0
        %1609 = vmatprep.subr.mxu0 0.0
        %1610 = vmatpush1.msra.mxu0 0.0
        %1611 = vmatprep.subr.mxu0 0.0
        %1612 = vmatpush1.msra.mxu0 0.0
        %1613 = vmatprep.subr.mxu0 0.0
        %1614 = vmatpush1.msra.mxu0 0.0
        %1615 = vmatprep.subr.mxu0 0.0
        %1616 = vmatpush1.msra.mxu0 0.0
        %1617 = vmatprep.subr.mxu0 0.0
        %1618 = vmatpush1.msra.mxu0 0.0
        %1619 = vmatprep.subr.mxu0 0.0
        %1620 = vmatpush1.msra.mxu0 0.0
        %1621 = vmatprep.subr.mxu0 0.0
        %1622 = vmatpush1.msra.mxu0 0.0
        %1623 = vmatprep.subr.mxu0 0.0
        %1624 = vmatpush1.msra.mxu0 0.0
        %1625 = vmatprep.subr.mxu0 0.0
        %1626 = vmatpush1.msra.mxu0 0.0
        %1627 = vmatprep.subr.mxu0 0.0
        %1628 = vmatpush1.msra.mxu0 0.0
        %1629 = vmatprep.subr.mxu0 0.0
        %1630 = vmatpush1.msra.mxu0 0.0
        %1631 = vmatprep.subr.mxu0 0.0
        %1632 = vmatpush1.msra.mxu0 0.0
        %1633 = vmatprep.subr.mxu0 0.0
        %1634 = vmatpush1.msra.mxu0 %v1601
        %1635 = vmatprep.subr.mxu0 0.0
        %1636 = vmatpush2.msra.mxu0 0.0
        %1637 = vmatprep.subr.mxu0 0.0
        %1638 = vmatpush2.msra.mxu0 0.0
        %1639 = vmatprep.subr.mxu0 0.0
        %1640 = vmatpush2.msra.mxu0 0.0
        %1641 = vmatprep.subr.mxu0 0.0
        %1642 = vmatpush2.msra.mxu0 0.0
        %1643 = vmatprep.subr.mxu0 0.0
        %1644 = vmatpush2.msra.mxu0 0.0
        %1645 = vmatprep.subr.mxu0 0.0
        %1646 = vmatpush2.msra.mxu0 0.0
        %1647 = vmatprep.subr.mxu0 0.0
        %1648 = vmatpush2.msra.mxu0 0.0
        %1649 = vmatprep.subr.mxu0 0.0
        %1650 = vmatpush2.msra.mxu0 0.0
        %1651 = vmatprep.subr.mxu0 0.0
        %1652 = vmatpush2.msra.mxu0 0.0
        %1653 = vmatprep.subr.mxu0 0.0
        %1654 = vmatpush2.msra.mxu0 0.0
        %1655 = vmatprep.subr.mxu0 0.0
        %1656 = vmatpush2.msra.mxu0 0.0
        %1657 = vmatprep.subr.mxu0 0.0
        %1658 = vmatpush2.msra.mxu0 0.0
        %1659 = vmatprep.subr.mxu0 0.0
        %1660 = vmatpush2.msra.mxu0 0.0
        %1661 = vmatprep.subr.mxu0 0.0
        %1662 = vmatpush2.msra.mxu0 0.0
        %1663 = vmatprep.subr.mxu0 0.0
        %1664 = vmatpush2.msra.mxu0 0.0
        %1665 = vmatprep.subr.mxu0 0.0
        %1666 = vmatpush2.msra.mxu0 0.0
        %1667 = vmatprep.mubr.f32.mxu0 0.0
        %1668 = vmatmul.mubr.f32.gmra.mxu0 %v1599
        %v1669 = vpop.f32.mrf.mxu0
        %v1670 = vadd.f32 0.0, %v1669
        %v1671 = vpop.f32.mrf.mxu0
        %1672 = vdwg.mxu0
        %v1674 = vsel %vm1521, %v1510, 0
        %v1676 = vsel %vm1525, %v794, 0
        %1678 = vmatprep.subr.mxu0 0.0
        %1679 = vmatpush1.msra.mxu0 0.0
        %1680 = vmatprep.subr.mxu0 0.0
        %1681 = vmatpush1.msra.mxu0 0.0
        %1682 = vmatprep.subr.mxu0 0.0
        %1683 = vmatpush1.msra.mxu0 0.0
        %1684 = vmatprep.subr.mxu0 0.0
        %1685 = vmatpush1.msra.mxu0 0.0
        %1686 = vmatprep.subr.mxu0 0.0
        %1687 = vmatpush1.msra.mxu0 0.0
        %1688 = vmatprep.subr.mxu0 0.0
        %1689 = vmatpush1.msra.mxu0 0.0
        %1690 = vmatprep.subr.mxu0 0.0
        %1691 = vmatpush1.msra.mxu0 0.0
        %1692 = vmatprep.subr.mxu0 0.0
        %1693 = vmatpush1.msra.mxu0 0.0
        %1694 = vmatprep.subr.mxu0 0.0
        %1695 = vmatpush1.msra.mxu0 0.0
        %1696 = vmatprep.subr.mxu0 0.0
        %1697 = vmatpush1.msra.mxu0 0.0
        %1698 = vmatprep.subr.mxu0 0.0
        %1699 = vmatpush1.msra.mxu0 0.0
        %1700 = vmatprep.subr.mxu0 0.0
        %1701 = vmatpush1.msra.mxu0 0.0
        %1702 = vmatprep.subr.mxu0 0.0
        %1703 = vmatpush1.msra.mxu0 0.0
        %1704 = vmatprep.subr.mxu0 0.0
        %1705 = vmatpush1.msra.mxu0 0.0
        %1706 = vmatprep.subr.mxu0 0.0
        %1707 = vmatpush1.msra.mxu0 0.0
        %1708 = vmatprep.subr.mxu0 0.0
        %1709 = vmatpush1.msra.mxu0 %v1676
        %1710 = vmatprep.subr.mxu0 0.0
        %1711 = vmatpush2.msra.mxu0 0.0
        %1712 = vmatprep.subr.mxu0 0.0
        %1713 = vmatpush2.msra.mxu0 0.0
        %1714 = vmatprep.subr.mxu0 0.0
        %1715 = vmatpush2.msra.mxu0 0.0
        %1716 = vmatprep.subr.mxu0 0.0
        %1717 = vmatpush2.msra.mxu0 0.0
        %1718 = vmatprep.subr.mxu0 0.0
        %1719 = vmatpush2.msra.mxu0 0.0
        %1720 = vmatprep.subr.mxu0 0.0
        %1721 = vmatpush2.msra.mxu0 0.0
        %1722 = vmatprep.subr.mxu0 0.0
        %1723 = vmatpush2.msra.mxu0 0.0
        %1724 = vmatprep.subr.mxu0 0.0
        %1725 = vmatpush2.msra.mxu0 0.0
        %1726 = vmatprep.subr.mxu0 0.0
        %1727 = vmatpush2.msra.mxu0 0.0
        %1728 = vmatprep.subr.mxu0 0.0
        %1729 = vmatpush2.msra.mxu0 0.0
        %1730 = vmatprep.subr.mxu0 0.0
        %1731 = vmatpush2.msra.mxu0 0.0
        %1732 = vmatprep.subr.mxu0 0.0
        %1733 = vmatpush2.msra.mxu0 0.0
        %1734 = vmatprep.subr.mxu0 0.0
        %1735 = vmatpush2.msra.mxu0 0.0
        %1736 = vmatprep.subr.mxu0 0.0
        %1737 = vmatpush2.msra.mxu0 0.0
        %1738 = vmatprep.subr.mxu0 0.0
        %1739 = vmatpush2.msra.mxu0 0.0
        %1740 = vmatprep.subr.mxu0 0.0
        %1741 = vmatpush2.msra.mxu0 0.0
        %1742 = vmatprep.mubr.f32.mxu0 0.0
        %1743 = vmatmul.mubr.f32.gmra.mxu0 %v1674
        %v1744 = vpop.f32.mrf.mxu0
        %v1745 = vadd.f32 0.0, %v1744
        %v1746 = vpop.f32.mrf.mxu0
        %1747 = vdwg.mxu0
        %v1749 = vsel %vm1521, %v1512, 0
        %v1751 = vsel %vm1525, %v812, 0
        %1753 = vmatprep.subr.mxu0 0.0
        %1754 = vmatpush1.msra.mxu0 0.0
        %1755 = vmatprep.subr.mxu0 0.0
        %1756 = vmatpush1.msra.mxu0 0.0
        %1757 = vmatprep.subr.mxu0 0.0
        %1758 = vmatpush1.msra.mxu0 0.0
        %1759 = vmatprep.subr.mxu0 0.0
        %1760 = vmatpush1.msra.mxu0 0.0
        %1761 = vmatprep.subr.mxu0 0.0
        %1762 = vmatpush1.msra.mxu0 0.0
        %1763 = vmatprep.subr.mxu0 0.0
        %1764 = vmatpush1.msra.mxu0 0.0
        %1765 = vmatprep.subr.mxu0 0.0
        %1766 = vmatpush1.msra.mxu0 0.0
        %1767 = vmatprep.subr.mxu0 0.0
        %1768 = vmatpush1.msra.mxu0 0.0
        %1769 = vmatprep.subr.mxu0 0.0
        %1770 = vmatpush1.msra.mxu0 0.0
        %1771 = vmatprep.subr.mxu0 0.0
        %1772 = vmatpush1.msra.mxu0 0.0
        %1773 = vmatprep.subr.mxu0 0.0
        %1774 = vmatpush1.msra.mxu0 0.0
        %1775 = vmatprep.subr.mxu0 0.0
        %1776 = vmatpush1.msra.mxu0 0.0
        %1777 = vmatprep.subr.mxu0 0.0
        %1778 = vmatpush1.msra.mxu0 0.0
        %1779 = vmatprep.subr.mxu0 0.0
        %1780 = vmatpush1.msra.mxu0 0.0
        %1781 = vmatprep.subr.mxu0 0.0
        %1782 = vmatpush1.msra.mxu0 0.0
        %1783 = vmatprep.subr.mxu0 0.0
        %1784 = vmatpush1.msra.mxu0 %v1751
        %1785 = vmatprep.subr.mxu0 0.0
        %1786 = vmatpush2.msra.mxu0 0.0
        %1787 = vmatprep.subr.mxu0 0.0
        %1788 = vmatpush2.msra.mxu0 0.0
        %1789 = vmatprep.subr.mxu0 0.0
        %1790 = vmatpush2.msra.mxu0 0.0
        %1791 = vmatprep.subr.mxu0 0.0
        %1792 = vmatpush2.msra.mxu0 0.0
        %1793 = vmatprep.subr.mxu0 0.0
        %1794 = vmatpush2.msra.mxu0 0.0
        %1795 = vmatprep.subr.mxu0 0.0
        %1796 = vmatpush2.msra.mxu0 0.0
        %1797 = vmatprep.subr.mxu0 0.0
        %1798 = vmatpush2.msra.mxu0 0.0
        %1799 = vmatprep.subr.mxu0 0.0
        %1800 = vmatpush2.msra.mxu0 0.0
        %1801 = vmatprep.subr.mxu0 0.0
        %1802 = vmatpush2.msra.mxu0 0.0
        %1803 = vmatprep.subr.mxu0 0.0
        %1804 = vmatpush2.msra.mxu0 0.0
        %1805 = vmatprep.subr.mxu0 0.0
        %1806 = vmatpush2.msra.mxu0 0.0
        %1807 = vmatprep.subr.mxu0 0.0
        %1808 = vmatpush2.msra.mxu0 0.0
        %1809 = vmatprep.subr.mxu0 0.0
        %1810 = vmatpush2.msra.mxu0 0.0
        %1811 = vmatprep.subr.mxu0 0.0
        %1812 = vmatpush2.msra.mxu0 0.0
        %1813 = vmatprep.subr.mxu0 0.0
        %1814 = vmatpush2.msra.mxu0 0.0
        %1815 = vmatprep.subr.mxu0 0.0
        %1816 = vmatpush2.msra.mxu0 0.0
        %1817 = vmatprep.mubr.f32.mxu0 0.0
        %1818 = vmatmul.mubr.f32.gmra.mxu0 %v1749
        %v1819 = vpop.f32.mrf.mxu0
        %v1820 = vadd.f32 0.0, %v1819
        %v1821 = vpop.f32.mrf.mxu0
        %1822 = vdwg.mxu0
        %v1824 = vsel %vm1521, %v1514, 0
        %v1826 = vsel %vm1525, %v799, 0
        %1828 = vmatprep.subr.mxu0 0.0
        %1829 = vmatpush1.msra.mxu0 0.0
        %1830 = vmatprep.subr.mxu0 0.0
        %1831 = vmatpush1.msra.mxu0 0.0
        %1832 = vmatprep.subr.mxu0 0.0
        %1833 = vmatpush1.msra.mxu0 0.0
        %1834 = vmatprep.subr.mxu0 0.0
        %1835 = vmatpush1.msra.mxu0 0.0
        %1836 = vmatprep.subr.mxu0 0.0
        %1837 = vmatpush1.msra.mxu0 0.0
        %1838 = vmatprep.subr.mxu0 0.0
        %1839 = vmatpush1.msra.mxu0 0.0
        %1840 = vmatprep.subr.mxu0 0.0
        %1841 = vmatpush1.msra.mxu0 0.0
        %1842 = vmatprep.subr.mxu0 0.0
        %1843 = vmatpush1.msra.mxu0 0.0
        %1844 = vmatprep.subr.mxu0 0.0
        %1845 = vmatpush1.msra.mxu0 0.0
        %1846 = vmatprep.subr.mxu0 0.0
        %1847 = vmatpush1.msra.mxu0 0.0
        %1848 = vmatprep.subr.mxu0 0.0
        %1849 = vmatpush1.msra.mxu0 0.0
        %1850 = vmatprep.subr.mxu0 0.0
        %1851 = vmatpush1.msra.mxu0 0.0
        %1852 = vmatprep.subr.mxu0 0.0
        %1853 = vmatpush1.msra.mxu0 0.0
        %1854 = vmatprep.subr.mxu0 0.0
        %1855 = vmatpush1.msra.mxu0 0.0
        %1856 = vmatprep.subr.mxu0 0.0
        %1857 = vmatpush1.msra.mxu0 0.0
        %1858 = vmatprep.subr.mxu0 0.0
        %1859 = vmatpush1.msra.mxu0 %v1826
        %1860 = vmatprep.subr.mxu0 0.0
        %1861 = vmatpush2.msra.mxu0 0.0
        %1862 = vmatprep.subr.mxu0 0.0
        %1863 = vmatpush2.msra.mxu0 0.0
        %1864 = vmatprep.subr.mxu0 0.0
        %1865 = vmatpush2.msra.mxu0 0.0
        %1866 = vmatprep.subr.mxu0 0.0
        %1867 = vmatpush2.msra.mxu0 0.0
        %1868 = vmatprep.subr.mxu0 0.0
        %1869 = vmatpush2.msra.mxu0 0.0
        %1870 = vmatprep.subr.mxu0 0.0
        %1871 = vmatpush2.msra.mxu0 0.0
        %1872 = vmatprep.subr.mxu0 0.0
        %1873 = vmatpush2.msra.mxu0 0.0
        %1874 = vmatprep.subr.mxu0 0.0
        %1875 = vmatpush2.msra.mxu0 0.0
        %1876 = vmatprep.subr.mxu0 0.0
        %1877 = vmatpush2.msra.mxu0 0.0
        %1878 = vmatprep.subr.mxu0 0.0
        %1879 = vmatpush2.msra.mxu0 0.0
        %1880 = vmatprep.subr.mxu0 0.0
        %1881 = vmatpush2.msra.mxu0 0.0
        %1882 = vmatprep.subr.mxu0 0.0
        %1883 = vmatpush2.msra.mxu0 0.0
        %1884 = vmatprep.subr.mxu0 0.0
        %1885 = vmatpush2.msra.mxu0 0.0
        %1886 = vmatprep.subr.mxu0 0.0
        %1887 = vmatpush2.msra.mxu0 0.0
        %1888 = vmatprep.subr.mxu0 0.0
        %1889 = vmatpush2.msra.mxu0 0.0
        %1890 = vmatprep.subr.mxu0 0.0
        %1891 = vmatpush2.msra.mxu0 0.0
        %1892 = vmatprep.mubr.f32.mxu0 0.0
        %1893 = vmatmul.mubr.f32.gmra.mxu0 %v1824
        %v1894 = vpop.f32.mrf.mxu0
        %v1895 = vadd.f32 0.0, %v1894
        %v1896 = vpop.f32.mrf.mxu0
        %1897 = vdwg.mxu0
        %v1899 = vsel %vm1521, %v1516, 0
        %v1901 = vsel %vm1525, %v813, 0
        %1903 = vmatprep.subr.mxu0 0.0
        %1904 = vmatpush1.msra.mxu0 0.0
        %1905 = vmatprep.subr.mxu0 0.0
        %1906 = vmatpush1.msra.mxu0 0.0
        %1907 = vmatprep.subr.mxu0 0.0
        %1908 = vmatpush1.msra.mxu0 0.0
        %1909 = vmatprep.subr.mxu0 0.0
        %1910 = vmatpush1.msra.mxu0 0.0
        %1911 = vmatprep.subr.mxu0 0.0
        %1912 = vmatpush1.msra.mxu0 0.0
        %1913 = vmatprep.subr.mxu0 0.0
        %1914 = vmatpush1.msra.mxu0 0.0
        %1915 = vmatprep.subr.mxu0 0.0
        %1916 = vmatpush1.msra.mxu0 0.0
        %1917 = vmatprep.subr.mxu0 0.0
        %1918 = vmatpush1.msra.mxu0 0.0
        %1919 = vmatprep.subr.mxu0 0.0
        %1920 = vmatpush1.msra.mxu0 0.0
        %1921 = vmatprep.subr.mxu0 0.0
        %1922 = vmatpush1.msra.mxu0 0.0
        %1923 = vmatprep.subr.mxu0 0.0
        %1924 = vmatpush1.msra.mxu0 0.0
        %1925 = vmatprep.subr.mxu0 0.0
        %1926 = vmatpush1.msra.mxu0 0.0
        %1927 = vmatprep.subr.mxu0 0.0
        %1928 = vmatpush1.msra.mxu0 0.0
        %1929 = vmatprep.subr.mxu0 0.0
        %1930 = vmatpush1.msra.mxu0 0.0
        %1931 = vmatprep.subr.mxu0 0.0
        %1932 = vmatpush1.msra.mxu0 0.0
        %1933 = vmatprep.subr.mxu0 0.0
        %1934 = vmatpush1.msra.mxu0 %v1901
        %1935 = vmatprep.subr.mxu0 0.0
        %1936 = vmatpush2.msra.mxu0 0.0
        %1937 = vmatprep.subr.mxu0 0.0
        %1938 = vmatpush2.msra.mxu0 0.0
        %1939 = vmatprep.subr.mxu0 0.0
        %1940 = vmatpush2.msra.mxu0 0.0
        %1941 = vmatprep.subr.mxu0 0.0
        %1942 = vmatpush2.msra.mxu0 0.0
        %1943 = vmatprep.subr.mxu0 0.0
        %1944 = vmatpush2.msra.mxu0 0.0
        %1945 = vmatprep.subr.mxu0 0.0
        %1946 = vmatpush2.msra.mxu0 0.0
        %1947 = vmatprep.subr.mxu0 0.0
        %1948 = vmatpush2.msra.mxu0 0.0
        %1949 = vmatprep.subr.mxu0 0.0
        %1950 = vmatpush2.msra.mxu0 0.0
        %1951 = vmatprep.subr.mxu0 0.0
        %1952 = vmatpush2.msra.mxu0 0.0
        %1953 = vmatprep.subr.mxu0 0.0
        %1954 = vmatpush2.msra.mxu0 0.0
        %1955 = vmatprep.subr.mxu0 0.0
        %1956 = vmatpush2.msra.mxu0 0.0
        %1957 = vmatprep.subr.mxu0 0.0
        %1958 = vmatpush2.msra.mxu0 0.0
        %1959 = vmatprep.subr.mxu0 0.0
        %1960 = vmatpush2.msra.mxu0 0.0
        %1961 = vmatprep.subr.mxu0 0.0
        %1962 = vmatpush2.msra.mxu0 0.0
        %1963 = vmatprep.subr.mxu0 0.0
        %1964 = vmatpush2.msra.mxu0 0.0
        %1965 = vmatprep.subr.mxu0 0.0
        %1966 = vmatpush2.msra.mxu0 0.0
        %1967 = vmatprep.mubr.f32.mxu0 0.0
        %1968 = vmatmul.mubr.f32.gmra.mxu0 %v1899
        %v1969 = vpop.f32.mrf.mxu0
        %v1970 = vadd.f32 0.0, %v1969
        %v1971 = vpop.f32.mrf.mxu0
        %1972 = vdwg.mxu0
        %v1974 = vsel %vm1521, %v1518, 0
        %v1976 = vsel %vm1525, %v804, 0
        %1978 = vmatprep.subr.mxu0 0.0
        %1979 = vmatpush1.msra.mxu0 0.0
        %1980 = vmatprep.subr.mxu0 0.0
        %1981 = vmatpush1.msra.mxu0 0.0
        %1982 = vmatprep.subr.mxu0 0.0
        %1983 = vmatpush1.msra.mxu0 0.0
        %1984 = vmatprep.subr.mxu0 0.0
        %1985 = vmatpush1.msra.mxu0 0.0
        %1986 = vmatprep.subr.mxu0 0.0
        %1987 = vmatpush1.msra.mxu0 0.0
        %1988 = vmatprep.subr.mxu0 0.0
        %1989 = vmatpush1.msra.mxu0 0.0
        %1990 = vmatprep.subr.mxu0 0.0
        %1991 = vmatpush1.msra.mxu0 0.0
        %1992 = vmatprep.subr.mxu0 0.0
        %1993 = vmatpush1.msra.mxu0 0.0
        %1994 = vmatprep.subr.mxu0 0.0
        %1995 = vmatpush1.msra.mxu0 0.0
        %1996 = vmatprep.subr.mxu0 0.0
        %1997 = vmatpush1.msra.mxu0 0.0
        %1998 = vmatprep.subr.mxu0 0.0
        %1999 = vmatpush1.msra.mxu0 0.0
        %2000 = vmatprep.subr.mxu0 0.0
        %2001 = vmatpush1.msra.mxu0 0.0
        %2002 = vmatprep.subr.mxu0 0.0
        %2003 = vmatpush1.msra.mxu0 0.0
        %2004 = vmatprep.subr.mxu0 0.0
        %2005 = vmatpush1.msra.mxu0 0.0
        %2006 = vmatprep.subr.mxu0 0.0
        %2007 = vmatpush1.msra.mxu0 0.0
        %2008 = vmatprep.subr.mxu0 0.0
        %2009 = vmatpush1.msra.mxu0 %v1976
        %2010 = vmatprep.subr.mxu0 0.0
        %2011 = vmatpush2.msra.mxu0 0.0
        %2012 = vmatprep.subr.mxu0 0.0
        %2013 = vmatpush2.msra.mxu0 0.0
        %2014 = vmatprep.subr.mxu0 0.0
        %2015 = vmatpush2.msra.mxu0 0.0
        %2016 = vmatprep.subr.mxu0 0.0
        %2017 = vmatpush2.msra.mxu0 0.0
        %2018 = vmatprep.subr.mxu0 0.0
        %2019 = vmatpush2.msra.mxu0 0.0
        %2020 = vmatprep.subr.mxu0 0.0
        %2021 = vmatpush2.msra.mxu0 0.0
        %2022 = vmatprep.subr.mxu0 0.0
        %2023 = vmatpush2.msra.mxu0 0.0
        %2024 = vmatprep.subr.mxu0 0.0
        %2025 = vmatpush2.msra.mxu0 0.0
        %2026 = vmatprep.subr.mxu0 0.0
        %2027 = vmatpush2.msra.mxu0 0.0
        %2028 = vmatprep.subr.mxu0 0.0
        %2029 = vmatpush2.msra.mxu0 0.0
        %2030 = vmatprep.subr.mxu0 0.0
        %2031 = vmatpush2.msra.mxu0 0.0
        %2032 = vmatprep.subr.mxu0 0.0
        %2033 = vmatpush2.msra.mxu0 0.0
        %2034 = vmatprep.subr.mxu0 0.0
        %2035 = vmatpush2.msra.mxu0 0.0
        %2036 = vmatprep.subr.mxu0 0.0
        %2037 = vmatpush2.msra.mxu0 0.0
        %2038 = vmatprep.subr.mxu0 0.0
        %2039 = vmatpush2.msra.mxu0 0.0
        %2040 = vmatprep.subr.mxu0 0.0
        %2041 = vmatpush2.msra.mxu0 0.0
        %2042 = vmatprep.mubr.f32.mxu0 0.0
        %2043 = vmatmul.mubr.f32.gmra.mxu0 %v1974
        %v2044 = vpop.f32.mrf.mxu0
        %v2045 = vadd.f32 0.0, %v2044
        %v2046 = vpop.f32.mrf.mxu0
        %2047 = vdwg.mxu0
        %v2049 = vsel %vm1521, %v1520, 0
        %v2051 = vsel %vm1525, %v814, 0
        %2053 = vmatprep.subr.mxu0 0.0
        %2054 = vmatpush1.msra.mxu0 0.0
        %2055 = vmatprep.subr.mxu0 0.0
        %2056 = vmatpush1.msra.mxu0 0.0
        %2057 = vmatprep.subr.mxu0 0.0
        %2058 = vmatpush1.msra.mxu0 0.0
        %2059 = vmatprep.subr.mxu0 0.0
        %2060 = vmatpush1.msra.mxu0 0.0
        %2061 = vmatprep.subr.mxu0 0.0
        %2062 = vmatpush1.msra.mxu0 0.0
        %2063 = vmatprep.subr.mxu0 0.0
        %2064 = vmatpush1.msra.mxu0 0.0
        %2065 = vmatprep.subr.mxu0 0.0
        %2066 = vmatpush1.msra.mxu0 0.0
        %2067 = vmatprep.subr.mxu0 0.0
        %2068 = vmatpush1.msra.mxu0 0.0
        %2069 = vmatprep.subr.mxu0 0.0
        %2070 = vmatpush1.msra.mxu0 0.0
        %2071 = vmatprep.subr.mxu0 0.0
        %2072 = vmatpush1.msra.mxu0 0.0
        %2073 = vmatprep.subr.mxu0 0.0
        %2074 = vmatpush1.msra.mxu0 0.0
        %2075 = vmatprep.subr.mxu0 0.0
        %2076 = vmatpush1.msra.mxu0 0.0
        %2077 = vmatprep.subr.mxu0 0.0
        %2078 = vmatpush1.msra.mxu0 0.0
        %2079 = vmatprep.subr.mxu0 0.0
        %2080 = vmatpush1.msra.mxu0 0.0
        %2081 = vmatprep.subr.mxu0 0.0
        %2082 = vmatpush1.msra.mxu0 0.0
        %2083 = vmatprep.subr.mxu0 0.0
        %2084 = vmatpush1.msra.mxu0 %v2051
        %2085 = vmatprep.subr.mxu0 0.0
        %2086 = vmatpush2.msra.mxu0 0.0
        %2087 = vmatprep.subr.mxu0 0.0
        %2088 = vmatpush2.msra.mxu0 0.0
        %2089 = vmatprep.subr.mxu0 0.0
        %2090 = vmatpush2.msra.mxu0 0.0
        %2091 = vmatprep.subr.mxu0 0.0
        %2092 = vmatpush2.msra.mxu0 0.0
        %2093 = vmatprep.subr.mxu0 0.0
        %2094 = vmatpush2.msra.mxu0 0.0
        %2095 = vmatprep.subr.mxu0 0.0
        %2096 = vmatpush2.msra.mxu0 0.0
        %2097 = vmatprep.subr.mxu0 0.0
        %2098 = vmatpush2.msra.mxu0 0.0
        %2099 = vmatprep.subr.mxu0 0.0
        %2100 = vmatpush2.msra.mxu0 0.0
        %2101 = vmatprep.subr.mxu0 0.0
        %2102 = vmatpush2.msra.mxu0 0.0
        %2103 = vmatprep.subr.mxu0 0.0
        %2104 = vmatpush2.msra.mxu0 0.0
        %2105 = vmatprep.subr.mxu0 0.0
        %2106 = vmatpush2.msra.mxu0 0.0
        %2107 = vmatprep.subr.mxu0 0.0
        %2108 = vmatpush2.msra.mxu0 0.0
        %2109 = vmatprep.subr.mxu0 0.0
        %2110 = vmatpush2.msra.mxu0 0.0
        %2111 = vmatprep.subr.mxu0 0.0
        %2112 = vmatpush2.msra.mxu0 0.0
        %2113 = vmatprep.subr.mxu0 0.0
        %2114 = vmatpush2.msra.mxu0 0.0
        %2115 = vmatprep.subr.mxu0 0.0
        %2116 = vmatpush2.msra.mxu0 0.0
        %2117 = vmatprep.mubr.f32.mxu0 0.0
        %2118 = vmatmul.mubr.f32.gmra.mxu0 %v2049
        %v2119 = vpop.f32.mrf.mxu0
        %v2120 = vadd.f32 0.0, %v2119
        %v2121 = vpop.f32.mrf.mxu0
        %2122 = vdwg.mxu0
        %2123 = vrot.lane.b32.xlu0 %v589, 120
        %v2124 = vpop.permute.xlu0 %2123
        %2125 = vrot.lane.b32.xlu0 %v689, 120
        %v2126 = vpop.permute.xlu0 %2125
        %v2127 = vsel %vm815, %v2124, 0
        %v2129 = vsel %vm815, %v2126, 0
        %2131 = vmatprep.subr.mxu0 0.0
        %2132 = vmatpush1.xpose.msra.mxu0 0.0
        %2133 = vmatprep.subr.mxu0 0.0
        %2134 = vmatpush1.xpose.msra.mxu0 0.0
        %2135 = vmatprep.subr.mxu0 0.0
        %2136 = vmatpush1.xpose.msra.mxu0 0.0
        %2137 = vmatprep.subr.mxu0 0.0
        %2138 = vmatpush1.xpose.msra.mxu0 0.0
        %2139 = vmatprep.subr.mxu0 0.0
        %2140 = vmatpush1.xpose.msra.mxu0 0.0
        %2141 = vmatprep.subr.mxu0 0.0
        %2142 = vmatpush1.xpose.msra.mxu0 0.0
        %2143 = vmatprep.subr.mxu0 0.0
        %2144 = vmatpush1.xpose.msra.mxu0 0.0
        %2145 = vmatprep.subr.mxu0 0.0
        %2146 = vmatpush1.xpose.msra.mxu0 0.0
        %2147 = vmatprep.subr.mxu0 0.0
        %2148 = vmatpush1.xpose.msra.mxu0 0.0
        %2149 = vmatprep.subr.mxu0 0.0
        %2150 = vmatpush1.xpose.msra.mxu0 0.0
        %2151 = vmatprep.subr.mxu0 0.0
        %2152 = vmatpush1.xpose.msra.mxu0 0.0
        %2153 = vmatprep.subr.mxu0 0.0
        %2154 = vmatpush1.xpose.msra.mxu0 0.0
        %2155 = vmatprep.subr.mxu0 0.0
        %2156 = vmatpush1.xpose.msra.mxu0 0.0
        %2157 = vmatprep.subr.mxu0 0.0
        %2158 = vmatpush1.xpose.msra.mxu0 0.0
        %2159 = vmatprep.subr.mxu0 0.0
        %2160 = vmatpush1.xpose.msra.mxu0 0.0
        %2161 = vmatprep.subr.mxu0 0.0
        %2162 = vmatpush1.xpose.msra.mxu0 %v2129
        %2163 = vmatprep.subr.mxu0 0.0
        %2164 = vmatpush2.xpose.msra.mxu0 0.0
        %2165 = vmatprep.subr.mxu0 0.0
        %2166 = vmatpush2.xpose.msra.mxu0 0.0
        %2167 = vmatprep.subr.mxu0 0.0
        %2168 = vmatpush2.xpose.msra.mxu0 0.0
        %2169 = vmatprep.subr.mxu0 0.0
        %2170 = vmatpush2.xpose.msra.mxu0 0.0
        %2171 = vmatprep.subr.mxu0 0.0
        %2172 = vmatpush2.xpose.msra.mxu0 0.0
        %2173 = vmatprep.subr.mxu0 0.0
        %2174 = vmatpush2.xpose.msra.mxu0 0.0
        %2175 = vmatprep.subr.mxu0 0.0
        %2176 = vmatpush2.xpose.msra.mxu0 0.0
        %2177 = vmatprep.subr.mxu0 0.0
        %2178 = vmatpush2.xpose.msra.mxu0 0.0
        %2179 = vmatprep.subr.mxu0 0.0
        %2180 = vmatpush2.xpose.msra.mxu0 0.0
        %2181 = vmatprep.subr.mxu0 0.0
        %2182 = vmatpush2.xpose.msra.mxu0 0.0
        %2183 = vmatprep.subr.mxu0 0.0
        %2184 = vmatpush2.xpose.msra.mxu0 0.0
        %2185 = vmatprep.subr.mxu0 0.0
        %2186 = vmatpush2.xpose.msra.mxu0 0.0
        %2187 = vmatprep.subr.mxu0 0.0
        %2188 = vmatpush2.xpose.msra.mxu0 0.0
        %2189 = vmatprep.subr.mxu0 0.0
        %2190 = vmatpush2.xpose.msra.mxu0 0.0
        %2191 = vmatprep.subr.mxu0 0.0
        %2192 = vmatpush2.xpose.msra.mxu0 0.0
        %2193 = vmatprep.subr.mxu0 0.0
        %2194 = vmatpush2.xpose.msra.mxu0 0.0
        %2195 = vmatprep.mubr.f32.mxu0 0.0
        %2196 = vmatmul.mubr.f32.gmra.mxu0 %v2127
        %v2197 = vpop.f32.mrf.mxu0
        %v2198 = vadd.f32 0.0, %v2197
        %v2199 = vpop.f32.mrf.mxu0
        %2200 = vdwg.mxu0
        %2201 = vrot.lane.b32.xlu0 %v611, 120
        %v2202 = vpop.permute.xlu0 %2201
        %2203 = vrot.lane.b32.xlu0 %v711, 120
        %v2204 = vpop.permute.xlu0 %2203
        %v2205 = vsel %vm815, %v2202, 0
        %v2207 = vsel %vm815, %v2204, 0
        %2209 = vmatprep.subr.mxu0 0.0
        %2210 = vmatpush1.xpose.msra.mxu0 0.0
        %2211 = vmatprep.subr.mxu0 0.0
        %2212 = vmatpush1.xpose.msra.mxu0 0.0
        %2213 = vmatprep.subr.mxu0 0.0
        %2214 = vmatpush1.xpose.msra.mxu0 0.0
        %2215 = vmatprep.subr.mxu0 0.0
        %2216 = vmatpush1.xpose.msra.mxu0 0.0
        %2217 = vmatprep.subr.mxu0 0.0
        %2218 = vmatpush1.xpose.msra.mxu0 0.0
        %2219 = vmatprep.subr.mxu0 0.0
        %2220 = vmatpush1.xpose.msra.mxu0 0.0
        %2221 = vmatprep.subr.mxu0 0.0
        %2222 = vmatpush1.xpose.msra.mxu0 0.0
        %2223 = vmatprep.subr.mxu0 0.0
        %2224 = vmatpush1.xpose.msra.mxu0 0.0
        %2225 = vmatprep.subr.mxu0 0.0
        %2226 = vmatpush1.xpose.msra.mxu0 0.0
        %2227 = vmatprep.subr.mxu0 0.0
        %2228 = vmatpush1.xpose.msra.mxu0 0.0
        %2229 = vmatprep.subr.mxu0 0.0
        %2230 = vmatpush1.xpose.msra.mxu0 0.0
        %2231 = vmatprep.subr.mxu0 0.0
        %2232 = vmatpush1.xpose.msra.mxu0 0.0
        %2233 = vmatprep.subr.mxu0 0.0
        %2234 = vmatpush1.xpose.msra.mxu0 0.0
        %2235 = vmatprep.subr.mxu0 0.0
        %2236 = vmatpush1.xpose.msra.mxu0 0.0
        %2237 = vmatprep.subr.mxu0 0.0
        %2238 = vmatpush1.xpose.msra.mxu0 0.0
        %2239 = vmatprep.subr.mxu0 0.0
        %2240 = vmatpush1.xpose.msra.mxu0 %v2207
        %2241 = vmatprep.subr.mxu0 0.0
        %2242 = vmatpush2.xpose.msra.mxu0 0.0
        %2243 = vmatprep.subr.mxu0 0.0
        %2244 = vmatpush2.xpose.msra.mxu0 0.0
        %2245 = vmatprep.subr.mxu0 0.0
        %2246 = vmatpush2.xpose.msra.mxu0 0.0
        %2247 = vmatprep.subr.mxu0 0.0
        %2248 = vmatpush2.xpose.msra.mxu0 0.0
        %2249 = vmatprep.subr.mxu0 0.0
        %2250 = vmatpush2.xpose.msra.mxu0 0.0
        %2251 = vmatprep.subr.mxu0 0.0
        %2252 = vmatpush2.xpose.msra.mxu0 0.0
        %2253 = vmatprep.subr.mxu0 0.0
        %2254 = vmatpush2.xpose.msra.mxu0 0.0
        %2255 = vmatprep.subr.mxu0 0.0
        %2256 = vmatpush2.xpose.msra.mxu0 0.0
        %2257 = vmatprep.subr.mxu0 0.0
        %2258 = vmatpush2.xpose.msra.mxu0 0.0
        %2259 = vmatprep.subr.mxu0 0.0
        %2260 = vmatpush2.xpose.msra.mxu0 0.0
        %2261 = vmatprep.subr.mxu0 0.0
        %2262 = vmatpush2.xpose.msra.mxu0 0.0
        %2263 = vmatprep.subr.mxu0 0.0
        %2264 = vmatpush2.xpose.msra.mxu0 0.0
        %2265 = vmatprep.subr.mxu0 0.0
        %2266 = vmatpush2.xpose.msra.mxu0 0.0
        %2267 = vmatprep.subr.mxu0 0.0
        %2268 = vmatpush2.xpose.msra.mxu0 0.0
        %2269 = vmatprep.subr.mxu0 0.0
        %2270 = vmatpush2.xpose.msra.mxu0 0.0
        %2271 = vmatprep.subr.mxu0 0.0
        %2272 = vmatpush2.xpose.msra.mxu0 0.0
        %2273 = vmatprep.mubr.f32.mxu0 0.0
        %2274 = vmatmul.mubr.f32.gmra.mxu0 %v2205
        %v2275 = vpop.f32.mrf.mxu0
        %v2276 = vadd.f32 0.0, %v2275
        %v2277 = vpop.f32.mrf.mxu0
        %2278 = vdwg.mxu0
        %2279 = vrot.lane.b32.xlu0 %v594, 120
        %v2280 = vpop.permute.xlu0 %2279
        %2281 = vrot.lane.b32.xlu0 %v694, 120
        %v2282 = vpop.permute.xlu0 %2281
        %v2283 = vsel %vm815, %v2280, 0
        %v2285 = vsel %vm815, %v2282, 0
        %2287 = vmatprep.subr.mxu0 0.0
        %2288 = vmatpush1.xpose.msra.mxu0 0.0
        %2289 = vmatprep.subr.mxu0 0.0
        %2290 = vmatpush1.xpose.msra.mxu0 0.0
        %2291 = vmatprep.subr.mxu0 0.0
        %2292 = vmatpush1.xpose.msra.mxu0 0.0
        %2293 = vmatprep.subr.mxu0 0.0
        %2294 = vmatpush1.xpose.msra.mxu0 0.0
        %2295 = vmatprep.subr.mxu0 0.0
        %2296 = vmatpush1.xpose.msra.mxu0 0.0
        %2297 = vmatprep.subr.mxu0 0.0
        %2298 = vmatpush1.xpose.msra.mxu0 0.0
        %2299 = vmatprep.subr.mxu0 0.0
        %2300 = vmatpush1.xpose.msra.mxu0 0.0
        %2301 = vmatprep.subr.mxu0 0.0
        %2302 = vmatpush1.xpose.msra.mxu0 0.0
        %2303 = vmatprep.subr.mxu0 0.0
        %2304 = vmatpush1.xpose.msra.mxu0 0.0
        %2305 = vmatprep.subr.mxu0 0.0
        %2306 = vmatpush1.xpose.msra.mxu0 0.0
        %2307 = vmatprep.subr.mxu0 0.0
        %2308 = vmatpush1.xpose.msra.mxu0 0.0
        %2309 = vmatprep.subr.mxu0 0.0
        %2310 = vmatpush1.xpose.msra.mxu0 0.0
        %2311 = vmatprep.subr.mxu0 0.0
        %2312 = vmatpush1.xpose.msra.mxu0 0.0
        %2313 = vmatprep.subr.mxu0 0.0
        %2314 = vmatpush1.xpose.msra.mxu0 0.0
        %2315 = vmatprep.subr.mxu0 0.0
        %2316 = vmatpush1.xpose.msra.mxu0 0.0
        %2317 = vmatprep.subr.mxu0 0.0
        %2318 = vmatpush1.xpose.msra.mxu0 %v2285
        %2319 = vmatprep.subr.mxu0 0.0
        %2320 = vmatpush2.xpose.msra.mxu0 0.0
        %2321 = vmatprep.subr.mxu0 0.0
        %2322 = vmatpush2.xpose.msra.mxu0 0.0
        %2323 = vmatprep.subr.mxu0 0.0
        %2324 = vmatpush2.xpose.msra.mxu0 0.0
        %2325 = vmatprep.subr.mxu0 0.0
        %2326 = vmatpush2.xpose.msra.mxu0 0.0
        %2327 = vmatprep.subr.mxu0 0.0
        %2328 = vmatpush2.xpose.msra.mxu0 0.0
        %2329 = vmatprep.subr.mxu0 0.0
        %2330 = vmatpush2.xpose.msra.mxu0 0.0
        %2331 = vmatprep.subr.mxu0 0.0
        %2332 = vmatpush2.xpose.msra.mxu0 0.0
        %2333 = vmatprep.subr.mxu0 0.0
        %2334 = vmatpush2.xpose.msra.mxu0 0.0
        %2335 = vmatprep.subr.mxu0 0.0
        %2336 = vmatpush2.xpose.msra.mxu0 0.0
        %2337 = vmatprep.subr.mxu0 0.0
        %2338 = vmatpush2.xpose.msra.mxu0 0.0
        %2339 = vmatprep.subr.mxu0 0.0
        %2340 = vmatpush2.xpose.msra.mxu0 0.0
        %2341 = vmatprep.subr.mxu0 0.0
        %2342 = vmatpush2.xpose.msra.mxu0 0.0
        %2343 = vmatprep.subr.mxu0 0.0
        %2344 = vmatpush2.xpose.msra.mxu0 0.0
        %2345 = vmatprep.subr.mxu0 0.0
        %2346 = vmatpush2.xpose.msra.mxu0 0.0
        %2347 = vmatprep.subr.mxu0 0.0
        %2348 = vmatpush2.xpose.msra.mxu0 0.0
        %2349 = vmatprep.subr.mxu0 0.0
        %2350 = vmatpush2.xpose.msra.mxu0 0.0
        %2351 = vmatprep.mubr.f32.mxu0 0.0
        %2352 = vmatmul.mubr.f32.gmra.mxu0 %v2283
        %v2353 = vpop.f32.mrf.mxu0
        %v2354 = vadd.f32 0.0, %v2353
        %v2355 = vpop.f32.mrf.mxu0
        %2356 = vdwg.mxu0
        %2357 = vrot.lane.b32.xlu0 %v612, 120
        %v2358 = vpop.permute.xlu0 %2357
        %2359 = vrot.lane.b32.xlu0 %v712, 120
        %v2360 = vpop.permute.xlu0 %2359
        %v2361 = vsel %vm815, %v2358, 0
        %v2363 = vsel %vm815, %v2360, 0
        %2365 = vmatprep.subr.mxu0 0.0
        %2366 = vmatpush1.xpose.msra.mxu0 0.0
        %2367 = vmatprep.subr.mxu0 0.0
        %2368 = vmatpush1.xpose.msra.mxu0 0.0
        %2369 = vmatprep.subr.mxu0 0.0
        %2370 = vmatpush1.xpose.msra.mxu0 0.0
        %2371 = vmatprep.subr.mxu0 0.0
        %2372 = vmatpush1.xpose.msra.mxu0 0.0
        %2373 = vmatprep.subr.mxu0 0.0
        %2374 = vmatpush1.xpose.msra.mxu0 0.0
        %2375 = vmatprep.subr.mxu0 0.0
        %2376 = vmatpush1.xpose.msra.mxu0 0.0
        %2377 = vmatprep.subr.mxu0 0.0
        %2378 = vmatpush1.xpose.msra.mxu0 0.0
        %2379 = vmatprep.subr.mxu0 0.0
        %2380 = vmatpush1.xpose.msra.mxu0 0.0
        %2381 = vmatprep.subr.mxu0 0.0
        %2382 = vmatpush1.xpose.msra.mxu0 0.0
        %2383 = vmatprep.subr.mxu0 0.0
        %2384 = vmatpush1.xpose.msra.mxu0 0.0
        %2385 = vmatprep.subr.mxu0 0.0
        %2386 = vmatpush1.xpose.msra.mxu0 0.0
        %2387 = vmatprep.subr.mxu0 0.0
        %2388 = vmatpush1.xpose.msra.mxu0 0.0
        %2389 = vmatprep.subr.mxu0 0.0
        %2390 = vmatpush1.xpose.msra.mxu0 0.0
        %2391 = vmatprep.subr.mxu0 0.0
        %2392 = vmatpush1.xpose.msra.mxu0 0.0
        %2393 = vmatprep.subr.mxu0 0.0
        %2394 = vmatpush1.xpose.msra.mxu0 0.0
        %2395 = vmatprep.subr.mxu0 0.0
        %2396 = vmatpush1.xpose.msra.mxu0 %v2363
        %2397 = vmatprep.subr.mxu0 0.0
        %2398 = vmatpush2.xpose.msra.mxu0 0.0
        %2399 = vmatprep.subr.mxu0 0.0
        %2400 = vmatpush2.xpose.msra.mxu0 0.0
        %2401 = vmatprep.subr.mxu0 0.0
        %2402 = vmatpush2.xpose.msra.mxu0 0.0
        %2403 = vmatprep.subr.mxu0 0.0
        %2404 = vmatpush2.xpose.msra.mxu0 0.0
        %2405 = vmatprep.subr.mxu0 0.0
        %2406 = vmatpush2.xpose.msra.mxu0 0.0
        %2407 = vmatprep.subr.mxu0 0.0
        %2408 = vmatpush2.xpose.msra.mxu0 0.0
        %2409 = vmatprep.subr.mxu0 0.0
        %2410 = vmatpush2.xpose.msra.mxu0 0.0
        %2411 = vmatprep.subr.mxu0 0.0
        %2412 = vmatpush2.xpose.msra.mxu0 0.0
        %2413 = vmatprep.subr.mxu0 0.0
        %2414 = vmatpush2.xpose.msra.mxu0 0.0
        %2415 = vmatprep.subr.mxu0 0.0
        %2416 = vmatpush2.xpose.msra.mxu0 0.0
        %2417 = vmatprep.subr.mxu0 0.0
        %2418 = vmatpush2.xpose.msra.mxu0 0.0
        %2419 = vmatprep.subr.mxu0 0.0
        %2420 = vmatpush2.xpose.msra.mxu0 0.0
        %2421 = vmatprep.subr.mxu0 0.0
        %2422 = vmatpush2.xpose.msra.mxu0 0.0
        %2423 = vmatprep.subr.mxu0 0.0
        %2424 = vmatpush2.xpose.msra.mxu0 0.0
        %2425 = vmatprep.subr.mxu0 0.0
        %2426 = vmatpush2.xpose.msra.mxu0 0.0
        %2427 = vmatprep.subr.mxu0 0.0
        %2428 = vmatpush2.xpose.msra.mxu0 0.0
        %2429 = vmatprep.mubr.f32.mxu0 0.0
        %2430 = vmatmul.mubr.f32.gmra.mxu0 %v2361
        %v2431 = vpop.f32.mrf.mxu0
        %v2432 = vadd.f32 0.0, %v2431
        %v2433 = vpop.f32.mrf.mxu0
        %2434 = vdwg.mxu0
        %2435 = vrot.lane.b32.xlu0 %v599, 120
        %v2436 = vpop.permute.xlu0 %2435
        %2437 = vrot.lane.b32.xlu0 %v699, 120
        %v2438 = vpop.permute.xlu0 %2437
        %v2439 = vsel %vm815, %v2436, 0
        %v2441 = vsel %vm815, %v2438, 0
        %2443 = vmatprep.subr.mxu0 0.0
        %2444 = vmatpush1.xpose.msra.mxu0 0.0
        %2445 = vmatprep.subr.mxu0 0.0
        %2446 = vmatpush1.xpose.msra.mxu0 0.0
        %2447 = vmatprep.subr.mxu0 0.0
        %2448 = vmatpush1.xpose.msra.mxu0 0.0
        %2449 = vmatprep.subr.mxu0 0.0
        %2450 = vmatpush1.xpose.msra.mxu0 0.0
        %2451 = vmatprep.subr.mxu0 0.0
        %2452 = vmatpush1.xpose.msra.mxu0 0.0
        %2453 = vmatprep.subr.mxu0 0.0
        %2454 = vmatpush1.xpose.msra.mxu0 0.0
        %2455 = vmatprep.subr.mxu0 0.0
        %2456 = vmatpush1.xpose.msra.mxu0 0.0
        %2457 = vmatprep.subr.mxu0 0.0
        %2458 = vmatpush1.xpose.msra.mxu0 0.0
        %2459 = vmatprep.subr.mxu0 0.0
        %2460 = vmatpush1.xpose.msra.mxu0 0.0
        %2461 = vmatprep.subr.mxu0 0.0
        %2462 = vmatpush1.xpose.msra.mxu0 0.0
        %2463 = vmatprep.subr.mxu0 0.0
        %2464 = vmatpush1.xpose.msra.mxu0 0.0
        %2465 = vmatprep.subr.mxu0 0.0
        %2466 = vmatpush1.xpose.msra.mxu0 0.0
        %2467 = vmatprep.subr.mxu0 0.0
        %2468 = vmatpush1.xpose.msra.mxu0 0.0
        %2469 = vmatprep.subr.mxu0 0.0
        %2470 = vmatpush1.xpose.msra.mxu0 0.0
        %2471 = vmatprep.subr.mxu0 0.0
        %2472 = vmatpush1.xpose.msra.mxu0 0.0
        %2473 = vmatprep.subr.mxu0 0.0
        %2474 = vmatpush1.xpose.msra.mxu0 %v2441
        %2475 = vmatprep.subr.mxu0 0.0
        %2476 = vmatpush2.xpose.msra.mxu0 0.0
        %2477 = vmatprep.subr.mxu0 0.0
        %2478 = vmatpush2.xpose.msra.mxu0 0.0
        %2479 = vmatprep.subr.mxu0 0.0
        %2480 = vmatpush2.xpose.msra.mxu0 0.0
        %2481 = vmatprep.subr.mxu0 0.0
        %2482 = vmatpush2.xpose.msra.mxu0 0.0
        %2483 = vmatprep.subr.mxu0 0.0
        %2484 = vmatpush2.xpose.msra.mxu0 0.0
        %2485 = vmatprep.subr.mxu0 0.0
        %2486 = vmatpush2.xpose.msra.mxu0 0.0
        %2487 = vmatprep.subr.mxu0 0.0
        %2488 = vmatpush2.xpose.msra.mxu0 0.0
        %2489 = vmatprep.subr.mxu0 0.0
        %2490 = vmatpush2.xpose.msra.mxu0 0.0
        %2491 = vmatprep.subr.mxu0 0.0
        %2492 = vmatpush2.xpose.msra.mxu0 0.0
        %2493 = vmatprep.subr.mxu0 0.0
        %2494 = vmatpush2.xpose.msra.mxu0 0.0
        %2495 = vmatprep.subr.mxu0 0.0
        %2496 = vmatpush2.xpose.msra.mxu0 0.0
        %2497 = vmatprep.subr.mxu0 0.0
        %2498 = vmatpush2.xpose.msra.mxu0 0.0
        %2499 = vmatprep.subr.mxu0 0.0
        %2500 = vmatpush2.xpose.msra.mxu0 0.0
        %2501 = vmatprep.subr.mxu0 0.0
        %2502 = vmatpush2.xpose.msra.mxu0 0.0
        %2503 = vmatprep.subr.mxu0 0.0
        %2504 = vmatpush2.xpose.msra.mxu0 0.0
        %2505 = vmatprep.subr.mxu0 0.0
        %2506 = vmatpush2.xpose.msra.mxu0 0.0
        %2507 = vmatprep.mubr.f32.mxu0 0.0
        %2508 = vmatmul.mubr.f32.gmra.mxu0 %v2439
        %v2509 = vpop.f32.mrf.mxu0
        %v2510 = vadd.f32 0.0, %v2509
        %v2511 = vpop.f32.mrf.mxu0
        %2512 = vdwg.mxu0
        %2513 = vrot.lane.b32.xlu0 %v613, 120
        %v2514 = vpop.permute.xlu0 %2513
        %2515 = vrot.lane.b32.xlu0 %v713, 120
        %v2516 = vpop.permute.xlu0 %2515
        %v2517 = vsel %vm815, %v2514, 0
        %v2519 = vsel %vm815, %v2516, 0
        %2521 = vmatprep.subr.mxu0 0.0
        %2522 = vmatpush1.xpose.msra.mxu0 0.0
        %2523 = vmatprep.subr.mxu0 0.0
        %2524 = vmatpush1.xpose.msra.mxu0 0.0
        %2525 = vmatprep.subr.mxu0 0.0
        %2526 = vmatpush1.xpose.msra.mxu0 0.0
        %2527 = vmatprep.subr.mxu0 0.0
        %2528 = vmatpush1.xpose.msra.mxu0 0.0
        %2529 = vmatprep.subr.mxu0 0.0
        %2530 = vmatpush1.xpose.msra.mxu0 0.0
        %2531 = vmatprep.subr.mxu0 0.0
        %2532 = vmatpush1.xpose.msra.mxu0 0.0
        %2533 = vmatprep.subr.mxu0 0.0
        %2534 = vmatpush1.xpose.msra.mxu0 0.0
        %2535 = vmatprep.subr.mxu0 0.0
        %2536 = vmatpush1.xpose.msra.mxu0 0.0
        %2537 = vmatprep.subr.mxu0 0.0
        %2538 = vmatpush1.xpose.msra.mxu0 0.0
        %2539 = vmatprep.subr.mxu0 0.0
        %2540 = vmatpush1.xpose.msra.mxu0 0.0
        %2541 = vmatprep.subr.mxu0 0.0
        %2542 = vmatpush1.xpose.msra.mxu0 0.0
        %2543 = vmatprep.subr.mxu0 0.0
        %2544 = vmatpush1.xpose.msra.mxu0 0.0
        %2545 = vmatprep.subr.mxu0 0.0
        %2546 = vmatpush1.xpose.msra.mxu0 0.0
        %2547 = vmatprep.subr.mxu0 0.0
        %2548 = vmatpush1.xpose.msra.mxu0 0.0
        %2549 = vmatprep.subr.mxu0 0.0
        %2550 = vmatpush1.xpose.msra.mxu0 0.0
        %2551 = vmatprep.subr.mxu0 0.0
        %2552 = vmatpush1.xpose.msra.mxu0 %v2519
        %2553 = vmatprep.subr.mxu0 0.0
        %2554 = vmatpush2.xpose.msra.mxu0 0.0
        %2555 = vmatprep.subr.mxu0 0.0
        %2556 = vmatpush2.xpose.msra.mxu0 0.0
        %2557 = vmatprep.subr.mxu0 0.0
        %2558 = vmatpush2.xpose.msra.mxu0 0.0
        %2559 = vmatprep.subr.mxu0 0.0
        %2560 = vmatpush2.xpose.msra.mxu0 0.0
        %2561 = vmatprep.subr.mxu0 0.0
        %2562 = vmatpush2.xpose.msra.mxu0 0.0
        %2563 = vmatprep.subr.mxu0 0.0
        %2564 = vmatpush2.xpose.msra.mxu0 0.0
        %2565 = vmatprep.subr.mxu0 0.0
        %2566 = vmatpush2.xpose.msra.mxu0 0.0
        %2567 = vmatprep.subr.mxu0 0.0
        %2568 = vmatpush2.xpose.msra.mxu0 0.0
        %2569 = vmatprep.subr.mxu0 0.0
        %2570 = vmatpush2.xpose.msra.mxu0 0.0
        %2571 = vmatprep.subr.mxu0 0.0
        %2572 = vmatpush2.xpose.msra.mxu0 0.0
        %2573 = vmatprep.subr.mxu0 0.0
        %2574 = vmatpush2.xpose.msra.mxu0 0.0
        %2575 = vmatprep.subr.mxu0 0.0
        %2576 = vmatpush2.xpose.msra.mxu0 0.0
        %2577 = vmatprep.subr.mxu0 0.0
        %2578 = vmatpush2.xpose.msra.mxu0 0.0
        %2579 = vmatprep.subr.mxu0 0.0
        %2580 = vmatpush2.xpose.msra.mxu0 0.0
        %2581 = vmatprep.subr.mxu0 0.0
        %2582 = vmatpush2.xpose.msra.mxu0 0.0
        %2583 = vmatprep.subr.mxu0 0.0
        %2584 = vmatpush2.xpose.msra.mxu0 0.0
        %2585 = vmatprep.mubr.f32.mxu0 0.0
        %2586 = vmatmul.mubr.f32.gmra.mxu0 %v2517
        %v2587 = vpop.f32.mrf.mxu0
        %v2588 = vadd.f32 0.0, %v2587
        %v2589 = vpop.f32.mrf.mxu0
        %2590 = vdwg.mxu0
        %2591 = vrot.lane.b32.xlu0 %v604, 120
        %v2592 = vpop.permute.xlu0 %2591
        %2593 = vrot.lane.b32.xlu0 %v704, 120
        %v2594 = vpop.permute.xlu0 %2593
        %v2595 = vsel %vm815, %v2592, 0
        %v2597 = vsel %vm815, %v2594, 0
        %2599 = vmatprep.subr.mxu0 0.0
        %2600 = vmatpush1.xpose.msra.mxu0 0.0
        %2601 = vmatprep.subr.mxu0 0.0
        %2602 = vmatpush1.xpose.msra.mxu0 0.0
        %2603 = vmatprep.subr.mxu0 0.0
        %2604 = vmatpush1.xpose.msra.mxu0 0.0
        %2605 = vmatprep.subr.mxu0 0.0
        %2606 = vmatpush1.xpose.msra.mxu0 0.0
        %2607 = vmatprep.subr.mxu0 0.0
        %2608 = vmatpush1.xpose.msra.mxu0 0.0
        %2609 = vmatprep.subr.mxu0 0.0
        %2610 = vmatpush1.xpose.msra.mxu0 0.0
        %2611 = vmatprep.subr.mxu0 0.0
        %2612 = vmatpush1.xpose.msra.mxu0 0.0
        %2613 = vmatprep.subr.mxu0 0.0
        %2614 = vmatpush1.xpose.msra.mxu0 0.0
        %2615 = vmatprep.subr.mxu0 0.0
        %2616 = vmatpush1.xpose.msra.mxu0 0.0
        %2617 = vmatprep.subr.mxu0 0.0
        %2618 = vmatpush1.xpose.msra.mxu0 0.0
        %2619 = vmatprep.subr.mxu0 0.0
        %2620 = vmatpush1.xpose.msra.mxu0 0.0
        %2621 = vmatprep.subr.mxu0 0.0
        %2622 = vmatpush1.xpose.msra.mxu0 0.0
        %2623 = vmatprep.subr.mxu0 0.0
        %2624 = vmatpush1.xpose.msra.mxu0 0.0
        %2625 = vmatprep.subr.mxu0 0.0
        %2626 = vmatpush1.xpose.msra.mxu0 0.0
        %2627 = vmatprep.subr.mxu0 0.0
        %2628 = vmatpush1.xpose.msra.mxu0 0.0
        %2629 = vmatprep.subr.mxu0 0.0
        %2630 = vmatpush1.xpose.msra.mxu0 %v2597
        %2631 = vmatprep.subr.mxu0 0.0
        %2632 = vmatpush2.xpose.msra.mxu0 0.0
        %2633 = vmatprep.subr.mxu0 0.0
        %2634 = vmatpush2.xpose.msra.mxu0 0.0
        %2635 = vmatprep.subr.mxu0 0.0
        %2636 = vmatpush2.xpose.msra.mxu0 0.0
        %2637 = vmatprep.subr.mxu0 0.0
        %2638 = vmatpush2.xpose.msra.mxu0 0.0
        %2639 = vmatprep.subr.mxu0 0.0
        %2640 = vmatpush2.xpose.msra.mxu0 0.0
        %2641 = vmatprep.subr.mxu0 0.0
        %2642 = vmatpush2.xpose.msra.mxu0 0.0
        %2643 = vmatprep.subr.mxu0 0.0
        %2644 = vmatpush2.xpose.msra.mxu0 0.0
        %2645 = vmatprep.subr.mxu0 0.0
        %2646 = vmatpush2.xpose.msra.mxu0 0.0
        %2647 = vmatprep.subr.mxu0 0.0
        %2648 = vmatpush2.xpose.msra.mxu0 0.0
        %2649 = vmatprep.subr.mxu0 0.0
        %2650 = vmatpush2.xpose.msra.mxu0 0.0
        %2651 = vmatprep.subr.mxu0 0.0
        %2652 = vmatpush2.xpose.msra.mxu0 0.0
        %2653 = vmatprep.subr.mxu0 0.0
        %2654 = vmatpush2.xpose.msra.mxu0 0.0
        %2655 = vmatprep.subr.mxu0 0.0
        %2656 = vmatpush2.xpose.msra.mxu0 0.0
        %2657 = vmatprep.subr.mxu0 0.0
        %2658 = vmatpush2.xpose.msra.mxu0 0.0
        %2659 = vmatprep.subr.mxu0 0.0
        %2660 = vmatpush2.xpose.msra.mxu0 0.0
        %2661 = vmatprep.subr.mxu0 0.0
        %2662 = vmatpush2.xpose.msra.mxu0 0.0
        %2663 = vmatprep.mubr.f32.mxu0 0.0
        %2664 = vmatmul.mubr.f32.gmra.mxu0 %v2595
        %v2665 = vpop.f32.mrf.mxu0
        %v2666 = vadd.f32 0.0, %v2665
        %v2667 = vpop.f32.mrf.mxu0
        %2668 = vdwg.mxu0
        %2669 = vrot.lane.b32.xlu0 %v614, 120
        %v2670 = vpop.permute.xlu0 %2669
        %2671 = vrot.lane.b32.xlu0 %v714, 120
        %v2672 = vpop.permute.xlu0 %2671
        %v2673 = vsel %vm815, %v2670, 0
        %v2675 = vsel %vm815, %v2672, 0
        %2677 = vmatprep.subr.mxu0 0.0
        %2678 = vmatpush1.xpose.msra.mxu0 0.0
        %2679 = vmatprep.subr.mxu0 0.0
        %2680 = vmatpush1.xpose.msra.mxu0 0.0
        %2681 = vmatprep.subr.mxu0 0.0
        %2682 = vmatpush1.xpose.msra.mxu0 0.0
        %2683 = vmatprep.subr.mxu0 0.0
        %2684 = vmatpush1.xpose.msra.mxu0 0.0
        %2685 = vmatprep.subr.mxu0 0.0
        %2686 = vmatpush1.xpose.msra.mxu0 0.0
        %2687 = vmatprep.subr.mxu0 0.0
        %2688 = vmatpush1.xpose.msra.mxu0 0.0
        %2689 = vmatprep.subr.mxu0 0.0
        %2690 = vmatpush1.xpose.msra.mxu0 0.0
        %2691 = vmatprep.subr.mxu0 0.0
        %2692 = vmatpush1.xpose.msra.mxu0 0.0
        %2693 = vmatprep.subr.mxu0 0.0
        %2694 = vmatpush1.xpose.msra.mxu0 0.0
        %2695 = vmatprep.subr.mxu0 0.0
        %2696 = vmatpush1.xpose.msra.mxu0 0.0
        %2697 = vmatprep.subr.mxu0 0.0
        %2698 = vmatpush1.xpose.msra.mxu0 0.0
        %2699 = vmatprep.subr.mxu0 0.0
        %2700 = vmatpush1.xpose.msra.mxu0 0.0
        %2701 = vmatprep.subr.mxu0 0.0
        %2702 = vmatpush1.xpose.msra.mxu0 0.0
        %2703 = vmatprep.subr.mxu0 0.0
        %2704 = vmatpush1.xpose.msra.mxu0 0.0
        %2705 = vmatprep.subr.mxu0 0.0
        %2706 = vmatpush1.xpose.msra.mxu0 0.0
        %2707 = vmatprep.subr.mxu0 0.0
        %2708 = vmatpush1.xpose.msra.mxu0 %v2675
        %2709 = vmatprep.subr.mxu0 0.0
        %2710 = vmatpush2.xpose.msra.mxu0 0.0
        %2711 = vmatprep.subr.mxu0 0.0
        %2712 = vmatpush2.xpose.msra.mxu0 0.0
        %2713 = vmatprep.subr.mxu0 0.0
        %2714 = vmatpush2.xpose.msra.mxu0 0.0
        %2715 = vmatprep.subr.mxu0 0.0
        %2716 = vmatpush2.xpose.msra.mxu0 0.0
        %2717 = vmatprep.subr.mxu0 0.0
        %2718 = vmatpush2.xpose.msra.mxu0 0.0
        %2719 = vmatprep.subr.mxu0 0.0
        %2720 = vmatpush2.xpose.msra.mxu0 0.0
        %2721 = vmatprep.subr.mxu0 0.0
        %2722 = vmatpush2.xpose.msra.mxu0 0.0
        %2723 = vmatprep.subr.mxu0 0.0
        %2724 = vmatpush2.xpose.msra.mxu0 0.0
        %2725 = vmatprep.subr.mxu0 0.0
        %2726 = vmatpush2.xpose.msra.mxu0 0.0
        %2727 = vmatprep.subr.mxu0 0.0
        %2728 = vmatpush2.xpose.msra.mxu0 0.0
        %2729 = vmatprep.subr.mxu0 0.0
        %2730 = vmatpush2.xpose.msra.mxu0 0.0
        %2731 = vmatprep.subr.mxu0 0.0
        %2732 = vmatpush2.xpose.msra.mxu0 0.0
        %2733 = vmatprep.subr.mxu0 0.0
        %2734 = vmatpush2.xpose.msra.mxu0 0.0
        %2735 = vmatprep.subr.mxu0 0.0
        %2736 = vmatpush2.xpose.msra.mxu0 0.0
        %2737 = vmatprep.subr.mxu0 0.0
        %2738 = vmatpush2.xpose.msra.mxu0 0.0
        %2739 = vmatprep.subr.mxu0 0.0
        %2740 = vmatpush2.xpose.msra.mxu0 0.0
        %2741 = vmatprep.mubr.f32.mxu0 0.0
        %2742 = vmatmul.mubr.f32.gmra.mxu0 %v2673
        %v2743 = vpop.f32.mrf.mxu0
        %v2744 = vadd.f32 0.0, %v2743
        %v2745 = vpop.f32.mrf.mxu0
        %2746 = vdwg.mxu0
        %v2747 = vmul.f32 %v2198, 0.35355338
        %v2748 = vmul.f32 %v2276, 0.35355338
        %v2749 = vmul.f32 %v2354, 0.35355338
        %v2750 = vmul.f32 %v2432, 0.35355338
        %v2751 = vmul.f32 %v2510, 0.35355338
        %v2752 = vmul.f32 %v2588, 0.35355338
        %v2753 = vmul.f32 %v2666, 0.35355338
        %v2754 = vmul.f32 %v2744, 0.35355338
        %v2755 = vsel %vm1416, -1e+09, %v2747
        %v2756 = vsel %vm1417, -1e+09, %v2748
        %v2757 = vsel %vm1418, -1e+09, %v2749
        %v2758 = vsel %vm1419, -1e+09, %v2750
        %v2759 = vsel %vm1420, -1e+09, %v2751
        %v2760 = vsel %vm1421, -1e+09, %v2752
        %v2761 = vsel %vm1422, -1e+09, %v2753
        %v2762 = vsel %vm1423, -1e+09, %v2754
        %v2763 = vsel %vm1432, %v2755, -inf
        %2764 = vmax.xlane.f32.xlu0 %v2763
        %v2765 = vpop.xlane.xlu0 %2764
        %v2766 = vsel %vm1432, %v2756, -inf
        %2767 = vmax.xlane.f32.xlu0 %v2766
        %v2768 = vpop.xlane.xlu0 %2767
        %v2769 = vsel %vm1432, %v2757, -inf
        %2770 = vmax.xlane.f32.xlu0 %v2769
        %v2771 = vpop.xlane.xlu0 %2770
        %v2772 = vsel %vm1432, %v2758, -inf
        %2773 = vmax.xlane.f32.xlu0 %v2772
        %v2774 = vpop.xlane.xlu0 %2773
        %v2775 = vsel %vm1432, %v2759, -inf
        %2776 = vmax.xlane.f32.xlu0 %v2775
        %v2777 = vpop.xlane.xlu0 %2776
        %v2778 = vsel %vm1432, %v2760, -inf
        %2779 = vmax.xlane.f32.xlu0 %v2778
        %v2780 = vpop.xlane.xlu0 %2779
        %v2781 = vsel %vm1432, %v2761, -inf
        %2782 = vmax.xlane.f32.xlu0 %v2781
        %v2783 = vpop.xlane.xlu0 %2782
        %v2784 = vsel %vm1432, %v2762, -inf
        %2785 = vmax.xlane.f32.xlu0 %v2784
        %v2786 = vpop.xlane.xlu0 %2785
        %v2787 = vsub.f32 %v2755, %v2765
        %v2788 = vsub.f32 %v2756, %v2768
        %v2789 = vsub.f32 %v2757, %v2771
        %v2790 = vsub.f32 %v2758, %v2774
        %v2791 = vsub.f32 %v2759, %v2777
        %v2792 = vsub.f32 %v2760, %v2780
        %v2793 = vsub.f32 %v2761, %v2783
        %v2794 = vsub.f32 %v2762, %v2786
        %v2795 = vmul.f32 %v2787, 1.442695
        %v2796 = vpow.pop %v2795
        %v2797 = vmul.f32 %v2788, 1.442695
        %v2798 = vpow.pop %v2797
        %v2799 = vmul.f32 %v2789, 1.442695
        %v2800 = vpow.pop %v2799
        %v2801 = vmul.f32 %v2790, 1.442695
        %v2802 = vpow.pop %v2801
        %v2803 = vmul.f32 %v2791, 1.442695
        %v2804 = vpow.pop %v2803
        %v2805 = vmul.f32 %v2792, 1.442695
        %v2806 = vpow.pop %v2805
        %v2807 = vmul.f32 %v2793, 1.442695
        %v2808 = vpow.pop %v2807
        %v2809 = vmul.f32 %v2794, 1.442695
        %v2810 = vpow.pop %v2809
        %v2811 = vsel %vm1432, %v2796, 0.0
        %2812 = vadd.xlane.f32.xlu0 %v2811
        %v2813 = vpop.xlane.xlu0 %2812
        %v2814 = vsel %vm1432, %v2798, 0.0
        %2815 = vadd.xlane.f32.xlu0 %v2814
        %v2816 = vpop.xlane.xlu0 %2815
        %v2817 = vsel %vm1432, %v2800, 0.0
        %2818 = vadd.xlane.f32.xlu0 %v2817
        %v2819 = vpop.xlane.xlu0 %2818
        %v2820 = vsel %vm1432, %v2802, 0.0
        %2821 = vadd.xlane.f32.xlu0 %v2820
        %v2822 = vpop.xlane.xlu0 %2821
        %v2823 = vsel %vm1432, %v2804, 0.0
        %2824 = vadd.xlane.f32.xlu0 %v2823
        %v2825 = vpop.xlane.xlu0 %2824
        %v2826 = vsel %vm1432, %v2806, 0.0
        %2827 = vadd.xlane.f32.xlu0 %v2826
        %v2828 = vpop.xlane.xlu0 %2827
        %v2829 = vsel %vm1432, %v2808, 0.0
        %2830 = vadd.xlane.f32.xlu0 %v2829
        %v2831 = vpop.xlane.xlu0 %2830
        %v2832 = vsel %vm1432, %v2810, 0.0
        %2833 = vadd.xlane.f32.xlu0 %v2832
        %v2834 = vpop.xlane.xlu0 %2833
        %v2835 = vrcp.pop %v2813
        %v2836 = vmul.f32 %v2796, %v2835
        %v2837 = vrcp.pop %v2816
        %v2838 = vmul.f32 %v2798, %v2837
        %v2839 = vrcp.pop %v2819
        %v2840 = vmul.f32 %v2800, %v2839
        %v2841 = vrcp.pop %v2822
        %v2842 = vmul.f32 %v2802, %v2841
        %v2843 = vrcp.pop %v2825
        %v2844 = vmul.f32 %v2804, %v2843
        %v2845 = vrcp.pop %v2828
        %v2846 = vmul.f32 %v2806, %v2845
        %v2847 = vrcp.pop %v2831
        %v2848 = vmul.f32 %v2808, %v2847
        %v2849 = vrcp.pop %v2834
        %v2850 = vmul.f32 %v2810, %v2849
        %2851 = vrot.lane.b32.xlu0 %v789, 120
        %v2852 = vpop.permute.xlu0 %2851
        %v2854 = vsel %vm1521, %v2836, 0
        %v2856 = vsel %vm1525, %v2852, 0
        %2858 = vmatprep.subr.mxu0 0.0
        %2859 = vmatpush1.msra.mxu0 0.0
        %2860 = vmatprep.subr.mxu0 0.0
        %2861 = vmatpush1.msra.mxu0 0.0
        %2862 = vmatprep.subr.mxu0 0.0
        %2863 = vmatpush1.msra.mxu0 0.0
        %2864 = vmatprep.subr.mxu0 0.0
        %2865 = vmatpush1.msra.mxu0 0.0
        %2866 = vmatprep.subr.mxu0 0.0
        %2867 = vmatpush1.msra.mxu0 0.0
        %2868 = vmatprep.subr.mxu0 0.0
        %2869 = vmatpush1.msra.mxu0 0.0
        %2870 = vmatprep.subr.mxu0 0.0
        %2871 = vmatpush1.msra.mxu0 0.0
        %2872 = vmatprep.subr.mxu0 0.0
        %2873 = vmatpush1.msra.mxu0 0.0
        %2874 = vmatprep.subr.mxu0 0.0
        %2875 = vmatpush1.msra.mxu0 0.0
        %2876 = vmatprep.subr.mxu0 0.0
        %2877 = vmatpush1.msra.mxu0 0.0
        %2878 = vmatprep.subr.mxu0 0.0
        %2879 = vmatpush1.msra.mxu0 0.0
        %2880 = vmatprep.subr.mxu0 0.0
        %2881 = vmatpush1.msra.mxu0 0.0
        %2882 = vmatprep.subr.mxu0 0.0
        %2883 = vmatpush1.msra.mxu0 0.0
        %2884 = vmatprep.subr.mxu0 0.0
        %2885 = vmatpush1.msra.mxu0 0.0
        %2886 = vmatprep.subr.mxu0 0.0
        %2887 = vmatpush1.msra.mxu0 0.0
        %2888 = vmatprep.subr.mxu0 0.0
        %2889 = vmatpush1.msra.mxu0 %v2856
        %2890 = vmatprep.subr.mxu0 0.0
        %2891 = vmatpush2.msra.mxu0 0.0
        %2892 = vmatprep.subr.mxu0 0.0
        %2893 = vmatpush2.msra.mxu0 0.0
        %2894 = vmatprep.subr.mxu0 0.0
        %2895 = vmatpush2.msra.mxu0 0.0
        %2896 = vmatprep.subr.mxu0 0.0
        %2897 = vmatpush2.msra.mxu0 0.0
        %2898 = vmatprep.subr.mxu0 0.0
        %2899 = vmatpush2.msra.mxu0 0.0
        %2900 = vmatprep.subr.mxu0 0.0
        %2901 = vmatpush2.msra.mxu0 0.0
        %2902 = vmatprep.subr.mxu0 0.0
        %2903 = vmatpush2.msra.mxu0 0.0
        %2904 = vmatprep.subr.mxu0 0.0
        %2905 = vmatpush2.msra.mxu0 0.0
        %2906 = vmatprep.subr.mxu0 0.0
        %2907 = vmatpush2.msra.mxu0 0.0
        %2908 = vmatprep.subr.mxu0 0.0
        %2909 = vmatpush2.msra.mxu0 0.0
        %2910 = vmatprep.subr.mxu0 0.0
        %2911 = vmatpush2.msra.mxu0 0.0
        %2912 = vmatprep.subr.mxu0 0.0
        %2913 = vmatpush2.msra.mxu0 0.0
        %2914 = vmatprep.subr.mxu0 0.0
        %2915 = vmatpush2.msra.mxu0 0.0
        %2916 = vmatprep.subr.mxu0 0.0
        %2917 = vmatpush2.msra.mxu0 0.0
        %2918 = vmatprep.subr.mxu0 0.0
        %2919 = vmatpush2.msra.mxu0 0.0
        %2920 = vmatprep.subr.mxu0 0.0
        %2921 = vmatpush2.msra.mxu0 0.0
        %2922 = vmatprep.mubr.f32.mxu0 0.0
        %2923 = vmatmul.mubr.f32.gmra.mxu0 %v2854
        %v2924 = vpop.f32.mrf.mxu0
        %v2925 = vadd.f32 0.0, %v2924
        %v2926 = vpop.f32.mrf.mxu0
        %2927 = vdwg.mxu0
        %2928 = vrot.lane.b32.xlu0 %v811, 120
        %v2929 = vpop.permute.xlu0 %2928
        %v2931 = vsel %vm1521, %v2838, 0
        %v2933 = vsel %vm1525, %v2929, 0
        %2935 = vmatprep.subr.mxu0 0.0
        %2936 = vmatpush1.msra.mxu0 0.0
        %2937 = vmatprep.subr.mxu0 0.0
        %2938 = vmatpush1.msra.mxu0 0.0
        %2939 = vmatprep.subr.mxu0 0.0
        %2940 = vmatpush1.msra.mxu0 0.0
        %2941 = vmatprep.subr.mxu0 0.0
        %2942 = vmatpush1.msra.mxu0 0.0
        %2943 = vmatprep.subr.mxu0 0.0
        %2944 = vmatpush1.msra.mxu0 0.0
        %2945 = vmatprep.subr.mxu0 0.0
        %2946 = vmatpush1.msra.mxu0 0.0
        %2947 = vmatprep.subr.mxu0 0.0
        %2948 = vmatpush1.msra.mxu0 0.0
        %2949 = vmatprep.subr.mxu0 0.0
        %2950 = vmatpush1.msra.mxu0 0.0
        %2951 = vmatprep.subr.mxu0 0.0
        %2952 = vmatpush1.msra.mxu0 0.0
        %2953 = vmatprep.subr.mxu0 0.0
        %2954 = vmatpush1.msra.mxu0 0.0
        %2955 = vmatprep.subr.mxu0 0.0
        %2956 = vmatpush1.msra.mxu0 0.0
        %2957 = vmatprep.subr.mxu0 0.0
        %2958 = vmatpush1.msra.mxu0 0.0
        %2959 = vmatprep.subr.mxu0 0.0
        %2960 = vmatpush1.msra.mxu0 0.0
        %2961 = vmatprep.subr.mxu0 0.0
        %2962 = vmatpush1.msra.mxu0 0.0
        %2963 = vmatprep.subr.mxu0 0.0
        %2964 = vmatpush1.msra.mxu0 0.0
        %2965 = vmatprep.subr.mxu0 0.0
        %2966 = vmatpush1.msra.mxu0 %v2933
        %2967 = vmatprep.subr.mxu0 0.0
        %2968 = vmatpush2.msra.mxu0 0.0
        %2969 = vmatprep.subr.mxu0 0.0
        %2970 = vmatpush2.msra.mxu0 0.0
        %2971 = vmatprep.subr.mxu0 0.0
        %2972 = vmatpush2.msra.mxu0 0.0
        %2973 = vmatprep.subr.mxu0 0.0
        %2974 = vmatpush2.msra.mxu0 0.0
        %2975 = vmatprep.subr.mxu0 0.0
        %2976 = vmatpush2.msra.mxu0 0.0
        %2977 = vmatprep.subr.mxu0 0.0
        %2978 = vmatpush2.msra.mxu0 0.0
        %2979 = vmatprep.subr.mxu0 0.0
        %2980 = vmatpush2.msra.mxu0 0.0
        %2981 = vmatprep.subr.mxu0 0.0
        %2982 = vmatpush2.msra.mxu0 0.0
        %2983 = vmatprep.subr.mxu0 0.0
        %2984 = vmatpush2.msra.mxu0 0.0
        %2985 = vmatprep.subr.mxu0 0.0
        %2986 = vmatpush2.msra.mxu0 0.0
        %2987 = vmatprep.subr.mxu0 0.0
        %2988 = vmatpush2.msra.mxu0 0.0
        %2989 = vmatprep.subr.mxu0 0.0
        %2990 = vmatpush2.msra.mxu0 0.0
        %2991 = vmatprep.subr.mxu0 0.0
        %2992 = vmatpush2.msra.mxu0 0.0
        %2993 = vmatprep.subr.mxu0 0.0
        %2994 = vmatpush2.msra.mxu0 0.0
        %2995 = vmatprep.subr.mxu0 0.0
        %2996 = vmatpush2.msra.mxu0 0.0
        %2997 = vmatprep.subr.mxu0 0.0
        %2998 = vmatpush2.msra.mxu0 0.0
        %2999 = vmatprep.mubr.f32.mxu0 0.0
        %3000 = vmatmul.mubr.f32.gmra.mxu0 %v2931
        %v3001 = vpop.f32.mrf.mxu0
        %v3002 = vadd.f32 0.0, %v3001
        %v3003 = vpop.f32.mrf.mxu0
        %3004 = vdwg.mxu0
        %3005 = vrot.lane.b32.xlu0 %v794, 120
        %v3006 = vpop.permute.xlu0 %3005
        %v3008 = vsel %vm1521, %v2840, 0
        %v3010 = vsel %vm1525, %v3006, 0
        %3012 = vmatprep.subr.mxu0 0.0
        %3013 = vmatpush1.msra.mxu0 0.0
        %3014 = vmatprep.subr.mxu0 0.0
        %3015 = vmatpush1.msra.mxu0 0.0
        %3016 = vmatprep.subr.mxu0 0.0
        %3017 = vmatpush1.msra.mxu0 0.0
        %3018 = vmatprep.subr.mxu0 0.0
        %3019 = vmatpush1.msra.mxu0 0.0
        %3020 = vmatprep.subr.mxu0 0.0
        %3021 = vmatpush1.msra.mxu0 0.0
        %3022 = vmatprep.subr.mxu0 0.0
        %3023 = vmatpush1.msra.mxu0 0.0
        %3024 = vmatprep.subr.mxu0 0.0
        %3025 = vmatpush1.msra.mxu0 0.0
        %3026 = vmatprep.subr.mxu0 0.0
        %3027 = vmatpush1.msra.mxu0 0.0
        %3028 = vmatprep.subr.mxu0 0.0
        %3029 = vmatpush1.msra.mxu0 0.0
        %3030 = vmatprep.subr.mxu0 0.0
        %3031 = vmatpush1.msra.mxu0 0.0
        %3032 = vmatprep.subr.mxu0 0.0
        %3033 = vmatpush1.msra.mxu0 0.0
        %3034 = vmatprep.subr.mxu0 0.0
        %3035 = vmatpush1.msra.mxu0 0.0
        %3036 = vmatprep.subr.mxu0 0.0
        %3037 = vmatpush1.msra.mxu0 0.0
        %3038 = vmatprep.subr.mxu0 0.0
        %3039 = vmatpush1.msra.mxu0 0.0
        %3040 = vmatprep.subr.mxu0 0.0
        %3041 = vmatpush1.msra.mxu0 0.0
        %3042 = vmatprep.subr.mxu0 0.0
        %3043 = vmatpush1.msra.mxu0 %v3010
        %3044 = vmatprep.subr.mxu0 0.0
        %3045 = vmatpush2.msra.mxu0 0.0
        %3046 = vmatprep.subr.mxu0 0.0
        %3047 = vmatpush2.msra.mxu0 0.0
        %3048 = vmatprep.subr.mxu0 0.0
        %3049 = vmatpush2.msra.mxu0 0.0
        %3050 = vmatprep.subr.mxu0 0.0
        %3051 = vmatpush2.msra.mxu0 0.0
        %3052 = vmatprep.subr.mxu0 0.0
        %3053 = vmatpush2.msra.mxu0 0.0
        %3054 = vmatprep.subr.mxu0 0.0
        %3055 = vmatpush2.msra.mxu0 0.0
        %3056 = vmatprep.subr.mxu0 0.0
        %3057 = vmatpush2.msra.mxu0 0.0
        %3058 = vmatprep.subr.mxu0 0.0
        %3059 = vmatpush2.msra.mxu0 0.0
        %3060 = vmatprep.subr.mxu0 0.0
        %3061 = vmatpush2.msra.mxu0 0.0
        %3062 = vmatprep.subr.mxu0 0.0
        %3063 = vmatpush2.msra.mxu0 0.0
        %3064 = vmatprep.subr.mxu0 0.0
        %3065 = vmatpush2.msra.mxu0 0.0
        %3066 = vmatprep.subr.mxu0 0.0
        %3067 = vmatpush2.msra.mxu0 0.0
        %3068 = vmatprep.subr.mxu0 0.0
        %3069 = vmatpush2.msra.mxu0 0.0
        %3070 = vmatprep.subr.mxu0 0.0
        %3071 = vmatpush2.msra.mxu0 0.0
        %3072 = vmatprep.subr.mxu0 0.0
        %3073 = vmatpush2.msra.mxu0 0.0
        %3074 = vmatprep.subr.mxu0 0.0
        %3075 = vmatpush2.msra.mxu0 0.0
        %3076 = vmatprep.mubr.f32.mxu0 0.0
        %3077 = vmatmul.mubr.f32.gmra.mxu0 %v3008
        %v3078 = vpop.f32.mrf.mxu0
        %v3079 = vadd.f32 0.0, %v3078
        %v3080 = vpop.f32.mrf.mxu0
        %3081 = vdwg.mxu0
        %3082 = vrot.lane.b32.xlu0 %v812, 120
        %v3083 = vpop.permute.xlu0 %3082
        %v3085 = vsel %vm1521, %v2842, 0
        %v3087 = vsel %vm1525, %v3083, 0
        %3089 = vmatprep.subr.mxu0 0.0
        %3090 = vmatpush1.msra.mxu0 0.0
        %3091 = vmatprep.subr.mxu0 0.0
        %3092 = vmatpush1.msra.mxu0 0.0
        %3093 = vmatprep.subr.mxu0 0.0
        %3094 = vmatpush1.msra.mxu0 0.0
        %3095 = vmatprep.subr.mxu0 0.0
        %3096 = vmatpush1.msra.mxu0 0.0
        %3097 = vmatprep.subr.mxu0 0.0
        %3098 = vmatpush1.msra.mxu0 0.0
        %3099 = vmatprep.subr.mxu0 0.0
        %3100 = vmatpush1.msra.mxu0 0.0
        %3101 = vmatprep.subr.mxu0 0.0
        %3102 = vmatpush1.msra.mxu0 0.0
        %3103 = vmatprep.subr.mxu0 0.0
        %3104 = vmatpush1.msra.mxu0 0.0
        %3105 = vmatprep.subr.mxu0 0.0
        %3106 = vmatpush1.msra.mxu0 0.0
        %3107 = vmatprep.subr.mxu0 0.0
        %3108 = vmatpush1.msra.mxu0 0.0
        %3109 = vmatprep.subr.mxu0 0.0
        %3110 = vmatpush1.msra.mxu0 0.0
        %3111 = vmatprep.subr.mxu0 0.0
        %3112 = vmatpush1.msra.mxu0 0.0
        %3113 = vmatprep.subr.mxu0 0.0
        %3114 = vmatpush1.msra.mxu0 0.0
        %3115 = vmatprep.subr.mxu0 0.0
        %3116 = vmatpush1.msra.mxu0 0.0
        %3117 = vmatprep.subr.mxu0 0.0
        %3118 = vmatpush1.msra.mxu0 0.0
        %3119 = vmatprep.subr.mxu0 0.0
        %3120 = vmatpush1.msra.mxu0 %v3087
        %3121 = vmatprep.subr.mxu0 0.0
        %3122 = vmatpush2.msra.mxu0 0.0
        %3123 = vmatprep.subr.mxu0 0.0
        %3124 = vmatpush2.msra.mxu0 0.0
        %3125 = vmatprep.subr.mxu0 0.0
        %3126 = vmatpush2.msra.mxu0 0.0
        %3127 = vmatprep.subr.mxu0 0.0
        %3128 = vmatpush2.msra.mxu0 0.0
        %3129 = vmatprep.subr.mxu0 0.0
        %3130 = vmatpush2.msra.mxu0 0.0
        %3131 = vmatprep.subr.mxu0 0.0
        %3132 = vmatpush2.msra.mxu0 0.0
        %3133 = vmatprep.subr.mxu0 0.0
        %3134 = vmatpush2.msra.mxu0 0.0
        %3135 = vmatprep.subr.mxu0 0.0
        %3136 = vmatpush2.msra.mxu0 0.0
        %3137 = vmatprep.subr.mxu0 0.0
        %3138 = vmatpush2.msra.mxu0 0.0
        %3139 = vmatprep.subr.mxu0 0.0
        %3140 = vmatpush2.msra.mxu0 0.0
        %3141 = vmatprep.subr.mxu0 0.0
        %3142 = vmatpush2.msra.mxu0 0.0
        %3143 = vmatprep.subr.mxu0 0.0
        %3144 = vmatpush2.msra.mxu0 0.0
        %3145 = vmatprep.subr.mxu0 0.0
        %3146 = vmatpush2.msra.mxu0 0.0
        %3147 = vmatprep.subr.mxu0 0.0
        %3148 = vmatpush2.msra.mxu0 0.0
        %3149 = vmatprep.subr.mxu0 0.0
        %3150 = vmatpush2.msra.mxu0 0.0
        %3151 = vmatprep.subr.mxu0 0.0
        %3152 = vmatpush2.msra.mxu0 0.0
        %3153 = vmatprep.mubr.f32.mxu0 0.0
        %3154 = vmatmul.mubr.f32.gmra.mxu0 %v3085
        %v3155 = vpop.f32.mrf.mxu0
        %v3156 = vadd.f32 0.0, %v3155
        %v3157 = vpop.f32.mrf.mxu0
        %3158 = vdwg.mxu0
        %3159 = vrot.lane.b32.xlu0 %v799, 120
        %v3160 = vpop.permute.xlu0 %3159
        %v3162 = vsel %vm1521, %v2844, 0
        %v3164 = vsel %vm1525, %v3160, 0
        %3166 = vmatprep.subr.mxu0 0.0
        %3167 = vmatpush1.msra.mxu0 0.0
        %3168 = vmatprep.subr.mxu0 0.0
        %3169 = vmatpush1.msra.mxu0 0.0
        %3170 = vmatprep.subr.mxu0 0.0
        %3171 = vmatpush1.msra.mxu0 0.0
        %3172 = vmatprep.subr.mxu0 0.0
        %3173 = vmatpush1.msra.mxu0 0.0
        %3174 = vmatprep.subr.mxu0 0.0
        %3175 = vmatpush1.msra.mxu0 0.0
        %3176 = vmatprep.subr.mxu0 0.0
        %3177 = vmatpush1.msra.mxu0 0.0
        %3178 = vmatprep.subr.mxu0 0.0
        %3179 = vmatpush1.msra.mxu0 0.0
        %3180 = vmatprep.subr.mxu0 0.0
        %3181 = vmatpush1.msra.mxu0 0.0
        %3182 = vmatprep.subr.mxu0 0.0
        %3183 = vmatpush1.msra.mxu0 0.0
        %3184 = vmatprep.subr.mxu0 0.0
        %3185 = vmatpush1.msra.mxu0 0.0
        %3186 = vmatprep.subr.mxu0 0.0
        %3187 = vmatpush1.msra.mxu0 0.0
        %3188 = vmatprep.subr.mxu0 0.0
        %3189 = vmatpush1.msra.mxu0 0.0
        %3190 = vmatprep.subr.mxu0 0.0
        %3191 = vmatpush1.msra.mxu0 0.0
        %3192 = vmatprep.subr.mxu0 0.0
        %3193 = vmatpush1.msra.mxu0 0.0
        %3194 = vmatprep.subr.mxu0 0.0
        %3195 = vmatpush1.msra.mxu0 0.0
        %3196 = vmatprep.subr.mxu0 0.0
        %3197 = vmatpush1.msra.mxu0 %v3164
        %3198 = vmatprep.subr.mxu0 0.0
        %3199 = vmatpush2.msra.mxu0 0.0
        %3200 = vmatprep.subr.mxu0 0.0
        %3201 = vmatpush2.msra.mxu0 0.0
        %3202 = vmatprep.subr.mxu0 0.0
        %3203 = vmatpush2.msra.mxu0 0.0
        %3204 = vmatprep.subr.mxu0 0.0
        %3205 = vmatpush2.msra.mxu0 0.0
        %3206 = vmatprep.subr.mxu0 0.0
        %3207 = vmatpush2.msra.mxu0 0.0
        %3208 = vmatprep.subr.mxu0 0.0
        %3209 = vmatpush2.msra.mxu0 0.0
        %3210 = vmatprep.subr.mxu0 0.0
        %3211 = vmatpush2.msra.mxu0 0.0
        %3212 = vmatprep.subr.mxu0 0.0
        %3213 = vmatpush2.msra.mxu0 0.0
        %3214 = vmatprep.subr.mxu0 0.0
        %3215 = vmatpush2.msra.mxu0 0.0
        %3216 = vmatprep.subr.mxu0 0.0
        %3217 = vmatpush2.msra.mxu0 0.0
        %3218 = vmatprep.subr.mxu0 0.0
        %3219 = vmatpush2.msra.mxu0 0.0
        %3220 = vmatprep.subr.mxu0 0.0
        %3221 = vmatpush2.msra.mxu0 0.0
        %3222 = vmatprep.subr.mxu0 0.0
        %3223 = vmatpush2.msra.mxu0 0.0
        %3224 = vmatprep.subr.mxu0 0.0
        %3225 = vmatpush2.msra.mxu0 0.0
        %3226 = vmatprep.subr.mxu0 0.0
        %3227 = vmatpush2.msra.mxu0 0.0
        %3228 = vmatprep.subr.mxu0 0.0
        %3229 = vmatpush2.msra.mxu0 0.0
        %3230 = vmatprep.mubr.f32.mxu0 0.0
        %3231 = vmatmul.mubr.f32.gmra.mxu0 %v3162
        %v3232 = vpop.f32.mrf.mxu0
        %v3233 = vadd.f32 0.0, %v3232
        %v3234 = vpop.f32.mrf.mxu0
        %3235 = vdwg.mxu0
        %3236 = vrot.lane.b32.xlu0 %v813, 120
        %v3237 = vpop.permute.xlu0 %3236
        %v3239 = vsel %vm1521, %v2846, 0
        %v3241 = vsel %vm1525, %v3237, 0
        %3243 = vmatprep.subr.mxu0 0.0
        %3244 = vmatpush1.msra.mxu0 0.0
        %3245 = vmatprep.subr.mxu0 0.0
        %3246 = vmatpush1.msra.mxu0 0.0
        %3247 = vmatprep.subr.mxu0 0.0
        %3248 = vmatpush1.msra.mxu0 0.0
        %3249 = vmatprep.subr.mxu0 0.0
        %3250 = vmatpush1.msra.mxu0 0.0
        %3251 = vmatprep.subr.mxu0 0.0
        %3252 = vmatpush1.msra.mxu0 0.0
        %3253 = vmatprep.subr.mxu0 0.0
        %3254 = vmatpush1.msra.mxu0 0.0
        %3255 = vmatprep.subr.mxu0 0.0
        %3256 = vmatpush1.msra.mxu0 0.0
        %3257 = vmatprep.subr.mxu0 0.0
        %3258 = vmatpush1.msra.mxu0 0.0
        %3259 = vmatprep.subr.mxu0 0.0
        %3260 = vmatpush1.msra.mxu0 0.0
        %3261 = vmatprep.subr.mxu0 0.0
        %3262 = vmatpush1.msra.mxu0 0.0
        %3263 = vmatprep.subr.mxu0 0.0
        %3264 = vmatpush1.msra.mxu0 0.0
        %3265 = vmatprep.subr.mxu0 0.0
        %3266 = vmatpush1.msra.mxu0 0.0
        %3267 = vmatprep.subr.mxu0 0.0
        %3268 = vmatpush1.msra.mxu0 0.0
        %3269 = vmatprep.subr.mxu0 0.0
        %3270 = vmatpush1.msra.mxu0 0.0
        %3271 = vmatprep.subr.mxu0 0.0
        %3272 = vmatpush1.msra.mxu0 0.0
        %3273 = vmatprep.subr.mxu0 0.0
        %3274 = vmatpush1.msra.mxu0 %v3241
        %3275 = vmatprep.subr.mxu0 0.0
        %3276 = vmatpush2.msra.mxu0 0.0
        %3277 = vmatprep.subr.mxu0 0.0
        %3278 = vmatpush2.msra.mxu0 0.0
        %3279 = vmatprep.subr.mxu0 0.0
        %3280 = vmatpush2.msra.mxu0 0.0
        %3281 = vmatprep.subr.mxu0 0.0
        %3282 = vmatpush2.msra.mxu0 0.0
        %3283 = vmatprep.subr.mxu0 0.0
        %3284 = vmatpush2.msra.mxu0 0.0
        %3285 = vmatprep.subr.mxu0 0.0
        %3286 = vmatpush2.msra.mxu0 0.0
        %3287 = vmatprep.subr.mxu0 0.0
        %3288 = vmatpush2.msra.mxu0 0.0
        %3289 = vmatprep.subr.mxu0 0.0
        %3290 = vmatpush2.msra.mxu0 0.0
        %3291 = vmatprep.subr.mxu0 0.0
        %3292 = vmatpush2.msra.mxu0 0.0
        %3293 = vmatprep.subr.mxu0 0.0
        %3294 = vmatpush2.msra.mxu0 0.0
        %3295 = vmatprep.subr.mxu0 0.0
        %3296 = vmatpush2.msra.mxu0 0.0
        %3297 = vmatprep.subr.mxu0 0.0
        %3298 = vmatpush2.msra.mxu0 0.0
        %3299 = vmatprep.subr.mxu0 0.0
        %3300 = vmatpush2.msra.mxu0 0.0
        %3301 = vmatprep.subr.mxu0 0.0
        %3302 = vmatpush2.msra.mxu0 0.0
        %3303 = vmatprep.subr.mxu0 0.0
        %3304 = vmatpush2.msra.mxu0 0.0
        %3305 = vmatprep.subr.mxu0 0.0
        %3306 = vmatpush2.msra.mxu0 0.0
        %3307 = vmatprep.mubr.f32.mxu0 0.0
        %3308 = vmatmul.mubr.f32.gmra.mxu0 %v3239
        %v3309 = vpop.f32.mrf.mxu0
        %v3310 = vadd.f32 0.0, %v3309
        %v3311 = vpop.f32.mrf.mxu0
        %3312 = vdwg.mxu0
        %3313 = vrot.lane.b32.xlu0 %v804, 120
        %v3314 = vpop.permute.xlu0 %3313
        %v3316 = vsel %vm1521, %v2848, 0
        %v3318 = vsel %vm1525, %v3314, 0
        %3320 = vmatprep.subr.mxu0 0.0
        %3321 = vmatpush1.msra.mxu0 0.0
        %3322 = vmatprep.subr.mxu0 0.0
        %3323 = vmatpush1.msra.mxu0 0.0
        %3324 = vmatprep.subr.mxu0 0.0
        %3325 = vmatpush1.msra.mxu0 0.0
        %3326 = vmatprep.subr.mxu0 0.0
        %3327 = vmatpush1.msra.mxu0 0.0
        %3328 = vmatprep.subr.mxu0 0.0
        %3329 = vmatpush1.msra.mxu0 0.0
        %3330 = vmatprep.subr.mxu0 0.0
        %3331 = vmatpush1.msra.mxu0 0.0
        %3332 = vmatprep.subr.mxu0 0.0
        %3333 = vmatpush1.msra.mxu0 0.0
        %3334 = vmatprep.subr.mxu0 0.0
        %3335 = vmatpush1.msra.mxu0 0.0
        %3336 = vmatprep.subr.mxu0 0.0
        %3337 = vmatpush1.msra.mxu0 0.0
        %3338 = vmatprep.subr.mxu0 0.0
        %3339 = vmatpush1.msra.mxu0 0.0
        %3340 = vmatprep.subr.mxu0 0.0
        %3341 = vmatpush1.msra.mxu0 0.0
        %3342 = vmatprep.subr.mxu0 0.0
        %3343 = vmatpush1.msra.mxu0 0.0
        %3344 = vmatprep.subr.mxu0 0.0
        %3345 = vmatpush1.msra.mxu0 0.0
        %3346 = vmatprep.subr.mxu0 0.0
        %3347 = vmatpush1.msra.mxu0 0.0
        %3348 = vmatprep.subr.mxu0 0.0
        %3349 = vmatpush1.msra.mxu0 0.0
        %3350 = vmatprep.subr.mxu0 0.0
        %3351 = vmatpush1.msra.mxu0 %v3318
        %3352 = vmatprep.subr.mxu0 0.0
        %3353 = vmatpush2.msra.mxu0 0.0
        %3354 = vmatprep.subr.mxu0 0.0
        %3355 = vmatpush2.msra.mxu0 0.0
        %3356 = vmatprep.subr.mxu0 0.0
        %3357 = vmatpush2.msra.mxu0 0.0
        %3358 = vmatprep.subr.mxu0 0.0
        %3359 = vmatpush2.msra.mxu0 0.0
        %3360 = vmatprep.subr.mxu0 0.0
        %3361 = vmatpush2.msra.mxu0 0.0
        %3362 = vmatprep.subr.mxu0 0.0
        %3363 = vmatpush2.msra.mxu0 0.0
        %3364 = vmatprep.subr.mxu0 0.0
        %3365 = vmatpush2.msra.mxu0 0.0
        %3366 = vmatprep.subr.mxu0 0.0
        %3367 = vmatpush2.msra.mxu0 0.0
        %3368 = vmatprep.subr.mxu0 0.0
        %3369 = vmatpush2.msra.mxu0 0.0
        %3370 = vmatprep.subr.mxu0 0.0
        %3371 = vmatpush2.msra.mxu0 0.0
        %3372 = vmatprep.subr.mxu0 0.0
        %3373 = vmatpush2.msra.mxu0 0.0
        %3374 = vmatprep.subr.mxu0 0.0
        %3375 = vmatpush2.msra.mxu0 0.0
        %3376 = vmatprep.subr.mxu0 0.0
        %3377 = vmatpush2.msra.mxu0 0.0
        %3378 = vmatprep.subr.mxu0 0.0
        %3379 = vmatpush2.msra.mxu0 0.0
        %3380 = vmatprep.subr.mxu0 0.0
        %3381 = vmatpush2.msra.mxu0 0.0
        %3382 = vmatprep.subr.mxu0 0.0
        %3383 = vmatpush2.msra.mxu0 0.0
        %3384 = vmatprep.mubr.f32.mxu0 0.0
        %3385 = vmatmul.mubr.f32.gmra.mxu0 %v3316
        %v3386 = vpop.f32.mrf.mxu0
        %v3387 = vadd.f32 0.0, %v3386
        %v3388 = vpop.f32.mrf.mxu0
        %3389 = vdwg.mxu0
        %3390 = vrot.lane.b32.xlu0 %v814, 120
        %v3391 = vpop.permute.xlu0 %3390
        %v3393 = vsel %vm1521, %v2850, 0
        %v3395 = vsel %vm1525, %v3391, 0
        %3397 = vmatprep.subr.mxu0 0.0
        %3398 = vmatpush1.msra.mxu0 0.0
        %3399 = vmatprep.subr.mxu0 0.0
        %3400 = vmatpush1.msra.mxu0 0.0
        %3401 = vmatprep.subr.mxu0 0.0
        %3402 = vmatpush1.msra.mxu0 0.0
        %3403 = vmatprep.subr.mxu0 0.0
        %3404 = vmatpush1.msra.mxu0 0.0
        %3405 = vmatprep.subr.mxu0 0.0
        %3406 = vmatpush1.msra.mxu0 0.0
        %3407 = vmatprep.subr.mxu0 0.0
        %3408 = vmatpush1.msra.mxu0 0.0
        %3409 = vmatprep.subr.mxu0 0.0
        %3410 = vmatpush1.msra.mxu0 0.0
        %3411 = vmatprep.subr.mxu0 0.0
        %3412 = vmatpush1.msra.mxu0 0.0
        %3413 = vmatprep.subr.mxu0 0.0
        %3414 = vmatpush1.msra.mxu0 0.0
        %3415 = vmatprep.subr.mxu0 0.0
        %3416 = vmatpush1.msra.mxu0 0.0
        %3417 = vmatprep.subr.mxu0 0.0
        %3418 = vmatpush1.msra.mxu0 0.0
        %3419 = vmatprep.subr.mxu0 0.0
        %3420 = vmatpush1.msra.mxu0 0.0
        %3421 = vmatprep.subr.mxu0 0.0
        %3422 = vmatpush1.msra.mxu0 0.0
        %3423 = vmatprep.subr.mxu0 0.0
        %3424 = vmatpush1.msra.mxu0 0.0
        %3425 = vmatprep.subr.mxu0 0.0
        %3426 = vmatpush1.msra.mxu0 0.0
        %3427 = vmatprep.subr.mxu0 0.0
        %3428 = vmatpush1.msra.mxu0 %v3395
        %3429 = vmatprep.subr.mxu0 0.0
        %3430 = vmatpush2.msra.mxu0 0.0
        %3431 = vmatprep.subr.mxu0 0.0
        %3432 = vmatpush2.msra.mxu0 0.0
        %3433 = vmatprep.subr.mxu0 0.0
        %3434 = vmatpush2.msra.mxu0 0.0
        %3435 = vmatprep.subr.mxu0 0.0
        %3436 = vmatpush2.msra.mxu0 0.0
        %3437 = vmatprep.subr.mxu0 0.0
        %3438 = vmatpush2.msra.mxu0 0.0
        %3439 = vmatprep.subr.mxu0 0.0
        %3440 = vmatpush2.msra.mxu0 0.0
        %3441 = vmatprep.subr.mxu0 0.0
        %3442 = vmatpush2.msra.mxu0 0.0
        %3443 = vmatprep.subr.mxu0 0.0
        %3444 = vmatpush2.msra.mxu0 0.0
        %3445 = vmatprep.subr.mxu0 0.0
        %3446 = vmatpush2.msra.mxu0 0.0
        %3447 = vmatprep.subr.mxu0 0.0
        %3448 = vmatpush2.msra.mxu0 0.0
        %3449 = vmatprep.subr.mxu0 0.0
        %3450 = vmatpush2.msra.mxu0 0.0
        %3451 = vmatprep.subr.mxu0 0.0
        %3452 = vmatpush2.msra.mxu0 0.0
        %3453 = vmatprep.subr.mxu0 0.0
        %3454 = vmatpush2.msra.mxu0 0.0
        %3455 = vmatprep.subr.mxu0 0.0
        %3456 = vmatpush2.msra.mxu0 0.0
        %3457 = vmatprep.subr.mxu0 0.0
        %3458 = vmatpush2.msra.mxu0 0.0
        %3459 = vmatprep.subr.mxu0 0.0
        %3460 = vmatpush2.msra.mxu0 0.0
        %3461 = vmatprep.mubr.f32.mxu0 0.0
        %3462 = vmatmul.mubr.f32.gmra.mxu0 %v3393
        %v3463 = vpop.f32.mrf.mxu0
        %v3464 = vadd.f32 0.0, %v3463
        %v3465 = vpop.f32.mrf.mxu0
        %3466 = vdwg.mxu0
        %v3475 = vcombine.low %v2925, %v3002
        %v3476 = vcombine.low %v3079, %v3156
        %v3477 = vcombine.low %v3233, %v3310
        %v3478 = vcombine.low %v3387, %v3464
        %v3479 = vsel %vm815, %v3475, 0
        %v3481 = vsel %vm815, %v3476, 0
        %v3483 = vsel %vm815, %v3477, 0
        %v3485 = vsel %vm815, %v3478, 0
        %3487 = vmatprep.subr.mxu0 0.0
        %3488 = vmatpush1.msra.mxu0 0.0
        %3489 = vmatprep.subr.mxu0 0.0
        %3490 = vmatpush1.msra.mxu0 0.0
        %3491 = vmatprep.subr.mxu0 0.0
        %3492 = vmatpush1.msra.mxu0 0.0
        %3493 = vmatprep.subr.mxu0 0.0
        %3494 = vmatpush1.msra.mxu0 0.0
        %3495 = vmatprep.subr.mxu0 0.0
        %3496 = vmatpush1.msra.mxu0 0.0
        %3497 = vmatprep.subr.mxu0 0.0
        %3498 = vmatpush1.msra.mxu0 0.0
        %3499 = vmatprep.subr.mxu0 0.0
        %3500 = vmatpush1.msra.mxu0 0.0
        %3501 = vmatprep.subr.mxu0 0.0
        %3502 = vmatpush1.msra.mxu0 0.0
        %3503 = vmatprep.subr.mxu0 0.0
        %3504 = vmatpush1.msra.mxu0 0.0
        %3505 = vmatprep.subr.mxu0 0.0
        %3506 = vmatpush1.msra.mxu0 0.0
        %3507 = vmatprep.subr.mxu0 0.0
        %3508 = vmatpush1.msra.mxu0 0.0
        %3509 = vmatprep.subr.mxu0 0.0
        %3510 = vmatpush1.msra.mxu0 0.0
        %3511 = vmatprep.subr.mxu0 0.0
        %3512 = vmatpush1.msra.mxu0 0.0
        %3513 = vmatprep.subr.mxu0 0.0
        %3514 = vmatpush1.msra.mxu0 0.0
        %3515 = vmatprep.subr.mxu0 0.0
        %3516 = vmatpush1.msra.mxu0 0.0
        %3517 = vmatprep.subr.mxu0 0.0
        %3518 = vmatpush1.msra.mxu0 %v490
        %3519 = vmatprep.subr.mxu0 0.0
        %3520 = vmatpush2.msra.mxu0 0.0
        %3521 = vmatprep.subr.mxu0 0.0
        %3522 = vmatpush2.msra.mxu0 0.0
        %3523 = vmatprep.subr.mxu0 0.0
        %3524 = vmatpush2.msra.mxu0 0.0
        %3525 = vmatprep.subr.mxu0 0.0
        %3526 = vmatpush2.msra.mxu0 0.0
        %3527 = vmatprep.subr.mxu0 0.0
        %3528 = vmatpush2.msra.mxu0 0.0
        %3529 = vmatprep.subr.mxu0 0.0
        %3530 = vmatpush2.msra.mxu0 0.0
        %3531 = vmatprep.subr.mxu0 0.0
        %3532 = vmatpush2.msra.mxu0 0.0
        %3533 = vmatprep.subr.mxu0 0.0
        %3534 = vmatpush2.msra.mxu0 0.0
        %3535 = vmatprep.subr.mxu0 0.0
        %3536 = vmatpush2.msra.mxu0 0.0
        %3537 = vmatprep.subr.mxu0 0.0
        %3538 = vmatpush2.msra.mxu0 0.0
        %3539 = vmatprep.subr.mxu0 0.0
        %3540 = vmatpush2.msra.mxu0 0.0
        %3541 = vmatprep.subr.mxu0 0.0
        %3542 = vmatpush2.msra.mxu0 0.0
        %3543 = vmatprep.subr.mxu0 0.0
        %3544 = vmatpush2.msra.mxu0 0.0
        %3545 = vmatprep.subr.mxu0 0.0
        %3546 = vmatpush2.msra.mxu0 0.0
        %3547 = vmatprep.subr.mxu0 0.0
        %3548 = vmatpush2.msra.mxu0 0.0
        %3549 = vmatprep.subr.mxu0 0.0
        %3550 = vmatpush2.msra.mxu0 0.0
        %3551 = vmatprep.mubr.f32.mxu0 0.0
        %3552 = vmatmul.mubr.f32.gmra.mxu0 %v3479
        %v3553 = vpop.f32.mrf.mxu0
        %v3554 = vadd.f32 0.0, %v3553
        %v3555 = vpop.f32.mrf.mxu0
        %3556 = vmatprep.mubr.f32.mxu0 0.0
        %3557 = vmatmul.mubr.f32.gmra.mxu0 %v3481
        %v3558 = vpop.f32.mrf.mxu0
        %v3559 = vadd.f32 0.0, %v3558
        %v3560 = vpop.f32.mrf.mxu0
        %3561 = vmatprep.mubr.f32.mxu0 0.0
        %3562 = vmatmul.mubr.f32.gmra.mxu0 %v3483
        %v3563 = vpop.f32.mrf.mxu0
        %v3564 = vadd.f32 0.0, %v3563
        %v3565 = vpop.f32.mrf.mxu0
        %3566 = vmatprep.mubr.f32.mxu0 0.0
        %3567 = vmatmul.mubr.f32.gmra.mxu0 %v3485
        %v3568 = vpop.f32.mrf.mxu0
        %v3569 = vadd.f32 0.0, %v3568
        %v3570 = vpop.f32.mrf.mxu0
        %3571 = vdwg.mxu0
        %v3580 = vcombine.low %v1595, %v1670
        %v3581 = vcombine.low %v1745, %v1820
        %v3582 = vcombine.low %v1895, %v1970
        %v3583 = vcombine.low %v2045, %v2120
        %v3584 = vsel %vm815, %v3580, 0
        %v3586 = vsel %vm815, %v3581, 0
        %v3588 = vsel %vm815, %v3582, 0
        %v3590 = vsel %vm815, %v3583, 0
        %3592 = vmatprep.subr.mxu0 0.0
        %3593 = vmatpush1.msra.mxu0 0.0
        %3594 = vmatprep.subr.mxu0 0.0
        %3595 = vmatpush1.msra.mxu0 0.0
        %3596 = vmatprep.subr.mxu0 0.0
        %3597 = vmatpush1.msra.mxu0 0.0
        %3598 = vmatprep.subr.mxu0 0.0
        %3599 = vmatpush1.msra.mxu0 0.0
        %3600 = vmatprep.subr.mxu0 0.0
        %3601 = vmatpush1.msra.mxu0 0.0
        %3602 = vmatprep.subr.mxu0 0.0
        %3603 = vmatpush1.msra.mxu0 0.0
        %3604 = vmatprep.subr.mxu0 0.0
        %3605 = vmatpush1.msra.mxu0 0.0
        %3606 = vmatprep.subr.mxu0 0.0
        %3607 = vmatpush1.msra.mxu0 0.0
        %3608 = vmatprep.subr.mxu0 0.0
        %3609 = vmatpush1.msra.mxu0 0.0
        %3610 = vmatprep.subr.mxu0 0.0
        %3611 = vmatpush1.msra.mxu0 0.0
        %3612 = vmatprep.subr.mxu0 0.0
        %3613 = vmatpush1.msra.mxu0 0.0
        %3614 = vmatprep.subr.mxu0 0.0
        %3615 = vmatpush1.msra.mxu0 0.0
        %3616 = vmatprep.subr.mxu0 0.0
        %3617 = vmatpush1.msra.mxu0 0.0
        %3618 = vmatprep.subr.mxu0 0.0
        %3619 = vmatpush1.msra.mxu0 0.0
        %3620 = vmatprep.subr.mxu0 0.0
        %3621 = vmatpush1.msra.mxu0 0.0
        %3622 = vmatprep.subr.mxu0 0.0
        %3623 = vmatpush1.msra.mxu0 %v489
        %3624 = vmatprep.subr.mxu0 0.0
        %3625 = vmatpush2.msra.mxu0 0.0
        %3626 = vmatprep.subr.mxu0 0.0
        %3627 = vmatpush2.msra.mxu0 0.0
        %3628 = vmatprep.subr.mxu0 0.0
        %3629 = vmatpush2.msra.mxu0 0.0
        %3630 = vmatprep.subr.mxu0 0.0
        %3631 = vmatpush2.msra.mxu0 0.0
        %3632 = vmatprep.subr.mxu0 0.0
        %3633 = vmatpush2.msra.mxu0 0.0
        %3634 = vmatprep.subr.mxu0 0.0
        %3635 = vmatpush2.msra.mxu0 0.0
        %3636 = vmatprep.subr.mxu0 0.0
        %3637 = vmatpush2.msra.mxu0 0.0
        %3638 = vmatprep.subr.mxu0 0.0
        %3639 = vmatpush2.msra.mxu0 0.0
        %3640 = vmatprep.subr.mxu0 0.0
        %3641 = vmatpush2.msra.mxu0 0.0
        %3642 = vmatprep.subr.mxu0 0.0
        %3643 = vmatpush2.msra.mxu0 0.0
        %3644 = vmatprep.subr.mxu0 0.0
        %3645 = vmatpush2.msra.mxu0 0.0
        %3646 = vmatprep.subr.mxu0 0.0
        %3647 = vmatpush2.msra.mxu0 0.0
        %3648 = vmatprep.subr.mxu0 0.0
        %3649 = vmatpush2.msra.mxu0 0.0
        %3650 = vmatprep.subr.mxu0 0.0
        %3651 = vmatpush2.msra.mxu0 0.0
        %3652 = vmatprep.subr.mxu0 0.0
        %3653 = vmatpush2.msra.mxu0 0.0
        %3654 = vmatprep.subr.mxu0 0.0
        %3655 = vmatpush2.msra.mxu0 0.0
        %3656 = vmatprep.mubr.f32.mxu0 0.0
        %3657 = vmatmul.mubr.f32.gmra.mxu0 %v3584
        %v3658 = vpop.f32.mrf.mxu0
        %v3659 = vadd.f32 %v3554, %v3658
        %v3660 = vpop.f32.mrf.mxu0
        %3661 = vmatprep.mubr.f32.mxu0 0.0
        %3662 = vmatmul.mubr.f32.gmra.mxu0 %v3586
        %v3663 = vpop.f32.mrf.mxu0
        %v3664 = vadd.f32 %v3559, %v3663
        %v3665 = vpop.f32.mrf.mxu0
        %3666 = vmatprep.mubr.f32.mxu0 0.0
        %3667 = vmatmul.mubr.f32.gmra.mxu0 %v3588
        %v3668 = vpop.f32.mrf.mxu0
        %v3669 = vadd.f32 %v3564, %v3668
        %v3670 = vpop.f32.mrf.mxu0
        %3671 = vmatprep.mubr.f32.mxu0 0.0
        %3672 = vmatmul.mubr.f32.gmra.mxu0 %v3590
        %v3673 = vpop.f32.mrf.mxu0
        %v3674 = vadd.f32 %v3569, %v3673
        %v3675 = vpop.f32.mrf.mxu0
        %3676 = vdwg.mxu0
        %v3681 = vcombine.high %v3659, %v3659
        %v3682 = vcombine.high %v3664, %v3664
        %v3683 = vcombine.high %v3669, %v3669
        %v3684 = vcombine.high %v3674, %v3674
        %3689 = vrot.lane.b32.xlu0 %v589, 112
        %v3690 = vpop.permute.xlu0 %3689
        %3691 = vrot.lane.b32.xlu0 %v689, 112
        %v3692 = vpop.permute.xlu0 %3691
        %v3693 = vsel %vm815, %v3690, 0
        %v3695 = vsel %vm815, %v3692, 0
        %3697 = vmatprep.subr.mxu0 0.0
        %3698 = vmatpush1.xpose.msra.mxu0 0.0
        %3699 = vmatprep.subr.mxu0 0.0
        %3700 = vmatpush1.xpose.msra.mxu0 0.0
        %3701 = vmatprep.subr.mxu0 0.0
        %3702 = vmatpush1.xpose.msra.mxu0 0.0
        %3703 = vmatprep.subr.mxu0 0.0
        %3704 = vmatpush1.xpose.msra.mxu0 0.0
        %3705 = vmatprep.subr.mxu0 0.0
        %3706 = vmatpush1.xpose.msra.mxu0 0.0
        %3707 = vmatprep.subr.mxu0 0.0
        %3708 = vmatpush1.xpose.msra.mxu0 0.0
        %3709 = vmatprep.subr.mxu0 0.0
        %3710 = vmatpush1.xpose.msra.mxu0 0.0
        %3711 = vmatprep.subr.mxu0 0.0
        %3712 = vmatpush1.xpose.msra.mxu0 0.0
        %3713 = vmatprep.subr.mxu0 0.0
        %3714 = vmatpush1.xpose.msra.mxu0 0.0
        %3715 = vmatprep.subr.mxu0 0.0
        %3716 = vmatpush1.xpose.msra.mxu0 0.0
        %3717 = vmatprep.subr.mxu0 0.0
        %3718 = vmatpush1.xpose.msra.mxu0 0.0
        %3719 = vmatprep.subr.mxu0 0.0
        %3720 = vmatpush1.xpose.msra.mxu0 0.0
        %3721 = vmatprep.subr.mxu0 0.0
        %3722 = vmatpush1.xpose.msra.mxu0 0.0
        %3723 = vmatprep.subr.mxu0 0.0
        %3724 = vmatpush1.xpose.msra.mxu0 0.0
        %3725 = vmatprep.subr.mxu0 0.0
        %3726 = vmatpush1.xpose.msra.mxu0 0.0
        %3727 = vmatprep.subr.mxu0 0.0
        %3728 = vmatpush1.xpose.msra.mxu0 %v3695
        %3729 = vmatprep.subr.mxu0 0.0
        %3730 = vmatpush2.xpose.msra.mxu0 0.0
        %3731 = vmatprep.subr.mxu0 0.0
        %3732 = vmatpush2.xpose.msra.mxu0 0.0
        %3733 = vmatprep.subr.mxu0 0.0
        %3734 = vmatpush2.xpose.msra.mxu0 0.0
        %3735 = vmatprep.subr.mxu0 0.0
        %3736 = vmatpush2.xpose.msra.mxu0 0.0
        %3737 = vmatprep.subr.mxu0 0.0
        %3738 = vmatpush2.xpose.msra.mxu0 0.0
        %3739 = vmatprep.subr.mxu0 0.0
        %3740 = vmatpush2.xpose.msra.mxu0 0.0
        %3741 = vmatprep.subr.mxu0 0.0
        %3742 = vmatpush2.xpose.msra.mxu0 0.0
        %3743 = vmatprep.subr.mxu0 0.0
        %3744 = vmatpush2.xpose.msra.mxu0 0.0
        %3745 = vmatprep.subr.mxu0 0.0
        %3746 = vmatpush2.xpose.msra.mxu0 0.0
        %3747 = vmatprep.subr.mxu0 0.0
        %3748 = vmatpush2.xpose.msra.mxu0 0.0
        %3749 = vmatprep.subr.mxu0 0.0
        %3750 = vmatpush2.xpose.msra.mxu0 0.0
        %3751 = vmatprep.subr.mxu0 0.0
        %3752 = vmatpush2.xpose.msra.mxu0 0.0
        %3753 = vmatprep.subr.mxu0 0.0
        %3754 = vmatpush2.xpose.msra.mxu0 0.0
        %3755 = vmatprep.subr.mxu0 0.0
        %3756 = vmatpush2.xpose.msra.mxu0 0.0
        %3757 = vmatprep.subr.mxu0 0.0
        %3758 = vmatpush2.xpose.msra.mxu0 0.0
        %3759 = vmatprep.subr.mxu0 0.0
        %3760 = vmatpush2.xpose.msra.mxu0 0.0
        %3761 = vmatprep.mubr.f32.mxu0 0.0
        %3762 = vmatmul.mubr.f32.gmra.mxu0 %v3693
        %v3763 = vpop.f32.mrf.mxu0
        %v3764 = vadd.f32 0.0, %v3763
        %v3765 = vpop.f32.mrf.mxu0
        %3766 = vdwg.mxu0
        %3767 = vrot.lane.b32.xlu0 %v611, 112
        %v3768 = vpop.permute.xlu0 %3767
        %3769 = vrot.lane.b32.xlu0 %v711, 112
        %v3770 = vpop.permute.xlu0 %3769
        %v3771 = vsel %vm815, %v3768, 0
        %v3773 = vsel %vm815, %v3770, 0
        %3775 = vmatprep.subr.mxu0 0.0
        %3776 = vmatpush1.xpose.msra.mxu0 0.0
        %3777 = vmatprep.subr.mxu0 0.0
        %3778 = vmatpush1.xpose.msra.mxu0 0.0
        %3779 = vmatprep.subr.mxu0 0.0
        %3780 = vmatpush1.xpose.msra.mxu0 0.0
        %3781 = vmatprep.subr.mxu0 0.0
        %3782 = vmatpush1.xpose.msra.mxu0 0.0
        %3783 = vmatprep.subr.mxu0 0.0
        %3784 = vmatpush1.xpose.msra.mxu0 0.0
        %3785 = vmatprep.subr.mxu0 0.0
        %3786 = vmatpush1.xpose.msra.mxu0 0.0
        %3787 = vmatprep.subr.mxu0 0.0
        %3788 = vmatpush1.xpose.msra.mxu0 0.0
        %3789 = vmatprep.subr.mxu0 0.0
        %3790 = vmatpush1.xpose.msra.mxu0 0.0
        %3791 = vmatprep.subr.mxu0 0.0
        %3792 = vmatpush1.xpose.msra.mxu0 0.0
        %3793 = vmatprep.subr.mxu0 0.0
        %3794 = vmatpush1.xpose.msra.mxu0 0.0
        %3795 = vmatprep.subr.mxu0 0.0
        %3796 = vmatpush1.xpose.msra.mxu0 0.0
        %3797 = vmatprep.subr.mxu0 0.0
        %3798 = vmatpush1.xpose.msra.mxu0 0.0
        %3799 = vmatprep.subr.mxu0 0.0
        %3800 = vmatpush1.xpose.msra.mxu0 0.0
        %3801 = vmatprep.subr.mxu0 0.0
        %3802 = vmatpush1.xpose.msra.mxu0 0.0
        %3803 = vmatprep.subr.mxu0 0.0
        %3804 = vmatpush1.xpose.msra.mxu0 0.0
        %3805 = vmatprep.subr.mxu0 0.0
        %3806 = vmatpush1.xpose.msra.mxu0 %v3773
        %3807 = vmatprep.subr.mxu0 0.0
        %3808 = vmatpush2.xpose.msra.mxu0 0.0
        %3809 = vmatprep.subr.mxu0 0.0
        %3810 = vmatpush2.xpose.msra.mxu0 0.0
        %3811 = vmatprep.subr.mxu0 0.0
        %3812 = vmatpush2.xpose.msra.mxu0 0.0
        %3813 = vmatprep.subr.mxu0 0.0
        %3814 = vmatpush2.xpose.msra.mxu0 0.0
        %3815 = vmatprep.subr.mxu0 0.0
        %3816 = vmatpush2.xpose.msra.mxu0 0.0
        %3817 = vmatprep.subr.mxu0 0.0
        %3818 = vmatpush2.xpose.msra.mxu0 0.0
        %3819 = vmatprep.subr.mxu0 0.0
        %3820 = vmatpush2.xpose.msra.mxu0 0.0
        %3821 = vmatprep.subr.mxu0 0.0
        %3822 = vmatpush2.xpose.msra.mxu0 0.0
        %3823 = vmatprep.subr.mxu0 0.0
        %3824 = vmatpush2.xpose.msra.mxu0 0.0
        %3825 = vmatprep.subr.mxu0 0.0
        %3826 = vmatpush2.xpose.msra.mxu0 0.0
        %3827 = vmatprep.subr.mxu0 0.0
        %3828 = vmatpush2.xpose.msra.mxu0 0.0
        %3829 = vmatprep.subr.mxu0 0.0
        %3830 = vmatpush2.xpose.msra.mxu0 0.0
        %3831 = vmatprep.subr.mxu0 0.0
        %3832 = vmatpush2.xpose.msra.mxu0 0.0
        %3833 = vmatprep.subr.mxu0 0.0
        %3834 = vmatpush2.xpose.msra.mxu0 0.0
        %3835 = vmatprep.subr.mxu0 0.0
        %3836 = vmatpush2.xpose.msra.mxu0 0.0
        %3837 = vmatprep.subr.mxu0 0.0
        %3838 = vmatpush2.xpose.msra.mxu0 0.0
        %3839 = vmatprep.mubr.f32.mxu0 0.0
        %3840 = vmatmul.mubr.f32.gmra.mxu0 %v3771
        %v3841 = vpop.f32.mrf.mxu0
        %v3842 = vadd.f32 0.0, %v3841
        %v3843 = vpop.f32.mrf.mxu0
        %3844 = vdwg.mxu0
        %3845 = vrot.lane.b32.xlu0 %v594, 112
        %v3846 = vpop.permute.xlu0 %3845
        %3847 = vrot.lane.b32.xlu0 %v694, 112
        %v3848 = vpop.permute.xlu0 %3847
        %v3849 = vsel %vm815, %v3846, 0
        %v3851 = vsel %vm815, %v3848, 0
        %3853 = vmatprep.subr.mxu0 0.0
        %3854 = vmatpush1.xpose.msra.mxu0 0.0
        %3855 = vmatprep.subr.mxu0 0.0
        %3856 = vmatpush1.xpose.msra.mxu0 0.0
        %3857 = vmatprep.subr.mxu0 0.0
        %3858 = vmatpush1.xpose.msra.mxu0 0.0
        %3859 = vmatprep.subr.mxu0 0.0
        %3860 = vmatpush1.xpose.msra.mxu0 0.0
        %3861 = vmatprep.subr.mxu0 0.0
        %3862 = vmatpush1.xpose.msra.mxu0 0.0
        %3863 = vmatprep.subr.mxu0 0.0
        %3864 = vmatpush1.xpose.msra.mxu0 0.0
        %3865 = vmatprep.subr.mxu0 0.0
        %3866 = vmatpush1.xpose.msra.mxu0 0.0
        %3867 = vmatprep.subr.mxu0 0.0
        %3868 = vmatpush1.xpose.msra.mxu0 0.0
        %3869 = vmatprep.subr.mxu0 0.0
        %3870 = vmatpush1.xpose.msra.mxu0 0.0
        %3871 = vmatprep.subr.mxu0 0.0
        %3872 = vmatpush1.xpose.msra.mxu0 0.0
        %3873 = vmatprep.subr.mxu0 0.0
        %3874 = vmatpush1.xpose.msra.mxu0 0.0
        %3875 = vmatprep.subr.mxu0 0.0
        %3876 = vmatpush1.xpose.msra.mxu0 0.0
        %3877 = vmatprep.subr.mxu0 0.0
        %3878 = vmatpush1.xpose.msra.mxu0 0.0
        %3879 = vmatprep.subr.mxu0 0.0
        %3880 = vmatpush1.xpose.msra.mxu0 0.0
        %3881 = vmatprep.subr.mxu0 0.0
        %3882 = vmatpush1.xpose.msra.mxu0 0.0
        %3883 = vmatprep.subr.mxu0 0.0
        %3884 = vmatpush1.xpose.msra.mxu0 %v3851
        %3885 = vmatprep.subr.mxu0 0.0
        %3886 = vmatpush2.xpose.msra.mxu0 0.0
        %3887 = vmatprep.subr.mxu0 0.0
        %3888 = vmatpush2.xpose.msra.mxu0 0.0
        %3889 = vmatprep.subr.mxu0 0.0
        %3890 = vmatpush2.xpose.msra.mxu0 0.0
        %3891 = vmatprep.subr.mxu0 0.0
        %3892 = vmatpush2.xpose.msra.mxu0 0.0
        %3893 = vmatprep.subr.mxu0 0.0
        %3894 = vmatpush2.xpose.msra.mxu0 0.0
        %3895 = vmatprep.subr.mxu0 0.0
        %3896 = vmatpush2.xpose.msra.mxu0 0.0
        %3897 = vmatprep.subr.mxu0 0.0
        %3898 = vmatpush2.xpose.msra.mxu0 0.0
        %3899 = vmatprep.subr.mxu0 0.0
        %3900 = vmatpush2.xpose.msra.mxu0 0.0
        %3901 = vmatprep.subr.mxu0 0.0
        %3902 = vmatpush2.xpose.msra.mxu0 0.0
        %3903 = vmatprep.subr.mxu0 0.0
        %3904 = vmatpush2.xpose.msra.mxu0 0.0
        %3905 = vmatprep.subr.mxu0 0.0
        %3906 = vmatpush2.xpose.msra.mxu0 0.0
        %3907 = vmatprep.subr.mxu0 0.0
        %3908 = vmatpush2.xpose.msra.mxu0 0.0
        %3909 = vmatprep.subr.mxu0 0.0
        %3910 = vmatpush2.xpose.msra.mxu0 0.0
        %3911 = vmatprep.subr.mxu0 0.0
        %3912 = vmatpush2.xpose.msra.mxu0 0.0
        %3913 = vmatprep.subr.mxu0 0.0
        %3914 = vmatpush2.xpose.msra.mxu0 0.0
        %3915 = vmatprep.subr.mxu0 0.0
        %3916 = vmatpush2.xpose.msra.mxu0 0.0
        %3917 = vmatprep.mubr.f32.mxu0 0.0
        %3918 = vmatmul.mubr.f32.gmra.mxu0 %v3849
        %v3919 = vpop.f32.mrf.mxu0
        %v3920 = vadd.f32 0.0, %v3919
        %v3921 = vpop.f32.mrf.mxu0
        %3922 = vdwg.mxu0
        %3923 = vrot.lane.b32.xlu0 %v612, 112
        %v3924 = vpop.permute.xlu0 %3923
        %3925 = vrot.lane.b32.xlu0 %v712, 112
        %v3926 = vpop.permute.xlu0 %3925
        %v3927 = vsel %vm815, %v3924, 0
        %v3929 = vsel %vm815, %v3926, 0
        %3931 = vmatprep.subr.mxu0 0.0
        %3932 = vmatpush1.xpose.msra.mxu0 0.0
        %3933 = vmatprep.subr.mxu0 0.0
        %3934 = vmatpush1.xpose.msra.mxu0 0.0
        %3935 = vmatprep.subr.mxu0 0.0
        %3936 = vmatpush1.xpose.msra.mxu0 0.0
        %3937 = vmatprep.subr.mxu0 0.0
        %3938 = vmatpush1.xpose.msra.mxu0 0.0
        %3939 = vmatprep.subr.mxu0 0.0
        %3940 = vmatpush1.xpose.msra.mxu0 0.0
        %3941 = vmatprep.subr.mxu0 0.0
        %3942 = vmatpush1.xpose.msra.mxu0 0.0
        %3943 = vmatprep.subr.mxu0 0.0
        %3944 = vmatpush1.xpose.msra.mxu0 0.0
        %3945 = vmatprep.subr.mxu0 0.0
        %3946 = vmatpush1.xpose.msra.mxu0 0.0
        %3947 = vmatprep.subr.mxu0 0.0
        %3948 = vmatpush1.xpose.msra.mxu0 0.0
        %3949 = vmatprep.subr.mxu0 0.0
        %3950 = vmatpush1.xpose.msra.mxu0 0.0
        %3951 = vmatprep.subr.mxu0 0.0
        %3952 = vmatpush1.xpose.msra.mxu0 0.0
        %3953 = vmatprep.subr.mxu0 0.0
        %3954 = vmatpush1.xpose.msra.mxu0 0.0
        %3955 = vmatprep.subr.mxu0 0.0
        %3956 = vmatpush1.xpose.msra.mxu0 0.0
        %3957 = vmatprep.subr.mxu0 0.0
        %3958 = vmatpush1.xpose.msra.mxu0 0.0
        %3959 = vmatprep.subr.mxu0 0.0
        %3960 = vmatpush1.xpose.msra.mxu0 0.0
        %3961 = vmatprep.subr.mxu0 0.0
        %3962 = vmatpush1.xpose.msra.mxu0 %v3929
        %3963 = vmatprep.subr.mxu0 0.0
        %3964 = vmatpush2.xpose.msra.mxu0 0.0
        %3965 = vmatprep.subr.mxu0 0.0
        %3966 = vmatpush2.xpose.msra.mxu0 0.0
        %3967 = vmatprep.subr.mxu0 0.0
        %3968 = vmatpush2.xpose.msra.mxu0 0.0
        %3969 = vmatprep.subr.mxu0 0.0
        %3970 = vmatpush2.xpose.msra.mxu0 0.0
        %3971 = vmatprep.subr.mxu0 0.0
        %3972 = vmatpush2.xpose.msra.mxu0 0.0
        %3973 = vmatprep.subr.mxu0 0.0
        %3974 = vmatpush2.xpose.msra.mxu0 0.0
        %3975 = vmatprep.subr.mxu0 0.0
        %3976 = vmatpush2.xpose.msra.mxu0 0.0
        %3977 = vmatprep.subr.mxu0 0.0
        %3978 = vmatpush2.xpose.msra.mxu0 0.0
        %3979 = vmatprep.subr.mxu0 0.0
        %3980 = vmatpush2.xpose.msra.mxu0 0.0
        %3981 = vmatprep.subr.mxu0 0.0
        %3982 = vmatpush2.xpose.msra.mxu0 0.0
        %3983 = vmatprep.subr.mxu0 0.0
        %3984 = vmatpush2.xpose.msra.mxu0 0.0
        %3985 = vmatprep.subr.mxu0 0.0
        %3986 = vmatpush2.xpose.msra.mxu0 0.0
        %3987 = vmatprep.subr.mxu0 0.0
        %3988 = vmatpush2.xpose.msra.mxu0 0.0
        %3989 = vmatprep.subr.mxu0 0.0
        %3990 = vmatpush2.xpose.msra.mxu0 0.0
        %3991 = vmatprep.subr.mxu0 0.0
        %3992 = vmatpush2.xpose.msra.mxu0 0.0
        %3993 = vmatprep.subr.mxu0 0.0
        %3994 = vmatpush2.xpose.msra.mxu0 0.0
        %3995 = vmatprep.mubr.f32.mxu0 0.0
        %3996 = vmatmul.mubr.f32.gmra.mxu0 %v3927
        %v3997 = vpop.f32.mrf.mxu0
        %v3998 = vadd.f32 0.0, %v3997
        %v3999 = vpop.f32.mrf.mxu0
        %4000 = vdwg.mxu0
        %4001 = vrot.lane.b32.xlu0 %v599, 112
        %v4002 = vpop.permute.xlu0 %4001
        %4003 = vrot.lane.b32.xlu0 %v699, 112
        %v4004 = vpop.permute.xlu0 %4003
        %v4005 = vsel %vm815, %v4002, 0
        %v4007 = vsel %vm815, %v4004, 0
        %4009 = vmatprep.subr.mxu0 0.0
        %4010 = vmatpush1.xpose.msra.mxu0 0.0
        %4011 = vmatprep.subr.mxu0 0.0
        %4012 = vmatpush1.xpose.msra.mxu0 0.0
        %4013 = vmatprep.subr.mxu0 0.0
        %4014 = vmatpush1.xpose.msra.mxu0 0.0
        %4015 = vmatprep.subr.mxu0 0.0
        %4016 = vmatpush1.xpose.msra.mxu0 0.0
        %4017 = vmatprep.subr.mxu0 0.0
        %4018 = vmatpush1.xpose.msra.mxu0 0.0
        %4019 = vmatprep.subr.mxu0 0.0
        %4020 = vmatpush1.xpose.msra.mxu0 0.0
        %4021 = vmatprep.subr.mxu0 0.0
        %4022 = vmatpush1.xpose.msra.mxu0 0.0
        %4023 = vmatprep.subr.mxu0 0.0
        %4024 = vmatpush1.xpose.msra.mxu0 0.0
        %4025 = vmatprep.subr.mxu0 0.0
        %4026 = vmatpush1.xpose.msra.mxu0 0.0
        %4027 = vmatprep.subr.mxu0 0.0
        %4028 = vmatpush1.xpose.msra.mxu0 0.0
        %4029 = vmatprep.subr.mxu0 0.0
        %4030 = vmatpush1.xpose.msra.mxu0 0.0
        %4031 = vmatprep.subr.mxu0 0.0
        %4032 = vmatpush1.xpose.msra.mxu0 0.0
        %4033 = vmatprep.subr.mxu0 0.0
        %4034 = vmatpush1.xpose.msra.mxu0 0.0
        %4035 = vmatprep.subr.mxu0 0.0
        %4036 = vmatpush1.xpose.msra.mxu0 0.0
        %4037 = vmatprep.subr.mxu0 0.0
        %4038 = vmatpush1.xpose.msra.mxu0 0.0
        %4039 = vmatprep.subr.mxu0 0.0
        %4040 = vmatpush1.xpose.msra.mxu0 %v4007
        %4041 = vmatprep.subr.mxu0 0.0
        %4042 = vmatpush2.xpose.msra.mxu0 0.0
        %4043 = vmatprep.subr.mxu0 0.0
        %4044 = vmatpush2.xpose.msra.mxu0 0.0
        %4045 = vmatprep.subr.mxu0 0.0
        %4046 = vmatpush2.xpose.msra.mxu0 0.0
        %4047 = vmatprep.subr.mxu0 0.0
        %4048 = vmatpush2.xpose.msra.mxu0 0.0
        %4049 = vmatprep.subr.mxu0 0.0
        %4050 = vmatpush2.xpose.msra.mxu0 0.0
        %4051 = vmatprep.subr.mxu0 0.0
        %4052 = vmatpush2.xpose.msra.mxu0 0.0
        %4053 = vmatprep.subr.mxu0 0.0
        %4054 = vmatpush2.xpose.msra.mxu0 0.0
        %4055 = vmatprep.subr.mxu0 0.0
        %4056 = vmatpush2.xpose.msra.mxu0 0.0
        %4057 = vmatprep.subr.mxu0 0.0
        %4058 = vmatpush2.xpose.msra.mxu0 0.0
        %4059 = vmatprep.subr.mxu0 0.0
        %4060 = vmatpush2.xpose.msra.mxu0 0.0
        %4061 = vmatprep.subr.mxu0 0.0
        %4062 = vmatpush2.xpose.msra.mxu0 0.0
        %4063 = vmatprep.subr.mxu0 0.0
        %4064 = vmatpush2.xpose.msra.mxu0 0.0
        %4065 = vmatprep.subr.mxu0 0.0
        %4066 = vmatpush2.xpose.msra.mxu0 0.0
        %4067 = vmatprep.subr.mxu0 0.0
        %4068 = vmatpush2.xpose.msra.mxu0 0.0
        %4069 = vmatprep.subr.mxu0 0.0
        %4070 = vmatpush2.xpose.msra.mxu0 0.0
        %4071 = vmatprep.subr.mxu0 0.0
        %4072 = vmatpush2.xpose.msra.mxu0 0.0
        %4073 = vmatprep.mubr.f32.mxu0 0.0
        %4074 = vmatmul.mubr.f32.gmra.mxu0 %v4005
        %v4075 = vpop.f32.mrf.mxu0
        %v4076 = vadd.f32 0.0, %v4075
        %v4077 = vpop.f32.mrf.mxu0
        %4078 = vdwg.mxu0
        %4079 = vrot.lane.b32.xlu0 %v613, 112
        %v4080 = vpop.permute.xlu0 %4079
        %4081 = vrot.lane.b32.xlu0 %v713, 112
        %v4082 = vpop.permute.xlu0 %4081
        %v4083 = vsel %vm815, %v4080, 0
        %v4085 = vsel %vm815, %v4082, 0
        %4087 = vmatprep.subr.mxu0 0.0
        %4088 = vmatpush1.xpose.msra.mxu0 0.0
        %4089 = vmatprep.subr.mxu0 0.0
        %4090 = vmatpush1.xpose.msra.mxu0 0.0
        %4091 = vmatprep.subr.mxu0 0.0
        %4092 = vmatpush1.xpose.msra.mxu0 0.0
        %4093 = vmatprep.subr.mxu0 0.0
        %4094 = vmatpush1.xpose.msra.mxu0 0.0
        %4095 = vmatprep.subr.mxu0 0.0
        %4096 = vmatpush1.xpose.msra.mxu0 0.0
        %4097 = vmatprep.subr.mxu0 0.0
        %4098 = vmatpush1.xpose.msra.mxu0 0.0
        %4099 = vmatprep.subr.mxu0 0.0
        %4100 = vmatpush1.xpose.msra.mxu0 0.0
        %4101 = vmatprep.subr.mxu0 0.0
        %4102 = vmatpush1.xpose.msra.mxu0 0.0
        %4103 = vmatprep.subr.mxu0 0.0
        %4104 = vmatpush1.xpose.msra.mxu0 0.0
        %4105 = vmatprep.subr.mxu0 0.0
        %4106 = vmatpush1.xpose.msra.mxu0 0.0
        %4107 = vmatprep.subr.mxu0 0.0
        %4108 = vmatpush1.xpose.msra.mxu0 0.0
        %4109 = vmatprep.subr.mxu0 0.0
        %4110 = vmatpush1.xpose.msra.mxu0 0.0
        %4111 = vmatprep.subr.mxu0 0.0
        %4112 = vmatpush1.xpose.msra.mxu0 0.0
        %4113 = vmatprep.subr.mxu0 0.0
        %4114 = vmatpush1.xpose.msra.mxu0 0.0
        %4115 = vmatprep.subr.mxu0 0.0
        %4116 = vmatpush1.xpose.msra.mxu0 0.0
        %4117 = vmatprep.subr.mxu0 0.0
        %4118 = vmatpush1.xpose.msra.mxu0 %v4085
        %4119 = vmatprep.subr.mxu0 0.0
        %4120 = vmatpush2.xpose.msra.mxu0 0.0
        %4121 = vmatprep.subr.mxu0 0.0
        %4122 = vmatpush2.xpose.msra.mxu0 0.0
        %4123 = vmatprep.subr.mxu0 0.0
        %4124 = vmatpush2.xpose.msra.mxu0 0.0
        %4125 = vmatprep.subr.mxu0 0.0
        %4126 = vmatpush2.xpose.msra.mxu0 0.0
        %4127 = vmatprep.subr.mxu0 0.0
        %4128 = vmatpush2.xpose.msra.mxu0 0.0
        %4129 = vmatprep.subr.mxu0 0.0
        %4130 = vmatpush2.xpose.msra.mxu0 0.0
        %4131 = vmatprep.subr.mxu0 0.0
        %4132 = vmatpush2.xpose.msra.mxu0 0.0
        %4133 = vmatprep.subr.mxu0 0.0
        %4134 = vmatpush2.xpose.msra.mxu0 0.0
        %4135 = vmatprep.subr.mxu0 0.0
        %4136 = vmatpush2.xpose.msra.mxu0 0.0
        %4137 = vmatprep.subr.mxu0 0.0
        %4138 = vmatpush2.xpose.msra.mxu0 0.0
        %4139 = vmatprep.subr.mxu0 0.0
        %4140 = vmatpush2.xpose.msra.mxu0 0.0
        %4141 = vmatprep.subr.mxu0 0.0
        %4142 = vmatpush2.xpose.msra.mxu0 0.0
        %4143 = vmatprep.subr.mxu0 0.0
        %4144 = vmatpush2.xpose.msra.mxu0 0.0
        %4145 = vmatprep.subr.mxu0 0.0
        %4146 = vmatpush2.xpose.msra.mxu0 0.0
        %4147 = vmatprep.subr.mxu0 0.0
        %4148 = vmatpush2.xpose.msra.mxu0 0.0
        %4149 = vmatprep.subr.mxu0 0.0
        %4150 = vmatpush2.xpose.msra.mxu0 0.0
        %4151 = vmatprep.mubr.f32.mxu0 0.0
        %4152 = vmatmul.mubr.f32.gmra.mxu0 %v4083
        %v4153 = vpop.f32.mrf.mxu0
        %v4154 = vadd.f32 0.0, %v4153
        %v4155 = vpop.f32.mrf.mxu0
        %4156 = vdwg.mxu0
        %4157 = vrot.lane.b32.xlu0 %v604, 112
        %v4158 = vpop.permute.xlu0 %4157
        %4159 = vrot.lane.b32.xlu0 %v704, 112
        %v4160 = vpop.permute.xlu0 %4159
        %v4161 = vsel %vm815, %v4158, 0
        %v4163 = vsel %vm815, %v4160, 0
        %4165 = vmatprep.subr.mxu0 0.0
        %4166 = vmatpush1.xpose.msra.mxu0 0.0
        %4167 = vmatprep.subr.mxu0 0.0
        %4168 = vmatpush1.xpose.msra.mxu0 0.0
        %4169 = vmatprep.subr.mxu0 0.0
        %4170 = vmatpush1.xpose.msra.mxu0 0.0
        %4171 = vmatprep.subr.mxu0 0.0
        %4172 = vmatpush1.xpose.msra.mxu0 0.0
        %4173 = vmatprep.subr.mxu0 0.0
        %4174 = vmatpush1.xpose.msra.mxu0 0.0
        %4175 = vmatprep.subr.mxu0 0.0
        %4176 = vmatpush1.xpose.msra.mxu0 0.0
        %4177 = vmatprep.subr.mxu0 0.0
        %4178 = vmatpush1.xpose.msra.mxu0 0.0
        %4179 = vmatprep.subr.mxu0 0.0
        %4180 = vmatpush1.xpose.msra.mxu0 0.0
        %4181 = vmatprep.subr.mxu0 0.0
        %4182 = vmatpush1.xpose.msra.mxu0 0.0
        %4183 = vmatprep.subr.mxu0 0.0
        %4184 = vmatpush1.xpose.msra.mxu0 0.0
        %4185 = vmatprep.subr.mxu0 0.0
        %4186 = vmatpush1.xpose.msra.mxu0 0.0
        %4187 = vmatprep.subr.mxu0 0.0
        %4188 = vmatpush1.xpose.msra.mxu0 0.0
        %4189 = vmatprep.subr.mxu0 0.0
        %4190 = vmatpush1.xpose.msra.mxu0 0.0
        %4191 = vmatprep.subr.mxu0 0.0
        %4192 = vmatpush1.xpose.msra.mxu0 0.0
        %4193 = vmatprep.subr.mxu0 0.0
        %4194 = vmatpush1.xpose.msra.mxu0 0.0
        %4195 = vmatprep.subr.mxu0 0.0
        %4196 = vmatpush1.xpose.msra.mxu0 %v4163
        %4197 = vmatprep.subr.mxu0 0.0
        %4198 = vmatpush2.xpose.msra.mxu0 0.0
        %4199 = vmatprep.subr.mxu0 0.0
        %4200 = vmatpush2.xpose.msra.mxu0 0.0
        %4201 = vmatprep.subr.mxu0 0.0
        %4202 = vmatpush2.xpose.msra.mxu0 0.0
        %4203 = vmatprep.subr.mxu0 0.0
        %4204 = vmatpush2.xpose.msra.mxu0 0.0
        %4205 = vmatprep.subr.mxu0 0.0
        %4206 = vmatpush2.xpose.msra.mxu0 0.0
        %4207 = vmatprep.subr.mxu0 0.0
        %4208 = vmatpush2.xpose.msra.mxu0 0.0
        %4209 = vmatprep.subr.mxu0 0.0
        %4210 = vmatpush2.xpose.msra.mxu0 0.0
        %4211 = vmatprep.subr.mxu0 0.0
        %4212 = vmatpush2.xpose.msra.mxu0 0.0
        %4213 = vmatprep.subr.mxu0 0.0
        %4214 = vmatpush2.xpose.msra.mxu0 0.0
        %4215 = vmatprep.subr.mxu0 0.0
        %4216 = vmatpush2.xpose.msra.mxu0 0.0
        %4217 = vmatprep.subr.mxu0 0.0
        %4218 = vmatpush2.xpose.msra.mxu0 0.0
        %4219 = vmatprep.subr.mxu0 0.0
        %4220 = vmatpush2.xpose.msra.mxu0 0.0
        %4221 = vmatprep.subr.mxu0 0.0
        %4222 = vmatpush2.xpose.msra.mxu0 0.0
        %4223 = vmatprep.subr.mxu0 0.0
        %4224 = vmatpush2.xpose.msra.mxu0 0.0
        %4225 = vmatprep.subr.mxu0 0.0
        %4226 = vmatpush2.xpose.msra.mxu0 0.0
        %4227 = vmatprep.subr.mxu0 0.0
        %4228 = vmatpush2.xpose.msra.mxu0 0.0
        %4229 = vmatprep.mubr.f32.mxu0 0.0
        %4230 = vmatmul.mubr.f32.gmra.mxu0 %v4161
        %v4231 = vpop.f32.mrf.mxu0
        %v4232 = vadd.f32 0.0, %v4231
        %v4233 = vpop.f32.mrf.mxu0
        %4234 = vdwg.mxu0
        %4235 = vrot.lane.b32.xlu0 %v614, 112
        %v4236 = vpop.permute.xlu0 %4235
        %4237 = vrot.lane.b32.xlu0 %v714, 112
        %v4238 = vpop.permute.xlu0 %4237
        %v4239 = vsel %vm815, %v4236, 0
        %v4241 = vsel %vm815, %v4238, 0
        %4243 = vmatprep.subr.mxu0 0.0
        %4244 = vmatpush1.xpose.msra.mxu0 0.0
        %4245 = vmatprep.subr.mxu0 0.0
        %4246 = vmatpush1.xpose.msra.mxu0 0.0
        %4247 = vmatprep.subr.mxu0 0.0
        %4248 = vmatpush1.xpose.msra.mxu0 0.0
        %4249 = vmatprep.subr.mxu0 0.0
        %4250 = vmatpush1.xpose.msra.mxu0 0.0
        %4251 = vmatprep.subr.mxu0 0.0
        %4252 = vmatpush1.xpose.msra.mxu0 0.0
        %4253 = vmatprep.subr.mxu0 0.0
        %4254 = vmatpush1.xpose.msra.mxu0 0.0
        %4255 = vmatprep.subr.mxu0 0.0
        %4256 = vmatpush1.xpose.msra.mxu0 0.0
        %4257 = vmatprep.subr.mxu0 0.0
        %4258 = vmatpush1.xpose.msra.mxu0 0.0
        %4259 = vmatprep.subr.mxu0 0.0
        %4260 = vmatpush1.xpose.msra.mxu0 0.0
        %4261 = vmatprep.subr.mxu0 0.0
        %4262 = vmatpush1.xpose.msra.mxu0 0.0
        %4263 = vmatprep.subr.mxu0 0.0
        %4264 = vmatpush1.xpose.msra.mxu0 0.0
        %4265 = vmatprep.subr.mxu0 0.0
        %4266 = vmatpush1.xpose.msra.mxu0 0.0
        %4267 = vmatprep.subr.mxu0 0.0
        %4268 = vmatpush1.xpose.msra.mxu0 0.0
        %4269 = vmatprep.subr.mxu0 0.0
        %4270 = vmatpush1.xpose.msra.mxu0 0.0
        %4271 = vmatprep.subr.mxu0 0.0
        %4272 = vmatpush1.xpose.msra.mxu0 0.0
        %4273 = vmatprep.subr.mxu0 0.0
        %4274 = vmatpush1.xpose.msra.mxu0 %v4241
        %4275 = vmatprep.subr.mxu0 0.0
        %4276 = vmatpush2.xpose.msra.mxu0 0.0
        %4277 = vmatprep.subr.mxu0 0.0
        %4278 = vmatpush2.xpose.msra.mxu0 0.0
        %4279 = vmatprep.subr.mxu0 0.0
        %4280 = vmatpush2.xpose.msra.mxu0 0.0
        %4281 = vmatprep.subr.mxu0 0.0
        %4282 = vmatpush2.xpose.msra.mxu0 0.0
        %4283 = vmatprep.subr.mxu0 0.0
        %4284 = vmatpush2.xpose.msra.mxu0 0.0
        %4285 = vmatprep.subr.mxu0 0.0
        %4286 = vmatpush2.xpose.msra.mxu0 0.0
        %4287 = vmatprep.subr.mxu0 0.0
        %4288 = vmatpush2.xpose.msra.mxu0 0.0
        %4289 = vmatprep.subr.mxu0 0.0
        %4290 = vmatpush2.xpose.msra.mxu0 0.0
        %4291 = vmatprep.subr.mxu0 0.0
        %4292 = vmatpush2.xpose.msra.mxu0 0.0
        %4293 = vmatprep.subr.mxu0 0.0
        %4294 = vmatpush2.xpose.msra.mxu0 0.0
        %4295 = vmatprep.subr.mxu0 0.0
        %4296 = vmatpush2.xpose.msra.mxu0 0.0
        %4297 = vmatprep.subr.mxu0 0.0
        %4298 = vmatpush2.xpose.msra.mxu0 0.0
        %4299 = vmatprep.subr.mxu0 0.0
        %4300 = vmatpush2.xpose.msra.mxu0 0.0
        %4301 = vmatprep.subr.mxu0 0.0
        %4302 = vmatpush2.xpose.msra.mxu0 0.0
        %4303 = vmatprep.subr.mxu0 0.0
        %4304 = vmatpush2.xpose.msra.mxu0 0.0
        %4305 = vmatprep.subr.mxu0 0.0
        %4306 = vmatpush2.xpose.msra.mxu0 0.0
        %4307 = vmatprep.mubr.f32.mxu0 0.0
        %4308 = vmatmul.mubr.f32.gmra.mxu0 %v4239
        %v4309 = vpop.f32.mrf.mxu0
        %v4310 = vadd.f32 0.0, %v4309
        %v4311 = vpop.f32.mrf.mxu0
        %4312 = vdwg.mxu0
        %v4313 = vmul.f32 %v3764, 0.35355338
        %v4314 = vmul.f32 %v3842, 0.35355338
        %v4315 = vmul.f32 %v3920, 0.35355338
        %v4316 = vmul.f32 %v3998, 0.35355338
        %v4317 = vmul.f32 %v4076, 0.35355338
        %v4318 = vmul.f32 %v4154, 0.35355338
        %v4319 = vmul.f32 %v4232, 0.35355338
        %v4320 = vmul.f32 %v4310, 0.35355338
        %v4321 = vsel %vm1416, -1e+09, %v4313
        %v4322 = vsel %vm1417, -1e+09, %v4314
        %v4323 = vsel %vm1418, -1e+09, %v4315
        %v4324 = vsel %vm1419, -1e+09, %v4316
        %v4325 = vsel %vm1420, -1e+09, %v4317
        %v4326 = vsel %vm1421, -1e+09, %v4318
        %v4327 = vsel %vm1422, -1e+09, %v4319
        %v4328 = vsel %vm1423, -1e+09, %v4320
        %v4329 = vsel %vm1432, %v4321, -inf
        %4330 = vmax.xlane.f32.xlu0 %v4329
        %v4331 = vpop.xlane.xlu0 %4330
        %v4332 = vsel %vm1432, %v4322, -inf
        %4333 = vmax.xlane.f32.xlu0 %v4332
        %v4334 = vpop.xlane.xlu0 %4333
        %v4335 = vsel %vm1432, %v4323, -inf
        %4336 = vmax.xlane.f32.xlu0 %v4335
        %v4337 = vpop.xlane.xlu0 %4336
        %v4338 = vsel %vm1432, %v4324, -inf
        %4339 = vmax.xlane.f32.xlu0 %v4338
        %v4340 = vpop.xlane.xlu0 %4339
        %v4341 = vsel %vm1432, %v4325, -inf
        %4342 = vmax.xlane.f32.xlu0 %v4341
        %v4343 = vpop.xlane.xlu0 %4342
        %v4344 = vsel %vm1432, %v4326, -inf
        %4345 = vmax.xlane.f32.xlu0 %v4344
        %v4346 = vpop.xlane.xlu0 %4345
        %v4347 = vsel %vm1432, %v4327, -inf
        %4348 = vmax.xlane.f32.xlu0 %v4347
        %v4349 = vpop.xlane.xlu0 %4348
        %v4350 = vsel %vm1432, %v4328, -inf
        %4351 = vmax.xlane.f32.xlu0 %v4350
        %v4352 = vpop.xlane.xlu0 %4351
        %v4353 = vsub.f32 %v4321, %v4331
        %v4354 = vsub.f32 %v4322, %v4334
        %v4355 = vsub.f32 %v4323, %v4337
        %v4356 = vsub.f32 %v4324, %v4340
        %v4357 = vsub.f32 %v4325, %v4343
        %v4358 = vsub.f32 %v4326, %v4346
        %v4359 = vsub.f32 %v4327, %v4349
        %v4360 = vsub.f32 %v4328, %v4352
        %v4361 = vmul.f32 %v4353, 1.442695
        %v4362 = vpow.pop %v4361
        %v4363 = vmul.f32 %v4354, 1.442695
        %v4364 = vpow.pop %v4363
        %v4365 = vmul.f32 %v4355, 1.442695
        %v4366 = vpow.pop %v4365
        %v4367 = vmul.f32 %v4356, 1.442695
        %v4368 = vpow.pop %v4367
        %v4369 = vmul.f32 %v4357, 1.442695
        %v4370 = vpow.pop %v4369
        %v4371 = vmul.f32 %v4358, 1.442695
        %v4372 = vpow.pop %v4371
        %v4373 = vmul.f32 %v4359, 1.442695
        %v4374 = vpow.pop %v4373
        %v4375 = vmul.f32 %v4360, 1.442695
        %v4376 = vpow.pop %v4375
        %v4377 = vsel %vm1432, %v4362, 0.0
        %4378 = vadd.xlane.f32.xlu0 %v4377
        %v4379 = vpop.xlane.xlu0 %4378
        %v4380 = vsel %vm1432, %v4364, 0.0
        %4381 = vadd.xlane.f32.xlu0 %v4380
        %v4382 = vpop.xlane.xlu0 %4381
        %v4383 = vsel %vm1432, %v4366, 0.0
        %4384 = vadd.xlane.f32.xlu0 %v4383
        %v4385 = vpop.xlane.xlu0 %4384
        %v4386 = vsel %vm1432, %v4368, 0.0
        %4387 = vadd.xlane.f32.xlu0 %v4386
        %v4388 = vpop.xlane.xlu0 %4387
        %v4389 = vsel %vm1432, %v4370, 0.0
        %4390 = vadd.xlane.f32.xlu0 %v4389
        %v4391 = vpop.xlane.xlu0 %4390
        %v4392 = vsel %vm1432, %v4372, 0.0
        %4393 = vadd.xlane.f32.xlu0 %v4392
        %v4394 = vpop.xlane.xlu0 %4393
        %v4395 = vsel %vm1432, %v4374, 0.0
        %4396 = vadd.xlane.f32.xlu0 %v4395
        %v4397 = vpop.xlane.xlu0 %4396
        %v4398 = vsel %vm1432, %v4376, 0.0
        %4399 = vadd.xlane.f32.xlu0 %v4398
        %v4400 = vpop.xlane.xlu0 %4399
        %v4401 = vrcp.pop %v4379
        %v4402 = vmul.f32 %v4362, %v4401
        %v4403 = vrcp.pop %v4382
        %v4404 = vmul.f32 %v4364, %v4403
        %v4405 = vrcp.pop %v4385
        %v4406 = vmul.f32 %v4366, %v4405
        %v4407 = vrcp.pop %v4388
        %v4408 = vmul.f32 %v4368, %v4407
        %v4409 = vrcp.pop %v4391
        %v4410 = vmul.f32 %v4370, %v4409
        %v4411 = vrcp.pop %v4394
        %v4412 = vmul.f32 %v4372, %v4411
        %v4413 = vrcp.pop %v4397
        %v4414 = vmul.f32 %v4374, %v4413
        %v4415 = vrcp.pop %v4400
        %v4416 = vmul.f32 %v4376, %v4415
        %4417 = vrot.lane.b32.xlu0 %v789, 112
        %v4418 = vpop.permute.xlu0 %4417
        %v4420 = vsel %vm1521, %v4402, 0
        %v4422 = vsel %vm1525, %v4418, 0
        %4424 = vmatprep.subr.mxu0 0.0
        %4425 = vmatpush1.msra.mxu0 0.0
        %4426 = vmatprep.subr.mxu0 0.0
        %4427 = vmatpush1.msra.mxu0 0.0
        %4428 = vmatprep.subr.mxu0 0.0
        %4429 = vmatpush1.msra.mxu0 0.0
        %4430 = vmatprep.subr.mxu0 0.0
        %4431 = vmatpush1.msra.mxu0 0.0
        %4432 = vmatprep.subr.mxu0 0.0
        %4433 = vmatpush1.msra.mxu0 0.0
        %4434 = vmatprep.subr.mxu0 0.0
        %4435 = vmatpush1.msra.mxu0 0.0
        %4436 = vmatprep.subr.mxu0 0.0
        %4437 = vmatpush1.msra.mxu0 0.0
        %4438 = vmatprep.subr.mxu0 0.0
        %4439 = vmatpush1.msra.mxu0 0.0
        %4440 = vmatprep.subr.mxu0 0.0
        %4441 = vmatpush1.msra.mxu0 0.0
        %4442 = vmatprep.subr.mxu0 0.0
        %4443 = vmatpush1.msra.mxu0 0.0
        %4444 = vmatprep.subr.mxu0 0.0
        %4445 = vmatpush1.msra.mxu0 0.0
        %4446 = vmatprep.subr.mxu0 0.0
        %4447 = vmatpush1.msra.mxu0 0.0
        %4448 = vmatprep.subr.mxu0 0.0
        %4449 = vmatpush1.msra.mxu0 0.0
        %4450 = vmatprep.subr.mxu0 0.0
        %4451 = vmatpush1.msra.mxu0 0.0
        %4452 = vmatprep.subr.mxu0 0.0
        %4453 = vmatpush1.msra.mxu0 0.0
        %4454 = vmatprep.subr.mxu0 0.0
        %4455 = vmatpush1.msra.mxu0 %v4422
        %4456 = vmatprep.subr.mxu0 0.0
        %4457 = vmatpush2.msra.mxu0 0.0
        %4458 = vmatprep.subr.mxu0 0.0
        %4459 = vmatpush2.msra.mxu0 0.0
        %4460 = vmatprep.subr.mxu0 0.0
        %4461 = vmatpush2.msra.mxu0 0.0
        %4462 = vmatprep.subr.mxu0 0.0
        %4463 = vmatpush2.msra.mxu0 0.0
        %4464 = vmatprep.subr.mxu0 0.0
        %4465 = vmatpush2.msra.mxu0 0.0
        %4466 = vmatprep.subr.mxu0 0.0
        %4467 = vmatpush2.msra.mxu0 0.0
        %4468 = vmatprep.subr.mxu0 0.0
        %4469 = vmatpush2.msra.mxu0 0.0
        %4470 = vmatprep.subr.mxu0 0.0
        %4471 = vmatpush2.msra.mxu0 0.0
        %4472 = vmatprep.subr.mxu0 0.0
        %4473 = vmatpush2.msra.mxu0 0.0
        %4474 = vmatprep.subr.mxu0 0.0
        %4475 = vmatpush2.msra.mxu0 0.0
        %4476 = vmatprep.subr.mxu0 0.0
        %4477 = vmatpush2.msra.mxu0 0.0
        %4478 = vmatprep.subr.mxu0 0.0
        %4479 = vmatpush2.msra.mxu0 0.0
        %4480 = vmatprep.subr.mxu0 0.0
        %4481 = vmatpush2.msra.mxu0 0.0
        %4482 = vmatprep.subr.mxu0 0.0
        %4483 = vmatpush2.msra.mxu0 0.0
        %4484 = vmatprep.subr.mxu0 0.0
        %4485 = vmatpush2.msra.mxu0 0.0
        %4486 = vmatprep.subr.mxu0 0.0
        %4487 = vmatpush2.msra.mxu0 0.0
        %4488 = vmatprep.mubr.f32.mxu0 0.0
        %4489 = vmatmul.mubr.f32.gmra.mxu0 %v4420
        %v4490 = vpop.f32.mrf.mxu0
        %v4491 = vadd.f32 0.0, %v4490
        %v4492 = vpop.f32.mrf.mxu0
        %4493 = vdwg.mxu0
        %4494 = vrot.lane.b32.xlu0 %v811, 112
        %v4495 = vpop.permute.xlu0 %4494
        %v4497 = vsel %vm1521, %v4404, 0
        %v4499 = vsel %vm1525, %v4495, 0
        %4501 = vmatprep.subr.mxu0 0.0
        %4502 = vmatpush1.msra.mxu0 0.0
        %4503 = vmatprep.subr.mxu0 0.0
        %4504 = vmatpush1.msra.mxu0 0.0
        %4505 = vmatprep.subr.mxu0 0.0
        %4506 = vmatpush1.msra.mxu0 0.0
        %4507 = vmatprep.subr.mxu0 0.0
        %4508 = vmatpush1.msra.mxu0 0.0
        %4509 = vmatprep.subr.mxu0 0.0
        %4510 = vmatpush1.msra.mxu0 0.0
        %4511 = vmatprep.subr.mxu0 0.0
        %4512 = vmatpush1.msra.mxu0 0.0
        %4513 = vmatprep.subr.mxu0 0.0
        %4514 = vmatpush1.msra.mxu0 0.0
        %4515 = vmatprep.subr.mxu0 0.0
        %4516 = vmatpush1.msra.mxu0 0.0
        %4517 = vmatprep.subr.mxu0 0.0
        %4518 = vmatpush1.msra.mxu0 0.0
        %4519 = vmatprep.subr.mxu0 0.0
        %4520 = vmatpush1.msra.mxu0 0.0
        %4521 = vmatprep.subr.mxu0 0.0
        %4522 = vmatpush1.msra.mxu0 0.0
        %4523 = vmatprep.subr.mxu0 0.0
        %4524 = vmatpush1.msra.mxu0 0.0
        %4525 = vmatprep.subr.mxu0 0.0
        %4526 = vmatpush1.msra.mxu0 0.0
        %4527 = vmatprep.subr.mxu0 0.0
        %4528 = vmatpush1.msra.mxu0 0.0
        %4529 = vmatprep.subr.mxu0 0.0
        %4530 = vmatpush1.msra.mxu0 0.0
        %4531 = vmatprep.subr.mxu0 0.0
        %4532 = vmatpush1.msra.mxu0 %v4499
        %4533 = vmatprep.subr.mxu0 0.0
        %4534 = vmatpush2.msra.mxu0 0.0
        %4535 = vmatprep.subr.mxu0 0.0
        %4536 = vmatpush2.msra.mxu0 0.0
        %4537 = vmatprep.subr.mxu0 0.0
        %4538 = vmatpush2.msra.mxu0 0.0
        %4539 = vmatprep.subr.mxu0 0.0
        %4540 = vmatpush2.msra.mxu0 0.0
        %4541 = vmatprep.subr.mxu0 0.0
        %4542 = vmatpush2.msra.mxu0 0.0
        %4543 = vmatprep.subr.mxu0 0.0
        %4544 = vmatpush2.msra.mxu0 0.0
        %4545 = vmatprep.subr.mxu0 0.0
        %4546 = vmatpush2.msra.mxu0 0.0
        %4547 = vmatprep.subr.mxu0 0.0
        %4548 = vmatpush2.msra.mxu0 0.0
        %4549 = vmatprep.subr.mxu0 0.0
        %4550 = vmatpush2.msra.mxu0 0.0
        %4551 = vmatprep.subr.mxu0 0.0
        %4552 = vmatpush2.msra.mxu0 0.0
        %4553 = vmatprep.subr.mxu0 0.0
        %4554 = vmatpush2.msra.mxu0 0.0
        %4555 = vmatprep.subr.mxu0 0.0
        %4556 = vmatpush2.msra.mxu0 0.0
        %4557 = vmatprep.subr.mxu0 0.0
        %4558 = vmatpush2.msra.mxu0 0.0
        %4559 = vmatprep.subr.mxu0 0.0
        %4560 = vmatpush2.msra.mxu0 0.0
        %4561 = vmatprep.subr.mxu0 0.0
        %4562 = vmatpush2.msra.mxu0 0.0
        %4563 = vmatprep.subr.mxu0 0.0
        %4564 = vmatpush2.msra.mxu0 0.0
        %4565 = vmatprep.mubr.f32.mxu0 0.0
        %4566 = vmatmul.mubr.f32.gmra.mxu0 %v4497
        %v4567 = vpop.f32.mrf.mxu0
        %v4568 = vadd.f32 0.0, %v4567
        %v4569 = vpop.f32.mrf.mxu0
        %4570 = vdwg.mxu0
        %4571 = vrot.lane.b32.xlu0 %v794, 112
        %v4572 = vpop.permute.xlu0 %4571
        %v4574 = vsel %vm1521, %v4406, 0
        %v4576 = vsel %vm1525, %v4572, 0
        %4578 = vmatprep.subr.mxu0 0.0
        %4579 = vmatpush1.msra.mxu0 0.0
        %4580 = vmatprep.subr.mxu0 0.0
        %4581 = vmatpush1.msra.mxu0 0.0
        %4582 = vmatprep.subr.mxu0 0.0
        %4583 = vmatpush1.msra.mxu0 0.0
        %4584 = vmatprep.subr.mxu0 0.0
        %4585 = vmatpush1.msra.mxu0 0.0
        %4586 = vmatprep.subr.mxu0 0.0
        %4587 = vmatpush1.msra.mxu0 0.0
        %4588 = vmatprep.subr.mxu0 0.0
        %4589 = vmatpush1.msra.mxu0 0.0
        %4590 = vmatprep.subr.mxu0 0.0
        %4591 = vmatpush1.msra.mxu0 0.0
        %4592 = vmatprep.subr.mxu0 0.0
        %4593 = vmatpush1.msra.mxu0 0.0
        %4594 = vmatprep.subr.mxu0 0.0
        %4595 = vmatpush1.msra.mxu0 0.0
        %4596 = vmatprep.subr.mxu0 0.0
        %4597 = vmatpush1.msra.mxu0 0.0
        %4598 = vmatprep.subr.mxu0 0.0
        %4599 = vmatpush1.msra.mxu0 0.0
        %4600 = vmatprep.subr.mxu0 0.0
        %4601 = vmatpush1.msra.mxu0 0.0
        %4602 = vmatprep.subr.mxu0 0.0
        %4603 = vmatpush1.msra.mxu0 0.0
        %4604 = vmatprep.subr.mxu0 0.0
        %4605 = vmatpush1.msra.mxu0 0.0
        %4606 = vmatprep.subr.mxu0 0.0
        %4607 = vmatpush1.msra.mxu0 0.0
        %4608 = vmatprep.subr.mxu0 0.0
        %4609 = vmatpush1.msra.mxu0 %v4576
        %4610 = vmatprep.subr.mxu0 0.0
        %4611 = vmatpush2.msra.mxu0 0.0
        %4612 = vmatprep.subr.mxu0 0.0
        %4613 = vmatpush2.msra.mxu0 0.0
        %4614 = vmatprep.subr.mxu0 0.0
        %4615 = vmatpush2.msra.mxu0 0.0
        %4616 = vmatprep.subr.mxu0 0.0
        %4617 = vmatpush2.msra.mxu0 0.0
        %4618 = vmatprep.subr.mxu0 0.0
        %4619 = vmatpush2.msra.mxu0 0.0
        %4620 = vmatprep.subr.mxu0 0.0
        %4621 = vmatpush2.msra.mxu0 0.0
        %4622 = vmatprep.subr.mxu0 0.0
        %4623 = vmatpush2.msra.mxu0 0.0
        %4624 = vmatprep.subr.mxu0 0.0
        %4625 = vmatpush2.msra.mxu0 0.0
        %4626 = vmatprep.subr.mxu0 0.0
        %4627 = vmatpush2.msra.mxu0 0.0
        %4628 = vmatprep.subr.mxu0 0.0
        %4629 = vmatpush2.msra.mxu0 0.0
        %4630 = vmatprep.subr.mxu0 0.0
        %4631 = vmatpush2.msra.mxu0 0.0
        %4632 = vmatprep.subr.mxu0 0.0
        %4633 = vmatpush2.msra.mxu0 0.0
        %4634 = vmatprep.subr.mxu0 0.0
        %4635 = vmatpush2.msra.mxu0 0.0
        %4636 = vmatprep.subr.mxu0 0.0
        %4637 = vmatpush2.msra.mxu0 0.0
        %4638 = vmatprep.subr.mxu0 0.0
        %4639 = vmatpush2.msra.mxu0 0.0
        %4640 = vmatprep.subr.mxu0 0.0
        %4641 = vmatpush2.msra.mxu0 0.0
        %4642 = vmatprep.mubr.f32.mxu0 0.0
        %4643 = vmatmul.mubr.f32.gmra.mxu0 %v4574
        %v4644 = vpop.f32.mrf.mxu0
        %v4645 = vadd.f32 0.0, %v4644
        %v4646 = vpop.f32.mrf.mxu0
        %4647 = vdwg.mxu0
        %4648 = vrot.lane.b32.xlu0 %v812, 112
        %v4649 = vpop.permute.xlu0 %4648
        %v4651 = vsel %vm1521, %v4408, 0
        %v4653 = vsel %vm1525, %v4649, 0
        %4655 = vmatprep.subr.mxu0 0.0
        %4656 = vmatpush1.msra.mxu0 0.0
        %4657 = vmatprep.subr.mxu0 0.0
        %4658 = vmatpush1.msra.mxu0 0.0
        %4659 = vmatprep.subr.mxu0 0.0
        %4660 = vmatpush1.msra.mxu0 0.0
        %4661 = vmatprep.subr.mxu0 0.0
        %4662 = vmatpush1.msra.mxu0 0.0
        %4663 = vmatprep.subr.mxu0 0.0
        %4664 = vmatpush1.msra.mxu0 0.0
        %4665 = vmatprep.subr.mxu0 0.0
        %4666 = vmatpush1.msra.mxu0 0.0
        %4667 = vmatprep.subr.mxu0 0.0
        %4668 = vmatpush1.msra.mxu0 0.0
        %4669 = vmatprep.subr.mxu0 0.0
        %4670 = vmatpush1.msra.mxu0 0.0
        %4671 = vmatprep.subr.mxu0 0.0
        %4672 = vmatpush1.msra.mxu0 0.0
        %4673 = vmatprep.subr.mxu0 0.0
        %4674 = vmatpush1.msra.mxu0 0.0
        %4675 = vmatprep.subr.mxu0 0.0
        %4676 = vmatpush1.msra.mxu0 0.0
        %4677 = vmatprep.subr.mxu0 0.0
        %4678 = vmatpush1.msra.mxu0 0.0
        %4679 = vmatprep.subr.mxu0 0.0
        %4680 = vmatpush1.msra.mxu0 0.0
        %4681 = vmatprep.subr.mxu0 0.0
        %4682 = vmatpush1.msra.mxu0 0.0
        %4683 = vmatprep.subr.mxu0 0.0
        %4684 = vmatpush1.msra.mxu0 0.0
        %4685 = vmatprep.subr.mxu0 0.0
        %4686 = vmatpush1.msra.mxu0 %v4653
        %4687 = vmatprep.subr.mxu0 0.0
        %4688 = vmatpush2.msra.mxu0 0.0
        %4689 = vmatprep.subr.mxu0 0.0
        %4690 = vmatpush2.msra.mxu0 0.0
        %4691 = vmatprep.subr.mxu0 0.0
        %4692 = vmatpush2.msra.mxu0 0.0
        %4693 = vmatprep.subr.mxu0 0.0
        %4694 = vmatpush2.msra.mxu0 0.0
        %4695 = vmatprep.subr.mxu0 0.0
        %4696 = vmatpush2.msra.mxu0 0.0
        %4697 = vmatprep.subr.mxu0 0.0
        %4698 = vmatpush2.msra.mxu0 0.0
        %4699 = vmatprep.subr.mxu0 0.0
        %4700 = vmatpush2.msra.mxu0 0.0
        %4701 = vmatprep.subr.mxu0 0.0
        %4702 = vmatpush2.msra.mxu0 0.0
        %4703 = vmatprep.subr.mxu0 0.0
        %4704 = vmatpush2.msra.mxu0 0.0
        %4705 = vmatprep.subr.mxu0 0.0
        %4706 = vmatpush2.msra.mxu0 0.0
        %4707 = vmatprep.subr.mxu0 0.0
        %4708 = vmatpush2.msra.mxu0 0.0
        %4709 = vmatprep.subr.mxu0 0.0
        %4710 = vmatpush2.msra.mxu0 0.0
        %4711 = vmatprep.subr.mxu0 0.0
        %4712 = vmatpush2.msra.mxu0 0.0
        %4713 = vmatprep.subr.mxu0 0.0
        %4714 = vmatpush2.msra.mxu0 0.0
        %4715 = vmatprep.subr.mxu0 0.0
        %4716 = vmatpush2.msra.mxu0 0.0
        %4717 = vmatprep.subr.mxu0 0.0
        %4718 = vmatpush2.msra.mxu0 0.0
        %4719 = vmatprep.mubr.f32.mxu0 0.0
        %4720 = vmatmul.mubr.f32.gmra.mxu0 %v4651
        %v4721 = vpop.f32.mrf.mxu0
        %v4722 = vadd.f32 0.0, %v4721
        %v4723 = vpop.f32.mrf.mxu0
        %4724 = vdwg.mxu0
        %4725 = vrot.lane.b32.xlu0 %v799, 112
        %v4726 = vpop.permute.xlu0 %4725
        %v4728 = vsel %vm1521, %v4410, 0
        %v4730 = vsel %vm1525, %v4726, 0
        %4732 = vmatprep.subr.mxu0 0.0
        %4733 = vmatpush1.msra.mxu0 0.0
        %4734 = vmatprep.subr.mxu0 0.0
        %4735 = vmatpush1.msra.mxu0 0.0
        %4736 = vmatprep.subr.mxu0 0.0
        %4737 = vmatpush1.msra.mxu0 0.0
        %4738 = vmatprep.subr.mxu0 0.0
        %4739 = vmatpush1.msra.mxu0 0.0
        %4740 = vmatprep.subr.mxu0 0.0
        %4741 = vmatpush1.msra.mxu0 0.0
        %4742 = vmatprep.subr.mxu0 0.0
        %4743 = vmatpush1.msra.mxu0 0.0
        %4744 = vmatprep.subr.mxu0 0.0
        %4745 = vmatpush1.msra.mxu0 0.0
        %4746 = vmatprep.subr.mxu0 0.0
        %4747 = vmatpush1.msra.mxu0 0.0
        %4748 = vmatprep.subr.mxu0 0.0
        %4749 = vmatpush1.msra.mxu0 0.0
        %4750 = vmatprep.subr.mxu0 0.0
        %4751 = vmatpush1.msra.mxu0 0.0
        %4752 = vmatprep.subr.mxu0 0.0
        %4753 = vmatpush1.msra.mxu0 0.0
        %4754 = vmatprep.subr.mxu0 0.0
        %4755 = vmatpush1.msra.mxu0 0.0
        %4756 = vmatprep.subr.mxu0 0.0
        %4757 = vmatpush1.msra.mxu0 0.0
        %4758 = vmatprep.subr.mxu0 0.0
        %4759 = vmatpush1.msra.mxu0 0.0
        %4760 = vmatprep.subr.mxu0 0.0
        %4761 = vmatpush1.msra.mxu0 0.0
        %4762 = vmatprep.subr.mxu0 0.0
        %4763 = vmatpush1.msra.mxu0 %v4730
        %4764 = vmatprep.subr.mxu0 0.0
        %4765 = vmatpush2.msra.mxu0 0.0
        %4766 = vmatprep.subr.mxu0 0.0
        %4767 = vmatpush2.msra.mxu0 0.0
        %4768 = vmatprep.subr.mxu0 0.0
        %4769 = vmatpush2.msra.mxu0 0.0
        %4770 = vmatprep.subr.mxu0 0.0
        %4771 = vmatpush2.msra.mxu0 0.0
        %4772 = vmatprep.subr.mxu0 0.0
        %4773 = vmatpush2.msra.mxu0 0.0
        %4774 = vmatprep.subr.mxu0 0.0
        %4775 = vmatpush2.msra.mxu0 0.0
        %4776 = vmatprep.subr.mxu0 0.0
        %4777 = vmatpush2.msra.mxu0 0.0
        %4778 = vmatprep.subr.mxu0 0.0
        %4779 = vmatpush2.msra.mxu0 0.0
        %4780 = vmatprep.subr.mxu0 0.0
        %4781 = vmatpush2.msra.mxu0 0.0
        %4782 = vmatprep.subr.mxu0 0.0
        %4783 = vmatpush2.msra.mxu0 0.0
        %4784 = vmatprep.subr.mxu0 0.0
        %4785 = vmatpush2.msra.mxu0 0.0
        %4786 = vmatprep.subr.mxu0 0.0
        %4787 = vmatpush2.msra.mxu0 0.0
        %4788 = vmatprep.subr.mxu0 0.0
        %4789 = vmatpush2.msra.mxu0 0.0
        %4790 = vmatprep.subr.mxu0 0.0
        %4791 = vmatpush2.msra.mxu0 0.0
        %4792 = vmatprep.subr.mxu0 0.0
        %4793 = vmatpush2.msra.mxu0 0.0
        %4794 = vmatprep.subr.mxu0 0.0
        %4795 = vmatpush2.msra.mxu0 0.0
        %4796 = vmatprep.mubr.f32.mxu0 0.0
        %4797 = vmatmul.mubr.f32.gmra.mxu0 %v4728
        %v4798 = vpop.f32.mrf.mxu0
        %v4799 = vadd.f32 0.0, %v4798
        %v4800 = vpop.f32.mrf.mxu0
        %4801 = vdwg.mxu0
        %4802 = vrot.lane.b32.xlu0 %v813, 112
        %v4803 = vpop.permute.xlu0 %4802
        %v4805 = vsel %vm1521, %v4412, 0
        %v4807 = vsel %vm1525, %v4803, 0
        %4809 = vmatprep.subr.mxu0 0.0
        %4810 = vmatpush1.msra.mxu0 0.0
        %4811 = vmatprep.subr.mxu0 0.0
        %4812 = vmatpush1.msra.mxu0 0.0
        %4813 = vmatprep.subr.mxu0 0.0
        %4814 = vmatpush1.msra.mxu0 0.0
        %4815 = vmatprep.subr.mxu0 0.0
        %4816 = vmatpush1.msra.mxu0 0.0
        %4817 = vmatprep.subr.mxu0 0.0
        %4818 = vmatpush1.msra.mxu0 0.0
        %4819 = vmatprep.subr.mxu0 0.0
        %4820 = vmatpush1.msra.mxu0 0.0
        %4821 = vmatprep.subr.mxu0 0.0
        %4822 = vmatpush1.msra.mxu0 0.0
        %4823 = vmatprep.subr.mxu0 0.0
        %4824 = vmatpush1.msra.mxu0 0.0
        %4825 = vmatprep.subr.mxu0 0.0
        %4826 = vmatpush1.msra.mxu0 0.0
        %4827 = vmatprep.subr.mxu0 0.0
        %4828 = vmatpush1.msra.mxu0 0.0
        %4829 = vmatprep.subr.mxu0 0.0
        %4830 = vmatpush1.msra.mxu0 0.0
        %4831 = vmatprep.subr.mxu0 0.0
        %4832 = vmatpush1.msra.mxu0 0.0
        %4833 = vmatprep.subr.mxu0 0.0
        %4834 = vmatpush1.msra.mxu0 0.0
        %4835 = vmatprep.subr.mxu0 0.0
        %4836 = vmatpush1.msra.mxu0 0.0
        %4837 = vmatprep.subr.mxu0 0.0
        %4838 = vmatpush1.msra.mxu0 0.0
        %4839 = vmatprep.subr.mxu0 0.0
        %4840 = vmatpush1.msra.mxu0 %v4807
        %4841 = vmatprep.subr.mxu0 0.0
        %4842 = vmatpush2.msra.mxu0 0.0
        %4843 = vmatprep.subr.mxu0 0.0
        %4844 = vmatpush2.msra.mxu0 0.0
        %4845 = vmatprep.subr.mxu0 0.0
        %4846 = vmatpush2.msra.mxu0 0.0
        %4847 = vmatprep.subr.mxu0 0.0
        %4848 = vmatpush2.msra.mxu0 0.0
        %4849 = vmatprep.subr.mxu0 0.0
        %4850 = vmatpush2.msra.mxu0 0.0
        %4851 = vmatprep.subr.mxu0 0.0
        %4852 = vmatpush2.msra.mxu0 0.0
        %4853 = vmatprep.subr.mxu0 0.0
        %4854 = vmatpush2.msra.mxu0 0.0
        %4855 = vmatprep.subr.mxu0 0.0
        %4856 = vmatpush2.msra.mxu0 0.0
        %4857 = vmatprep.subr.mxu0 0.0
        %4858 = vmatpush2.msra.mxu0 0.0
        %4859 = vmatprep.subr.mxu0 0.0
        %4860 = vmatpush2.msra.mxu0 0.0
        %4861 = vmatprep.subr.mxu0 0.0
        %4862 = vmatpush2.msra.mxu0 0.0
        %4863 = vmatprep.subr.mxu0 0.0
        %4864 = vmatpush2.msra.mxu0 0.0
        %4865 = vmatprep.subr.mxu0 0.0
        %4866 = vmatpush2.msra.mxu0 0.0
        %4867 = vmatprep.subr.mxu0 0.0
        %4868 = vmatpush2.msra.mxu0 0.0
        %4869 = vmatprep.subr.mxu0 0.0
        %4870 = vmatpush2.msra.mxu0 0.0
        %4871 = vmatprep.subr.mxu0 0.0
        %4872 = vmatpush2.msra.mxu0 0.0
        %4873 = vmatprep.mubr.f32.mxu0 0.0
        %4874 = vmatmul.mubr.f32.gmra.mxu0 %v4805
        %v4875 = vpop.f32.mrf.mxu0
        %v4876 = vadd.f32 0.0, %v4875
        %v4877 = vpop.f32.mrf.mxu0
        %4878 = vdwg.mxu0
        %4879 = vrot.lane.b32.xlu0 %v804, 112
        %v4880 = vpop.permute.xlu0 %4879
        %v4882 = vsel %vm1521, %v4414, 0
        %v4884 = vsel %vm1525, %v4880, 0
        %4886 = vmatprep.subr.mxu0 0.0
        %4887 = vmatpush1.msra.mxu0 0.0
        %4888 = vmatprep.subr.mxu0 0.0
        %4889 = vmatpush1.msra.mxu0 0.0
        %4890 = vmatprep.subr.mxu0 0.0
        %4891 = vmatpush1.msra.mxu0 0.0
        %4892 = vmatprep.subr.mxu0 0.0
        %4893 = vmatpush1.msra.mxu0 0.0
        %4894 = vmatprep.subr.mxu0 0.0
        %4895 = vmatpush1.msra.mxu0 0.0
        %4896 = vmatprep.subr.mxu0 0.0
        %4897 = vmatpush1.msra.mxu0 0.0
        %4898 = vmatprep.subr.mxu0 0.0
        %4899 = vmatpush1.msra.mxu0 0.0
        %4900 = vmatprep.subr.mxu0 0.0
        %4901 = vmatpush1.msra.mxu0 0.0
        %4902 = vmatprep.subr.mxu0 0.0
        %4903 = vmatpush1.msra.mxu0 0.0
        %4904 = vmatprep.subr.mxu0 0.0
        %4905 = vmatpush1.msra.mxu0 0.0
        %4906 = vmatprep.subr.mxu0 0.0
        %4907 = vmatpush1.msra.mxu0 0.0
        %4908 = vmatprep.subr.mxu0 0.0
        %4909 = vmatpush1.msra.mxu0 0.0
        %4910 = vmatprep.subr.mxu0 0.0
        %4911 = vmatpush1.msra.mxu0 0.0
        %4912 = vmatprep.subr.mxu0 0.0
        %4913 = vmatpush1.msra.mxu0 0.0
        %4914 = vmatprep.subr.mxu0 0.0
        %4915 = vmatpush1.msra.mxu0 0.0
        %4916 = vmatprep.subr.mxu0 0.0
        %4917 = vmatpush1.msra.mxu0 %v4884
        %4918 = vmatprep.subr.mxu0 0.0
        %4919 = vmatpush2.msra.mxu0 0.0
        %4920 = vmatprep.subr.mxu0 0.0
        %4921 = vmatpush2.msra.mxu0 0.0
        %4922 = vmatprep.subr.mxu0 0.0
        %4923 = vmatpush2.msra.mxu0 0.0
        %4924 = vmatprep.subr.mxu0 0.0
        %4925 = vmatpush2.msra.mxu0 0.0
        %4926 = vmatprep.subr.mxu0 0.0
        %4927 = vmatpush2.msra.mxu0 0.0
        %4928 = vmatprep.subr.mxu0 0.0
        %4929 = vmatpush2.msra.mxu0 0.0
        %4930 = vmatprep.subr.mxu0 0.0
        %4931 = vmatpush2.msra.mxu0 0.0
        %4932 = vmatprep.subr.mxu0 0.0
        %4933 = vmatpush2.msra.mxu0 0.0
        %4934 = vmatprep.subr.mxu0 0.0
        %4935 = vmatpush2.msra.mxu0 0.0
        %4936 = vmatprep.subr.mxu0 0.0
        %4937 = vmatpush2.msra.mxu0 0.0
        %4938 = vmatprep.subr.mxu0 0.0
        %4939 = vmatpush2.msra.mxu0 0.0
        %4940 = vmatprep.subr.mxu0 0.0
        %4941 = vmatpush2.msra.mxu0 0.0
        %4942 = vmatprep.subr.mxu0 0.0
        %4943 = vmatpush2.msra.mxu0 0.0
        %4944 = vmatprep.subr.mxu0 0.0
        %4945 = vmatpush2.msra.mxu0 0.0
        %4946 = vmatprep.subr.mxu0 0.0
        %4947 = vmatpush2.msra.mxu0 0.0
        %4948 = vmatprep.subr.mxu0 0.0
        %4949 = vmatpush2.msra.mxu0 0.0
        %4950 = vmatprep.mubr.f32.mxu0 0.0
        %4951 = vmatmul.mubr.f32.gmra.mxu0 %v4882
        %v4952 = vpop.f32.mrf.mxu0
        %v4953 = vadd.f32 0.0, %v4952
        %v4954 = vpop.f32.mrf.mxu0
        %4955 = vdwg.mxu0
        %4956 = vrot.lane.b32.xlu0 %v814, 112
        %v4957 = vpop.permute.xlu0 %4956
        %v4959 = vsel %vm1521, %v4416, 0
        %v4961 = vsel %vm1525, %v4957, 0
        %4963 = vmatprep.subr.mxu0 0.0
        %4964 = vmatpush1.msra.mxu0 0.0
        %4965 = vmatprep.subr.mxu0 0.0
        %4966 = vmatpush1.msra.mxu0 0.0
        %4967 = vmatprep.subr.mxu0 0.0
        %4968 = vmatpush1.msra.mxu0 0.0
        %4969 = vmatprep.subr.mxu0 0.0
        %4970 = vmatpush1.msra.mxu0 0.0
        %4971 = vmatprep.subr.mxu0 0.0
        %4972 = vmatpush1.msra.mxu0 0.0
        %4973 = vmatprep.subr.mxu0 0.0
        %4974 = vmatpush1.msra.mxu0 0.0
        %4975 = vmatprep.subr.mxu0 0.0
        %4976 = vmatpush1.msra.mxu0 0.0
        %4977 = vmatprep.subr.mxu0 0.0
        %4978 = vmatpush1.msra.mxu0 0.0
        %4979 = vmatprep.subr.mxu0 0.0
        %4980 = vmatpush1.msra.mxu0 0.0
        %4981 = vmatprep.subr.mxu0 0.0
        %4982 = vmatpush1.msra.mxu0 0.0
        %4983 = vmatprep.subr.mxu0 0.0
        %4984 = vmatpush1.msra.mxu0 0.0
        %4985 = vmatprep.subr.mxu0 0.0
        %4986 = vmatpush1.msra.mxu0 0.0
        %4987 = vmatprep.subr.mxu0 0.0
        %4988 = vmatpush1.msra.mxu0 0.0
        %4989 = vmatprep.subr.mxu0 0.0
        %4990 = vmatpush1.msra.mxu0 0.0
        %4991 = vmatprep.subr.mxu0 0.0
        %4992 = vmatpush1.msra.mxu0 0.0
        %4993 = vmatprep.subr.mxu0 0.0
        %4994 = vmatpush1.msra.mxu0 %v4961
        %4995 = vmatprep.subr.mxu0 0.0
        %4996 = vmatpush2.msra.mxu0 0.0
        %4997 = vmatprep.subr.mxu0 0.0
        %4998 = vmatpush2.msra.mxu0 0.0
        %4999 = vmatprep.subr.mxu0 0.0
        %5000 = vmatpush2.msra.mxu0 0.0
        %5001 = vmatprep.subr.mxu0 0.0
        %5002 = vmatpush2.msra.mxu0 0.0
        %5003 = vmatprep.subr.mxu0 0.0
        %5004 = vmatpush2.msra.mxu0 0.0
        %5005 = vmatprep.subr.mxu0 0.0
        %5006 = vmatpush2.msra.mxu0 0.0
        %5007 = vmatprep.subr.mxu0 0.0
        %5008 = vmatpush2.msra.mxu0 0.0
        %5009 = vmatprep.subr.mxu0 0.0
        %5010 = vmatpush2.msra.mxu0 0.0
        %5011 = vmatprep.subr.mxu0 0.0
        %5012 = vmatpush2.msra.mxu0 0.0
        %5013 = vmatprep.subr.mxu0 0.0
        %5014 = vmatpush2.msra.mxu0 0.0
        %5015 = vmatprep.subr.mxu0 0.0
        %5016 = vmatpush2.msra.mxu0 0.0
        %5017 = vmatprep.subr.mxu0 0.0
        %5018 = vmatpush2.msra.mxu0 0.0
        %5019 = vmatprep.subr.mxu0 0.0
        %5020 = vmatpush2.msra.mxu0 0.0
        %5021 = vmatprep.subr.mxu0 0.0
        %5022 = vmatpush2.msra.mxu0 0.0
        %5023 = vmatprep.subr.mxu0 0.0
        %5024 = vmatpush2.msra.mxu0 0.0
        %5025 = vmatprep.subr.mxu0 0.0
        %5026 = vmatpush2.msra.mxu0 0.0
        %5027 = vmatprep.mubr.f32.mxu0 0.0
        %5028 = vmatmul.mubr.f32.gmra.mxu0 %v4959
        %v5029 = vpop.f32.mrf.mxu0
        %v5030 = vadd.f32 0.0, %v5029
        %v5031 = vpop.f32.mrf.mxu0
        %5032 = vdwg.mxu0
        %v5041 = vcombine.low %v4491, %v4568
        %v5042 = vcombine.low %v4645, %v4722
        %v5043 = vcombine.low %v4799, %v4876
        %v5044 = vcombine.low %v4953, %v5030
        %v5045 = vsel %vm815, %v5041, 0
        %v5047 = vsel %vm815, %v5042, 0
        %v5049 = vsel %vm815, %v5043, 0
        %v5051 = vsel %vm815, %v5044, 0
        %5053 = vmatprep.subr.mxu0 0.0
        %5054 = vmatpush1.msra.mxu0 0.0
        %5055 = vmatprep.subr.mxu0 0.0
        %5056 = vmatpush1.msra.mxu0 0.0
        %5057 = vmatprep.subr.mxu0 0.0
        %5058 = vmatpush1.msra.mxu0 0.0
        %5059 = vmatprep.subr.mxu0 0.0
        %5060 = vmatpush1.msra.mxu0 0.0
        %5061 = vmatprep.subr.mxu0 0.0
        %5062 = vmatpush1.msra.mxu0 0.0
        %5063 = vmatprep.subr.mxu0 0.0
        %5064 = vmatpush1.msra.mxu0 0.0
        %5065 = vmatprep.subr.mxu0 0.0
        %5066 = vmatpush1.msra.mxu0 0.0
        %5067 = vmatprep.subr.mxu0 0.0
        %5068 = vmatpush1.msra.mxu0 0.0
        %5069 = vmatprep.subr.mxu0 0.0
        %5070 = vmatpush1.msra.mxu0 0.0
        %5071 = vmatprep.subr.mxu0 0.0
        %5072 = vmatpush1.msra.mxu0 0.0
        %5073 = vmatprep.subr.mxu0 0.0
        %5074 = vmatpush1.msra.mxu0 0.0
        %5075 = vmatprep.subr.mxu0 0.0
        %5076 = vmatpush1.msra.mxu0 0.0
        %5077 = vmatprep.subr.mxu0 0.0
        %5078 = vmatpush1.msra.mxu0 0.0
        %5079 = vmatprep.subr.mxu0 0.0
        %5080 = vmatpush1.msra.mxu0 0.0
        %5081 = vmatprep.subr.mxu0 0.0
        %5082 = vmatpush1.msra.mxu0 0.0
        %5083 = vmatprep.subr.mxu0 0.0
        %5084 = vmatpush1.msra.mxu0 %v491
        %5085 = vmatprep.subr.mxu0 0.0
        %5086 = vmatpush2.msra.mxu0 0.0
        %5087 = vmatprep.subr.mxu0 0.0
        %5088 = vmatpush2.msra.mxu0 0.0
        %5089 = vmatprep.subr.mxu0 0.0
        %5090 = vmatpush2.msra.mxu0 0.0
        %5091 = vmatprep.subr.mxu0 0.0
        %5092 = vmatpush2.msra.mxu0 0.0
        %5093 = vmatprep.subr.mxu0 0.0
        %5094 = vmatpush2.msra.mxu0 0.0
        %5095 = vmatprep.subr.mxu0 0.0
        %5096 = vmatpush2.msra.mxu0 0.0
        %5097 = vmatprep.subr.mxu0 0.0
        %5098 = vmatpush2.msra.mxu0 0.0
        %5099 = vmatprep.subr.mxu0 0.0
        %5100 = vmatpush2.msra.mxu0 0.0
        %5101 = vmatprep.subr.mxu0 0.0
        %5102 = vmatpush2.msra.mxu0 0.0
        %5103 = vmatprep.subr.mxu0 0.0
        %5104 = vmatpush2.msra.mxu0 0.0
        %5105 = vmatprep.subr.mxu0 0.0
        %5106 = vmatpush2.msra.mxu0 0.0
        %5107 = vmatprep.subr.mxu0 0.0
        %5108 = vmatpush2.msra.mxu0 0.0
        %5109 = vmatprep.subr.mxu0 0.0
        %5110 = vmatpush2.msra.mxu0 0.0
        %5111 = vmatprep.subr.mxu0 0.0
        %5112 = vmatpush2.msra.mxu0 0.0
        %5113 = vmatprep.subr.mxu0 0.0
        %5114 = vmatpush2.msra.mxu0 0.0
        %5115 = vmatprep.subr.mxu0 0.0
        %5116 = vmatpush2.msra.mxu0 0.0
        %5117 = vmatprep.mubr.f32.mxu0 0.0
        %5118 = vmatmul.mubr.f32.gmra.mxu0 %v5045
        %v5119 = vpop.f32.mrf.mxu0
        %v5120 = vadd.f32 0.0, %v5119
        %v5121 = vpop.f32.mrf.mxu0
        %5122 = vmatprep.mubr.f32.mxu0 0.0
        %5123 = vmatmul.mubr.f32.gmra.mxu0 %v5047
        %v5124 = vpop.f32.mrf.mxu0
        %v5125 = vadd.f32 0.0, %v5124
        %v5126 = vpop.f32.mrf.mxu0
        %5127 = vmatprep.mubr.f32.mxu0 0.0
        %5128 = vmatmul.mubr.f32.gmra.mxu0 %v5049
        %v5129 = vpop.f32.mrf.mxu0
        %v5130 = vadd.f32 0.0, %v5129
        %v5131 = vpop.f32.mrf.mxu0
        %5132 = vmatprep.mubr.f32.mxu0 0.0
        %5133 = vmatmul.mubr.f32.gmra.mxu0 %v5051
        %v5134 = vpop.f32.mrf.mxu0
        %v5135 = vadd.f32 0.0, %v5134
        %v5136 = vpop.f32.mrf.mxu0
        %5137 = vdwg.mxu0
        %v5142 = vcombine.high %v5120, %v5120
        %v5143 = vcombine.high %v5125, %v5125
        %v5144 = vcombine.high %v5130, %v5130
        %v5145 = vcombine.high %v5135, %v5135
        %v5150 = vadd.f32 %v3659, %v5120
        %v5151 = vadd.f32 %v3681, %v5142
        %v5152 = vadd.f32 %v3664, %v5125
        %v5153 = vadd.f32 %v3682, %v5143
        %v5154 = vadd.f32 %v3669, %v5130
        %v5155 = vadd.f32 %v3683, %v5144
        %v5156 = vadd.f32 %v3674, %v5135
        %v5157 = vadd.f32 %v3684, %v5145
        %5158 = vrot.lane.b32.xlu0 %v589, 104
        %v5159 = vpop.permute.xlu0 %5158
        %5160 = vrot.lane.b32.xlu0 %v689, 104
        %v5161 = vpop.permute.xlu0 %5160
        %v5162 = vsel %vm815, %v5159, 0
        %v5164 = vsel %vm815, %v5161, 0
        %5166 = vmatprep.subr.mxu0 0.0
        %5167 = vmatpush1.xpose.msra.mxu0 0.0
        %5168 = vmatprep.subr.mxu0 0.0
        %5169 = vmatpush1.xpose.msra.mxu0 0.0
        %5170 = vmatprep.subr.mxu0 0.0
        %5171 = vmatpush1.xpose.msra.mxu0 0.0
        %5172 = vmatprep.subr.mxu0 0.0
        %5173 = vmatpush1.xpose.msra.mxu0 0.0
        %5174 = vmatprep.subr.mxu0 0.0
        %5175 = vmatpush1.xpose.msra.mxu0 0.0
        %5176 = vmatprep.subr.mxu0 0.0
        %5177 = vmatpush1.xpose.msra.mxu0 0.0
        %5178 = vmatprep.subr.mxu0 0.0
        %5179 = vmatpush1.xpose.msra.mxu0 0.0
        %5180 = vmatprep.subr.mxu0 0.0
        %5181 = vmatpush1.xpose.msra.mxu0 0.0
        %5182 = vmatprep.subr.mxu0 0.0
        %5183 = vmatpush1.xpose.msra.mxu0 0.0
        %5184 = vmatprep.subr.mxu0 0.0
        %5185 = vmatpush1.xpose.msra.mxu0 0.0
        %5186 = vmatprep.subr.mxu0 0.0
        %5187 = vmatpush1.xpose.msra.mxu0 0.0
        %5188 = vmatprep.subr.mxu0 0.0
        %5189 = vmatpush1.xpose.msra.mxu0 0.0
        %5190 = vmatprep.subr.mxu0 0.0
        %5191 = vmatpush1.xpose.msra.mxu0 0.0
        %5192 = vmatprep.subr.mxu0 0.0
        %5193 = vmatpush1.xpose.msra.mxu0 0.0
        %5194 = vmatprep.subr.mxu0 0.0
        %5195 = vmatpush1.xpose.msra.mxu0 0.0
        %5196 = vmatprep.subr.mxu0 0.0
        %5197 = vmatpush1.xpose.msra.mxu0 %v5164
        %5198 = vmatprep.subr.mxu0 0.0
        %5199 = vmatpush2.xpose.msra.mxu0 0.0
        %5200 = vmatprep.subr.mxu0 0.0
        %5201 = vmatpush2.xpose.msra.mxu0 0.0
        %5202 = vmatprep.subr.mxu0 0.0
        %5203 = vmatpush2.xpose.msra.mxu0 0.0
        %5204 = vmatprep.subr.mxu0 0.0
        %5205 = vmatpush2.xpose.msra.mxu0 0.0
        %5206 = vmatprep.subr.mxu0 0.0
        %5207 = vmatpush2.xpose.msra.mxu0 0.0
        %5208 = vmatprep.subr.mxu0 0.0
        %5209 = vmatpush2.xpose.msra.mxu0 0.0
        %5210 = vmatprep.subr.mxu0 0.0
        %5211 = vmatpush2.xpose.msra.mxu0 0.0
        %5212 = vmatprep.subr.mxu0 0.0
        %5213 = vmatpush2.xpose.msra.mxu0 0.0
        %5214 = vmatprep.subr.mxu0 0.0
        %5215 = vmatpush2.xpose.msra.mxu0 0.0
        %5216 = vmatprep.subr.mxu0 0.0
        %5217 = vmatpush2.xpose.msra.mxu0 0.0
        %5218 = vmatprep.subr.mxu0 0.0
        %5219 = vmatpush2.xpose.msra.mxu0 0.0
        %5220 = vmatprep.subr.mxu0 0.0
        %5221 = vmatpush2.xpose.msra.mxu0 0.0
        %5222 = vmatprep.subr.mxu0 0.0
        %5223 = vmatpush2.xpose.msra.mxu0 0.0
        %5224 = vmatprep.subr.mxu0 0.0
        %5225 = vmatpush2.xpose.msra.mxu0 0.0
        %5226 = vmatprep.subr.mxu0 0.0
        %5227 = vmatpush2.xpose.msra.mxu0 0.0
        %5228 = vmatprep.subr.mxu0 0.0
        %5229 = vmatpush2.xpose.msra.mxu0 0.0
        %5230 = vmatprep.mubr.f32.mxu0 0.0
        %5231 = vmatmul.mubr.f32.gmra.mxu0 %v5162
        %v5232 = vpop.f32.mrf.mxu0
        %v5233 = vadd.f32 0.0, %v5232
        %v5234 = vpop.f32.mrf.mxu0
        %5235 = vdwg.mxu0
        %5236 = vrot.lane.b32.xlu0 %v611, 104
        %v5237 = vpop.permute.xlu0 %5236
        %5238 = vrot.lane.b32.xlu0 %v711, 104
        %v5239 = vpop.permute.xlu0 %5238
        %v5240 = vsel %vm815, %v5237, 0
        %v5242 = vsel %vm815, %v5239, 0
        %5244 = vmatprep.subr.mxu0 0.0
        %5245 = vmatpush1.xpose.msra.mxu0 0.0
        %5246 = vmatprep.subr.mxu0 0.0
        %5247 = vmatpush1.xpose.msra.mxu0 0.0
        %5248 = vmatprep.subr.mxu0 0.0
        %5249 = vmatpush1.xpose.msra.mxu0 0.0
        %5250 = vmatprep.subr.mxu0 0.0
        %5251 = vmatpush1.xpose.msra.mxu0 0.0
        %5252 = vmatprep.subr.mxu0 0.0
        %5253 = vmatpush1.xpose.msra.mxu0 0.0
        %5254 = vmatprep.subr.mxu0 0.0
        %5255 = vmatpush1.xpose.msra.mxu0 0.0
        %5256 = vmatprep.subr.mxu0 0.0
        %5257 = vmatpush1.xpose.msra.mxu0 0.0
        %5258 = vmatprep.subr.mxu0 0.0
        %5259 = vmatpush1.xpose.msra.mxu0 0.0
        %5260 = vmatprep.subr.mxu0 0.0
        %5261 = vmatpush1.xpose.msra.mxu0 0.0
        %5262 = vmatprep.subr.mxu0 0.0
        %5263 = vmatpush1.xpose.msra.mxu0 0.0
        %5264 = vmatprep.subr.mxu0 0.0
        %5265 = vmatpush1.xpose.msra.mxu0 0.0
        %5266 = vmatprep.subr.mxu0 0.0
        %5267 = vmatpush1.xpose.msra.mxu0 0.0
        %5268 = vmatprep.subr.mxu0 0.0
        %5269 = vmatpush1.xpose.msra.mxu0 0.0
        %5270 = vmatprep.subr.mxu0 0.0
        %5271 = vmatpush1.xpose.msra.mxu0 0.0
        %5272 = vmatprep.subr.mxu0 0.0
        %5273 = vmatpush1.xpose.msra.mxu0 0.0
        %5274 = vmatprep.subr.mxu0 0.0
        %5275 = vmatpush1.xpose.msra.mxu0 %v5242
        %5276 = vmatprep.subr.mxu0 0.0
        %5277 = vmatpush2.xpose.msra.mxu0 0.0
        %5278 = vmatprep.subr.mxu0 0.0
        %5279 = vmatpush2.xpose.msra.mxu0 0.0
        %5280 = vmatprep.subr.mxu0 0.0
        %5281 = vmatpush2.xpose.msra.mxu0 0.0
        %5282 = vmatprep.subr.mxu0 0.0
        %5283 = vmatpush2.xpose.msra.mxu0 0.0
        %5284 = vmatprep.subr.mxu0 0.0
        %5285 = vmatpush2.xpose.msra.mxu0 0.0
        %5286 = vmatprep.subr.mxu0 0.0
        %5287 = vmatpush2.xpose.msra.mxu0 0.0
        %5288 = vmatprep.subr.mxu0 0.0
        %5289 = vmatpush2.xpose.msra.mxu0 0.0
        %5290 = vmatprep.subr.mxu0 0.0
        %5291 = vmatpush2.xpose.msra.mxu0 0.0
        %5292 = vmatprep.subr.mxu0 0.0
        %5293 = vmatpush2.xpose.msra.mxu0 0.0
        %5294 = vmatprep.subr.mxu0 0.0
        %5295 = vmatpush2.xpose.msra.mxu0 0.0
        %5296 = vmatprep.subr.mxu0 0.0
        %5297 = vmatpush2.xpose.msra.mxu0 0.0
        %5298 = vmatprep.subr.mxu0 0.0
        %5299 = vmatpush2.xpose.msra.mxu0 0.0
        %5300 = vmatprep.subr.mxu0 0.0
        %5301 = vmatpush2.xpose.msra.mxu0 0.0
        %5302 = vmatprep.subr.mxu0 0.0
        %5303 = vmatpush2.xpose.msra.mxu0 0.0
        %5304 = vmatprep.subr.mxu0 0.0
        %5305 = vmatpush2.xpose.msra.mxu0 0.0
        %5306 = vmatprep.subr.mxu0 0.0
        %5307 = vmatpush2.xpose.msra.mxu0 0.0
        %5308 = vmatprep.mubr.f32.mxu0 0.0
        %5309 = vmatmul.mubr.f32.gmra.mxu0 %v5240
        %v5310 = vpop.f32.mrf.mxu0
        %v5311 = vadd.f32 0.0, %v5310
        %v5312 = vpop.f32.mrf.mxu0
        %5313 = vdwg.mxu0
        %5314 = vrot.lane.b32.xlu0 %v594, 104
        %v5315 = vpop.permute.xlu0 %5314
        %5316 = vrot.lane.b32.xlu0 %v694, 104
        %v5317 = vpop.permute.xlu0 %5316
        %v5318 = vsel %vm815, %v5315, 0
        %v5320 = vsel %vm815, %v5317, 0
        %5322 = vmatprep.subr.mxu0 0.0
        %5323 = vmatpush1.xpose.msra.mxu0 0.0
        %5324 = vmatprep.subr.mxu0 0.0
        %5325 = vmatpush1.xpose.msra.mxu0 0.0
        %5326 = vmatprep.subr.mxu0 0.0
        %5327 = vmatpush1.xpose.msra.mxu0 0.0
        %5328 = vmatprep.subr.mxu0 0.0
        %5329 = vmatpush1.xpose.msra.mxu0 0.0
        %5330 = vmatprep.subr.mxu0 0.0
        %5331 = vmatpush1.xpose.msra.mxu0 0.0
        %5332 = vmatprep.subr.mxu0 0.0
        %5333 = vmatpush1.xpose.msra.mxu0 0.0
        %5334 = vmatprep.subr.mxu0 0.0
        %5335 = vmatpush1.xpose.msra.mxu0 0.0
        %5336 = vmatprep.subr.mxu0 0.0
        %5337 = vmatpush1.xpose.msra.mxu0 0.0
        %5338 = vmatprep.subr.mxu0 0.0
        %5339 = vmatpush1.xpose.msra.mxu0 0.0
        %5340 = vmatprep.subr.mxu0 0.0
        %5341 = vmatpush1.xpose.msra.mxu0 0.0
        %5342 = vmatprep.subr.mxu0 0.0
        %5343 = vmatpush1.xpose.msra.mxu0 0.0
        %5344 = vmatprep.subr.mxu0 0.0
        %5345 = vmatpush1.xpose.msra.mxu0 0.0
        %5346 = vmatprep.subr.mxu0 0.0
        %5347 = vmatpush1.xpose.msra.mxu0 0.0
        %5348 = vmatprep.subr.mxu0 0.0
        %5349 = vmatpush1.xpose.msra.mxu0 0.0
        %5350 = vmatprep.subr.mxu0 0.0
        %5351 = vmatpush1.xpose.msra.mxu0 0.0
        %5352 = vmatprep.subr.mxu0 0.0
        %5353 = vmatpush1.xpose.msra.mxu0 %v5320
        %5354 = vmatprep.subr.mxu0 0.0
        %5355 = vmatpush2.xpose.msra.mxu0 0.0
        %5356 = vmatprep.subr.mxu0 0.0
        %5357 = vmatpush2.xpose.msra.mxu0 0.0
        %5358 = vmatprep.subr.mxu0 0.0
        %5359 = vmatpush2.xpose.msra.mxu0 0.0
        %5360 = vmatprep.subr.mxu0 0.0
        %5361 = vmatpush2.xpose.msra.mxu0 0.0
        %5362 = vmatprep.subr.mxu0 0.0
        %5363 = vmatpush2.xpose.msra.mxu0 0.0
        %5364 = vmatprep.subr.mxu0 0.0
        %5365 = vmatpush2.xpose.msra.mxu0 0.0
        %5366 = vmatprep.subr.mxu0 0.0
        %5367 = vmatpush2.xpose.msra.mxu0 0.0
        %5368 = vmatprep.subr.mxu0 0.0
        %5369 = vmatpush2.xpose.msra.mxu0 0.0
        %5370 = vmatprep.subr.mxu0 0.0
        %5371 = vmatpush2.xpose.msra.mxu0 0.0
        %5372 = vmatprep.subr.mxu0 0.0
        %5373 = vmatpush2.xpose.msra.mxu0 0.0
        %5374 = vmatprep.subr.mxu0 0.0
        %5375 = vmatpush2.xpose.msra.mxu0 0.0
        %5376 = vmatprep.subr.mxu0 0.0
        %5377 = vmatpush2.xpose.msra.mxu0 0.0
        %5378 = vmatprep.subr.mxu0 0.0
        %5379 = vmatpush2.xpose.msra.mxu0 0.0
        %5380 = vmatprep.subr.mxu0 0.0
        %5381 = vmatpush2.xpose.msra.mxu0 0.0
        %5382 = vmatprep.subr.mxu0 0.0
        %5383 = vmatpush2.xpose.msra.mxu0 0.0
        %5384 = vmatprep.subr.mxu0 0.0
        %5385 = vmatpush2.xpose.msra.mxu0 0.0
        %5386 = vmatprep.mubr.f32.mxu0 0.0
        %5387 = vmatmul.mubr.f32.gmra.mxu0 %v5318
        %v5388 = vpop.f32.mrf.mxu0
        %v5389 = vadd.f32 0.0, %v5388
        %v5390 = vpop.f32.mrf.mxu0
        %5391 = vdwg.mxu0
        %5392 = vrot.lane.b32.xlu0 %v612, 104
        %v5393 = vpop.permute.xlu0 %5392
        %5394 = vrot.lane.b32.xlu0 %v712, 104
        %v5395 = vpop.permute.xlu0 %5394
        %v5396 = vsel %vm815, %v5393, 0
        %v5398 = vsel %vm815, %v5395, 0
        %5400 = vmatprep.subr.mxu0 0.0
        %5401 = vmatpush1.xpose.msra.mxu0 0.0
        %5402 = vmatprep.subr.mxu0 0.0
        %5403 = vmatpush1.xpose.msra.mxu0 0.0
        %5404 = vmatprep.subr.mxu0 0.0
        %5405 = vmatpush1.xpose.msra.mxu0 0.0
        %5406 = vmatprep.subr.mxu0 0.0
        %5407 = vmatpush1.xpose.msra.mxu0 0.0
        %5408 = vmatprep.subr.mxu0 0.0
        %5409 = vmatpush1.xpose.msra.mxu0 0.0
        %5410 = vmatprep.subr.mxu0 0.0
        %5411 = vmatpush1.xpose.msra.mxu0 0.0
        %5412 = vmatprep.subr.mxu0 0.0
        %5413 = vmatpush1.xpose.msra.mxu0 0.0
        %5414 = vmatprep.subr.mxu0 0.0
        %5415 = vmatpush1.xpose.msra.mxu0 0.0
        %5416 = vmatprep.subr.mxu0 0.0
        %5417 = vmatpush1.xpose.msra.mxu0 0.0
        %5418 = vmatprep.subr.mxu0 0.0
        %5419 = vmatpush1.xpose.msra.mxu0 0.0
        %5420 = vmatprep.subr.mxu0 0.0
        %5421 = vmatpush1.xpose.msra.mxu0 0.0
        %5422 = vmatprep.subr.mxu0 0.0
        %5423 = vmatpush1.xpose.msra.mxu0 0.0
        %5424 = vmatprep.subr.mxu0 0.0
        %5425 = vmatpush1.xpose.msra.mxu0 0.0
        %5426 = vmatprep.subr.mxu0 0.0
        %5427 = vmatpush1.xpose.msra.mxu0 0.0
        %5428 = vmatprep.subr.mxu0 0.0
        %5429 = vmatpush1.xpose.msra.mxu0 0.0
        %5430 = vmatprep.subr.mxu0 0.0
        %5431 = vmatpush1.xpose.msra.mxu0 %v5398
        %5432 = vmatprep.subr.mxu0 0.0
        %5433 = vmatpush2.xpose.msra.mxu0 0.0
        %5434 = vmatprep.subr.mxu0 0.0
        %5435 = vmatpush2.xpose.msra.mxu0 0.0
        %5436 = vmatprep.subr.mxu0 0.0
        %5437 = vmatpush2.xpose.msra.mxu0 0.0
        %5438 = vmatprep.subr.mxu0 0.0
        %5439 = vmatpush2.xpose.msra.mxu0 0.0
        %5440 = vmatprep.subr.mxu0 0.0
        %5441 = vmatpush2.xpose.msra.mxu0 0.0
        %5442 = vmatprep.subr.mxu0 0.0
        %5443 = vmatpush2.xpose.msra.mxu0 0.0
        %5444 = vmatprep.subr.mxu0 0.0
        %5445 = vmatpush2.xpose.msra.mxu0 0.0
        %5446 = vmatprep.subr.mxu0 0.0
        %5447 = vmatpush2.xpose.msra.mxu0 0.0
        %5448 = vmatprep.subr.mxu0 0.0
        %5449 = vmatpush2.xpose.msra.mxu0 0.0
        %5450 = vmatprep.subr.mxu0 0.0
        %5451 = vmatpush2.xpose.msra.mxu0 0.0
        %5452 = vmatprep.subr.mxu0 0.0
        %5453 = vmatpush2.xpose.msra.mxu0 0.0
        %5454 = vmatprep.subr.mxu0 0.0
        %5455 = vmatpush2.xpose.msra.mxu0 0.0
        %5456 = vmatprep.subr.mxu0 0.0
        %5457 = vmatpush2.xpose.msra.mxu0 0.0
        %5458 = vmatprep.subr.mxu0 0.0
        %5459 = vmatpush2.xpose.msra.mxu0 0.0
        %5460 = vmatprep.subr.mxu0 0.0
        %5461 = vmatpush2.xpose.msra.mxu0 0.0
        %5462 = vmatprep.subr.mxu0 0.0
        %5463 = vmatpush2.xpose.msra.mxu0 0.0
        %5464 = vmatprep.mubr.f32.mxu0 0.0
        %5465 = vmatmul.mubr.f32.gmra.mxu0 %v5396
        %v5466 = vpop.f32.mrf.mxu0
        %v5467 = vadd.f32 0.0, %v5466
        %v5468 = vpop.f32.mrf.mxu0
        %5469 = vdwg.mxu0
        %5470 = vrot.lane.b32.xlu0 %v599, 104
        %v5471 = vpop.permute.xlu0 %5470
        %5472 = vrot.lane.b32.xlu0 %v699, 104
        %v5473 = vpop.permute.xlu0 %5472
        %v5474 = vsel %vm815, %v5471, 0
        %v5476 = vsel %vm815, %v5473, 0
        %5478 = vmatprep.subr.mxu0 0.0
        %5479 = vmatpush1.xpose.msra.mxu0 0.0
        %5480 = vmatprep.subr.mxu0 0.0
        %5481 = vmatpush1.xpose.msra.mxu0 0.0
        %5482 = vmatprep.subr.mxu0 0.0
        %5483 = vmatpush1.xpose.msra.mxu0 0.0
        %5484 = vmatprep.subr.mxu0 0.0
        %5485 = vmatpush1.xpose.msra.mxu0 0.0
        %5486 = vmatprep.subr.mxu0 0.0
        %5487 = vmatpush1.xpose.msra.mxu0 0.0
        %5488 = vmatprep.subr.mxu0 0.0
        %5489 = vmatpush1.xpose.msra.mxu0 0.0
        %5490 = vmatprep.subr.mxu0 0.0
        %5491 = vmatpush1.xpose.msra.mxu0 0.0
        %5492 = vmatprep.subr.mxu0 0.0
        %5493 = vmatpush1.xpose.msra.mxu0 0.0
        %5494 = vmatprep.subr.mxu0 0.0
        %5495 = vmatpush1.xpose.msra.mxu0 0.0
        %5496 = vmatprep.subr.mxu0 0.0
        %5497 = vmatpush1.xpose.msra.mxu0 0.0
        %5498 = vmatprep.subr.mxu0 0.0
        %5499 = vmatpush1.xpose.msra.mxu0 0.0
        %5500 = vmatprep.subr.mxu0 0.0
        %5501 = vmatpush1.xpose.msra.mxu0 0.0
        %5502 = vmatprep.subr.mxu0 0.0
        %5503 = vmatpush1.xpose.msra.mxu0 0.0
        %5504 = vmatprep.subr.mxu0 0.0
        %5505 = vmatpush1.xpose.msra.mxu0 0.0
        %5506 = vmatprep.subr.mxu0 0.0
        %5507 = vmatpush1.xpose.msra.mxu0 0.0
        %5508 = vmatprep.subr.mxu0 0.0
        %5509 = vmatpush1.xpose.msra.mxu0 %v5476
        %5510 = vmatprep.subr.mxu0 0.0
        %5511 = vmatpush2.xpose.msra.mxu0 0.0
        %5512 = vmatprep.subr.mxu0 0.0
        %5513 = vmatpush2.xpose.msra.mxu0 0.0
        %5514 = vmatprep.subr.mxu0 0.0
        %5515 = vmatpush2.xpose.msra.mxu0 0.0
        %5516 = vmatprep.subr.mxu0 0.0
        %5517 = vmatpush2.xpose.msra.mxu0 0.0
        %5518 = vmatprep.subr.mxu0 0.0
        %5519 = vmatpush2.xpose.msra.mxu0 0.0
        %5520 = vmatprep.subr.mxu0 0.0
        %5521 = vmatpush2.xpose.msra.mxu0 0.0
        %5522 = vmatprep.subr.mxu0 0.0
        %5523 = vmatpush2.xpose.msra.mxu0 0.0
        %5524 = vmatprep.subr.mxu0 0.0
        %5525 = vmatpush2.xpose.msra.mxu0 0.0
        %5526 = vmatprep.subr.mxu0 0.0
        %5527 = vmatpush2.xpose.msra.mxu0 0.0
        %5528 = vmatprep.subr.mxu0 0.0
        %5529 = vmatpush2.xpose.msra.mxu0 0.0
        %5530 = vmatprep.subr.mxu0 0.0
        %5531 = vmatpush2.xpose.msra.mxu0 0.0
        %5532 = vmatprep.subr.mxu0 0.0
        %5533 = vmatpush2.xpose.msra.mxu0 0.0
        %5534 = vmatprep.subr.mxu0 0.0
        %5535 = vmatpush2.xpose.msra.mxu0 0.0
        %5536 = vmatprep.subr.mxu0 0.0
        %5537 = vmatpush2.xpose.msra.mxu0 0.0
        %5538 = vmatprep.subr.mxu0 0.0
        %5539 = vmatpush2.xpose.msra.mxu0 0.0
        %5540 = vmatprep.subr.mxu0 0.0
        %5541 = vmatpush2.xpose.msra.mxu0 0.0
        %5542 = vmatprep.mubr.f32.mxu0 0.0
        %5543 = vmatmul.mubr.f32.gmra.mxu0 %v5474
        %v5544 = vpop.f32.mrf.mxu0
        %v5545 = vadd.f32 0.0, %v5544
        %v5546 = vpop.f32.mrf.mxu0
        %5547 = vdwg.mxu0
        %5548 = vrot.lane.b32.xlu0 %v613, 104
        %v5549 = vpop.permute.xlu0 %5548
        %5550 = vrot.lane.b32.xlu0 %v713, 104
        %v5551 = vpop.permute.xlu0 %5550
        %v5552 = vsel %vm815, %v5549, 0
        %v5554 = vsel %vm815, %v5551, 0
        %5556 = vmatprep.subr.mxu0 0.0
        %5557 = vmatpush1.xpose.msra.mxu0 0.0
        %5558 = vmatprep.subr.mxu0 0.0
        %5559 = vmatpush1.xpose.msra.mxu0 0.0
        %5560 = vmatprep.subr.mxu0 0.0
        %5561 = vmatpush1.xpose.msra.mxu0 0.0
        %5562 = vmatprep.subr.mxu0 0.0
        %5563 = vmatpush1.xpose.msra.mxu0 0.0
        %5564 = vmatprep.subr.mxu0 0.0
        %5565 = vmatpush1.xpose.msra.mxu0 0.0
        %5566 = vmatprep.subr.mxu0 0.0
        %5567 = vmatpush1.xpose.msra.mxu0 0.0
        %5568 = vmatprep.subr.mxu0 0.0
        %5569 = vmatpush1.xpose.msra.mxu0 0.0
        %5570 = vmatprep.subr.mxu0 0.0
        %5571 = vmatpush1.xpose.msra.mxu0 0.0
        %5572 = vmatprep.subr.mxu0 0.0
        %5573 = vmatpush1.xpose.msra.mxu0 0.0
        %5574 = vmatprep.subr.mxu0 0.0
        %5575 = vmatpush1.xpose.msra.mxu0 0.0
        %5576 = vmatprep.subr.mxu0 0.0
        %5577 = vmatpush1.xpose.msra.mxu0 0.0
        %5578 = vmatprep.subr.mxu0 0.0
        %5579 = vmatpush1.xpose.msra.mxu0 0.0
        %5580 = vmatprep.subr.mxu0 0.0
        %5581 = vmatpush1.xpose.msra.mxu0 0.0
        %5582 = vmatprep.subr.mxu0 0.0
        %5583 = vmatpush1.xpose.msra.mxu0 0.0
        %5584 = vmatprep.subr.mxu0 0.0
        %5585 = vmatpush1.xpose.msra.mxu0 0.0
        %5586 = vmatprep.subr.mxu0 0.0
        %5587 = vmatpush1.xpose.msra.mxu0 %v5554
        %5588 = vmatprep.subr.mxu0 0.0
        %5589 = vmatpush2.xpose.msra.mxu0 0.0
        %5590 = vmatprep.subr.mxu0 0.0
        %5591 = vmatpush2.xpose.msra.mxu0 0.0
        %5592 = vmatprep.subr.mxu0 0.0
        %5593 = vmatpush2.xpose.msra.mxu0 0.0
        %5594 = vmatprep.subr.mxu0 0.0
        %5595 = vmatpush2.xpose.msra.mxu0 0.0
        %5596 = vmatprep.subr.mxu0 0.0
        %5597 = vmatpush2.xpose.msra.mxu0 0.0
        %5598 = vmatprep.subr.mxu0 0.0
        %5599 = vmatpush2.xpose.msra.mxu0 0.0
        %5600 = vmatprep.subr.mxu0 0.0
        %5601 = vmatpush2.xpose.msra.mxu0 0.0
        %5602 = vmatprep.subr.mxu0 0.0
        %5603 = vmatpush2.xpose.msra.mxu0 0.0
        %5604 = vmatprep.subr.mxu0 0.0
        %5605 = vmatpush2.xpose.msra.mxu0 0.0
        %5606 = vmatprep.subr.mxu0 0.0
        %5607 = vmatpush2.xpose.msra.mxu0 0.0
        %5608 = vmatprep.subr.mxu0 0.0
        %5609 = vmatpush2.xpose.msra.mxu0 0.0
        %5610 = vmatprep.subr.mxu0 0.0
        %5611 = vmatpush2.xpose.msra.mxu0 0.0
        %5612 = vmatprep.subr.mxu0 0.0
        %5613 = vmatpush2.xpose.msra.mxu0 0.0
        %5614 = vmatprep.subr.mxu0 0.0
        %5615 = vmatpush2.xpose.msra.mxu0 0.0
        %5616 = vmatprep.subr.mxu0 0.0
        %5617 = vmatpush2.xpose.msra.mxu0 0.0
        %5618 = vmatprep.subr.mxu0 0.0
        %5619 = vmatpush2.xpose.msra.mxu0 0.0
        %5620 = vmatprep.mubr.f32.mxu0 0.0
        %5621 = vmatmul.mubr.f32.gmra.mxu0 %v5552
        %v5622 = vpop.f32.mrf.mxu0
        %v5623 = vadd.f32 0.0, %v5622
        %v5624 = vpop.f32.mrf.mxu0
        %5625 = vdwg.mxu0
        %5626 = vrot.lane.b32.xlu0 %v604, 104
        %v5627 = vpop.permute.xlu0 %5626
        %5628 = vrot.lane.b32.xlu0 %v704, 104
        %v5629 = vpop.permute.xlu0 %5628
        %v5630 = vsel %vm815, %v5627, 0
        %v5632 = vsel %vm815, %v5629, 0
        %5634 = vmatprep.subr.mxu0 0.0
        %5635 = vmatpush1.xpose.msra.mxu0 0.0
        %5636 = vmatprep.subr.mxu0 0.0
        %5637 = vmatpush1.xpose.msra.mxu0 0.0
        %5638 = vmatprep.subr.mxu0 0.0
        %5639 = vmatpush1.xpose.msra.mxu0 0.0
        %5640 = vmatprep.subr.mxu0 0.0
        %5641 = vmatpush1.xpose.msra.mxu0 0.0
        %5642 = vmatprep.subr.mxu0 0.0
        %5643 = vmatpush1.xpose.msra.mxu0 0.0
        %5644 = vmatprep.subr.mxu0 0.0
        %5645 = vmatpush1.xpose.msra.mxu0 0.0
        %5646 = vmatprep.subr.mxu0 0.0
        %5647 = vmatpush1.xpose.msra.mxu0 0.0
        %5648 = vmatprep.subr.mxu0 0.0
        %5649 = vmatpush1.xpose.msra.mxu0 0.0
        %5650 = vmatprep.subr.mxu0 0.0
        %5651 = vmatpush1.xpose.msra.mxu0 0.0
        %5652 = vmatprep.subr.mxu0 0.0
        %5653 = vmatpush1.xpose.msra.mxu0 0.0
        %5654 = vmatprep.subr.mxu0 0.0
        %5655 = vmatpush1.xpose.msra.mxu0 0.0
        %5656 = vmatprep.subr.mxu0 0.0
        %5657 = vmatpush1.xpose.msra.mxu0 0.0
        %5658 = vmatprep.subr.mxu0 0.0
        %5659 = vmatpush1.xpose.msra.mxu0 0.0
        %5660 = vmatprep.subr.mxu0 0.0
        %5661 = vmatpush1.xpose.msra.mxu0 0.0
        %5662 = vmatprep.subr.mxu0 0.0
        %5663 = vmatpush1.xpose.msra.mxu0 0.0
        %5664 = vmatprep.subr.mxu0 0.0
        %5665 = vmatpush1.xpose.msra.mxu0 %v5632
        %5666 = vmatprep.subr.mxu0 0.0
        %5667 = vmatpush2.xpose.msra.mxu0 0.0
        %5668 = vmatprep.subr.mxu0 0.0
        %5669 = vmatpush2.xpose.msra.mxu0 0.0
        %5670 = vmatprep.subr.mxu0 0.0
        %5671 = vmatpush2.xpose.msra.mxu0 0.0
        %5672 = vmatprep.subr.mxu0 0.0
        %5673 = vmatpush2.xpose.msra.mxu0 0.0
        %5674 = vmatprep.subr.mxu0 0.0
        %5675 = vmatpush2.xpose.msra.mxu0 0.0
        %5676 = vmatprep.subr.mxu0 0.0
        %5677 = vmatpush2.xpose.msra.mxu0 0.0
        %5678 = vmatprep.subr.mxu0 0.0
        %5679 = vmatpush2.xpose.msra.mxu0 0.0
        %5680 = vmatprep.subr.mxu0 0.0
        %5681 = vmatpush2.xpose.msra.mxu0 0.0
        %5682 = vmatprep.subr.mxu0 0.0
        %5683 = vmatpush2.xpose.msra.mxu0 0.0
        %5684 = vmatprep.subr.mxu0 0.0
        %5685 = vmatpush2.xpose.msra.mxu0 0.0
        %5686 = vmatprep.subr.mxu0 0.0
        %5687 = vmatpush2.xpose.msra.mxu0 0.0
        %5688 = vmatprep.subr.mxu0 0.0
        %5689 = vmatpush2.xpose.msra.mxu0 0.0
        %5690 = vmatprep.subr.mxu0 0.0
        %5691 = vmatpush2.xpose.msra.mxu0 0.0
        %5692 = vmatprep.subr.mxu0 0.0
        %5693 = vmatpush2.xpose.msra.mxu0 0.0
        %5694 = vmatprep.subr.mxu0 0.0
        %5695 = vmatpush2.xpose.msra.mxu0 0.0
        %5696 = vmatprep.subr.mxu0 0.0
        %5697 = vmatpush2.xpose.msra.mxu0 0.0
        %5698 = vmatprep.mubr.f32.mxu0 0.0
        %5699 = vmatmul.mubr.f32.gmra.mxu0 %v5630
        %v5700 = vpop.f32.mrf.mxu0
        %v5701 = vadd.f32 0.0, %v5700
        %v5702 = vpop.f32.mrf.mxu0
        %5703 = vdwg.mxu0
        %5704 = vrot.lane.b32.xlu0 %v614, 104
        %v5705 = vpop.permute.xlu0 %5704
        %5706 = vrot.lane.b32.xlu0 %v714, 104
        %v5707 = vpop.permute.xlu0 %5706
        %v5708 = vsel %vm815, %v5705, 0
        %v5710 = vsel %vm815, %v5707, 0
        %5712 = vmatprep.subr.mxu0 0.0
        %5713 = vmatpush1.xpose.msra.mxu0 0.0
        %5714 = vmatprep.subr.mxu0 0.0
        %5715 = vmatpush1.xpose.msra.mxu0 0.0
        %5716 = vmatprep.subr.mxu0 0.0
        %5717 = vmatpush1.xpose.msra.mxu0 0.0
        %5718 = vmatprep.subr.mxu0 0.0
        %5719 = vmatpush1.xpose.msra.mxu0 0.0
        %5720 = vmatprep.subr.mxu0 0.0
        %5721 = vmatpush1.xpose.msra.mxu0 0.0
        %5722 = vmatprep.subr.mxu0 0.0
        %5723 = vmatpush1.xpose.msra.mxu0 0.0
        %5724 = vmatprep.subr.mxu0 0.0
        %5725 = vmatpush1.xpose.msra.mxu0 0.0
        %5726 = vmatprep.subr.mxu0 0.0
        %5727 = vmatpush1.xpose.msra.mxu0 0.0
        %5728 = vmatprep.subr.mxu0 0.0
        %5729 = vmatpush1.xpose.msra.mxu0 0.0
        %5730 = vmatprep.subr.mxu0 0.0
        %5731 = vmatpush1.xpose.msra.mxu0 0.0
        %5732 = vmatprep.subr.mxu0 0.0
        %5733 = vmatpush1.xpose.msra.mxu0 0.0
        %5734 = vmatprep.subr.mxu0 0.0
        %5735 = vmatpush1.xpose.msra.mxu0 0.0
        %5736 = vmatprep.subr.mxu0 0.0
        %5737 = vmatpush1.xpose.msra.mxu0 0.0
        %5738 = vmatprep.subr.mxu0 0.0
        %5739 = vmatpush1.xpose.msra.mxu0 0.0
        %5740 = vmatprep.subr.mxu0 0.0
        %5741 = vmatpush1.xpose.msra.mxu0 0.0
        %5742 = vmatprep.subr.mxu0 0.0
        %5743 = vmatpush1.xpose.msra.mxu0 %v5710
        %5744 = vmatprep.subr.mxu0 0.0
        %5745 = vmatpush2.xpose.msra.mxu0 0.0
        %5746 = vmatprep.subr.mxu0 0.0
        %5747 = vmatpush2.xpose.msra.mxu0 0.0
        %5748 = vmatprep.subr.mxu0 0.0
        %5749 = vmatpush2.xpose.msra.mxu0 0.0
        %5750 = vmatprep.subr.mxu0 0.0
        %5751 = vmatpush2.xpose.msra.mxu0 0.0
        %5752 = vmatprep.subr.mxu0 0.0
        %5753 = vmatpush2.xpose.msra.mxu0 0.0
        %5754 = vmatprep.subr.mxu0 0.0
        %5755 = vmatpush2.xpose.msra.mxu0 0.0
        %5756 = vmatprep.subr.mxu0 0.0
        %5757 = vmatpush2.xpose.msra.mxu0 0.0
        %5758 = vmatprep.subr.mxu0 0.0
        %5759 = vmatpush2.xpose.msra.mxu0 0.0
        %5760 = vmatprep.subr.mxu0 0.0
        %5761 = vmatpush2.xpose.msra.mxu0 0.0
        %5762 = vmatprep.subr.mxu0 0.0
        %5763 = vmatpush2.xpose.msra.mxu0 0.0
        %5764 = vmatprep.subr.mxu0 0.0
        %5765 = vmatpush2.xpose.msra.mxu0 0.0
        %5766 = vmatprep.subr.mxu0 0.0
        %5767 = vmatpush2.xpose.msra.mxu0 0.0
        %5768 = vmatprep.subr.mxu0 0.0
        %5769 = vmatpush2.xpose.msra.mxu0 0.0
        %5770 = vmatprep.subr.mxu0 0.0
        %5771 = vmatpush2.xpose.msra.mxu0 0.0
        %5772 = vmatprep.subr.mxu0 0.0
        %5773 = vmatpush2.xpose.msra.mxu0 0.0
        %5774 = vmatprep.subr.mxu0 0.0
        %5775 = vmatpush2.xpose.msra.mxu0 0.0
        %5776 = vmatprep.mubr.f32.mxu0 0.0
        %5777 = vmatmul.mubr.f32.gmra.mxu0 %v5708
        %v5778 = vpop.f32.mrf.mxu0
        %v5779 = vadd.f32 0.0, %v5778
        %v5780 = vpop.f32.mrf.mxu0
        %5781 = vdwg.mxu0
        %v5782 = vmul.f32 %v5233, 0.35355338
        %v5783 = vmul.f32 %v5311, 0.35355338
        %v5784 = vmul.f32 %v5389, 0.35355338
        %v5785 = vmul.f32 %v5467, 0.35355338
        %v5786 = vmul.f32 %v5545, 0.35355338
        %v5787 = vmul.f32 %v5623, 0.35355338
        %v5788 = vmul.f32 %v5701, 0.35355338
        %v5789 = vmul.f32 %v5779, 0.35355338
        %v5790 = vsel %vm1416, -1e+09, %v5782
        %v5791 = vsel %vm1417, -1e+09, %v5783
        %v5792 = vsel %vm1418, -1e+09, %v5784
        %v5793 = vsel %vm1419, -1e+09, %v5785
        %v5794 = vsel %vm1420, -1e+09, %v5786
        %v5795 = vsel %vm1421, -1e+09, %v5787
        %v5796 = vsel %vm1422, -1e+09, %v5788
        %v5797 = vsel %vm1423, -1e+09, %v5789
        %v5798 = vsel %vm1432, %v5790, -inf
        %5799 = vmax.xlane.f32.xlu0 %v5798
        %v5800 = vpop.xlane.xlu0 %5799
        %v5801 = vsel %vm1432, %v5791, -inf
        %5802 = vmax.xlane.f32.xlu0 %v5801
        %v5803 = vpop.xlane.xlu0 %5802
        %v5804 = vsel %vm1432, %v5792, -inf
        %5805 = vmax.xlane.f32.xlu0 %v5804
        %v5806 = vpop.xlane.xlu0 %5805
        %v5807 = vsel %vm1432, %v5793, -inf
        %5808 = vmax.xlane.f32.xlu0 %v5807
        %v5809 = vpop.xlane.xlu0 %5808
        %v5810 = vsel %vm1432, %v5794, -inf
        %5811 = vmax.xlane.f32.xlu0 %v5810
        %v5812 = vpop.xlane.xlu0 %5811
        %v5813 = vsel %vm1432, %v5795, -inf
        %5814 = vmax.xlane.f32.xlu0 %v5813
        %v5815 = vpop.xlane.xlu0 %5814
        %v5816 = vsel %vm1432, %v5796, -inf
        %5817 = vmax.xlane.f32.xlu0 %v5816
        %v5818 = vpop.xlane.xlu0 %5817
        %v5819 = vsel %vm1432, %v5797, -inf
        %5820 = vmax.xlane.f32.xlu0 %v5819
        %v5821 = vpop.xlane.xlu0 %5820
        %v5822 = vsub.f32 %v5790, %v5800
        %v5823 = vsub.f32 %v5791, %v5803
        %v5824 = vsub.f32 %v5792, %v5806
        %v5825 = vsub.f32 %v5793, %v5809
        %v5826 = vsub.f32 %v5794, %v5812
        %v5827 = vsub.f32 %v5795, %v5815
        %v5828 = vsub.f32 %v5796, %v5818
        %v5829 = vsub.f32 %v5797, %v5821
        %v5830 = vmul.f32 %v5822, 1.442695
        %v5831 = vpow.pop %v5830
        %v5832 = vmul.f32 %v5823, 1.442695
        %v5833 = vpow.pop %v5832
        %v5834 = vmul.f32 %v5824, 1.442695
        %v5835 = vpow.pop %v5834
        %v5836 = vmul.f32 %v5825, 1.442695
        %v5837 = vpow.pop %v5836
        %v5838 = vmul.f32 %v5826, 1.442695
        %v5839 = vpow.pop %v5838
        %v5840 = vmul.f32 %v5827, 1.442695
        %v5841 = vpow.pop %v5840
        %v5842 = vmul.f32 %v5828, 1.442695
        %v5843 = vpow.pop %v5842
        %v5844 = vmul.f32 %v5829, 1.442695
        %v5845 = vpow.pop %v5844
        %v5846 = vsel %vm1432, %v5831, 0.0
        %5847 = vadd.xlane.f32.xlu0 %v5846
        %v5848 = vpop.xlane.xlu0 %5847
        %v5849 = vsel %vm1432, %v5833, 0.0
        %5850 = vadd.xlane.f32.xlu0 %v5849
        %v5851 = vpop.xlane.xlu0 %5850
        %v5852 = vsel %vm1432, %v5835, 0.0
        %5853 = vadd.xlane.f32.xlu0 %v5852
        %v5854 = vpop.xlane.xlu0 %5853
        %v5855 = vsel %vm1432, %v5837, 0.0
        %5856 = vadd.xlane.f32.xlu0 %v5855
        %v5857 = vpop.xlane.xlu0 %5856
        %v5858 = vsel %vm1432, %v5839, 0.0
        %5859 = vadd.xlane.f32.xlu0 %v5858
        %v5860 = vpop.xlane.xlu0 %5859
        %v5861 = vsel %vm1432, %v5841, 0.0
        %5862 = vadd.xlane.f32.xlu0 %v5861
        %v5863 = vpop.xlane.xlu0 %5862
        %v5864 = vsel %vm1432, %v5843, 0.0
        %5865 = vadd.xlane.f32.xlu0 %v5864
        %v5866 = vpop.xlane.xlu0 %5865
        %v5867 = vsel %vm1432, %v5845, 0.0
        %5868 = vadd.xlane.f32.xlu0 %v5867
        %v5869 = vpop.xlane.xlu0 %5868
        %v5870 = vrcp.pop %v5848
        %v5871 = vmul.f32 %v5831, %v5870
        %v5872 = vrcp.pop %v5851
        %v5873 = vmul.f32 %v5833, %v5872
        %v5874 = vrcp.pop %v5854
        %v5875 = vmul.f32 %v5835, %v5874
        %v5876 = vrcp.pop %v5857
        %v5877 = vmul.f32 %v5837, %v5876
        %v5878 = vrcp.pop %v5860
        %v5879 = vmul.f32 %v5839, %v5878
        %v5880 = vrcp.pop %v5863
        %v5881 = vmul.f32 %v5841, %v5880
        %v5882 = vrcp.pop %v5866
        %v5883 = vmul.f32 %v5843, %v5882
        %v5884 = vrcp.pop %v5869
        %v5885 = vmul.f32 %v5845, %v5884
        %5886 = vrot.lane.b32.xlu0 %v789, 104
        %v5887 = vpop.permute.xlu0 %5886
        %v5889 = vsel %vm1521, %v5871, 0
        %v5891 = vsel %vm1525, %v5887, 0
        %5893 = vmatprep.subr.mxu0 0.0
        %5894 = vmatpush1.msra.mxu0 0.0
        %5895 = vmatprep.subr.mxu0 0.0
        %5896 = vmatpush1.msra.mxu0 0.0
        %5897 = vmatprep.subr.mxu0 0.0
        %5898 = vmatpush1.msra.mxu0 0.0
        %5899 = vmatprep.subr.mxu0 0.0
        %5900 = vmatpush1.msra.mxu0 0.0
        %5901 = vmatprep.subr.mxu0 0.0
        %5902 = vmatpush1.msra.mxu0 0.0
        %5903 = vmatprep.subr.mxu0 0.0
        %5904 = vmatpush1.msra.mxu0 0.0
        %5905 = vmatprep.subr.mxu0 0.0
        %5906 = vmatpush1.msra.mxu0 0.0
        %5907 = vmatprep.subr.mxu0 0.0
        %5908 = vmatpush1.msra.mxu0 0.0
        %5909 = vmatprep.subr.mxu0 0.0
        %5910 = vmatpush1.msra.mxu0 0.0
        %5911 = vmatprep.subr.mxu0 0.0
        %5912 = vmatpush1.msra.mxu0 0.0
        %5913 = vmatprep.subr.mxu0 0.0
        %5914 = vmatpush1.msra.mxu0 0.0
        %5915 = vmatprep.subr.mxu0 0.0
        %5916 = vmatpush1.msra.mxu0 0.0
        %5917 = vmatprep.subr.mxu0 0.0
        %5918 = vmatpush1.msra.mxu0 0.0
        %5919 = vmatprep.subr.mxu0 0.0
        %5920 = vmatpush1.msra.mxu0 0.0
        %5921 = vmatprep.subr.mxu0 0.0
        %5922 = vmatpush1.msra.mxu0 0.0
        %5923 = vmatprep.subr.mxu0 0.0
        %5924 = vmatpush1.msra.mxu0 %v5891
        %5925 = vmatprep.subr.mxu0 0.0
        %5926 = vmatpush2.msra.mxu0 0.0
        %5927 = vmatprep.subr.mxu0 0.0
        %5928 = vmatpush2.msra.mxu0 0.0
        %5929 = vmatprep.subr.mxu0 0.0
        %5930 = vmatpush2.msra.mxu0 0.0
        %5931 = vmatprep.subr.mxu0 0.0
        %5932 = vmatpush2.msra.mxu0 0.0
        %5933 = vmatprep.subr.mxu0 0.0
        %5934 = vmatpush2.msra.mxu0 0.0
        %5935 = vmatprep.subr.mxu0 0.0
        %5936 = vmatpush2.msra.mxu0 0.0
        %5937 = vmatprep.subr.mxu0 0.0
        %5938 = vmatpush2.msra.mxu0 0.0
        %5939 = vmatprep.subr.mxu0 0.0
        %5940 = vmatpush2.msra.mxu0 0.0
        %5941 = vmatprep.subr.mxu0 0.0
        %5942 = vmatpush2.msra.mxu0 0.0
        %5943 = vmatprep.subr.mxu0 0.0
        %5944 = vmatpush2.msra.mxu0 0.0
        %5945 = vmatprep.subr.mxu0 0.0
        %5946 = vmatpush2.msra.mxu0 0.0
        %5947 = vmatprep.subr.mxu0 0.0
        %5948 = vmatpush2.msra.mxu0 0.0
        %5949 = vmatprep.subr.mxu0 0.0
        %5950 = vmatpush2.msra.mxu0 0.0
        %5951 = vmatprep.subr.mxu0 0.0
        %5952 = vmatpush2.msra.mxu0 0.0
        %5953 = vmatprep.subr.mxu0 0.0
        %5954 = vmatpush2.msra.mxu0 0.0
        %5955 = vmatprep.subr.mxu0 0.0
        %5956 = vmatpush2.msra.mxu0 0.0
        %5957 = vmatprep.mubr.f32.mxu0 0.0
        %5958 = vmatmul.mubr.f32.gmra.mxu0 %v5889
        %v5959 = vpop.f32.mrf.mxu0
        %v5960 = vadd.f32 0.0, %v5959
        %v5961 = vpop.f32.mrf.mxu0
        %5962 = vdwg.mxu0
        %5963 = vrot.lane.b32.xlu0 %v811, 104
        %v5964 = vpop.permute.xlu0 %5963
        %v5966 = vsel %vm1521, %v5873, 0
        %v5968 = vsel %vm1525, %v5964, 0
        %5970 = vmatprep.subr.mxu0 0.0
        %5971 = vmatpush1.msra.mxu0 0.0
        %5972 = vmatprep.subr.mxu0 0.0
        %5973 = vmatpush1.msra.mxu0 0.0
        %5974 = vmatprep.subr.mxu0 0.0
        %5975 = vmatpush1.msra.mxu0 0.0
        %5976 = vmatprep.subr.mxu0 0.0
        %5977 = vmatpush1.msra.mxu0 0.0
        %5978 = vmatprep.subr.mxu0 0.0
        %5979 = vmatpush1.msra.mxu0 0.0
        %5980 = vmatprep.subr.mxu0 0.0
        %5981 = vmatpush1.msra.mxu0 0.0
        %5982 = vmatprep.subr.mxu0 0.0
        %5983 = vmatpush1.msra.mxu0 0.0
        %5984 = vmatprep.subr.mxu0 0.0
        %5985 = vmatpush1.msra.mxu0 0.0
        %5986 = vmatprep.subr.mxu0 0.0
        %5987 = vmatpush1.msra.mxu0 0.0
        %5988 = vmatprep.subr.mxu0 0.0
        %5989 = vmatpush1.msra.mxu0 0.0
        %5990 = vmatprep.subr.mxu0 0.0
        %5991 = vmatpush1.msra.mxu0 0.0
        %5992 = vmatprep.subr.mxu0 0.0
        %5993 = vmatpush1.msra.mxu0 0.0
        %5994 = vmatprep.subr.mxu0 0.0
        %5995 = vmatpush1.msra.mxu0 0.0
        %5996 = vmatprep.subr.mxu0 0.0
        %5997 = vmatpush1.msra.mxu0 0.0
        %5998 = vmatprep.subr.mxu0 0.0
        %5999 = vmatpush1.msra.mxu0 0.0
        %6000 = vmatprep.subr.mxu0 0.0
        %6001 = vmatpush1.msra.mxu0 %v5968
        %6002 = vmatprep.subr.mxu0 0.0
        %6003 = vmatpush2.msra.mxu0 0.0
        %6004 = vmatprep.subr.mxu0 0.0
        %6005 = vmatpush2.msra.mxu0 0.0
        %6006 = vmatprep.subr.mxu0 0.0
        %6007 = vmatpush2.msra.mxu0 0.0
        %6008 = vmatprep.subr.mxu0 0.0
        %6009 = vmatpush2.msra.mxu0 0.0
        %6010 = vmatprep.subr.mxu0 0.0
        %6011 = vmatpush2.msra.mxu0 0.0
        %6012 = vmatprep.subr.mxu0 0.0
        %6013 = vmatpush2.msra.mxu0 0.0
        %6014 = vmatprep.subr.mxu0 0.0
        %6015 = vmatpush2.msra.mxu0 0.0
        %6016 = vmatprep.subr.mxu0 0.0
        %6017 = vmatpush2.msra.mxu0 0.0
        %6018 = vmatprep.subr.mxu0 0.0
        %6019 = vmatpush2.msra.mxu0 0.0
        %6020 = vmatprep.subr.mxu0 0.0
        %6021 = vmatpush2.msra.mxu0 0.0
        %6022 = vmatprep.subr.mxu0 0.0
        %6023 = vmatpush2.msra.mxu0 0.0
        %6024 = vmatprep.subr.mxu0 0.0
        %6025 = vmatpush2.msra.mxu0 0.0
        %6026 = vmatprep.subr.mxu0 0.0
        %6027 = vmatpush2.msra.mxu0 0.0
        %6028 = vmatprep.subr.mxu0 0.0
        %6029 = vmatpush2.msra.mxu0 0.0
        %6030 = vmatprep.subr.mxu0 0.0
        %6031 = vmatpush2.msra.mxu0 0.0
        %6032 = vmatprep.subr.mxu0 0.0
        %6033 = vmatpush2.msra.mxu0 0.0
        %6034 = vmatprep.mubr.f32.mxu0 0.0
        %6035 = vmatmul.mubr.f32.gmra.mxu0 %v5966
        %v6036 = vpop.f32.mrf.mxu0
        %v6037 = vadd.f32 0.0, %v6036
        %v6038 = vpop.f32.mrf.mxu0
        %6039 = vdwg.mxu0
        %6040 = vrot.lane.b32.xlu0 %v794, 104
        %v6041 = vpop.permute.xlu0 %6040
        %v6043 = vsel %vm1521, %v5875, 0
        %v6045 = vsel %vm1525, %v6041, 0
        %6047 = vmatprep.subr.mxu0 0.0
        %6048 = vmatpush1.msra.mxu0 0.0
        %6049 = vmatprep.subr.mxu0 0.0
        %6050 = vmatpush1.msra.mxu0 0.0
        %6051 = vmatprep.subr.mxu0 0.0
        %6052 = vmatpush1.msra.mxu0 0.0
        %6053 = vmatprep.subr.mxu0 0.0
        %6054 = vmatpush1.msra.mxu0 0.0
        %6055 = vmatprep.subr.mxu0 0.0
        %6056 = vmatpush1.msra.mxu0 0.0
        %6057 = vmatprep.subr.mxu0 0.0
        %6058 = vmatpush1.msra.mxu0 0.0
        %6059 = vmatprep.subr.mxu0 0.0
        %6060 = vmatpush1.msra.mxu0 0.0
        %6061 = vmatprep.subr.mxu0 0.0
        %6062 = vmatpush1.msra.mxu0 0.0
        %6063 = vmatprep.subr.mxu0 0.0
        %6064 = vmatpush1.msra.mxu0 0.0
        %6065 = vmatprep.subr.mxu0 0.0
        %6066 = vmatpush1.msra.mxu0 0.0
        %6067 = vmatprep.subr.mxu0 0.0
        %6068 = vmatpush1.msra.mxu0 0.0
        %6069 = vmatprep.subr.mxu0 0.0
        %6070 = vmatpush1.msra.mxu0 0.0
        %6071 = vmatprep.subr.mxu0 0.0
        %6072 = vmatpush1.msra.mxu0 0.0
        %6073 = vmatprep.subr.mxu0 0.0
        %6074 = vmatpush1.msra.mxu0 0.0
        %6075 = vmatprep.subr.mxu0 0.0
        %6076 = vmatpush1.msra.mxu0 0.0
        %6077 = vmatprep.subr.mxu0 0.0
        %6078 = vmatpush1.msra.mxu0 %v6045
        %6079 = vmatprep.subr.mxu0 0.0
        %6080 = vmatpush2.msra.mxu0 0.0
        %6081 = vmatprep.subr.mxu0 0.0
        %6082 = vmatpush2.msra.mxu0 0.0
        %6083 = vmatprep.subr.mxu0 0.0
        %6084 = vmatpush2.msra.mxu0 0.0
        %6085 = vmatprep.subr.mxu0 0.0
        %6086 = vmatpush2.msra.mxu0 0.0
        %6087 = vmatprep.subr.mxu0 0.0
        %6088 = vmatpush2.msra.mxu0 0.0
        %6089 = vmatprep.subr.mxu0 0.0
        %6090 = vmatpush2.msra.mxu0 0.0
        %6091 = vmatprep.subr.mxu0 0.0
        %6092 = vmatpush2.msra.mxu0 0.0
        %6093 = vmatprep.subr.mxu0 0.0
        %6094 = vmatpush2.msra.mxu0 0.0
        %6095 = vmatprep.subr.mxu0 0.0
        %6096 = vmatpush2.msra.mxu0 0.0
        %6097 = vmatprep.subr.mxu0 0.0
        %6098 = vmatpush2.msra.mxu0 0.0
        %6099 = vmatprep.subr.mxu0 0.0
        %6100 = vmatpush2.msra.mxu0 0.0
        %6101 = vmatprep.subr.mxu0 0.0
        %6102 = vmatpush2.msra.mxu0 0.0
        %6103 = vmatprep.subr.mxu0 0.0
        %6104 = vmatpush2.msra.mxu0 0.0
        %6105 = vmatprep.subr.mxu0 0.0
        %6106 = vmatpush2.msra.mxu0 0.0
        %6107 = vmatprep.subr.mxu0 0.0
        %6108 = vmatpush2.msra.mxu0 0.0
        %6109 = vmatprep.subr.mxu0 0.0
        %6110 = vmatpush2.msra.mxu0 0.0
        %6111 = vmatprep.mubr.f32.mxu0 0.0
        %6112 = vmatmul.mubr.f32.gmra.mxu0 %v6043
        %v6113 = vpop.f32.mrf.mxu0
        %v6114 = vadd.f32 0.0, %v6113
        %v6115 = vpop.f32.mrf.mxu0
        %6116 = vdwg.mxu0
        %6117 = vrot.lane.b32.xlu0 %v812, 104
        %v6118 = vpop.permute.xlu0 %6117
        %v6120 = vsel %vm1521, %v5877, 0
        %v6122 = vsel %vm1525, %v6118, 0
        %6124 = vmatprep.subr.mxu0 0.0
        %6125 = vmatpush1.msra.mxu0 0.0
        %6126 = vmatprep.subr.mxu0 0.0
        %6127 = vmatpush1.msra.mxu0 0.0
        %6128 = vmatprep.subr.mxu0 0.0
        %6129 = vmatpush1.msra.mxu0 0.0
        %6130 = vmatprep.subr.mxu0 0.0
        %6131 = vmatpush1.msra.mxu0 0.0
        %6132 = vmatprep.subr.mxu0 0.0
        %6133 = vmatpush1.msra.mxu0 0.0
        %6134 = vmatprep.subr.mxu0 0.0
        %6135 = vmatpush1.msra.mxu0 0.0
        %6136 = vmatprep.subr.mxu0 0.0
        %6137 = vmatpush1.msra.mxu0 0.0
        %6138 = vmatprep.subr.mxu0 0.0
        %6139 = vmatpush1.msra.mxu0 0.0
        %6140 = vmatprep.subr.mxu0 0.0
        %6141 = vmatpush1.msra.mxu0 0.0
        %6142 = vmatprep.subr.mxu0 0.0
        %6143 = vmatpush1.msra.mxu0 0.0
        %6144 = vmatprep.subr.mxu0 0.0
        %6145 = vmatpush1.msra.mxu0 0.0
        %6146 = vmatprep.subr.mxu0 0.0
        %6147 = vmatpush1.msra.mxu0 0.0
        %6148 = vmatprep.subr.mxu0 0.0
        %6149 = vmatpush1.msra.mxu0 0.0
        %6150 = vmatprep.subr.mxu0 0.0
        %6151 = vmatpush1.msra.mxu0 0.0
        %6152 = vmatprep.subr.mxu0 0.0
        %6153 = vmatpush1.msra.mxu0 0.0
        %6154 = vmatprep.subr.mxu0 0.0
        %6155 = vmatpush1.msra.mxu0 %v6122
        %6156 = vmatprep.subr.mxu0 0.0
        %6157 = vmatpush2.msra.mxu0 0.0
        %6158 = vmatprep.subr.mxu0 0.0
        %6159 = vmatpush2.msra.mxu0 0.0
        %6160 = vmatprep.subr.mxu0 0.0
        %6161 = vmatpush2.msra.mxu0 0.0
        %6162 = vmatprep.subr.mxu0 0.0
        %6163 = vmatpush2.msra.mxu0 0.0
        %6164 = vmatprep.subr.mxu0 0.0
        %6165 = vmatpush2.msra.mxu0 0.0
        %6166 = vmatprep.subr.mxu0 0.0
        %6167 = vmatpush2.msra.mxu0 0.0
        %6168 = vmatprep.subr.mxu0 0.0
        %6169 = vmatpush2.msra.mxu0 0.0
        %6170 = vmatprep.subr.mxu0 0.0
        %6171 = vmatpush2.msra.mxu0 0.0
        %6172 = vmatprep.subr.mxu0 0.0
        %6173 = vmatpush2.msra.mxu0 0.0
        %6174 = vmatprep.subr.mxu0 0.0
        %6175 = vmatpush2.msra.mxu0 0.0
        %6176 = vmatprep.subr.mxu0 0.0
        %6177 = vmatpush2.msra.mxu0 0.0
        %6178 = vmatprep.subr.mxu0 0.0
        %6179 = vmatpush2.msra.mxu0 0.0
        %6180 = vmatprep.subr.mxu0 0.0
        %6181 = vmatpush2.msra.mxu0 0.0
        %6182 = vmatprep.subr.mxu0 0.0
        %6183 = vmatpush2.msra.mxu0 0.0
        %6184 = vmatprep.subr.mxu0 0.0
        %6185 = vmatpush2.msra.mxu0 0.0
        %6186 = vmatprep.subr.mxu0 0.0
        %6187 = vmatpush2.msra.mxu0 0.0
        %6188 = vmatprep.mubr.f32.mxu0 0.0
        %6189 = vmatmul.mubr.f32.gmra.mxu0 %v6120
        %v6190 = vpop.f32.mrf.mxu0
        %v6191 = vadd.f32 0.0, %v6190
        %v6192 = vpop.f32.mrf.mxu0
        %6193 = vdwg.mxu0
        %6194 = vrot.lane.b32.xlu0 %v799, 104
        %v6195 = vpop.permute.xlu0 %6194
        %v6197 = vsel %vm1521, %v5879, 0
        %v6199 = vsel %vm1525, %v6195, 0
        %6201 = vmatprep.subr.mxu0 0.0
        %6202 = vmatpush1.msra.mxu0 0.0
        %6203 = vmatprep.subr.mxu0 0.0
        %6204 = vmatpush1.msra.mxu0 0.0
        %6205 = vmatprep.subr.mxu0 0.0
        %6206 = vmatpush1.msra.mxu0 0.0
        %6207 = vmatprep.subr.mxu0 0.0
        %6208 = vmatpush1.msra.mxu0 0.0
        %6209 = vmatprep.subr.mxu0 0.0
        %6210 = vmatpush1.msra.mxu0 0.0
        %6211 = vmatprep.subr.mxu0 0.0
        %6212 = vmatpush1.msra.mxu0 0.0
        %6213 = vmatprep.subr.mxu0 0.0
        %6214 = vmatpush1.msra.mxu0 0.0
        %6215 = vmatprep.subr.mxu0 0.0
        %6216 = vmatpush1.msra.mxu0 0.0
        %6217 = vmatprep.subr.mxu0 0.0
        %6218 = vmatpush1.msra.mxu0 0.0
        %6219 = vmatprep.subr.mxu0 0.0
        %6220 = vmatpush1.msra.mxu0 0.0
        %6221 = vmatprep.subr.mxu0 0.0
        %6222 = vmatpush1.msra.mxu0 0.0
        %6223 = vmatprep.subr.mxu0 0.0
        %6224 = vmatpush1.msra.mxu0 0.0
        %6225 = vmatprep.subr.mxu0 0.0
        %6226 = vmatpush1.msra.mxu0 0.0
        %6227 = vmatprep.subr.mxu0 0.0
        %6228 = vmatpush1.msra.mxu0 0.0
        %6229 = vmatprep.subr.mxu0 0.0
        %6230 = vmatpush1.msra.mxu0 0.0
        %6231 = vmatprep.subr.mxu0 0.0
        %6232 = vmatpush1.msra.mxu0 %v6199
        %6233 = vmatprep.subr.mxu0 0.0
        %6234 = vmatpush2.msra.mxu0 0.0
        %6235 = vmatprep.subr.mxu0 0.0
        %6236 = vmatpush2.msra.mxu0 0.0
        %6237 = vmatprep.subr.mxu0 0.0
        %6238 = vmatpush2.msra.mxu0 0.0
        %6239 = vmatprep.subr.mxu0 0.0
        %6240 = vmatpush2.msra.mxu0 0.0
        %6241 = vmatprep.subr.mxu0 0.0
        %6242 = vmatpush2.msra.mxu0 0.0
        %6243 = vmatprep.subr.mxu0 0.0
        %6244 = vmatpush2.msra.mxu0 0.0
        %6245 = vmatprep.subr.mxu0 0.0
        %6246 = vmatpush2.msra.mxu0 0.0
        %6247 = vmatprep.subr.mxu0 0.0
        %6248 = vmatpush2.msra.mxu0 0.0
        %6249 = vmatprep.subr.mxu0 0.0
        %6250 = vmatpush2.msra.mxu0 0.0
        %6251 = vmatprep.subr.mxu0 0.0
        %6252 = vmatpush2.msra.mxu0 0.0
        %6253 = vmatprep.subr.mxu0 0.0
        %6254 = vmatpush2.msra.mxu0 0.0
        %6255 = vmatprep.subr.mxu0 0.0
        %6256 = vmatpush2.msra.mxu0 0.0
        %6257 = vmatprep.subr.mxu0 0.0
        %6258 = vmatpush2.msra.mxu0 0.0
        %6259 = vmatprep.subr.mxu0 0.0
        %6260 = vmatpush2.msra.mxu0 0.0
        %6261 = vmatprep.subr.mxu0 0.0
        %6262 = vmatpush2.msra.mxu0 0.0
        %6263 = vmatprep.subr.mxu0 0.0
        %6264 = vmatpush2.msra.mxu0 0.0
        %6265 = vmatprep.mubr.f32.mxu0 0.0
        %6266 = vmatmul.mubr.f32.gmra.mxu0 %v6197
        %v6267 = vpop.f32.mrf.mxu0
        %v6268 = vadd.f32 0.0, %v6267
        %v6269 = vpop.f32.mrf.mxu0
        %6270 = vdwg.mxu0
        %6271 = vrot.lane.b32.xlu0 %v813, 104
        %v6272 = vpop.permute.xlu0 %6271
        %v6274 = vsel %vm1521, %v5881, 0
        %v6276 = vsel %vm1525, %v6272, 0
        %6278 = vmatprep.subr.mxu0 0.0
        %6279 = vmatpush1.msra.mxu0 0.0
        %6280 = vmatprep.subr.mxu0 0.0
        %6281 = vmatpush1.msra.mxu0 0.0
        %6282 = vmatprep.subr.mxu0 0.0
        %6283 = vmatpush1.msra.mxu0 0.0
        %6284 = vmatprep.subr.mxu0 0.0
        %6285 = vmatpush1.msra.mxu0 0.0
        %6286 = vmatprep.subr.mxu0 0.0
        %6287 = vmatpush1.msra.mxu0 0.0
        %6288 = vmatprep.subr.mxu0 0.0
        %6289 = vmatpush1.msra.mxu0 0.0
        %6290 = vmatprep.subr.mxu0 0.0
        %6291 = vmatpush1.msra.mxu0 0.0
        %6292 = vmatprep.subr.mxu0 0.0
        %6293 = vmatpush1.msra.mxu0 0.0
        %6294 = vmatprep.subr.mxu0 0.0
        %6295 = vmatpush1.msra.mxu0 0.0
        %6296 = vmatprep.subr.mxu0 0.0
        %6297 = vmatpush1.msra.mxu0 0.0
        %6298 = vmatprep.subr.mxu0 0.0
        %6299 = vmatpush1.msra.mxu0 0.0
        %6300 = vmatprep.subr.mxu0 0.0
        %6301 = vmatpush1.msra.mxu0 0.0
        %6302 = vmatprep.subr.mxu0 0.0
        %6303 = vmatpush1.msra.mxu0 0.0
        %6304 = vmatprep.subr.mxu0 0.0
        %6305 = vmatpush1.msra.mxu0 0.0
        %6306 = vmatprep.subr.mxu0 0.0
        %6307 = vmatpush1.msra.mxu0 0.0
        %6308 = vmatprep.subr.mxu0 0.0
        %6309 = vmatpush1.msra.mxu0 %v6276
        %6310 = vmatprep.subr.mxu0 0.0
        %6311 = vmatpush2.msra.mxu0 0.0
        %6312 = vmatprep.subr.mxu0 0.0
        %6313 = vmatpush2.msra.mxu0 0.0
        %6314 = vmatprep.subr.mxu0 0.0
        %6315 = vmatpush2.msra.mxu0 0.0
        %6316 = vmatprep.subr.mxu0 0.0
        %6317 = vmatpush2.msra.mxu0 0.0
        %6318 = vmatprep.subr.mxu0 0.0
        %6319 = vmatpush2.msra.mxu0 0.0
        %6320 = vmatprep.subr.mxu0 0.0
        %6321 = vmatpush2.msra.mxu0 0.0
        %6322 = vmatprep.subr.mxu0 0.0
        %6323 = vmatpush2.msra.mxu0 0.0
        %6324 = vmatprep.subr.mxu0 0.0
        %6325 = vmatpush2.msra.mxu0 0.0
        %6326 = vmatprep.subr.mxu0 0.0
        %6327 = vmatpush2.msra.mxu0 0.0
        %6328 = vmatprep.subr.mxu0 0.0
        %6329 = vmatpush2.msra.mxu0 0.0
        %6330 = vmatprep.subr.mxu0 0.0
        %6331 = vmatpush2.msra.mxu0 0.0
        %6332 = vmatprep.subr.mxu0 0.0
        %6333 = vmatpush2.msra.mxu0 0.0
        %6334 = vmatprep.subr.mxu0 0.0
        %6335 = vmatpush2.msra.mxu0 0.0
        %6336 = vmatprep.subr.mxu0 0.0
        %6337 = vmatpush2.msra.mxu0 0.0
        %6338 = vmatprep.subr.mxu0 0.0
        %6339 = vmatpush2.msra.mxu0 0.0
        %6340 = vmatprep.subr.mxu0 0.0
        %6341 = vmatpush2.msra.mxu0 0.0
        %6342 = vmatprep.mubr.f32.mxu0 0.0
        %6343 = vmatmul.mubr.f32.gmra.mxu0 %v6274
        %v6344 = vpop.f32.mrf.mxu0
        %v6345 = vadd.f32 0.0, %v6344
        %v6346 = vpop.f32.mrf.mxu0
        %6347 = vdwg.mxu0
        %6348 = vrot.lane.b32.xlu0 %v804, 104
        %v6349 = vpop.permute.xlu0 %6348
        %v6351 = vsel %vm1521, %v5883, 0
        %v6353 = vsel %vm1525, %v6349, 0
        %6355 = vmatprep.subr.mxu0 0.0
        %6356 = vmatpush1.msra.mxu0 0.0
        %6357 = vmatprep.subr.mxu0 0.0
        %6358 = vmatpush1.msra.mxu0 0.0
        %6359 = vmatprep.subr.mxu0 0.0
        %6360 = vmatpush1.msra.mxu0 0.0
        %6361 = vmatprep.subr.mxu0 0.0
        %6362 = vmatpush1.msra.mxu0 0.0
        %6363 = vmatprep.subr.mxu0 0.0
        %6364 = vmatpush1.msra.mxu0 0.0
        %6365 = vmatprep.subr.mxu0 0.0
        %6366 = vmatpush1.msra.mxu0 0.0
        %6367 = vmatprep.subr.mxu0 0.0
        %6368 = vmatpush1.msra.mxu0 0.0
        %6369 = vmatprep.subr.mxu0 0.0
        %6370 = vmatpush1.msra.mxu0 0.0
        %6371 = vmatprep.subr.mxu0 0.0
        %6372 = vmatpush1.msra.mxu0 0.0
        %6373 = vmatprep.subr.mxu0 0.0
        %6374 = vmatpush1.msra.mxu0 0.0
        %6375 = vmatprep.subr.mxu0 0.0
        %6376 = vmatpush1.msra.mxu0 0.0
        %6377 = vmatprep.subr.mxu0 0.0
        %6378 = vmatpush1.msra.mxu0 0.0
        %6379 = vmatprep.subr.mxu0 0.0
        %6380 = vmatpush1.msra.mxu0 0.0
        %6381 = vmatprep.subr.mxu0 0.0
        %6382 = vmatpush1.msra.mxu0 0.0
        %6383 = vmatprep.subr.mxu0 0.0
        %6384 = vmatpush1.msra.mxu0 0.0
        %6385 = vmatprep.subr.mxu0 0.0
        %6386 = vmatpush1.msra.mxu0 %v6353
        %6387 = vmatprep.subr.mxu0 0.0
        %6388 = vmatpush2.msra.mxu0 0.0
        %6389 = vmatprep.subr.mxu0 0.0
        %6390 = vmatpush2.msra.mxu0 0.0
        %6391 = vmatprep.subr.mxu0 0.0
        %6392 = vmatpush2.msra.mxu0 0.0
        %6393 = vmatprep.subr.mxu0 0.0
        %6394 = vmatpush2.msra.mxu0 0.0
        %6395 = vmatprep.subr.mxu0 0.0
        %6396 = vmatpush2.msra.mxu0 0.0
        %6397 = vmatprep.subr.mxu0 0.0
        %6398 = vmatpush2.msra.mxu0 0.0
        %6399 = vmatprep.subr.mxu0 0.0
        %6400 = vmatpush2.msra.mxu0 0.0
        %6401 = vmatprep.subr.mxu0 0.0
        %6402 = vmatpush2.msra.mxu0 0.0
        %6403 = vmatprep.subr.mxu0 0.0
        %6404 = vmatpush2.msra.mxu0 0.0
        %6405 = vmatprep.subr.mxu0 0.0
        %6406 = vmatpush2.msra.mxu0 0.0
        %6407 = vmatprep.subr.mxu0 0.0
        %6408 = vmatpush2.msra.mxu0 0.0
        %6409 = vmatprep.subr.mxu0 0.0
        %6410 = vmatpush2.msra.mxu0 0.0
        %6411 = vmatprep.subr.mxu0 0.0
        %6412 = vmatpush2.msra.mxu0 0.0
        %6413 = vmatprep.subr.mxu0 0.0
        %6414 = vmatpush2.msra.mxu0 0.0
        %6415 = vmatprep.subr.mxu0 0.0
        %6416 = vmatpush2.msra.mxu0 0.0
        %6417 = vmatprep.subr.mxu0 0.0
        %6418 = vmatpush2.msra.mxu0 0.0
        %6419 = vmatprep.mubr.f32.mxu0 0.0
        %6420 = vmatmul.mubr.f32.gmra.mxu0 %v6351
        %v6421 = vpop.f32.mrf.mxu0
        %v6422 = vadd.f32 0.0, %v6421
        %v6423 = vpop.f32.mrf.mxu0
        %6424 = vdwg.mxu0
        %6425 = vrot.lane.b32.xlu0 %v814, 104
        %v6426 = vpop.permute.xlu0 %6425
        %v6428 = vsel %vm1521, %v5885, 0
        %v6430 = vsel %vm1525, %v6426, 0
        %6432 = vmatprep.subr.mxu0 0.0
        %6433 = vmatpush1.msra.mxu0 0.0
        %6434 = vmatprep.subr.mxu0 0.0
        %6435 = vmatpush1.msra.mxu0 0.0
        %6436 = vmatprep.subr.mxu0 0.0
        %6437 = vmatpush1.msra.mxu0 0.0
        %6438 = vmatprep.subr.mxu0 0.0
        %6439 = vmatpush1.msra.mxu0 0.0
        %6440 = vmatprep.subr.mxu0 0.0
        %6441 = vmatpush1.msra.mxu0 0.0
        %6442 = vmatprep.subr.mxu0 0.0
        %6443 = vmatpush1.msra.mxu0 0.0
        %6444 = vmatprep.subr.mxu0 0.0
        %6445 = vmatpush1.msra.mxu0 0.0
        %6446 = vmatprep.subr.mxu0 0.0
        %6447 = vmatpush1.msra.mxu0 0.0
        %6448 = vmatprep.subr.mxu0 0.0
        %6449 = vmatpush1.msra.mxu0 0.0
        %6450 = vmatprep.subr.mxu0 0.0
        %6451 = vmatpush1.msra.mxu0 0.0
        %6452 = vmatprep.subr.mxu0 0.0
        %6453 = vmatpush1.msra.mxu0 0.0
        %6454 = vmatprep.subr.mxu0 0.0
        %6455 = vmatpush1.msra.mxu0 0.0
        %6456 = vmatprep.subr.mxu0 0.0
        %6457 = vmatpush1.msra.mxu0 0.0
        %6458 = vmatprep.subr.mxu0 0.0
        %6459 = vmatpush1.msra.mxu0 0.0
        %6460 = vmatprep.subr.mxu0 0.0
        %6461 = vmatpush1.msra.mxu0 0.0
        %6462 = vmatprep.subr.mxu0 0.0
        %6463 = vmatpush1.msra.mxu0 %v6430
        %6464 = vmatprep.subr.mxu0 0.0
        %6465 = vmatpush2.msra.mxu0 0.0
        %6466 = vmatprep.subr.mxu0 0.0
        %6467 = vmatpush2.msra.mxu0 0.0
        %6468 = vmatprep.subr.mxu0 0.0
        %6469 = vmatpush2.msra.mxu0 0.0
        %6470 = vmatprep.subr.mxu0 0.0
        %6471 = vmatpush2.msra.mxu0 0.0
        %6472 = vmatprep.subr.mxu0 0.0
        %6473 = vmatpush2.msra.mxu0 0.0
        %6474 = vmatprep.subr.mxu0 0.0
        %6475 = vmatpush2.msra.mxu0 0.0
        %6476 = vmatprep.subr.mxu0 0.0
        %6477 = vmatpush2.msra.mxu0 0.0
        %6478 = vmatprep.subr.mxu0 0.0
        %6479 = vmatpush2.msra.mxu0 0.0
        %6480 = vmatprep.subr.mxu0 0.0
        %6481 = vmatpush2.msra.mxu0 0.0
        %6482 = vmatprep.subr.mxu0 0.0
        %6483 = vmatpush2.msra.mxu0 0.0
        %6484 = vmatprep.subr.mxu0 0.0
        %6485 = vmatpush2.msra.mxu0 0.0
        %6486 = vmatprep.subr.mxu0 0.0
        %6487 = vmatpush2.msra.mxu0 0.0
        %6488 = vmatprep.subr.mxu0 0.0
        %6489 = vmatpush2.msra.mxu0 0.0
        %6490 = vmatprep.subr.mxu0 0.0
        %6491 = vmatpush2.msra.mxu0 0.0
        %6492 = vmatprep.subr.mxu0 0.0
        %6493 = vmatpush2.msra.mxu0 0.0
        %6494 = vmatprep.subr.mxu0 0.0
        %6495 = vmatpush2.msra.mxu0 0.0
        %6496 = vmatprep.mubr.f32.mxu0 0.0
        %6497 = vmatmul.mubr.f32.gmra.mxu0 %v6428
        %v6498 = vpop.f32.mrf.mxu0
        %v6499 = vadd.f32 0.0, %v6498
        %v6500 = vpop.f32.mrf.mxu0
        %6501 = vdwg.mxu0
        %v6510 = vcombine.low %v5960, %v6037
        %v6511 = vcombine.low %v6114, %v6191
        %v6512 = vcombine.low %v6268, %v6345
        %v6513 = vcombine.low %v6422, %v6499
        %v6514 = vsel %vm815, %v6510, 0
        %v6516 = vsel %vm815, %v6511, 0
        %v6518 = vsel %vm815, %v6512, 0
        %v6520 = vsel %vm815, %v6513, 0
        %6522 = vmatprep.subr.mxu0 0.0
        %6523 = vmatpush1.msra.mxu0 0.0
        %6524 = vmatprep.subr.mxu0 0.0
        %6525 = vmatpush1.msra.mxu0 0.0
        %6526 = vmatprep.subr.mxu0 0.0
        %6527 = vmatpush1.msra.mxu0 0.0
        %6528 = vmatprep.subr.mxu0 0.0
        %6529 = vmatpush1.msra.mxu0 0.0
        %6530 = vmatprep.subr.mxu0 0.0
        %6531 = vmatpush1.msra.mxu0 0.0
        %6532 = vmatprep.subr.mxu0 0.0
        %6533 = vmatpush1.msra.mxu0 0.0
        %6534 = vmatprep.subr.mxu0 0.0
        %6535 = vmatpush1.msra.mxu0 0.0
        %6536 = vmatprep.subr.mxu0 0.0
        %6537 = vmatpush1.msra.mxu0 0.0
        %6538 = vmatprep.subr.mxu0 0.0
        %6539 = vmatpush1.msra.mxu0 0.0
        %6540 = vmatprep.subr.mxu0 0.0
        %6541 = vmatpush1.msra.mxu0 0.0
        %6542 = vmatprep.subr.mxu0 0.0
        %6543 = vmatpush1.msra.mxu0 0.0
        %6544 = vmatprep.subr.mxu0 0.0
        %6545 = vmatpush1.msra.mxu0 0.0
        %6546 = vmatprep.subr.mxu0 0.0
        %6547 = vmatpush1.msra.mxu0 0.0
        %6548 = vmatprep.subr.mxu0 0.0
        %6549 = vmatpush1.msra.mxu0 0.0
        %6550 = vmatprep.subr.mxu0 0.0
        %6551 = vmatpush1.msra.mxu0 0.0
        %6552 = vmatprep.subr.mxu0 0.0
        %6553 = vmatpush1.msra.mxu0 %v492
        %6554 = vmatprep.subr.mxu0 0.0
        %6555 = vmatpush2.msra.mxu0 0.0
        %6556 = vmatprep.subr.mxu0 0.0
        %6557 = vmatpush2.msra.mxu0 0.0
        %6558 = vmatprep.subr.mxu0 0.0
        %6559 = vmatpush2.msra.mxu0 0.0
        %6560 = vmatprep.subr.mxu0 0.0
        %6561 = vmatpush2.msra.mxu0 0.0
        %6562 = vmatprep.subr.mxu0 0.0
        %6563 = vmatpush2.msra.mxu0 0.0
        %6564 = vmatprep.subr.mxu0 0.0
        %6565 = vmatpush2.msra.mxu0 0.0
        %6566 = vmatprep.subr.mxu0 0.0
        %6567 = vmatpush2.msra.mxu0 0.0
        %6568 = vmatprep.subr.mxu0 0.0
        %6569 = vmatpush2.msra.mxu0 0.0
        %6570 = vmatprep.subr.mxu0 0.0
        %6571 = vmatpush2.msra.mxu0 0.0
        %6572 = vmatprep.subr.mxu0 0.0
        %6573 = vmatpush2.msra.mxu0 0.0
        %6574 = vmatprep.subr.mxu0 0.0
        %6575 = vmatpush2.msra.mxu0 0.0
        %6576 = vmatprep.subr.mxu0 0.0
        %6577 = vmatpush2.msra.mxu0 0.0
        %6578 = vmatprep.subr.mxu0 0.0
        %6579 = vmatpush2.msra.mxu0 0.0
        %6580 = vmatprep.subr.mxu0 0.0
        %6581 = vmatpush2.msra.mxu0 0.0
        %6582 = vmatprep.subr.mxu0 0.0
        %6583 = vmatpush2.msra.mxu0 0.0
        %6584 = vmatprep.subr.mxu0 0.0
        %6585 = vmatpush2.msra.mxu0 0.0
        %6586 = vmatprep.mubr.f32.mxu0 0.0
        %6587 = vmatmul.mubr.f32.gmra.mxu0 %v6514
        %v6588 = vpop.f32.mrf.mxu0
        %v6589 = vadd.f32 0.0, %v6588
        %v6590 = vpop.f32.mrf.mxu0
        %6591 = vmatprep.mubr.f32.mxu0 0.0
        %6592 = vmatmul.mubr.f32.gmra.mxu0 %v6516
        %v6593 = vpop.f32.mrf.mxu0
        %v6594 = vadd.f32 0.0, %v6593
        %v6595 = vpop.f32.mrf.mxu0
        %6596 = vmatprep.mubr.f32.mxu0 0.0
        %6597 = vmatmul.mubr.f32.gmra.mxu0 %v6518
        %v6598 = vpop.f32.mrf.mxu0
        %v6599 = vadd.f32 0.0, %v6598
        %v6600 = vpop.f32.mrf.mxu0
        %6601 = vmatprep.mubr.f32.mxu0 0.0
        %6602 = vmatmul.mubr.f32.gmra.mxu0 %v6520
        %v6603 = vpop.f32.mrf.mxu0
        %v6604 = vadd.f32 0.0, %v6603
        %v6605 = vpop.f32.mrf.mxu0
        %6606 = vdwg.mxu0
        %v6611 = vcombine.high %v6589, %v6589
        %v6612 = vcombine.high %v6594, %v6594
        %v6613 = vcombine.high %v6599, %v6599
        %v6614 = vcombine.high %v6604, %v6604
        %v6619 = vadd.f32 %v5150, %v6589
        %v6620 = vadd.f32 %v5151, %v6611
        %v6621 = vadd.f32 %v5152, %v6594
        %v6622 = vadd.f32 %v5153, %v6612
        %v6623 = vadd.f32 %v5154, %v6599
        %v6624 = vadd.f32 %v5155, %v6613
        %v6625 = vadd.f32 %v5156, %v6604
        %v6626 = vadd.f32 %v5157, %v6614
        %v6627 = vlaneseq
        %v6628 = vshrl.u32 %v6627, 7
        %v6629 = vsub.s32 3, %v6628
        %v6630 = vrot.slane %v493, %v6629
        %v6631 = vadd.f32 %v6619, %v6630
        %v6632 = vadd.f32 %v6620, %v6630
        %v6633 = vadd.f32 %v6621, %v6630
        %v6634 = vadd.f32 %v6622, %v6630
        %v6635 = vadd.f32 %v6623, %v6630
        %v6636 = vadd.f32 %v6624, %v6630
        %v6637 = vadd.f32 %v6625, %v6630
        %v6638 = vadd.f32 %v6626, %v6630
        %vm6639 = vcmask 257024
        %v6640 = vsel %vm6639, %v6631, -inf
        %v6641 = vsel %vm6639, %v6632, -inf
        %v6642 = vsel %vm6639, %v6633, -inf
        %v6643 = vsel %vm6639, %v6634, -inf
        %v6644 = vsel %vm6639, %v6635, -inf
        %v6645 = vmax.f32 %v6640, %v6644
        %v6646 = vsel %vm6639, %v6636, -inf
        %v6647 = vmax.f32 %v6641, %v6646
        %v6648 = vsel %vm6639, %v6637, -inf
        %v6649 = vmax.f32 %v6642, %v6648
        %v6650 = vsel %vm6639, %v6638, -inf
        %v6651 = vmax.f32 %v6643, %v6650
        %v6652 = vmax.f32 %v6645, %v6647
        %v6653 = vmax.f32 %v6649, %v6651
        %v6654 = vmax.f32 %v6652, %v6653
        %v6655 = vld [vmem:[#allocation2] sm:$0xff]
        %v6656 = vld [vmem:[#allocation2 + $0x8] sm:$0xff]
        %v6657 = vld [vmem:[#allocation2 + $0x10] sm:$0xff]
        %v6658 = vld [vmem:[#allocation2 + $0x18] sm:$0xff]
        %v6659 = vld [vmem:[%s5] sm:$0x1]
        %v6661 = vlaneseq
        %v6662 = vshrl.u32 %v6661, 7
        %v6663 = vsub.s32 0, %v6662
        %v6664 = vrot.slane %v6659, %v6663
        %v6667 = vsel %vm513, %v6654, 0
        %6669 = vmatprep.subr.mxu0 0.0
        %6670 = vmatpush1.msra.mxu0 0.0
        %6671 = vmatprep.subr.mxu0 0.0
        %6672 = vmatpush1.msra.mxu0 0.0
        %6673 = vmatprep.subr.mxu0 0.0
        %6674 = vmatpush1.msra.mxu0 0.0
        %6675 = vmatprep.subr.mxu0 0.0
        %6676 = vmatpush1.msra.mxu0 0.0
        %6677 = vmatprep.subr.mxu0 0.0
        %6678 = vmatpush1.msra.mxu0 0.0
        %6679 = vmatprep.subr.mxu0 0.0
        %6680 = vmatpush1.msra.mxu0 0.0
        %6681 = vmatprep.subr.mxu0 0.0
        %6682 = vmatpush1.msra.mxu0 0.0
        %6683 = vmatprep.subr.mxu0 0.0
        %6684 = vmatpush1.msra.mxu0 0.0
        %6685 = vmatprep.subr.mxu0 0.0
        %6686 = vmatpush1.msra.mxu0 0.0
        %6687 = vmatprep.subr.mxu0 0.0
        %6688 = vmatpush1.msra.mxu0 0.0
        %6689 = vmatprep.subr.mxu0 0.0
        %6690 = vmatpush1.msra.mxu0 0.0
        %6691 = vmatprep.subr.mxu0 0.0
        %6692 = vmatpush1.msra.mxu0 0.0
        %6693 = vmatprep.subr.mxu0 0.0
        %6694 = vmatpush1.msra.mxu0 %v6658
        %6695 = vmatprep.subr.mxu0 0.0
        %6696 = vmatpush1.msra.mxu0 %v6657
        %6697 = vmatprep.subr.mxu0 0.0
        %6698 = vmatpush1.msra.mxu0 %v6656
        %6699 = vmatprep.subr.mxu0 0.0
        %6700 = vmatpush1.msra.mxu0 %v6655
        %6701 = vmatprep.subr.mxu0 0.0
        %6702 = vmatpush2.msra.mxu0 0.0
        %6703 = vmatprep.subr.mxu0 0.0
        %6704 = vmatpush2.msra.mxu0 0.0
        %6705 = vmatprep.subr.mxu0 0.0
        %6706 = vmatpush2.msra.mxu0 0.0
        %6707 = vmatprep.subr.mxu0 0.0
        %6708 = vmatpush2.msra.mxu0 0.0
        %6709 = vmatprep.subr.mxu0 0.0
        %6710 = vmatpush2.msra.mxu0 0.0
        %6711 = vmatprep.subr.mxu0 0.0
        %6712 = vmatpush2.msra.mxu0 0.0
        %6713 = vmatprep.subr.mxu0 0.0
        %6714 = vmatpush2.msra.mxu0 0.0
        %6715 = vmatprep.subr.mxu0 0.0
        %6716 = vmatpush2.msra.mxu0 0.0
        %6717 = vmatprep.subr.mxu0 0.0
        %6718 = vmatpush2.msra.mxu0 0.0
        %6719 = vmatprep.subr.mxu0 0.0
        %6720 = vmatpush2.msra.mxu0 0.0
        %6721 = vmatprep.subr.mxu0 0.0
        %6722 = vmatpush2.msra.mxu0 0.0
        %6723 = vmatprep.subr.mxu0 0.0
        %6724 = vmatpush2.msra.mxu0 0.0
        %6725 = vmatprep.subr.mxu0 0.0
        %6726 = vmatpush2.msra.mxu0 0.0
        %6727 = vmatprep.subr.mxu0 0.0
        %6728 = vmatpush2.msra.mxu0 0.0
        %6729 = vmatprep.subr.mxu0 0.0
        %6730 = vmatpush2.msra.mxu0 0.0
        %6731 = vmatprep.subr.mxu0 0.0
        %6732 = vmatpush2.msra.mxu0 0.0
        %6733 = vmatprep.mubr.f32.mxu0 0.0
        %6734 = vmatmul.mubr.f32.gmra.mxu0 %v6667
        %v6735 = vpop.f32.mrf.mxu0
        %v6736 = vadd.f32 %v6664, %v6735
        %v6737 = vpop.f32.mrf.mxu0
        %6738 = vdwg.mxu0
        %v6739 = vmax.f32 %v6736, 0.0
        %v6740 = vld [vmem:[%s6] sm:$0xff]
        %v6741 = vld [vmem:[%s6 + $0x8] sm:$0xff]
        %v6742 = vld [vmem:[%s6 + $0x10] sm:$0xff]
        %v6743 = vld [vmem:[%s6 + $0x18] sm:$0xff]
        %v6744 = vld [vmem:[%s6 + $0x20] sm:$0xff]
        %v6745 = vld [vmem:[%s6 + $0x28] sm:$0xff]
        %v6746 = vld [vmem:[%s6 + $0x30] sm:$0xff]
        %v6747 = vld [vmem:[%s6 + $0x38] sm:$0xff]
        %v6748 = vld [vmem:[%s7] sm:$0x1]
        %v6750 = vlaneseq
        %v6751 = vshrl.u32 %v6750, 7
        %v6752 = vsub.s32 0, %v6751
        %v6753 = vrot.slane %v6748, %v6752
        %vm6755 = vcmask 523264
        %v6757 = vsel %vm6755, %v6739, 0
        %6759 = vmatprep.subr.mxu0 0.0
        %6760 = vmatpush1.msra.mxu0 0.0
        %6761 = vmatprep.subr.mxu0 0.0
        %6762 = vmatpush1.msra.mxu0 0.0
        %6763 = vmatprep.subr.mxu0 0.0
        %6764 = vmatpush1.msra.mxu0 0.0
        %6765 = vmatprep.subr.mxu0 0.0
        %6766 = vmatpush1.msra.mxu0 0.0
        %6767 = vmatprep.subr.mxu0 0.0
        %6768 = vmatpush1.msra.mxu0 0.0
        %6769 = vmatprep.subr.mxu0 0.0
        %6770 = vmatpush1.msra.mxu0 0.0
        %6771 = vmatprep.subr.mxu0 0.0
        %6772 = vmatpush1.msra.mxu0 0.0
        %6773 = vmatprep.subr.mxu0 0.0
        %6774 = vmatpush1.msra.mxu0 0.0
        %6775 = vmatprep.subr.mxu0 0.0
        %6776 = vmatpush1.msra.mxu0 %v6747
        %6777 = vmatprep.subr.mxu0 0.0
        %6778 = vmatpush1.msra.mxu0 %v6746
        %6779 = vmatprep.subr.mxu0 0.0
        %6780 = vmatpush1.msra.mxu0 %v6745
        %6781 = vmatprep.subr.mxu0 0.0
        %6782 = vmatpush1.msra.mxu0 %v6744
        %6783 = vmatprep.subr.mxu0 0.0
        %6784 = vmatpush1.msra.mxu0 %v6743
        %6785 = vmatprep.subr.mxu0 0.0
        %6786 = vmatpush1.msra.mxu0 %v6742
        %6787 = vmatprep.subr.mxu0 0.0
        %6788 = vmatpush1.msra.mxu0 %v6741
        %6789 = vmatprep.subr.mxu0 0.0
        %6790 = vmatpush1.msra.mxu0 %v6740
        %6791 = vmatprep.subr.mxu0 0.0
        %6792 = vmatpush2.msra.mxu0 0.0
        %6793 = vmatprep.subr.mxu0 0.0
        %6794 = vmatpush2.msra.mxu0 0.0
        %6795 = vmatprep.subr.mxu0 0.0
        %6796 = vmatpush2.msra.mxu0 0.0
        %6797 = vmatprep.subr.mxu0 0.0
        %6798 = vmatpush2.msra.mxu0 0.0
        %6799 = vmatprep.subr.mxu0 0.0
        %6800 = vmatpush2.msra.mxu0 0.0
        %6801 = vmatprep.subr.mxu0 0.0
        %6802 = vmatpush2.msra.mxu0 0.0
        %6803 = vmatprep.subr.mxu0 0.0
        %6804 = vmatpush2.msra.mxu0 0.0
        %6805 = vmatprep.subr.mxu0 0.0
        %6806 = vmatpush2.msra.mxu0 0.0
        %6807 = vmatprep.subr.mxu0 0.0
        %6808 = vmatpush2.msra.mxu0 0.0
        %6809 = vmatprep.subr.mxu0 0.0
        %6810 = vmatpush2.msra.mxu0 0.0
        %6811 = vmatprep.subr.mxu0 0.0
        %6812 = vmatpush2.msra.mxu0 0.0
        %6813 = vmatprep.subr.mxu0 0.0
        %6814 = vmatpush2.msra.mxu0 0.0
        %6815 = vmatprep.subr.mxu0 0.0
        %6816 = vmatpush2.msra.mxu0 0.0
        %6817 = vmatprep.subr.mxu0 0.0
        %6818 = vmatpush2.msra.mxu0 0.0
        %6819 = vmatprep.subr.mxu0 0.0
        %6820 = vmatpush2.msra.mxu0 0.0
        %6821 = vmatprep.subr.mxu0 0.0
        %6822 = vmatpush2.msra.mxu0 0.0
        %6823 = vmatprep.mubr.f32.mxu0 0.0
        %6824 = vmatmul.mubr.f32.gmra.mxu0 %v6757
        %v6825 = vpop.f32.mrf.mxu0
        %v6826 = vadd.f32 %v6753, %v6825
        %v6827 = vpop.f32.mrf.mxu0
        %6828 = vdwg.mxu0
        %v6829 = vld [vmem:[#allocation5] sm:$0xff]
        %v6830 = vld [vmem:[#allocation5 + $0x8] sm:$0xff]
        %v6831 = vld [vmem:[#allocation5 + $0x10] sm:$0xff]
        %v6832 = vld [vmem:[#allocation5 + $0x18] sm:$0xff]
        %v6833 = vld [vmem:[#allocation5 + $0x20] sm:$0xff]
        %v6834 = vld [vmem:[#allocation5 + $0x28] sm:$0xff]
        %v6835 = vld [vmem:[#allocation5 + $0x30] sm:$0xff]
        %v6836 = vld [vmem:[#allocation5 + $0x38] sm:$0xff]
        %v6837 = vld [vmem:[#allocation5 + $0x40] sm:$0xff]
        %v6838 = vld [vmem:[#allocation5 + $0x48] sm:$0xff]
        %v6839 = vld [vmem:[#allocation5 + $0x50] sm:$0xff]
        %v6840 = vld [vmem:[#allocation5 + $0x58] sm:$0xff]
        %v6841 = vld [vmem:[#allocation5 + $0x60] sm:$0xff]
        %v6842 = vld [vmem:[#allocation5 + $0x68] sm:$0xff]
        %v6843 = vld [vmem:[#allocation5 + $0x70] sm:$0xff]
        %v6844 = vld [vmem:[#allocation5 + $0x78] sm:$0xff]
        %v6845 = vld [vmem:[%s9] sm:$0xf]
        %v6846 = vlaneseq
        %v6847 = vshrl.u32 %v6846, 7
        %v6848 = vsub.s32 0, %v6847
        %v6849 = vrot.slane %v6845, %v6848
        %v6851 = vsel %vm513, %v6826, 0
        %6853 = vmatprep.subr.mxu0 0.0
        %6854 = vmatpush1.msra.mxu0 0.0
        %6855 = vmatprep.subr.mxu0 0.0
        %6856 = vmatpush1.msra.mxu0 0.0
        %6857 = vmatprep.subr.mxu0 0.0
        %6858 = vmatpush1.msra.mxu0 0.0
        %6859 = vmatprep.subr.mxu0 0.0
        %6860 = vmatpush1.msra.mxu0 0.0
        %6861 = vmatprep.subr.mxu0 0.0
        %6862 = vmatpush1.msra.mxu0 0.0
        %6863 = vmatprep.subr.mxu0 0.0
        %6864 = vmatpush1.msra.mxu0 0.0
        %6865 = vmatprep.subr.mxu0 0.0
        %6866 = vmatpush1.msra.mxu0 0.0
        %6867 = vmatprep.subr.mxu0 0.0
        %6868 = vmatpush1.msra.mxu0 0.0
        %6869 = vmatprep.subr.mxu0 0.0
        %6870 = vmatpush1.msra.mxu0 0.0
        %6871 = vmatprep.subr.mxu0 0.0
        %6872 = vmatpush1.msra.mxu0 0.0
        %6873 = vmatprep.subr.mxu0 0.0
        %6874 = vmatpush1.msra.mxu0 0.0
        %6875 = vmatprep.subr.mxu0 0.0
        %6876 = vmatpush1.msra.mxu0 0.0
        %6877 = vmatprep.subr.mxu0 0.0
        %6878 = vmatpush1.msra.mxu0 %v6832
        %6879 = vmatprep.subr.mxu0 0.0
        %6880 = vmatpush1.msra.mxu0 %v6831
        %6881 = vmatprep.subr.mxu0 0.0
        %6882 = vmatpush1.msra.mxu0 %v6830
        %6883 = vmatprep.subr.mxu0 0.0
        %6884 = vmatpush1.msra.mxu0 %v6829
        %6885 = vmatprep.subr.mxu0 0.0
        %6886 = vmatpush2.msra.mxu0 0.0
        %6887 = vmatprep.subr.mxu0 0.0
        %6888 = vmatpush2.msra.mxu0 0.0
        %6889 = vmatprep.subr.mxu0 0.0
        %6890 = vmatpush2.msra.mxu0 0.0
        %6891 = vmatprep.subr.mxu0 0.0
        %6892 = vmatpush2.msra.mxu0 0.0
        %6893 = vmatprep.subr.mxu0 0.0
        %6894 = vmatpush2.msra.mxu0 0.0
        %6895 = vmatprep.subr.mxu0 0.0
        %6896 = vmatpush2.msra.mxu0 0.0
        %6897 = vmatprep.subr.mxu0 0.0
        %6898 = vmatpush2.msra.mxu0 0.0
        %6899 = vmatprep.subr.mxu0 0.0
        %6900 = vmatpush2.msra.mxu0 0.0
        %6901 = vmatprep.subr.mxu0 0.0
        %6902 = vmatpush2.msra.mxu0 0.0
        %6903 = vmatprep.subr.mxu0 0.0
        %6904 = vmatpush2.msra.mxu0 0.0
        %6905 = vmatprep.subr.mxu0 0.0
        %6906 = vmatpush2.msra.mxu0 0.0
        %6907 = vmatprep.subr.mxu0 0.0
        %6908 = vmatpush2.msra.mxu0 0.0
        %6909 = vmatprep.subr.mxu0 0.0
        %6910 = vmatpush2.msra.mxu0 0.0
        %6911 = vmatprep.subr.mxu0 0.0
        %6912 = vmatpush2.msra.mxu0 0.0
        %6913 = vmatprep.subr.mxu0 0.0
        %6914 = vmatpush2.msra.mxu0 0.0
        %6915 = vmatprep.subr.mxu0 0.0
        %6916 = vmatpush2.msra.mxu0 0.0
        %6917 = vmatprep.mubr.f32.mxu0 0.0
        %6918 = vmatmul.mubr.f32.gmra.mxu0 %v6851
        %v6919 = vpop.f32.mrf.mxu0
        %v6920 = vadd.f32 %v6849, %v6919
        %v6921 = vpop.f32.mrf.mxu0
        %6922 = vdwg.mxu0
        %v6923 = vlaneseq
        %v6924 = vshrl.u32 %v6923, 7
        %v6925 = vsub.s32 1, %v6924
        %v6926 = vrot.slane %v6845, %v6925
        %6927 = vmatprep.subr.mxu0 0.0
        %6928 = vmatpush1.msra.mxu0 0.0
        %6929 = vmatprep.subr.mxu0 0.0
        %6930 = vmatpush1.msra.mxu0 0.0
        %6931 = vmatprep.subr.mxu0 0.0
        %6932 = vmatpush1.msra.mxu0 0.0
        %6933 = vmatprep.subr.mxu0 0.0
        %6934 = vmatpush1.msra.mxu0 0.0
        %6935 = vmatprep.subr.mxu0 0.0
        %6936 = vmatpush1.msra.mxu0 0.0
        %6937 = vmatprep.subr.mxu0 0.0
        %6938 = vmatpush1.msra.mxu0 0.0
        %6939 = vmatprep.subr.mxu0 0.0
        %6940 = vmatpush1.msra.mxu0 0.0
        %6941 = vmatprep.subr.mxu0 0.0
        %6942 = vmatpush1.msra.mxu0 0.0
        %6943 = vmatprep.subr.mxu0 0.0
        %6944 = vmatpush1.msra.mxu0 0.0
        %6945 = vmatprep.subr.mxu0 0.0
        %6946 = vmatpush1.msra.mxu0 0.0
        %6947 = vmatprep.subr.mxu0 0.0
        %6948 = vmatpush1.msra.mxu0 0.0
        %6949 = vmatprep.subr.mxu0 0.0
        %6950 = vmatpush1.msra.mxu0 0.0
        %6951 = vmatprep.subr.mxu0 0.0
        %6952 = vmatpush1.msra.mxu0 %v6836
        %6953 = vmatprep.subr.mxu0 0.0
        %6954 = vmatpush1.msra.mxu0 %v6835
        %6955 = vmatprep.subr.mxu0 0.0
        %6956 = vmatpush1.msra.mxu0 %v6834
        %6957 = vmatprep.subr.mxu0 0.0
        %6958 = vmatpush1.msra.mxu0 %v6833
        %6959 = vmatprep.subr.mxu0 0.0
        %6960 = vmatpush2.msra.mxu0 0.0
        %6961 = vmatprep.subr.mxu0 0.0
        %6962 = vmatpush2.msra.mxu0 0.0
        %6963 = vmatprep.subr.mxu0 0.0
        %6964 = vmatpush2.msra.mxu0 0.0
        %6965 = vmatprep.subr.mxu0 0.0
        %6966 = vmatpush2.msra.mxu0 0.0
        %6967 = vmatprep.subr.mxu0 0.0
        %6968 = vmatpush2.msra.mxu0 0.0
        %6969 = vmatprep.subr.mxu0 0.0
        %6970 = vmatpush2.msra.mxu0 0.0
        %6971 = vmatprep.subr.mxu0 0.0
        %6972 = vmatpush2.msra.mxu0 0.0
        %6973 = vmatprep.subr.mxu0 0.0
        %6974 = vmatpush2.msra.mxu0 0.0
        %6975 = vmatprep.subr.mxu0 0.0
        %6976 = vmatpush2.msra.mxu0 0.0
        %6977 = vmatprep.subr.mxu0 0.0
        %6978 = vmatpush2.msra.mxu0 0.0
        %6979 = vmatprep.subr.mxu0 0.0
        %6980 = vmatpush2.msra.mxu0 0.0
        %6981 = vmatprep.subr.mxu0 0.0
        %6982 = vmatpush2.msra.mxu0 0.0
        %6983 = vmatprep.subr.mxu0 0.0
        %6984 = vmatpush2.msra.mxu0 0.0
        %6985 = vmatprep.subr.mxu0 0.0
        %6986 = vmatpush2.msra.mxu0 0.0
        %6987 = vmatprep.subr.mxu0 0.0
        %6988 = vmatpush2.msra.mxu0 0.0
        %6989 = vmatprep.subr.mxu0 0.0
        %6990 = vmatpush2.msra.mxu0 0.0
        %6991 = vmatprep.mubr.f32.mxu0 0.0
        %6992 = vmatmul.mubr.f32.gmra.mxu0 %v6851
        %v6993 = vpop.f32.mrf.mxu0
        %v6994 = vadd.f32 %v6926, %v6993
        %v6995 = vpop.f32.mrf.mxu0
        %6996 = vdwg.mxu0
        %v6997 = vlaneseq
        %v6998 = vshrl.u32 %v6997, 7
        %v6999 = vsub.s32 2, %v6998
        %v7000 = vrot.slane %v6845, %v6999
        %7001 = vmatprep.subr.mxu0 0.0
        %7002 = vmatpush1.msra.mxu0 0.0
        %7003 = vmatprep.subr.mxu0 0.0
        %7004 = vmatpush1.msra.mxu0 0.0
        %7005 = vmatprep.subr.mxu0 0.0
        %7006 = vmatpush1.msra.mxu0 0.0
        %7007 = vmatprep.subr.mxu0 0.0
        %7008 = vmatpush1.msra.mxu0 0.0
        %7009 = vmatprep.subr.mxu0 0.0
        %7010 = vmatpush1.msra.mxu0 0.0
        %7011 = vmatprep.subr.mxu0 0.0
        %7012 = vmatpush1.msra.mxu0 0.0
        %7013 = vmatprep.subr.mxu0 0.0
        %7014 = vmatpush1.msra.mxu0 0.0
        %7015 = vmatprep.subr.mxu0 0.0
        %7016 = vmatpush1.msra.mxu0 0.0
        %7017 = vmatprep.subr.mxu0 0.0
        %7018 = vmatpush1.msra.mxu0 0.0
        %7019 = vmatprep.subr.mxu0 0.0
        %7020 = vmatpush1.msra.mxu0 0.0
        %7021 = vmatprep.subr.mxu0 0.0
        %7022 = vmatpush1.msra.mxu0 0.0
        %7023 = vmatprep.subr.mxu0 0.0
        %7024 = vmatpush1.msra.mxu0 0.0
        %7025 = vmatprep.subr.mxu0 0.0
        %7026 = vmatpush1.msra.mxu0 %v6840
        %7027 = vmatprep.subr.mxu0 0.0
        %7028 = vmatpush1.msra.mxu0 %v6839
        %7029 = vmatprep.subr.mxu0 0.0
        %7030 = vmatpush1.msra.mxu0 %v6838
        %7031 = vmatprep.subr.mxu0 0.0
        %7032 = vmatpush1.msra.mxu0 %v6837
        %7033 = vmatprep.subr.mxu0 0.0
        %7034 = vmatpush2.msra.mxu0 0.0
        %7035 = vmatprep.subr.mxu0 0.0
        %7036 = vmatpush2.msra.mxu0 0.0
        %7037 = vmatprep.subr.mxu0 0.0
        %7038 = vmatpush2.msra.mxu0 0.0
        %7039 = vmatprep.subr.mxu0 0.0
        %7040 = vmatpush2.msra.mxu0 0.0
        %7041 = vmatprep.subr.mxu0 0.0
        %7042 = vmatpush2.msra.mxu0 0.0
        %7043 = vmatprep.subr.mxu0 0.0
        %7044 = vmatpush2.msra.mxu0 0.0
        %7045 = vmatprep.subr.mxu0 0.0
        %7046 = vmatpush2.msra.mxu0 0.0
        %7047 = vmatprep.subr.mxu0 0.0
        %7048 = vmatpush2.msra.mxu0 0.0
        %7049 = vmatprep.subr.mxu0 0.0
        %7050 = vmatpush2.msra.mxu0 0.0
        %7051 = vmatprep.subr.mxu0 0.0
        %7052 = vmatpush2.msra.mxu0 0.0
        %7053 = vmatprep.subr.mxu0 0.0
        %7054 = vmatpush2.msra.mxu0 0.0
        %7055 = vmatprep.subr.mxu0 0.0
        %7056 = vmatpush2.msra.mxu0 0.0
        %7057 = vmatprep.subr.mxu0 0.0
        %7058 = vmatpush2.msra.mxu0 0.0
        %7059 = vmatprep.subr.mxu0 0.0
        %7060 = vmatpush2.msra.mxu0 0.0
        %7061 = vmatprep.subr.mxu0 0.0
        %7062 = vmatpush2.msra.mxu0 0.0
        %7063 = vmatprep.subr.mxu0 0.0
        %7064 = vmatpush2.msra.mxu0 0.0
        %7065 = vmatprep.mubr.f32.mxu0 0.0
        %7066 = vmatmul.mubr.f32.gmra.mxu0 %v6851
        %v7067 = vpop.f32.mrf.mxu0
        %v7068 = vadd.f32 %v7000, %v7067
        %v7069 = vpop.f32.mrf.mxu0
        %7070 = vdwg.mxu0
        %v7072 = vsel %vm815, %v6920, 0
        %v7075 = vsel %vm815, %v6994, 0
        %7077 = vmatprep.subr.mxu0 0.0
        %7078 = vmatpush1.xpose.msra.mxu0 0.0
        %7079 = vmatprep.subr.mxu0 0.0
        %7080 = vmatpush1.xpose.msra.mxu0 0.0
        %7081 = vmatprep.subr.mxu0 0.0
        %7082 = vmatpush1.xpose.msra.mxu0 0.0
        %7083 = vmatprep.subr.mxu0 0.0
        %7084 = vmatpush1.xpose.msra.mxu0 0.0
        %7085 = vmatprep.subr.mxu0 0.0
        %7086 = vmatpush1.xpose.msra.mxu0 0.0
        %7087 = vmatprep.subr.mxu0 0.0
        %7088 = vmatpush1.xpose.msra.mxu0 0.0
        %7089 = vmatprep.subr.mxu0 0.0
        %7090 = vmatpush1.xpose.msra.mxu0 0.0
        %7091 = vmatprep.subr.mxu0 0.0
        %7092 = vmatpush1.xpose.msra.mxu0 0.0
        %7093 = vmatprep.subr.mxu0 0.0
        %7094 = vmatpush1.xpose.msra.mxu0 0.0
        %7095 = vmatprep.subr.mxu0 0.0
        %7096 = vmatpush1.xpose.msra.mxu0 0.0
        %7097 = vmatprep.subr.mxu0 0.0
        %7098 = vmatpush1.xpose.msra.mxu0 0.0
        %7099 = vmatprep.subr.mxu0 0.0
        %7100 = vmatpush1.xpose.msra.mxu0 0.0
        %7101 = vmatprep.subr.mxu0 0.0
        %7102 = vmatpush1.xpose.msra.mxu0 0.0
        %7103 = vmatprep.subr.mxu0 0.0
        %7104 = vmatpush1.xpose.msra.mxu0 0.0
        %7105 = vmatprep.subr.mxu0 0.0
        %7106 = vmatpush1.xpose.msra.mxu0 0.0
        %7107 = vmatprep.subr.mxu0 0.0
        %7108 = vmatpush1.xpose.msra.mxu0 %v7075
        %7109 = vmatprep.subr.mxu0 0.0
        %7110 = vmatpush2.xpose.msra.mxu0 0.0
        %7111 = vmatprep.subr.mxu0 0.0
        %7112 = vmatpush2.xpose.msra.mxu0 0.0
        %7113 = vmatprep.subr.mxu0 0.0
        %7114 = vmatpush2.xpose.msra.mxu0 0.0
        %7115 = vmatprep.subr.mxu0 0.0
        %7116 = vmatpush2.xpose.msra.mxu0 0.0
        %7117 = vmatprep.subr.mxu0 0.0
        %7118 = vmatpush2.xpose.msra.mxu0 0.0
        %7119 = vmatprep.subr.mxu0 0.0
        %7120 = vmatpush2.xpose.msra.mxu0 0.0
        %7121 = vmatprep.subr.mxu0 0.0
        %7122 = vmatpush2.xpose.msra.mxu0 0.0
        %7123 = vmatprep.subr.mxu0 0.0
        %7124 = vmatpush2.xpose.msra.mxu0 0.0
        %7125 = vmatprep.subr.mxu0 0.0
        %7126 = vmatpush2.xpose.msra.mxu0 0.0
        %7127 = vmatprep.subr.mxu0 0.0
        %7128 = vmatpush2.xpose.msra.mxu0 0.0
        %7129 = vmatprep.subr.mxu0 0.0
        %7130 = vmatpush2.xpose.msra.mxu0 0.0
        %7131 = vmatprep.subr.mxu0 0.0
        %7132 = vmatpush2.xpose.msra.mxu0 0.0
        %7133 = vmatprep.subr.mxu0 0.0
        %7134 = vmatpush2.xpose.msra.mxu0 0.0
        %7135 = vmatprep.subr.mxu0 0.0
        %7136 = vmatpush2.xpose.msra.mxu0 0.0
        %7137 = vmatprep.subr.mxu0 0.0
        %7138 = vmatpush2.xpose.msra.mxu0 0.0
        %7139 = vmatprep.subr.mxu0 0.0
        %7140 = vmatpush2.xpose.msra.mxu0 0.0
        %7141 = vmatprep.mubr.f32.mxu0 0.0
        %7142 = vmatmul.mubr.f32.gmra.mxu0 %v7072
        %v7143 = vpop.f32.mrf.mxu0
        %v7144 = vadd.f32 0.0, %v7143
        %v7145 = vpop.f32.mrf.mxu0
        %7146 = vdwg.mxu0
        %v7147 = vmul.f32 %v7144, 0.35355338
        %v7148 = vsel %vm1432, %v7147, -inf
        %7149 = vmax.xlane.f32.xlu0 %v7148
        %v7150 = vpop.xlane.xlu0 %7149
        %v7151 = vsub.f32 %v7147, %v7150
        %v7152 = vmul.f32 %v7151, 1.442695
        %v7153 = vpow.pop %v7152
        %v7154 = vsel %vm1432, %v7153, 0.0
        %7155 = vadd.xlane.f32.xlu0 %v7154
        %v7156 = vpop.xlane.xlu0 %7155
        %v7157 = vrcp.pop %v7156
        %v7158 = vmul.f32 %v7153, %v7157
        %v7160 = vsel %vm1521, %v7158, 0
        %v7163 = vsel %vm1525, %v7068, 0
        %7165 = vmatprep.subr.mxu0 0.0
        %7166 = vmatpush1.msra.mxu0 0.0
        %7167 = vmatprep.subr.mxu0 0.0
        %7168 = vmatpush1.msra.mxu0 0.0
        %7169 = vmatprep.subr.mxu0 0.0
        %7170 = vmatpush1.msra.mxu0 0.0
        %7171 = vmatprep.subr.mxu0 0.0
        %7172 = vmatpush1.msra.mxu0 0.0
        %7173 = vmatprep.subr.mxu0 0.0
        %7174 = vmatpush1.msra.mxu0 0.0
        %7175 = vmatprep.subr.mxu0 0.0
        %7176 = vmatpush1.msra.mxu0 0.0
        %7177 = vmatprep.subr.mxu0 0.0
        %7178 = vmatpush1.msra.mxu0 0.0
        %7179 = vmatprep.subr.mxu0 0.0
        %7180 = vmatpush1.msra.mxu0 0.0
        %7181 = vmatprep.subr.mxu0 0.0
        %7182 = vmatpush1.msra.mxu0 0.0
        %7183 = vmatprep.subr.mxu0 0.0
        %7184 = vmatpush1.msra.mxu0 0.0
        %7185 = vmatprep.subr.mxu0 0.0
        %7186 = vmatpush1.msra.mxu0 0.0
        %7187 = vmatprep.subr.mxu0 0.0
        %7188 = vmatpush1.msra.mxu0 0.0
        %7189 = vmatprep.subr.mxu0 0.0
        %7190 = vmatpush1.msra.mxu0 0.0
        %7191 = vmatprep.subr.mxu0 0.0
        %7192 = vmatpush1.msra.mxu0 0.0
        %7193 = vmatprep.subr.mxu0 0.0
        %7194 = vmatpush1.msra.mxu0 0.0
        %7195 = vmatprep.subr.mxu0 0.0
        %7196 = vmatpush1.msra.mxu0 %v7163
        %7197 = vmatprep.subr.mxu0 0.0
        %7198 = vmatpush2.msra.mxu0 0.0
        %7199 = vmatprep.subr.mxu0 0.0
        %7200 = vmatpush2.msra.mxu0 0.0
        %7201 = vmatprep.subr.mxu0 0.0
        %7202 = vmatpush2.msra.mxu0 0.0
        %7203 = vmatprep.subr.mxu0 0.0
        %7204 = vmatpush2.msra.mxu0 0.0
        %7205 = vmatprep.subr.mxu0 0.0
        %7206 = vmatpush2.msra.mxu0 0.0
        %7207 = vmatprep.subr.mxu0 0.0
        %7208 = vmatpush2.msra.mxu0 0.0
        %7209 = vmatprep.subr.mxu0 0.0
        %7210 = vmatpush2.msra.mxu0 0.0
        %7211 = vmatprep.subr.mxu0 0.0
        %7212 = vmatpush2.msra.mxu0 0.0
        %7213 = vmatprep.subr.mxu0 0.0
        %7214 = vmatpush2.msra.mxu0 0.0
        %7215 = vmatprep.subr.mxu0 0.0
        %7216 = vmatpush2.msra.mxu0 0.0
        %7217 = vmatprep.subr.mxu0 0.0
        %7218 = vmatpush2.msra.mxu0 0.0
        %7219 = vmatprep.subr.mxu0 0.0
        %7220 = vmatpush2.msra.mxu0 0.0
        %7221 = vmatprep.subr.mxu0 0.0
        %7222 = vmatpush2.msra.mxu0 0.0
        %7223 = vmatprep.subr.mxu0 0.0
        %7224 = vmatpush2.msra.mxu0 0.0
        %7225 = vmatprep.subr.mxu0 0.0
        %7226 = vmatpush2.msra.mxu0 0.0
        %7227 = vmatprep.subr.mxu0 0.0
        %7228 = vmatpush2.msra.mxu0 0.0
        %7229 = vmatprep.mubr.f32.mxu0 0.0
        %7230 = vmatmul.mubr.f32.gmra.mxu0 %v7160
        %v7231 = vpop.f32.mrf.mxu0
        %v7232 = vadd.f32 0.0, %v7231
        %v7233 = vpop.f32.mrf.mxu0
        %7234 = vdwg.mxu0
        %7235 = vrot.lane.b32.xlu0 %v6920, 120
        %v7236 = vpop.permute.xlu0 %7235
        %7237 = vrot.lane.b32.xlu0 %v6994, 120
        %v7238 = vpop.permute.xlu0 %7237
        %v7239 = vsel %vm815, %v7236, 0
        %v7241 = vsel %vm815, %v7238, 0
        %7243 = vmatprep.subr.mxu0 0.0
        %7244 = vmatpush1.xpose.msra.mxu0 0.0
        %7245 = vmatprep.subr.mxu0 0.0
        %7246 = vmatpush1.xpose.msra.mxu0 0.0
        %7247 = vmatprep.subr.mxu0 0.0
        %7248 = vmatpush1.xpose.msra.mxu0 0.0
        %7249 = vmatprep.subr.mxu0 0.0
        %7250 = vmatpush1.xpose.msra.mxu0 0.0
        %7251 = vmatprep.subr.mxu0 0.0
        %7252 = vmatpush1.xpose.msra.mxu0 0.0
        %7253 = vmatprep.subr.mxu0 0.0
        %7254 = vmatpush1.xpose.msra.mxu0 0.0
        %7255 = vmatprep.subr.mxu0 0.0
        %7256 = vmatpush1.xpose.msra.mxu0 0.0
        %7257 = vmatprep.subr.mxu0 0.0
        %7258 = vmatpush1.xpose.msra.mxu0 0.0
        %7259 = vmatprep.subr.mxu0 0.0
        %7260 = vmatpush1.xpose.msra.mxu0 0.0
        %7261 = vmatprep.subr.mxu0 0.0
        %7262 = vmatpush1.xpose.msra.mxu0 0.0
        %7263 = vmatprep.subr.mxu0 0.0
        %7264 = vmatpush1.xpose.msra.mxu0 0.0
        %7265 = vmatprep.subr.mxu0 0.0
        %7266 = vmatpush1.xpose.msra.mxu0 0.0
        %7267 = vmatprep.subr.mxu0 0.0
        %7268 = vmatpush1.xpose.msra.mxu0 0.0
        %7269 = vmatprep.subr.mxu0 0.0
        %7270 = vmatpush1.xpose.msra.mxu0 0.0
        %7271 = vmatprep.subr.mxu0 0.0
        %7272 = vmatpush1.xpose.msra.mxu0 0.0
        %7273 = vmatprep.subr.mxu0 0.0
        %7274 = vmatpush1.xpose.msra.mxu0 %v7241
        %7275 = vmatprep.subr.mxu0 0.0
        %7276 = vmatpush2.xpose.msra.mxu0 0.0
        %7277 = vmatprep.subr.mxu0 0.0
        %7278 = vmatpush2.xpose.msra.mxu0 0.0
        %7279 = vmatprep.subr.mxu0 0.0
        %7280 = vmatpush2.xpose.msra.mxu0 0.0
        %7281 = vmatprep.subr.mxu0 0.0
        %7282 = vmatpush2.xpose.msra.mxu0 0.0
        %7283 = vmatprep.subr.mxu0 0.0
        %7284 = vmatpush2.xpose.msra.mxu0 0.0
        %7285 = vmatprep.subr.mxu0 0.0
        %7286 = vmatpush2.xpose.msra.mxu0 0.0
        %7287 = vmatprep.subr.mxu0 0.0
        %7288 = vmatpush2.xpose.msra.mxu0 0.0
        %7289 = vmatprep.subr.mxu0 0.0
        %7290 = vmatpush2.xpose.msra.mxu0 0.0
        %7291 = vmatprep.subr.mxu0 0.0
        %7292 = vmatpush2.xpose.msra.mxu0 0.0
        %7293 = vmatprep.subr.mxu0 0.0
        %7294 = vmatpush2.xpose.msra.mxu0 0.0
        %7295 = vmatprep.subr.mxu0 0.0
        %7296 = vmatpush2.xpose.msra.mxu0 0.0
        %7297 = vmatprep.subr.mxu0 0.0
        %7298 = vmatpush2.xpose.msra.mxu0 0.0
        %7299 = vmatprep.subr.mxu0 0.0
        %7300 = vmatpush2.xpose.msra.mxu0 0.0
        %7301 = vmatprep.subr.mxu0 0.0
        %7302 = vmatpush2.xpose.msra.mxu0 0.0
        %7303 = vmatprep.subr.mxu0 0.0
        %7304 = vmatpush2.xpose.msra.mxu0 0.0
        %7305 = vmatprep.subr.mxu0 0.0
        %7306 = vmatpush2.xpose.msra.mxu0 0.0
        %7307 = vmatprep.mubr.f32.mxu0 0.0
        %7308 = vmatmul.mubr.f32.gmra.mxu0 %v7239
        %v7309 = vpop.f32.mrf.mxu0
        %v7310 = vadd.f32 0.0, %v7309
        %v7311 = vpop.f32.mrf.mxu0
        %7312 = vdwg.mxu0
        %v7313 = vmul.f32 %v7310, 0.35355338
        %v7314 = vsel %vm1432, %v7313, -inf
        %7315 = vmax.xlane.f32.xlu0 %v7314
        %v7316 = vpop.xlane.xlu0 %7315
        %v7317 = vsub.f32 %v7313, %v7316
        %v7318 = vmul.f32 %v7317, 1.442695
        %v7319 = vpow.pop %v7318
        %v7320 = vsel %vm1432, %v7319, 0.0
        %7321 = vadd.xlane.f32.xlu0 %v7320
        %v7322 = vpop.xlane.xlu0 %7321
        %v7323 = vrcp.pop %v7322
        %v7324 = vmul.f32 %v7319, %v7323
        %7325 = vrot.lane.b32.xlu0 %v7068, 120
        %v7326 = vpop.permute.xlu0 %7325
        %v7328 = vsel %vm1521, %v7324, 0
        %v7330 = vsel %vm1525, %v7326, 0
        %7332 = vmatprep.subr.mxu0 0.0
        %7333 = vmatpush1.msra.mxu0 0.0
        %7334 = vmatprep.subr.mxu0 0.0
        %7335 = vmatpush1.msra.mxu0 0.0
        %7336 = vmatprep.subr.mxu0 0.0
        %7337 = vmatpush1.msra.mxu0 0.0
        %7338 = vmatprep.subr.mxu0 0.0
        %7339 = vmatpush1.msra.mxu0 0.0
        %7340 = vmatprep.subr.mxu0 0.0
        %7341 = vmatpush1.msra.mxu0 0.0
        %7342 = vmatprep.subr.mxu0 0.0
        %7343 = vmatpush1.msra.mxu0 0.0
        %7344 = vmatprep.subr.mxu0 0.0
        %7345 = vmatpush1.msra.mxu0 0.0
        %7346 = vmatprep.subr.mxu0 0.0
        %7347 = vmatpush1.msra.mxu0 0.0
        %7348 = vmatprep.subr.mxu0 0.0
        %7349 = vmatpush1.msra.mxu0 0.0
        %7350 = vmatprep.subr.mxu0 0.0
        %7351 = vmatpush1.msra.mxu0 0.0
        %7352 = vmatprep.subr.mxu0 0.0
        %7353 = vmatpush1.msra.mxu0 0.0
        %7354 = vmatprep.subr.mxu0 0.0
        %7355 = vmatpush1.msra.mxu0 0.0
        %7356 = vmatprep.subr.mxu0 0.0
        %7357 = vmatpush1.msra.mxu0 0.0
        %7358 = vmatprep.subr.mxu0 0.0
        %7359 = vmatpush1.msra.mxu0 0.0
        %7360 = vmatprep.subr.mxu0 0.0
        %7361 = vmatpush1.msra.mxu0 0.0
        %7362 = vmatprep.subr.mxu0 0.0
        %7363 = vmatpush1.msra.mxu0 %v7330
        %7364 = vmatprep.subr.mxu0 0.0
        %7365 = vmatpush2.msra.mxu0 0.0
        %7366 = vmatprep.subr.mxu0 0.0
        %7367 = vmatpush2.msra.mxu0 0.0
        %7368 = vmatprep.subr.mxu0 0.0
        %7369 = vmatpush2.msra.mxu0 0.0
        %7370 = vmatprep.subr.mxu0 0.0
        %7371 = vmatpush2.msra.mxu0 0.0
        %7372 = vmatprep.subr.mxu0 0.0
        %7373 = vmatpush2.msra.mxu0 0.0
        %7374 = vmatprep.subr.mxu0 0.0
        %7375 = vmatpush2.msra.mxu0 0.0
        %7376 = vmatprep.subr.mxu0 0.0
        %7377 = vmatpush2.msra.mxu0 0.0
        %7378 = vmatprep.subr.mxu0 0.0
        %7379 = vmatpush2.msra.mxu0 0.0
        %7380 = vmatprep.subr.mxu0 0.0
        %7381 = vmatpush2.msra.mxu0 0.0
        %7382 = vmatprep.subr.mxu0 0.0
        %7383 = vmatpush2.msra.mxu0 0.0
        %7384 = vmatprep.subr.mxu0 0.0
        %7385 = vmatpush2.msra.mxu0 0.0
        %7386 = vmatprep.subr.mxu0 0.0
        %7387 = vmatpush2.msra.mxu0 0.0
        %7388 = vmatprep.subr.mxu0 0.0
        %7389 = vmatpush2.msra.mxu0 0.0
        %7390 = vmatprep.subr.mxu0 0.0
        %7391 = vmatpush2.msra.mxu0 0.0
        %7392 = vmatprep.subr.mxu0 0.0
        %7393 = vmatpush2.msra.mxu0 0.0
        %7394 = vmatprep.subr.mxu0 0.0
        %7395 = vmatpush2.msra.mxu0 0.0
        %7396 = vmatprep.mubr.f32.mxu0 0.0
        %7397 = vmatmul.mubr.f32.gmra.mxu0 %v7328
        %v7398 = vpop.f32.mrf.mxu0
        %v7399 = vadd.f32 0.0, %v7398
        %v7400 = vpop.f32.mrf.mxu0
        %7401 = vdwg.mxu0
        %v7403 = vsel %vm815, %v7399, 0
        %7405 = vmatprep.subr.mxu0 0.0
        %7406 = vmatpush1.msra.mxu0 0.0
        %7407 = vmatprep.subr.mxu0 0.0
        %7408 = vmatpush1.msra.mxu0 0.0
        %7409 = vmatprep.subr.mxu0 0.0
        %7410 = vmatpush1.msra.mxu0 0.0
        %7411 = vmatprep.subr.mxu0 0.0
        %7412 = vmatpush1.msra.mxu0 0.0
        %7413 = vmatprep.subr.mxu0 0.0
        %7414 = vmatpush1.msra.mxu0 0.0
        %7415 = vmatprep.subr.mxu0 0.0
        %7416 = vmatpush1.msra.mxu0 0.0
        %7417 = vmatprep.subr.mxu0 0.0
        %7418 = vmatpush1.msra.mxu0 0.0
        %7419 = vmatprep.subr.mxu0 0.0
        %7420 = vmatpush1.msra.mxu0 0.0
        %7421 = vmatprep.subr.mxu0 0.0
        %7422 = vmatpush1.msra.mxu0 0.0
        %7423 = vmatprep.subr.mxu0 0.0
        %7424 = vmatpush1.msra.mxu0 0.0
        %7425 = vmatprep.subr.mxu0 0.0
        %7426 = vmatpush1.msra.mxu0 0.0
        %7427 = vmatprep.subr.mxu0 0.0
        %7428 = vmatpush1.msra.mxu0 0.0
        %7429 = vmatprep.subr.mxu0 0.0
        %7430 = vmatpush1.msra.mxu0 0.0
        %7431 = vmatprep.subr.mxu0 0.0
        %7432 = vmatpush1.msra.mxu0 0.0
        %7433 = vmatprep.subr.mxu0 0.0
        %7434 = vmatpush1.msra.mxu0 0.0
        %7435 = vmatprep.subr.mxu0 0.0
        %7436 = vmatpush1.msra.mxu0 %v6842
        %7437 = vmatprep.subr.mxu0 0.0
        %7438 = vmatpush2.msra.mxu0 0.0
        %7439 = vmatprep.subr.mxu0 0.0
        %7440 = vmatpush2.msra.mxu0 0.0
        %7441 = vmatprep.subr.mxu0 0.0
        %7442 = vmatpush2.msra.mxu0 0.0
        %7443 = vmatprep.subr.mxu0 0.0
        %7444 = vmatpush2.msra.mxu0 0.0
        %7445 = vmatprep.subr.mxu0 0.0
        %7446 = vmatpush2.msra.mxu0 0.0
        %7447 = vmatprep.subr.mxu0 0.0
        %7448 = vmatpush2.msra.mxu0 0.0
        %7449 = vmatprep.subr.mxu0 0.0
        %7450 = vmatpush2.msra.mxu0 0.0
        %7451 = vmatprep.subr.mxu0 0.0
        %7452 = vmatpush2.msra.mxu0 0.0
        %7453 = vmatprep.subr.mxu0 0.0
        %7454 = vmatpush2.msra.mxu0 0.0
        %7455 = vmatprep.subr.mxu0 0.0
        %7456 = vmatpush2.msra.mxu0 0.0
        %7457 = vmatprep.subr.mxu0 0.0
        %7458 = vmatpush2.msra.mxu0 0.0
        %7459 = vmatprep.subr.mxu0 0.0
        %7460 = vmatpush2.msra.mxu0 0.0
        %7461 = vmatprep.subr.mxu0 0.0
        %7462 = vmatpush2.msra.mxu0 0.0
        %7463 = vmatprep.subr.mxu0 0.0
        %7464 = vmatpush2.msra.mxu0 0.0
        %7465 = vmatprep.subr.mxu0 0.0
        %7466 = vmatpush2.msra.mxu0 0.0
        %7467 = vmatprep.subr.mxu0 0.0
        %7468 = vmatpush2.msra.mxu0 0.0
        %7469 = vmatprep.mubr.f32.mxu0 0.0
        %7470 = vmatmul.mubr.f32.gmra.mxu0 %v7403
        %v7471 = vpop.f32.mrf.mxu0
        %v7472 = vadd.f32 0.0, %v7471
        %v7473 = vpop.f32.mrf.mxu0
        %7474 = vdwg.mxu0
        %v7476 = vsel %vm815, %v7232, 0
        %7478 = vmatprep.subr.mxu0 0.0
        %7479 = vmatpush1.msra.mxu0 0.0
        %7480 = vmatprep.subr.mxu0 0.0
        %7481 = vmatpush1.msra.mxu0 0.0
        %7482 = vmatprep.subr.mxu0 0.0
        %7483 = vmatpush1.msra.mxu0 0.0
        %7484 = vmatprep.subr.mxu0 0.0
        %7485 = vmatpush1.msra.mxu0 0.0
        %7486 = vmatprep.subr.mxu0 0.0
        %7487 = vmatpush1.msra.mxu0 0.0
        %7488 = vmatprep.subr.mxu0 0.0
        %7489 = vmatpush1.msra.mxu0 0.0
        %7490 = vmatprep.subr.mxu0 0.0
        %7491 = vmatpush1.msra.mxu0 0.0
        %7492 = vmatprep.subr.mxu0 0.0
        %7493 = vmatpush1.msra.mxu0 0.0
        %7494 = vmatprep.subr.mxu0 0.0
        %7495 = vmatpush1.msra.mxu0 0.0
        %7496 = vmatprep.subr.mxu0 0.0
        %7497 = vmatpush1.msra.mxu0 0.0
        %7498 = vmatprep.subr.mxu0 0.0
        %7499 = vmatpush1.msra.mxu0 0.0
        %7500 = vmatprep.subr.mxu0 0.0
        %7501 = vmatpush1.msra.mxu0 0.0
        %7502 = vmatprep.subr.mxu0 0.0
        %7503 = vmatpush1.msra.mxu0 0.0
        %7504 = vmatprep.subr.mxu0 0.0
        %7505 = vmatpush1.msra.mxu0 0.0
        %7506 = vmatprep.subr.mxu0 0.0
        %7507 = vmatpush1.msra.mxu0 0.0
        %7508 = vmatprep.subr.mxu0 0.0
        %7509 = vmatpush1.msra.mxu0 %v6841
        %7510 = vmatprep.subr.mxu0 0.0
        %7511 = vmatpush2.msra.mxu0 0.0
        %7512 = vmatprep.subr.mxu0 0.0
        %7513 = vmatpush2.msra.mxu0 0.0
        %7514 = vmatprep.subr.mxu0 0.0
        %7515 = vmatpush2.msra.mxu0 0.0
        %7516 = vmatprep.subr.mxu0 0.0
        %7517 = vmatpush2.msra.mxu0 0.0
        %7518 = vmatprep.subr.mxu0 0.0
        %7519 = vmatpush2.msra.mxu0 0.0
        %7520 = vmatprep.subr.mxu0 0.0
        %7521 = vmatpush2.msra.mxu0 0.0
        %7522 = vmatprep.subr.mxu0 0.0
        %7523 = vmatpush2.msra.mxu0 0.0
        %7524 = vmatprep.subr.mxu0 0.0
        %7525 = vmatpush2.msra.mxu0 0.0
        %7526 = vmatprep.subr.mxu0 0.0
        %7527 = vmatpush2.msra.mxu0 0.0
        %7528 = vmatprep.subr.mxu0 0.0
        %7529 = vmatpush2.msra.mxu0 0.0
        %7530 = vmatprep.subr.mxu0 0.0
        %7531 = vmatpush2.msra.mxu0 0.0
        %7532 = vmatprep.subr.mxu0 0.0
        %7533 = vmatpush2.msra.mxu0 0.0
        %7534 = vmatprep.subr.mxu0 0.0
        %7535 = vmatpush2.msra.mxu0 0.0
        %7536 = vmatprep.subr.mxu0 0.0
        %7537 = vmatpush2.msra.mxu0 0.0
        %7538 = vmatprep.subr.mxu0 0.0
        %7539 = vmatpush2.msra.mxu0 0.0
        %7540 = vmatprep.subr.mxu0 0.0
        %7541 = vmatpush2.msra.mxu0 0.0
        %7542 = vmatprep.mubr.f32.mxu0 0.0
        %7543 = vmatmul.mubr.f32.gmra.mxu0 %v7476
        %v7544 = vpop.f32.mrf.mxu0
        %v7545 = vadd.f32 %v7472, %v7544
        %v7546 = vpop.f32.mrf.mxu0
        %7547 = vdwg.mxu0
        %7548 = vrot.lane.b32.xlu0 %v6920, 112
        %v7549 = vpop.permute.xlu0 %7548
        %7550 = vrot.lane.b32.xlu0 %v6994, 112
        %v7551 = vpop.permute.xlu0 %7550
        %v7552 = vsel %vm815, %v7549, 0
        %v7554 = vsel %vm815, %v7551, 0
        %7556 = vmatprep.subr.mxu0 0.0
        %7557 = vmatpush1.xpose.msra.mxu0 0.0
        %7558 = vmatprep.subr.mxu0 0.0
        %7559 = vmatpush1.xpose.msra.mxu0 0.0
        %7560 = vmatprep.subr.mxu0 0.0
        %7561 = vmatpush1.xpose.msra.mxu0 0.0
        %7562 = vmatprep.subr.mxu0 0.0
        %7563 = vmatpush1.xpose.msra.mxu0 0.0
        %7564 = vmatprep.subr.mxu0 0.0
        %7565 = vmatpush1.xpose.msra.mxu0 0.0
        %7566 = vmatprep.subr.mxu0 0.0
        %7567 = vmatpush1.xpose.msra.mxu0 0.0
        %7568 = vmatprep.subr.mxu0 0.0
        %7569 = vmatpush1.xpose.msra.mxu0 0.0
        %7570 = vmatprep.subr.mxu0 0.0
        %7571 = vmatpush1.xpose.msra.mxu0 0.0
        %7572 = vmatprep.subr.mxu0 0.0
        %7573 = vmatpush1.xpose.msra.mxu0 0.0
        %7574 = vmatprep.subr.mxu0 0.0
        %7575 = vmatpush1.xpose.msra.mxu0 0.0
        %7576 = vmatprep.subr.mxu0 0.0
        %7577 = vmatpush1.xpose.msra.mxu0 0.0
        %7578 = vmatprep.subr.mxu0 0.0
        %7579 = vmatpush1.xpose.msra.mxu0 0.0
        %7580 = vmatprep.subr.mxu0 0.0
        %7581 = vmatpush1.xpose.msra.mxu0 0.0
        %7582 = vmatprep.subr.mxu0 0.0
        %7583 = vmatpush1.xpose.msra.mxu0 0.0
        %7584 = vmatprep.subr.mxu0 0.0
        %7585 = vmatpush1.xpose.msra.mxu0 0.0
        %7586 = vmatprep.subr.mxu0 0.0
        %7587 = vmatpush1.xpose.msra.mxu0 %v7554
        %7588 = vmatprep.subr.mxu0 0.0
        %7589 = vmatpush2.xpose.msra.mxu0 0.0
        %7590 = vmatprep.subr.mxu0 0.0
        %7591 = vmatpush2.xpose.msra.mxu0 0.0
        %7592 = vmatprep.subr.mxu0 0.0
        %7593 = vmatpush2.xpose.msra.mxu0 0.0
        %7594 = vmatprep.subr.mxu0 0.0
        %7595 = vmatpush2.xpose.msra.mxu0 0.0
        %7596 = vmatprep.subr.mxu0 0.0
        %7597 = vmatpush2.xpose.msra.mxu0 0.0
        %7598 = vmatprep.subr.mxu0 0.0
        %7599 = vmatpush2.xpose.msra.mxu0 0.0
        %7600 = vmatprep.subr.mxu0 0.0
        %7601 = vmatpush2.xpose.msra.mxu0 0.0
        %7602 = vmatprep.subr.mxu0 0.0
        %7603 = vmatpush2.xpose.msra.mxu0 0.0
        %7604 = vmatprep.subr.mxu0 0.0
        %7605 = vmatpush2.xpose.msra.mxu0 0.0
        %7606 = vmatprep.subr.mxu0 0.0
        %7607 = vmatpush2.xpose.msra.mxu0 0.0
        %7608 = vmatprep.subr.mxu0 0.0
        %7609 = vmatpush2.xpose.msra.mxu0 0.0
        %7610 = vmatprep.subr.mxu0 0.0
        %7611 = vmatpush2.xpose.msra.mxu0 0.0
        %7612 = vmatprep.subr.mxu0 0.0
        %7613 = vmatpush2.xpose.msra.mxu0 0.0
        %7614 = vmatprep.subr.mxu0 0.0
        %7615 = vmatpush2.xpose.msra.mxu0 0.0
        %7616 = vmatprep.subr.mxu0 0.0
        %7617 = vmatpush2.xpose.msra.mxu0 0.0
        %7618 = vmatprep.subr.mxu0 0.0
        %7619 = vmatpush2.xpose.msra.mxu0 0.0
        %7620 = vmatprep.mubr.f32.mxu0 0.0
        %7621 = vmatmul.mubr.f32.gmra.mxu0 %v7552
        %v7622 = vpop.f32.mrf.mxu0
        %v7623 = vadd.f32 0.0, %v7622
        %v7624 = vpop.f32.mrf.mxu0
        %7625 = vdwg.mxu0
        %v7626 = vmul.f32 %v7623, 0.35355338
        %v7627 = vsel %vm1432, %v7626, -inf
        %7628 = vmax.xlane.f32.xlu0 %v7627
        %v7629 = vpop.xlane.xlu0 %7628
        %v7630 = vsub.f32 %v7626, %v7629
        %v7631 = vmul.f32 %v7630, 1.442695
        %v7632 = vpow.pop %v7631
        %v7633 = vsel %vm1432, %v7632, 0.0
        %7634 = vadd.xlane.f32.xlu0 %v7633
        %v7635 = vpop.xlane.xlu0 %7634
        %v7636 = vrcp.pop %v7635
        %v7637 = vmul.f32 %v7632, %v7636
        %7638 = vrot.lane.b32.xlu0 %v7068, 112
        %v7639 = vpop.permute.xlu0 %7638
        %v7641 = vsel %vm1521, %v7637, 0
        %v7643 = vsel %vm1525, %v7639, 0
        %7645 = vmatprep.subr.mxu0 0.0
        %7646 = vmatpush1.msra.mxu0 0.0
        %7647 = vmatprep.subr.mxu0 0.0
        %7648 = vmatpush1.msra.mxu0 0.0
        %7649 = vmatprep.subr.mxu0 0.0
        %7650 = vmatpush1.msra.mxu0 0.0
        %7651 = vmatprep.subr.mxu0 0.0
        %7652 = vmatpush1.msra.mxu0 0.0
        %7653 = vmatprep.subr.mxu0 0.0
        %7654 = vmatpush1.msra.mxu0 0.0
        %7655 = vmatprep.subr.mxu0 0.0
        %7656 = vmatpush1.msra.mxu0 0.0
        %7657 = vmatprep.subr.mxu0 0.0
        %7658 = vmatpush1.msra.mxu0 0.0
        %7659 = vmatprep.subr.mxu0 0.0
        %7660 = vmatpush1.msra.mxu0 0.0
        %7661 = vmatprep.subr.mxu0 0.0
        %7662 = vmatpush1.msra.mxu0 0.0
        %7663 = vmatprep.subr.mxu0 0.0
        %7664 = vmatpush1.msra.mxu0 0.0
        %7665 = vmatprep.subr.mxu0 0.0
        %7666 = vmatpush1.msra.mxu0 0.0
        %7667 = vmatprep.subr.mxu0 0.0
        %7668 = vmatpush1.msra.mxu0 0.0
        %7669 = vmatprep.subr.mxu0 0.0
        %7670 = vmatpush1.msra.mxu0 0.0
        %7671 = vmatprep.subr.mxu0 0.0
        %7672 = vmatpush1.msra.mxu0 0.0
        %7673 = vmatprep.subr.mxu0 0.0
        %7674 = vmatpush1.msra.mxu0 0.0
        %7675 = vmatprep.subr.mxu0 0.0
        %7676 = vmatpush1.msra.mxu0 %v7643
        %7677 = vmatprep.subr.mxu0 0.0
        %7678 = vmatpush2.msra.mxu0 0.0
        %7679 = vmatprep.subr.mxu0 0.0
        %7680 = vmatpush2.msra.mxu0 0.0
        %7681 = vmatprep.subr.mxu0 0.0
        %7682 = vmatpush2.msra.mxu0 0.0
        %7683 = vmatprep.subr.mxu0 0.0
        %7684 = vmatpush2.msra.mxu0 0.0
        %7685 = vmatprep.subr.mxu0 0.0
        %7686 = vmatpush2.msra.mxu0 0.0
        %7687 = vmatprep.subr.mxu0 0.0
        %7688 = vmatpush2.msra.mxu0 0.0
        %7689 = vmatprep.subr.mxu0 0.0
        %7690 = vmatpush2.msra.mxu0 0.0
        %7691 = vmatprep.subr.mxu0 0.0
        %7692 = vmatpush2.msra.mxu0 0.0
        %7693 = vmatprep.subr.mxu0 0.0
        %7694 = vmatpush2.msra.mxu0 0.0
        %7695 = vmatprep.subr.mxu0 0.0
        %7696 = vmatpush2.msra.mxu0 0.0
        %7697 = vmatprep.subr.mxu0 0.0
        %7698 = vmatpush2.msra.mxu0 0.0
        %7699 = vmatprep.subr.mxu0 0.0
        %7700 = vmatpush2.msra.mxu0 0.0
        %7701 = vmatprep.subr.mxu0 0.0
        %7702 = vmatpush2.msra.mxu0 0.0
        %7703 = vmatprep.subr.mxu0 0.0
        %7704 = vmatpush2.msra.mxu0 0.0
        %7705 = vmatprep.subr.mxu0 0.0
        %7706 = vmatpush2.msra.mxu0 0.0
        %7707 = vmatprep.subr.mxu0 0.0
        %7708 = vmatpush2.msra.mxu0 0.0
        %7709 = vmatprep.mubr.f32.mxu0 0.0
        %7710 = vmatmul.mubr.f32.gmra.mxu0 %v7641
        %v7711 = vpop.f32.mrf.mxu0
        %v7712 = vadd.f32 0.0, %v7711
        %v7713 = vpop.f32.mrf.mxu0
        %7714 = vdwg.mxu0
        %v7716 = vsel %vm815, %v7712, 0
        %7718 = vmatprep.subr.mxu0 0.0
        %7719 = vmatpush1.msra.mxu0 0.0
        %7720 = vmatprep.subr.mxu0 0.0
        %7721 = vmatpush1.msra.mxu0 0.0
        %7722 = vmatprep.subr.mxu0 0.0
        %7723 = vmatpush1.msra.mxu0 0.0
        %7724 = vmatprep.subr.mxu0 0.0
        %7725 = vmatpush1.msra.mxu0 0.0
        %7726 = vmatprep.subr.mxu0 0.0
        %7727 = vmatpush1.msra.mxu0 0.0
        %7728 = vmatprep.subr.mxu0 0.0
        %7729 = vmatpush1.msra.mxu0 0.0
        %7730 = vmatprep.subr.mxu0 0.0
        %7731 = vmatpush1.msra.mxu0 0.0
        %7732 = vmatprep.subr.mxu0 0.0
        %7733 = vmatpush1.msra.mxu0 0.0
        %7734 = vmatprep.subr.mxu0 0.0
        %7735 = vmatpush1.msra.mxu0 0.0
        %7736 = vmatprep.subr.mxu0 0.0
        %7737 = vmatpush1.msra.mxu0 0.0
        %7738 = vmatprep.subr.mxu0 0.0
        %7739 = vmatpush1.msra.mxu0 0.0
        %7740 = vmatprep.subr.mxu0 0.0
        %7741 = vmatpush1.msra.mxu0 0.0
        %7742 = vmatprep.subr.mxu0 0.0
        %7743 = vmatpush1.msra.mxu0 0.0
        %7744 = vmatprep.subr.mxu0 0.0
        %7745 = vmatpush1.msra.mxu0 0.0
        %7746 = vmatprep.subr.mxu0 0.0
        %7747 = vmatpush1.msra.mxu0 0.0
        %7748 = vmatprep.subr.mxu0 0.0
        %7749 = vmatpush1.msra.mxu0 %v6843
        %7750 = vmatprep.subr.mxu0 0.0
        %7751 = vmatpush2.msra.mxu0 0.0
        %7752 = vmatprep.subr.mxu0 0.0
        %7753 = vmatpush2.msra.mxu0 0.0
        %7754 = vmatprep.subr.mxu0 0.0
        %7755 = vmatpush2.msra.mxu0 0.0
        %7756 = vmatprep.subr.mxu0 0.0
        %7757 = vmatpush2.msra.mxu0 0.0
        %7758 = vmatprep.subr.mxu0 0.0
        %7759 = vmatpush2.msra.mxu0 0.0
        %7760 = vmatprep.subr.mxu0 0.0
        %7761 = vmatpush2.msra.mxu0 0.0
        %7762 = vmatprep.subr.mxu0 0.0
        %7763 = vmatpush2.msra.mxu0 0.0
        %7764 = vmatprep.subr.mxu0 0.0
        %7765 = vmatpush2.msra.mxu0 0.0
        %7766 = vmatprep.subr.mxu0 0.0
        %7767 = vmatpush2.msra.mxu0 0.0
        %7768 = vmatprep.subr.mxu0 0.0
        %7769 = vmatpush2.msra.mxu0 0.0
        %7770 = vmatprep.subr.mxu0 0.0
        %7771 = vmatpush2.msra.mxu0 0.0
        %7772 = vmatprep.subr.mxu0 0.0
        %7773 = vmatpush2.msra.mxu0 0.0
        %7774 = vmatprep.subr.mxu0 0.0
        %7775 = vmatpush2.msra.mxu0 0.0
        %7776 = vmatprep.subr.mxu0 0.0
        %7777 = vmatpush2.msra.mxu0 0.0
        %7778 = vmatprep.subr.mxu0 0.0
        %7779 = vmatpush2.msra.mxu0 0.0
        %7780 = vmatprep.subr.mxu0 0.0
        %7781 = vmatpush2.msra.mxu0 0.0
        %7782 = vmatprep.mubr.f32.mxu0 0.0
        %7783 = vmatmul.mubr.f32.gmra.mxu0 %v7716
        %v7784 = vpop.f32.mrf.mxu0
        %v7785 = vadd.f32 0.0, %v7784
        %v7786 = vpop.f32.mrf.mxu0
        %7787 = vdwg.mxu0
        %v7788 = vadd.f32 %v7545, %v7785
        %7789 = vrot.lane.b32.xlu0 %v6920, 104
        %v7790 = vpop.permute.xlu0 %7789
        %7791 = vrot.lane.b32.xlu0 %v6994, 104
        %v7792 = vpop.permute.xlu0 %7791
        %v7793 = vsel %vm815, %v7790, 0
        %v7795 = vsel %vm815, %v7792, 0
        %7797 = vmatprep.subr.mxu0 0.0
        %7798 = vmatpush1.xpose.msra.mxu0 0.0
        %7799 = vmatprep.subr.mxu0 0.0
        %7800 = vmatpush1.xpose.msra.mxu0 0.0
        %7801 = vmatprep.subr.mxu0 0.0
        %7802 = vmatpush1.xpose.msra.mxu0 0.0
        %7803 = vmatprep.subr.mxu0 0.0
        %7804 = vmatpush1.xpose.msra.mxu0 0.0
        %7805 = vmatprep.subr.mxu0 0.0
        %7806 = vmatpush1.xpose.msra.mxu0 0.0
        %7807 = vmatprep.subr.mxu0 0.0
        %7808 = vmatpush1.xpose.msra.mxu0 0.0
        %7809 = vmatprep.subr.mxu0 0.0
        %7810 = vmatpush1.xpose.msra.mxu0 0.0
        %7811 = vmatprep.subr.mxu0 0.0
        %7812 = vmatpush1.xpose.msra.mxu0 0.0
        %7813 = vmatprep.subr.mxu0 0.0
        %7814 = vmatpush1.xpose.msra.mxu0 0.0
        %7815 = vmatprep.subr.mxu0 0.0
        %7816 = vmatpush1.xpose.msra.mxu0 0.0
        %7817 = vmatprep.subr.mxu0 0.0
        %7818 = vmatpush1.xpose.msra.mxu0 0.0
        %7819 = vmatprep.subr.mxu0 0.0
        %7820 = vmatpush1.xpose.msra.mxu0 0.0
        %7821 = vmatprep.subr.mxu0 0.0
        %7822 = vmatpush1.xpose.msra.mxu0 0.0
        %7823 = vmatprep.subr.mxu0 0.0
        %7824 = vmatpush1.xpose.msra.mxu0 0.0
        %7825 = vmatprep.subr.mxu0 0.0
        %7826 = vmatpush1.xpose.msra.mxu0 0.0
        %7827 = vmatprep.subr.mxu0 0.0
        %7828 = vmatpush1.xpose.msra.mxu0 %v7795
        %7829 = vmatprep.subr.mxu0 0.0
        %7830 = vmatpush2.xpose.msra.mxu0 0.0
        %7831 = vmatprep.subr.mxu0 0.0
        %7832 = vmatpush2.xpose.msra.mxu0 0.0
        %7833 = vmatprep.subr.mxu0 0.0
        %7834 = vmatpush2.xpose.msra.mxu0 0.0
        %7835 = vmatprep.subr.mxu0 0.0
        %7836 = vmatpush2.xpose.msra.mxu0 0.0
        %7837 = vmatprep.subr.mxu0 0.0
        %7838 = vmatpush2.xpose.msra.mxu0 0.0
        %7839 = vmatprep.subr.mxu0 0.0
        %7840 = vmatpush2.xpose.msra.mxu0 0.0
        %7841 = vmatprep.subr.mxu0 0.0
        %7842 = vmatpush2.xpose.msra.mxu0 0.0
        %7843 = vmatprep.subr.mxu0 0.0
        %7844 = vmatpush2.xpose.msra.mxu0 0.0
        %7845 = vmatprep.subr.mxu0 0.0
        %7846 = vmatpush2.xpose.msra.mxu0 0.0
        %7847 = vmatprep.subr.mxu0 0.0
        %7848 = vmatpush2.xpose.msra.mxu0 0.0
        %7849 = vmatprep.subr.mxu0 0.0
        %7850 = vmatpush2.xpose.msra.mxu0 0.0
        %7851 = vmatprep.subr.mxu0 0.0
        %7852 = vmatpush2.xpose.msra.mxu0 0.0
        %7853 = vmatprep.subr.mxu0 0.0
        %7854 = vmatpush2.xpose.msra.mxu0 0.0
        %7855 = vmatprep.subr.mxu0 0.0
        %7856 = vmatpush2.xpose.msra.mxu0 0.0
        %7857 = vmatprep.subr.mxu0 0.0
        %7858 = vmatpush2.xpose.msra.mxu0 0.0
        %7859 = vmatprep.subr.mxu0 0.0
        %7860 = vmatpush2.xpose.msra.mxu0 0.0
        %7861 = vmatprep.mubr.f32.mxu0 0.0
        %7862 = vmatmul.mubr.f32.gmra.mxu0 %v7793
        %v7863 = vpop.f32.mrf.mxu0
        %v7864 = vadd.f32 0.0, %v7863
        %v7865 = vpop.f32.mrf.mxu0
        %7866 = vdwg.mxu0
        %v7867 = vmul.f32 %v7864, 0.35355338
        %v7868 = vsel %vm1432, %v7867, -inf
        %7869 = vmax.xlane.f32.xlu0 %v7868
        %v7870 = vpop.xlane.xlu0 %7869
        %v7871 = vsub.f32 %v7867, %v7870
        %v7872 = vmul.f32 %v7871, 1.442695
        %v7873 = vpow.pop %v7872
        %v7874 = vsel %vm1432, %v7873, 0.0
        %7875 = vadd.xlane.f32.xlu0 %v7874
        %v7876 = vpop.xlane.xlu0 %7875
        %v7877 = vrcp.pop %v7876
        %v7878 = vmul.f32 %v7873, %v7877
        %7879 = vrot.lane.b32.xlu0 %v7068, 104
        %v7880 = vpop.permute.xlu0 %7879
        %v7882 = vsel %vm1521, %v7878, 0
        %v7884 = vsel %vm1525, %v7880, 0
        %7886 = vmatprep.subr.mxu0 0.0
        %7887 = vmatpush1.msra.mxu0 0.0
        %7888 = vmatprep.subr.mxu0 0.0
        %7889 = vmatpush1.msra.mxu0 0.0
        %7890 = vmatprep.subr.mxu0 0.0
        %7891 = vmatpush1.msra.mxu0 0.0
        %7892 = vmatprep.subr.mxu0 0.0
        %7893 = vmatpush1.msra.mxu0 0.0
        %7894 = vmatprep.subr.mxu0 0.0
        %7895 = vmatpush1.msra.mxu0 0.0
        %7896 = vmatprep.subr.mxu0 0.0
        %7897 = vmatpush1.msra.mxu0 0.0
        %7898 = vmatprep.subr.mxu0 0.0
        %7899 = vmatpush1.msra.mxu0 0.0
        %7900 = vmatprep.subr.mxu0 0.0
        %7901 = vmatpush1.msra.mxu0 0.0
        %7902 = vmatprep.subr.mxu0 0.0
        %7903 = vmatpush1.msra.mxu0 0.0
        %7904 = vmatprep.subr.mxu0 0.0
        %7905 = vmatpush1.msra.mxu0 0.0
        %7906 = vmatprep.subr.mxu0 0.0
        %7907 = vmatpush1.msra.mxu0 0.0
        %7908 = vmatprep.subr.mxu0 0.0
        %7909 = vmatpush1.msra.mxu0 0.0
        %7910 = vmatprep.subr.mxu0 0.0
        %7911 = vmatpush1.msra.mxu0 0.0
        %7912 = vmatprep.subr.mxu0 0.0
        %7913 = vmatpush1.msra.mxu0 0.0
        %7914 = vmatprep.subr.mxu0 0.0
        %7915 = vmatpush1.msra.mxu0 0.0
        %7916 = vmatprep.subr.mxu0 0.0
        %7917 = vmatpush1.msra.mxu0 %v7884
        %7918 = vmatprep.subr.mxu0 0.0
        %7919 = vmatpush2.msra.mxu0 0.0
        %7920 = vmatprep.subr.mxu0 0.0
        %7921 = vmatpush2.msra.mxu0 0.0
        %7922 = vmatprep.subr.mxu0 0.0
        %7923 = vmatpush2.msra.mxu0 0.0
        %7924 = vmatprep.subr.mxu0 0.0
        %7925 = vmatpush2.msra.mxu0 0.0
        %7926 = vmatprep.subr.mxu0 0.0
        %7927 = vmatpush2.msra.mxu0 0.0
        %7928 = vmatprep.subr.mxu0 0.0
        %7929 = vmatpush2.msra.mxu0 0.0
        %7930 = vmatprep.subr.mxu0 0.0
        %7931 = vmatpush2.msra.mxu0 0.0
        %7932 = vmatprep.subr.mxu0 0.0
        %7933 = vmatpush2.msra.mxu0 0.0
        %7934 = vmatprep.subr.mxu0 0.0
        %7935 = vmatpush2.msra.mxu0 0.0
        %7936 = vmatprep.subr.mxu0 0.0
        %7937 = vmatpush2.msra.mxu0 0.0
        %7938 = vmatprep.subr.mxu0 0.0
        %7939 = vmatpush2.msra.mxu0 0.0
        %7940 = vmatprep.subr.mxu0 0.0
        %7941 = vmatpush2.msra.mxu0 0.0
        %7942 = vmatprep.subr.mxu0 0.0
        %7943 = vmatpush2.msra.mxu0 0.0
        %7944 = vmatprep.subr.mxu0 0.0
        %7945 = vmatpush2.msra.mxu0 0.0
        %7946 = vmatprep.subr.mxu0 0.0
        %7947 = vmatpush2.msra.mxu0 0.0
        %7948 = vmatprep.subr.mxu0 0.0
        %7949 = vmatpush2.msra.mxu0 0.0
        %7950 = vmatprep.mubr.f32.mxu0 0.0
        %7951 = vmatmul.mubr.f32.gmra.mxu0 %v7882
        %v7952 = vpop.f32.mrf.mxu0
        %v7953 = vadd.f32 0.0, %v7952
        %v7954 = vpop.f32.mrf.mxu0
        %7955 = vdwg.mxu0
        %v7957 = vsel %vm815, %v7953, 0
        %7959 = vmatprep.subr.mxu0 0.0
        %7960 = vmatpush1.msra.mxu0 0.0
        %7961 = vmatprep.subr.mxu0 0.0
        %7962 = vmatpush1.msra.mxu0 0.0
        %7963 = vmatprep.subr.mxu0 0.0
        %7964 = vmatpush1.msra.mxu0 0.0
        %7965 = vmatprep.subr.mxu0 0.0
        %7966 = vmatpush1.msra.mxu0 0.0
        %7967 = vmatprep.subr.mxu0 0.0
        %7968 = vmatpush1.msra.mxu0 0.0
        %7969 = vmatprep.subr.mxu0 0.0
        %7970 = vmatpush1.msra.mxu0 0.0
        %7971 = vmatprep.subr.mxu0 0.0
        %7972 = vmatpush1.msra.mxu0 0.0
        %7973 = vmatprep.subr.mxu0 0.0
        %7974 = vmatpush1.msra.mxu0 0.0
        %7975 = vmatprep.subr.mxu0 0.0
        %7976 = vmatpush1.msra.mxu0 0.0
        %7977 = vmatprep.subr.mxu0 0.0
        %7978 = vmatpush1.msra.mxu0 0.0
        %7979 = vmatprep.subr.mxu0 0.0
        %7980 = vmatpush1.msra.mxu0 0.0
        %7981 = vmatprep.subr.mxu0 0.0
        %7982 = vmatpush1.msra.mxu0 0.0
        %7983 = vmatprep.subr.mxu0 0.0
        %7984 = vmatpush1.msra.mxu0 0.0
        %7985 = vmatprep.subr.mxu0 0.0
        %7986 = vmatpush1.msra.mxu0 0.0
        %7987 = vmatprep.subr.mxu0 0.0
        %7988 = vmatpush1.msra.mxu0 0.0
        %7989 = vmatprep.subr.mxu0 0.0
        %7990 = vmatpush1.msra.mxu0 %v6844
        %7991 = vmatprep.subr.mxu0 0.0
        %7992 = vmatpush2.msra.mxu0 0.0
        %7993 = vmatprep.subr.mxu0 0.0
        %7994 = vmatpush2.msra.mxu0 0.0
        %7995 = vmatprep.subr.mxu0 0.0
        %7996 = vmatpush2.msra.mxu0 0.0
        %7997 = vmatprep.subr.mxu0 0.0
        %7998 = vmatpush2.msra.mxu0 0.0
        %7999 = vmatprep.subr.mxu0 0.0
        %8000 = vmatpush2.msra.mxu0 0.0
        %8001 = vmatprep.subr.mxu0 0.0
        %8002 = vmatpush2.msra.mxu0 0.0
        %8003 = vmatprep.subr.mxu0 0.0
        %8004 = vmatpush2.msra.mxu0 0.0
        %8005 = vmatprep.subr.mxu0 0.0
        %8006 = vmatpush2.msra.mxu0 0.0
        %8007 = vmatprep.subr.mxu0 0.0
        %8008 = vmatpush2.msra.mxu0 0.0
        %8009 = vmatprep.subr.mxu0 0.0
        %8010 = vmatpush2.msra.mxu0 0.0
        %8011 = vmatprep.subr.mxu0 0.0
        %8012 = vmatpush2.msra.mxu0 0.0
        %8013 = vmatprep.subr.mxu0 0.0
        %8014 = vmatpush2.msra.mxu0 0.0
        %8015 = vmatprep.subr.mxu0 0.0
        %8016 = vmatpush2.msra.mxu0 0.0
        %8017 = vmatprep.subr.mxu0 0.0
        %8018 = vmatpush2.msra.mxu0 0.0
        %8019 = vmatprep.subr.mxu0 0.0
        %8020 = vmatpush2.msra.mxu0 0.0
        %8021 = vmatprep.subr.mxu0 0.0
        %8022 = vmatpush2.msra.mxu0 0.0
        %8023 = vmatprep.mubr.f32.mxu0 0.0
        %8024 = vmatmul.mubr.f32.gmra.mxu0 %v7957
        %v8025 = vpop.f32.mrf.mxu0
        %v8026 = vadd.f32 0.0, %v8025
        %v8027 = vpop.f32.mrf.mxu0
        %8028 = vdwg.mxu0
        %v8029 = vadd.f32 %v7788, %v8026
        %v8030 = vlaneseq
        %v8031 = vshrl.u32 %v8030, 7
        %v8032 = vsub.s32 3, %v8031
        %v8033 = vrot.slane %v6845, %v8032
        %v8034 = vadd.f32 %v8029, %v8033
        %v8035 = vsel %vm6639, %v8034, -inf
        %v8036 = vrot.slane %v8035, 4
        %v8037 = vmax.f32 %v8035, %v8036
        %v8038 = vrot.slane %v8037, 2
        %v8039 = vmax.f32 %v8037, %v8038
        %v8040 = vrot.slane %v8039, 1
        %v8041 = vmax.f32 %v8039, %v8040
        %v8042 = vld [vmem:[%s10] sm:$0xff]
        %v8043 = vld [vmem:[%s10 + $0x8] sm:$0xff]
        %v8044 = vld [vmem:[%s10 + $0x10] sm:$0xff]
        %v8045 = vld [vmem:[%s10 + $0x18] sm:$0xff]
        %v8046 = vld [vmem:[%s11] sm:$0x1]
        %v8048 = vsel %vm513, %v8041, 0
        %8050 = vmatprep.subr.mxu0 0.0
        %8051 = vmatpush1.msra.mxu0 0.0
        %8052 = vmatprep.subr.mxu0 0.0
        %8053 = vmatpush1.msra.mxu0 0.0
        %8054 = vmatprep.subr.mxu0 0.0
        %8055 = vmatpush1.msra.mxu0 0.0
        %8056 = vmatprep.subr.mxu0 0.0
        %8057 = vmatpush1.msra.mxu0 0.0
        %8058 = vmatprep.subr.mxu0 0.0
        %8059 = vmatpush1.msra.mxu0 0.0
        %8060 = vmatprep.subr.mxu0 0.0
        %8061 = vmatpush1.msra.mxu0 0.0
        %8062 = vmatprep.subr.mxu0 0.0
        %8063 = vmatpush1.msra.mxu0 0.0
        %8064 = vmatprep.subr.mxu0 0.0
        %8065 = vmatpush1.msra.mxu0 0.0
        %8066 = vmatprep.subr.mxu0 0.0
        %8067 = vmatpush1.msra.mxu0 0.0
        %8068 = vmatprep.subr.mxu0 0.0
        %8069 = vmatpush1.msra.mxu0 0.0
        %8070 = vmatprep.subr.mxu0 0.0
        %8071 = vmatpush1.msra.mxu0 0.0
        %8072 = vmatprep.subr.mxu0 0.0
        %8073 = vmatpush1.msra.mxu0 0.0
        %8074 = vmatprep.subr.mxu0 0.0
        %8075 = vmatpush1.msra.mxu0 %v8045
        %8076 = vmatprep.subr.mxu0 0.0
        %8077 = vmatpush1.msra.mxu0 %v8044
        %8078 = vmatprep.subr.mxu0 0.0
        %8079 = vmatpush1.msra.mxu0 %v8043
        %8080 = vmatprep.subr.mxu0 0.0
        %8081 = vmatpush1.msra.mxu0 %v8042
        %8082 = vmatprep.subr.mxu0 0.0
        %8083 = vmatpush2.msra.mxu0 0.0
        %8084 = vmatprep.subr.mxu0 0.0
        %8085 = vmatpush2.msra.mxu0 0.0
        %8086 = vmatprep.subr.mxu0 0.0
        %8087 = vmatpush2.msra.mxu0 0.0
        %8088 = vmatprep.subr.mxu0 0.0
        %8089 = vmatpush2.msra.mxu0 0.0
        %8090 = vmatprep.subr.mxu0 0.0
        %8091 = vmatpush2.msra.mxu0 0.0
        %8092 = vmatprep.subr.mxu0 0.0
        %8093 = vmatpush2.msra.mxu0 0.0
        %8094 = vmatprep.subr.mxu0 0.0
        %8095 = vmatpush2.msra.mxu0 0.0
        %8096 = vmatprep.subr.mxu0 0.0
        %8097 = vmatpush2.msra.mxu0 0.0
        %8098 = vmatprep.subr.mxu0 0.0
        %8099 = vmatpush2.msra.mxu0 0.0
        %8100 = vmatprep.subr.mxu0 0.0
        %8101 = vmatpush2.msra.mxu0 0.0
        %8102 = vmatprep.subr.mxu0 0.0
        %8103 = vmatpush2.msra.mxu0 0.0
        %8104 = vmatprep.subr.mxu0 0.0
        %8105 = vmatpush2.msra.mxu0 0.0
        %8106 = vmatprep.subr.mxu0 0.0
        %8107 = vmatpush2.msra.mxu0 0.0
        %8108 = vmatprep.subr.mxu0 0.0
        %8109 = vmatpush2.msra.mxu0 0.0
        %8110 = vmatprep.subr.mxu0 0.0
        %8111 = vmatpush2.msra.mxu0 0.0
        %8112 = vmatprep.subr.mxu0 0.0
        %8113 = vmatpush2.msra.mxu0 0.0
        %8114 = vmatprep.mubr.f32.mxu0 0.0
        %8115 = vmatmul.mubr.f32.gmra.mxu0 %v8048
        %v8116 = vpop.f32.mrf.mxu0
        %v8117 = vadd.f32 %v8046, %v8116
        %v8118 = vpop.f32.mrf.mxu0
        %8119 = vdwg.mxu0
        %v8120 = vsub.f32 0.0, %v8117
        %v8121 = vmul.f32 %v8120, 1.442695
        %v8122 = vpow.pop %v8121
        %v8123 = vadd.f32 %v8122, 1.0
        %v8124 = vrcp.pop %v8123
        %v8125 = vmul.f32 1.0, %v8124
        %vm8126 = vcmask 57344
        %8127 = vst.msk [vmem:[%s450] sm:$0x1] %vm8126, %v8125
        %s8128 = sand.u32 %s298, 1
        %s8129 = scalar_lea.sflag [#allocation4], %s8128
        %s8130 = sand.u32 %s298, 1
        %s8131 = scalar_lea.vmem [#allocation7], %s8130
        // Predicated region
        $region77: #{tpu_custom_call.1} parent=67 // pred_check
          %p8132 = pneg %p308
        $region78: #{tpu_custom_call.1} parent=67 // pred_check_branch
          %8134 = sbr.rel (%p8132) target = $region80
        $region79: #{tpu_custom_call.1} parent=67 // pred_region
          %s8136 = ssub.s32 16, 16
          %8137 = vsyncadd %s8129, %s8136
          %s8138 = smul.addr %s28, 16
          %s8139 = scalar_lea.hbm %s12, %s8138
          %s8141 = sshll.u32 %s8131, 4
          %s8142 = int_to_ptr.vmem [resolvable:$true] %s8141
          %8144 = dma.vmem_to_hbm [thread:$0]  %s8142, 16, %s8139, %s8129
        $region80: #{tpu_custom_call.1} parent=67 // pred_fallthru
          _
      $region68: #{tpu_custom_call.1} parent=5 // pred_fallthru
        _
      %p8145 = scmp.le.s32.totalorder 2, %s23
      // Predicated region
      $region81: #{tpu_custom_call.1} parent=5 // pred_check
        %p8146 = pneg %p8145
      $region82: #{tpu_custom_call.1} parent=5 // pred_check_branch
        %8148 = sbr.rel (%p8146) target = $region84
      $region83: #{tpu_custom_call.1} parent=5 // pred_region
        %s8149 = ssub.s32 %s23, 2
        // Predicated region
        $region85: #{tpu_custom_call.1} parent=83 // pred_check
          %p8150 = pneg %p314
        $region86: #{tpu_custom_call.1} parent=83 // pred_check_branch
          %8152 = sbr.rel (%p8150) target = $region88
        $region87: #{tpu_custom_call.1} parent=83 // pred_region
          %s8153 = sand.u32 %s299, 1
          %s8154 = scalar_lea.sflag [#allocation4], %s8153
          %s8155 = sand.u32 %s299, 1
          %s8156 = scalar_lea.vmem [#allocation7], %s8155
          %8157 = dma.done %s8154, 16
        $region88: #{tpu_custom_call.1} parent=83 // pred_fallthru
          _
      $region84: #{tpu_custom_call.1} parent=5 // pred_fallthru
        _
    $region6: #{tpu_custom_call.1} parent=1 // loop_footer
      %s27 = sadd.s32 1, %s23
    $region7: #{tpu_custom_call.1} parent=1 // loop_footer_branch
      %22 = sbr.rel target = $region3
    $region8: #{tpu_custom_call.1} parent=1 // loop_exit
      _
    %8158 = vsyncpa [#allocation3], 1
    %s8159 = scalar_lea.sflag [#allocation3], 1
    %8160 = vsyncpa %s8159, 1
    %8161 = vsyncpa [#allocation6], 1
    %8162 = vsyncpa [#allocation4], 1
    %s8163 = scalar_lea.sflag [#allocation4], 1
    %8164 = vsyncpa %s8163, 1

</llo_original>
